<compile_context>
chip_gen: v6e
topology: v6e:2x2x1
jax: 0.10.0
libtpu: 0.0.40
codegen_flags: <defaults>
</compile_context>

<pallas_src>
import functools

import jax
import jax.numpy as jnp
import numpy as np
from jax.experimental import pallas as pl
from jax.experimental.pallas import tpu as pltpu


def _layernorm_f32(x, w, b, eps):
    mean = jnp.mean(x, axis=-1, keepdims=True)
    var = jnp.mean(jnp.square(x - mean), axis=-1, keepdims=True)
    return (x - mean) * jax.lax.rsqrt(var + eps) * w + b


def _silu(x):
    return x * jax.nn.sigmoid(x)


def retnet_layer_kernel(
    # inputs
    x_ref, prev_state_ref,
    qdec_ref, kdec_ref, ksdec_ref, gamma_ref, gammac_ref,
    ln1_w_ref, ln1_b_ref, ln2_w_ref, ln2_b_ref,
    wq_ref, bq_ref, wk_ref, bk_ref, wv_ref, bv_ref, wg_ref, bg_ref,
    wo_ref, bo_ref, w1_ref, b1_ref, w2_ref, b2_ref,
    # outputs
    out_ref, state_out_ref,
    # scratch
    state_acc,
    *, ln_eps, gn_eps,
):
    f32 = jnp.float32
    x = x_ref[0]                                   # (C, D) chunk of the sequence
    C, D = x.shape
    H = wq_ref.shape[0]
    cdt = x.dtype
    c_idx = pl.program_id(1)

    # ---- carried retention state: (re)load from prev_state at the first chunk ----
    @pl.when(c_idx == 0)
    def _():
        state_acc[...] = prev_state_ref[0].astype(f32)

    # ---- norm1 (fp32 LayerNorm, back to the activation dtype) ----
    h1 = _layernorm_f32(x.astype(f32), ln1_w_ref[...], ln1_b_ref[...],
                        ln_eps).astype(cdt)                                # (C, D)

    # causal mask for the within-chunk scores (shared by all heads)
    causal = (jax.lax.broadcasted_iota(jnp.int32, (C, C), 0)
              >= jax.lax.broadcasted_iota(jnp.int32, (C, C), 1))

    # ---- per-head retention (statically unrolled); the output projection is
    #      accumulated head-by-head into a single (C, D) f32 tile. ----
    y_acc = jnp.zeros((C, D), f32)
    for h in range(H):
        # projections: (C, D) @ (D, d_head), bf16 operands, f32 accumulation
        qf = jnp.dot(h1, wq_ref[h], preferred_element_type=f32) + bq_ref[h]
        kf = jnp.dot(h1, wk_ref[h], preferred_element_type=f32) + bk_ref[h]
        vf = jnp.dot(h1, wv_ref[h], preferred_element_type=f32) + bv_ref[h]
        gf = jnp.dot(h1, wg_ref[h], preferred_element_type=f32) + bg_ref[h]

        # decay pre-scaling with hoisted host-side tables (applied in f32, then
        # down-cast for the MXU):
        #   (q_t gamma^t) . (k_s gamma^{-s} / sqrt(dqk)) = (q_t . k_s) gamma^{t-s}/sqrt
        q = (qf * qdec_ref[h]).astype(cdt)            # (C, dqk)
        k_in = (kf * kdec_ref[h]).astype(cdt)         # (C, dqk)
        k_st = (kf * ksdec_ref[h]).astype(cdt)        # gamma^{C-1-s}/sqrt(dqk), for state
        v = vf.astype(cdt)                            # (C, dv)
        g = _silu(gf).astype(cdt)                     # (C, dv) swish gate

        # within-chunk retention: causal-masked QK^T, then P @ V
        # TODO(synk): if the bundle dump shows a per-head XLU transpose of k here,
        #             produce k contraction-major ((dqk, C)) instead.
        attn = jax.lax.dot_general(q, k_in, (((1,), (1,)), ((), ())),
                                   preferred_element_type=f32)             # (C, C)
        p = jnp.where(causal, attn, 0.0).astype(cdt)
        ret = jnp.dot(p, v, preferred_element_type=f32)                    # (C, dv)

        # cross-chunk contribution from the carried state: (q gamma^t) @ S * gamma
        s_prev = state_acc[h]                                              # (dqk, dv) f32
        ret = ret + jnp.dot(q, s_prev.astype(cdt),
                            preferred_element_type=f32) * gamma_ref[h]

        # state update: S <- gamma^C * S + sum_s gamma^(C-1-s) (k_s / sqrt)^T v_s
        state_acc[h] = (jax.lax.dot_general(k_st, v, (((0,), (0,)), ((), ())),
                                            preferred_element_type=f32)
                        + s_prev * gammac_ref[h])

        # GroupNorm (groups == heads, affine=False) + swish gate, f32
        rm = jnp.mean(ret, axis=-1, keepdims=True)
        rv = jnp.mean(jnp.square(ret - rm), axis=-1, keepdims=True)
        gated = ((ret - rm) * jax.lax.rsqrt(rv + gn_eps) * g).astype(cdt)  # (C, dv)

        # output projection, accumulated into the single (C, D) f32 tile
        y_acc = y_acc + jnp.dot(gated, wo_ref[h], preferred_element_type=f32)

    @pl.when(c_idx == pl.num_programs(1) - 1)
    def _():
        state_out_ref[0] = state_acc[...].astype(state_out_ref.dtype)

    # ---- residual + feedforward block (norm_first=True) ----
    y = (y_acc + bo_ref[...]).astype(cdt)
    x2 = x + y
    n2 = _layernorm_f32(x2.astype(f32), ln2_w_ref[...], ln2_b_ref[...],
                        ln_eps).astype(cdt)
    ff = _silu(jnp.dot(n2, w1_ref[...], preferred_element_type=f32)
               + b1_ref[...]).astype(cdt)
    ff = (jnp.dot(ff, w2_ref[...], preferred_element_type=f32)
          + b2_ref[...]).astype(cdt)
    out_ref[0] = (x2 + ff).astype(out_ref.dtype)


def _vmem_limit_bytes():
    """VMEM budget with headroom, derived from the actual part.

    v5e/v6e (128 MiB physical) -> ~96 MiB; v7x (64 MiB physical) -> ~48 MiB.
    """
    try:
        cap = int(pltpu.get_tpu_info().vmem_capacity_bytes)
    except Exception:
        return 64 * 1024 * 1024
    return min(cap * 3 // 4, 100 * 1024 * 1024)


def _default_chunk_size():
    """C=256 on 128 MiB parts (v5e/v6e), C=128 on v7x (64 MiB VMEM)."""
    try:
        cap = int(pltpu.get_tpu_info().vmem_capacity_bytes)
    except Exception:
        return 128
    return 256 if cap >= 100 * 1024 * 1024 else 128


def retnet_decoder_layer(x, prev_state, params, *, num_heads, head_dim_qk,
                         head_dim_v, dim_feedforward, chunk_size=None,
                         ln_eps=1e-6, gn_eps=1e-6):
    """Fused RetNetDecoderLayer.forward_chunkwise (eval mode, norm_first=True)."""
    B, N, D = x.shape
    H, dqk, dv = num_heads, head_dim_qk, head_dim_v
    assert D == H * dv
    if chunk_size is None:
        chunk_size = _default_chunk_size()
    C = N if N <= chunk_size else chunk_size
    assert N % C == 0, "sequence length must be a multiple of the chunk size"
    assert C == N or C % 8 == 0
    n_chunks = N // C
    f32 = jnp.float32

    (log_decays, ln1_w, ln1_b, ln2_w, ln2_b,
     wq, bq, wk, bk, wv, bv, wg, bg, wo, bo, w1, b1, w2, b2) = params

    # Host-side layout plumbing: head-major weights so the kernel never reshapes,
    # transposes or lane-slices; biases / LN params pre-cast to f32 once.
    def head_major(w, b, dh):
        w_hm = jnp.transpose(w.reshape(D, H, dh), (1, 0, 2))   # (H, D, dh)
        b_hm = b.reshape(H, 1, dh).astype(f32)                 # (H, 1, dh)
        return w_hm, b_hm

    wq_hm, bq_hm = head_major(wq, bq, dqk)
    wk_hm, bk_hm = head_major(wk, bk, dqk)
    wv_hm, bv_hm = head_major(wv, bv, dv)
    wg_hm, bg_hm = head_major(wg, bg, dv)
    wo_hm = wo.reshape(H, dv, D)                               # (H, dv, D)

    bo_f = bo.reshape(1, D).astype(f32)
    b1_f = b1.reshape(1, dim_feedforward).astype(f32)
    b2_f = b2.reshape(1, D).astype(f32)
    ln1_wf = ln1_w.reshape(1, D).astype(f32)
    ln1_bf = ln1_b.reshape(1, D).astype(f32)
    ln2_wf = ln2_w.reshape(1, D).astype(f32)
    ln2_bf = ln2_b.reshape(1, D).astype(f32)

    # Decay tables hoisted host-side (per head, per within-chunk position).
    lg = jnp.asarray(log_decays, f32).reshape(H, 1)            # log(gamma) < 0
    t = jnp.arange(C, dtype=f32).reshape(1, C)
    inv_scale = 1.0 / float(dqk) ** 0.5
    qdec = jnp.exp(lg * t).reshape(H, C, 1)                    # gamma^t
    kdec = (jnp.exp(-lg * t) * inv_scale).reshape(H, C, 1)     # gamma^{-s} / sqrt(dqk)
    ksdec = (jnp.exp(lg * (C - 1.0 - t)) * inv_scale).reshape(H, C, 1)
    gamma = jnp.exp(lg).reshape(H, 1, 1)                       # gamma
    gammac = jnp.exp(lg * float(C)).reshape(H, 1, 1)           # gamma^C

    consts = (qdec, kdec, ksdec, gamma, gammac,
              ln1_wf, ln1_bf, ln2_wf, ln2_bf,
              wq_hm, bq_hm, wk_hm, bk_hm, wv_hm, bv_hm, wg_hm, bg_hm,
              wo_hm, bo_f, w1, b1_f, w2, b2_f)

    out_shape = [jax.ShapeDtypeStruct((B, N, D), x.dtype),
                 jax.ShapeDtypeStruct((B, H, dqk, dv), prev_state.dtype)]
    kernel = functools.partial(retnet_layer_kernel, ln_eps=ln_eps, gn_eps=gn_eps)

    def _const_spec(shape, single_buffer):
        zero = (0,) * len(shape)
        index_map = lambda b, c, _z=zero: _z
        if single_buffer:
            try:   # grid-invariant -> never re-fetched; one buffer halves weight VMEM
                return pl.BlockSpec(shape, index_map,
                                    pipeline_mode=pl.Buffered(buffer_count=1))
            except Exception:                  # pipeline_mode / Buffered unavailable
                pass
        return pl.BlockSpec(shape, index_map)

    def _run(single_buffer_consts):
        in_specs = ([pl.BlockSpec((1, C, D), lambda b, c: (b, c, 0)),
                     pl.BlockSpec((1, H, dqk, dv), lambda b, c: (b, 0, 0, 0))]
                    + [_const_spec(a.shape, single_buffer_consts) for a in consts])
        out_specs = [pl.BlockSpec((1, C, D), lambda b, c: (b, c, 0)),
                     pl.BlockSpec((1, H, dqk, dv), lambda b, c: (b, 0, 0, 0))]
        return pl.pallas_call(
            kernel,
            grid=(B, n_chunks),
            in_specs=in_specs,
            out_specs=out_specs,
            out_shape=out_shape,
            scratch_shapes=[pltpu.VMEM((H, dqk, dv), jnp.float32)],
            input_output_aliases={1: 1},   # prev_state buffer reused for the new state
            compiler_params=pltpu.CompilerParams(
                dimension_semantics=("parallel", "arbitrary"),
                vmem_limit_bytes=_vmem_limit_bytes()),
        )(x, prev_state, *consts)

    try:
        return _run(True)
    except Exception:
        # Fallback for Pallas versions without single-buffered BlockSpec pipelining.
        return _run(False)


def _reference_recurrent(x, prev_state, params, *, num_heads, head_dim_qk,
                         head_dim_v, ln_eps=1e-6, gn_eps=1e-6):
    """Pure-JAX f32 reference using the recurrent retention formulation."""
    (log_decays, ln1_w, ln1_b, ln2_w, ln2_b,
     wq, bq, wk, bk, wv, bv, wg, bg, wo, bo, w1, b1, w2, b2) = params
    f32 = jnp.float32
    B, N, D = x.shape
    H, dqk, dv = num_heads, head_dim_qk, head_dim_v

    def ln(z, w, b):
        m = jnp.mean(z, -1, keepdims=True)
        var = jnp.mean(jnp.square(z - m), -1, keepdims=True)
        return (z - m) * jax.lax.rsqrt(var + ln_eps) * w.astype(f32) + b.astype(f32)

    def lin(z, w, b):
        return z @ w.astype(f32) + b.astype(f32)

    xf = x.astype(f32)
    h1 = ln(xf, ln1_w, ln1_b)
    q = lin(h1, wq, bq).reshape(B, N, H, dqk)
    k = lin(h1, wk, bk).reshape(B, N, H, dqk) / (float(dqk) ** 0.5)
    v = lin(h1, wv, bv).reshape(B, N, H, dv)
    gamma = jnp.exp(jnp.asarray(log_decays, f32)).reshape(1, H, 1, 1)

    state = prev_state.astype(f32)
    rets = []
    for t in range(N):
        kv = jnp.einsum('bhk,bhv->bhkv', k[:, t], v[:, t])
        state = kv + state * gamma
        rets.append(jnp.einsum('bhk,bhkv->bhv', q[:, t], state))
    ret = jnp.stack(rets, axis=1)                              # (B, N, H, dv)

    rm = jnp.mean(ret, -1, keepdims=True)
    rv = jnp.mean(jnp.square(ret - rm), -1, keepdims=True)
    rn = ((ret - rm) * jax.lax.rsqrt(rv + gn_eps)).reshape(B, N, D)
    gate = jax.nn.silu(lin(h1, wg, bg))
    y = lin(rn * gate, wo, bo)
    x2 = xf + y
    ff = lin(jax.nn.silu(lin(ln(x2, ln2_w, ln2_b), w1, b1)), w2, b2)
    return x2 + ff, state


if __name__ == "__main__":
    B, N = 2, 16
    H, DQK, DV = 4, 8, 8
    D = H * DV                     # d_model = 32
    DFF = 64
    CHUNK = 8                      # 2 chunks -> exercises the carried-state path
    dtype = jnp.bfloat16

    key = jax.random.PRNGKey(0)
    keys = jax.random.split(key, 10)

    # gamma_h = 1 - 2**(-5 - h)   (get_decays with decay_range=None)
    decays = 1.0 - np.exp2(-5.0 - np.arange(H))
    log_decays = jnp.asarray(np.log(decays), jnp.float32)

    ln1_w = jnp.ones((1, D), jnp.float32); ln1_b = jnp.zeros((1, D), jnp.float32)
    ln2_w = jnp.ones((1, D), jnp.float32); ln2_b = jnp.zeros((1, D), jnp.float32)

    def xavier(k_, fi, fo):
        std = (2.0 / (fi + fo)) ** 0.5
        return (jax.random.normal(k_, (fi, fo), jnp.float32) * std).astype(dtype)

    wq = xavier(keys[0], D, H * DQK); bq = jnp.zeros((1, H * DQK), dtype)
    wk = xavier(keys[1], D, H * DQK); bk = jnp.zeros((1, H * DQK), dtype)
    wv = xavier(keys[2], D, D);       bv = jnp.zeros((1, D), dtype)
    wg = xavier(keys[3], D, D);       bg = jnp.zeros((1, D), dtype)
    wo = xavier(keys[4], D, D);       bo = jnp.zeros((1, D), dtype)
    w1 = xavier(keys[5], D, DFF);     b1 = jnp.zeros((1, DFF), dtype)
    w2 = xavier(keys[6], DFF, D);     b2 = jnp.zeros((1, D), dtype)

    params = (log_decays, ln1_w, ln1_b, ln2_w, ln2_b,
              wq, bq, wk, bk, wv, bv, wg, bg, wo, bo, w1, b1, w2, b2)

    x = jax.random.normal(keys[7], (B, N, D), jnp.float32).astype(dtype)
    prev_state = (0.1 * jax.random.normal(keys[8], (B, H, DQK, DV),
                                          jnp.float32)).astype(dtype)

    # Reference computed first (kernel aliases the prev_state buffer to its output).
    ref_out, ref_state = _reference_recurrent(
        x, prev_state, params, num_heads=H, head_dim_qk=DQK, head_dim_v=DV)

    out, state = retnet_decoder_layer(
        x, prev_state, params,
        num_heads=H, head_dim_qk=DQK, head_dim_v=DV,
        dim_feedforward=DFF, chunk_size=CHUNK)
    jax.block_until_ready((out, state))

    assert out.shape == (B, N, D) and state.shape == (B, H, DQK, DV)
    o = out.astype(jnp.float32)
    s = state.astype(jnp.float32)
    assert bool(jnp.all(jnp.isfinite(o))) and bool(jnp.all(jnp.isfinite(s)))
    out_err = float(jnp.max(jnp.abs(o - ref_out)))
    state_err = float(jnp.max(jnp.abs(s - ref_state)))
    assert out_err < 0.25 and state_err < 0.25, (out_err, state_err)
    print("KERNEL_OK")
</pallas_src>

<mosaic_0001>
module attributes {stable_mosaic.version = 11 : i64} {
  func.func @retnet_layer_kernel(%arg0: i32, %arg1: i32, %arg2: memref<1x8x32xbf16, #tpu.memory_space<vmem>>, %arg3: memref<1x4x8x8xbf16, #tpu.memory_space<vmem>>, %arg4: memref<4x8x1xf32, #tpu.memory_space<vmem>>, %arg5: memref<4x8x1xf32, #tpu.memory_space<vmem>>, %arg6: memref<4x8x1xf32, #tpu.memory_space<vmem>>, %arg7: memref<4x1x1xf32, #tpu.memory_space<vmem>>, %arg8: memref<4x1x1xf32, #tpu.memory_space<vmem>>, %arg9: memref<1x32xf32, #tpu.memory_space<vmem>>, %arg10: memref<1x32xf32, #tpu.memory_space<vmem>>, %arg11: memref<1x32xf32, #tpu.memory_space<vmem>>, %arg12: memref<1x32xf32, #tpu.memory_space<vmem>>, %arg13: memref<4x32x8xbf16, #tpu.memory_space<vmem>>, %arg14: memref<4x1x8xf32, #tpu.memory_space<vmem>>, %arg15: memref<4x32x8xbf16, #tpu.memory_space<vmem>>, %arg16: memref<4x1x8xf32, #tpu.memory_space<vmem>>, %arg17: memref<4x32x8xbf16, #tpu.memory_space<vmem>>, %arg18: memref<4x1x8xf32, #tpu.memory_space<vmem>>, %arg19: memref<4x32x8xbf16, #tpu.memory_space<vmem>>, %arg20: memref<4x1x8xf32, #tpu.memory_space<vmem>>, %arg21: memref<4x8x32xbf16, #tpu.memory_space<vmem>>, %arg22: memref<1x32xf32, #tpu.memory_space<vmem>>, %arg23: memref<32x64xbf16, #tpu.memory_space<vmem>>, %arg24: memref<1x64xf32, #tpu.memory_space<vmem>>, %arg25: memref<64x32xbf16, #tpu.memory_space<vmem>>, %arg26: memref<1x32xf32, #tpu.memory_space<vmem>>, %arg27: memref<1x8x32xbf16, #tpu.memory_space<vmem>>, %arg28: memref<1x4x8x8xbf16, #tpu.memory_space<vmem>>, %arg29: memref<4x8x8xf32, #tpu.memory_space<vmem>>) attributes {dimension_semantics = [#tpu.dimension_semantics<parallel>, #tpu.dimension_semantics<arbitrary>], iteration_bounds = array<i64: 2, 2>, scalar_prefetch = 0 : i64, scratch_operands = 1 : i64, tpu.core_type = #tpu.core_type<tc>, window_params = [{transform_indices = @transform_0, window_bounds = array<i64: 1, 8, 32>}, {transform_indices = @transform_1, window_bounds = array<i64: 1, 4, 8, 8>}, {pipeline_mode = #tpu.pipeline_mode<synchronous>, transform_indices = @transform_2, window_bounds = array<i64: 4, 8, 1>}, {pipeline_mode = #tpu.pipeline_mode<synchronous>, transform_indices = @transform_3, window_bounds = array<i64: 4, 8, 1>}, {pipeline_mode = #tpu.pipeline_mode<synchronous>, transform_indices = @transform_4, window_bounds = array<i64: 4, 8, 1>}, {pipeline_mode = #tpu.pipeline_mode<synchronous>, transform_indices = @transform_5, window_bounds = array<i64: 4, 1, 1>}, {pipeline_mode = #tpu.pipeline_mode<synchronous>, transform_indices = @transform_6, window_bounds = array<i64: 4, 1, 1>}, {pipeline_mode = #tpu.pipeline_mode<synchronous>, transform_indices = @transform_7, window_bounds = array<i64: 1, 32>}, {pipeline_mode = #tpu.pipeline_mode<synchronous>, transform_indices = @transform_8, window_bounds = array<i64: 1, 32>}, {pipeline_mode = #tpu.pipeline_mode<synchronous>, transform_indices = @transform_9, window_bounds = array<i64: 1, 32>}, {pipeline_mode = #tpu.pipeline_mode<synchronous>, transform_indices = @transform_10, window_bounds = array<i64: 1, 32>}, {pipeline_mode = #tpu.pipeline_mode<synchronous>, transform_indices = @transform_11, window_bounds = array<i64: 4, 32, 8>}, {pipeline_mode = #tpu.pipeline_mode<synchronous>, transform_indices = @transform_12, window_bounds = array<i64: 4, 1, 8>}, {pipeline_mode = #tpu.pipeline_mode<synchronous>, transform_indices = @transform_13, window_bounds = array<i64: 4, 32, 8>}, {pipeline_mode = #tpu.pipeline_mode<synchronous>, transform_indices = @transform_14, window_bounds = array<i64: 4, 1, 8>}, {pipeline_mode = #tpu.pipeline_mode<synchronous>, transform_indices = @transform_15, window_bounds = array<i64: 4, 32, 8>}, {pipeline_mode = #tpu.pipeline_mode<synchronous>, transform_indices = @transform_16, window_bounds = array<i64: 4, 1, 8>}, {pipeline_mode = #tpu.pipeline_mode<synchronous>, transform_indices = @transform_17, window_bounds = array<i64: 4, 32, 8>}, {pipeline_mode = #tpu.pipeline_mode<synchronous>, transform_indices = @transform_18, window_bounds = array<i64: 4, 1, 8>}, {pipeline_mode = #tpu.pipeline_mode<synchronous>, transform_indices = @transform_19, window_bounds = array<i64: 4, 8, 32>}, {pipeline_mode = #tpu.pipeline_mode<synchronous>, transform_indices = @transform_20, window_bounds = array<i64: 1, 32>}, {pipeline_mode = #tpu.pipeline_mode<synchronous>, transform_indices = @transform_21, window_bounds = array<i64: 32, 64>}, {pipeline_mode = #tpu.pipeline_mode<synchronous>, transform_indices = @transform_22, window_bounds = array<i64: 1, 64>}, {pipeline_mode = #tpu.pipeline_mode<synchronous>, transform_indices = @transform_23, window_bounds = array<i64: 64, 32>}, {pipeline_mode = #tpu.pipeline_mode<synchronous>, transform_indices = @transform_24, window_bounds = array<i64: 1, 32>}, {transform_indices = @transform_25, window_bounds = array<i64: 1, 8, 32>}, {transform_indices = @transform_26, window_bounds = array<i64: 1, 4, 8, 8>}]} {
    %c0 = arith.constant 0 : index
    %c0_0 = arith.constant 0 : index
    %c0_1 = arith.constant 0 : index
    %0 = vector.load %arg2[%c0, %c0_0, %c0_1] : memref<1x8x32xbf16, #tpu.memory_space<vmem>>, vector<1x8x32xbf16>
    %1 = vector.shape_cast %0 : vector<1x8x32xbf16> to vector<8x32xbf16>
    %c0_i32 = arith.constant 0 : i32
    %2 = arith.cmpi eq, %arg1, %c0_i32 : i32
    %3 = arith.extui %2 : i1 to i32
    %c0_i32_2 = arith.constant 0 : i32
    %4 = arith.cmpi ne, %3, %c0_i32_2 : i32
    scf.if %4 {
      %c0_291 = arith.constant 0 : index
      %c0_292 = arith.constant 0 : index
      %c0_293 = arith.constant 0 : index
      %c0_294 = arith.constant 0 : index
      %487 = vector.load %arg3[%c0_291, %c0_292, %c0_293, %c0_294] : memref<1x4x8x8xbf16, #tpu.memory_space<vmem>>, vector<1x4x8x8xbf16>
      %488 = vector.shape_cast %487 : vector<1x4x8x8xbf16> to vector<4x8x8xbf16>
      %489 = arith.extf %488 : vector<4x8x8xbf16> to vector<4x8x8xf32>
      %c0_295 = arith.constant 0 : index
      %c0_296 = arith.constant 0 : index
      %c0_297 = arith.constant 0 : index
      %490 = vector.load %arg29[%c0_295, %c0_296, %c0_297] : memref<4x8x8xf32, #tpu.memory_space<vmem>>, vector<4x8x8xf32>
      tpu.vector_store %arg29[%c0_295, %c0_296, %c0_297], %489 {strides = array<i32>} : memref<4x8x8xf32, #tpu.memory_space<vmem>>, vector<4x8x8xf32>,
    } else {
    }
    %5 = arith.extf %1 : vector<8x32xbf16> to vector<8x32xf32>
    %c0_3 = arith.constant 0 : index
    %c0_4 = arith.constant 0 : index
    %6 = vector.load %arg9[%c0_3, %c0_4] : memref<1x32xf32, #tpu.memory_space<vmem>>, vector<1x32xf32>
    %c0_5 = arith.constant 0 : index
    %c0_6 = arith.constant 0 : index
    %7 = vector.load %arg10[%c0_5, %c0_6] : memref<1x32xf32, #tpu.memory_space<vmem>>, vector<1x32xf32>
    %cst = arith.constant dense<0.000000e+00> : vector<8xf32>
    %8 = vector.multi_reduction <add>, %5, %cst [1] : vector<8x32xf32> to vector<8xf32>
    %9 = vector.shape_cast %8 : vector<8xf32> to vector<8x1xf32>
    %cst_7 = arith.constant 3.200000e+01 : f32
    %10 = vector.broadcast %cst_7 : f32 to vector<8x1xf32>
    %11 = arith.divf %9, %10 : vector<8x1xf32>
    %12 = vector.broadcast %11 : vector<8x1xf32> to vector<8x32xf32>
    %13 = arith.subf %5, %12 : vector<8x32xf32>
    %14 = arith.mulf %13, %13 : vector<8x32xf32>
    %cst_8 = arith.constant dense<0.000000e+00> : vector<8xf32>
    %15 = vector.multi_reduction <add>, %14, %cst_8 [1] : vector<8x32xf32> to vector<8xf32>
    %16 = vector.shape_cast %15 : vector<8xf32> to vector<8x1xf32>
    %cst_9 = arith.constant 3.200000e+01 : f32
    %17 = vector.broadcast %cst_9 : f32 to vector<8x1xf32>
    %18 = arith.divf %16, %17 : vector<8x1xf32>
    %19 = vector.broadcast %11 : vector<8x1xf32> to vector<8x32xf32>
    %20 = arith.subf %5, %19 : vector<8x32xf32>
    %cst_10 = arith.constant 9.99999997E-7 : f32
    %21 = vector.broadcast %cst_10 : f32 to vector<8x1xf32>
    %22 = arith.addf %18, %21 : vector<8x1xf32>
    %23 = math.rsqrt %22 : vector<8x1xf32>
    %24 = vector.broadcast %23 : vector<8x1xf32> to vector<8x32xf32>
    %25 = arith.mulf %20, %24 : vector<8x32xf32>
    %26 = vector.broadcast %6 : vector<1x32xf32> to vector<8x32xf32>
    %27 = arith.mulf %25, %26 : vector<8x32xf32>
    %28 = vector.broadcast %7 : vector<1x32xf32> to vector<8x32xf32>
    %29 = arith.addf %27, %28 : vector<8x32xf32>
    %30 = arith.truncf %29 : vector<8x32xf32> to vector<8x32xbf16>
    %31 = tpu.iota {dimensions = array<i32: 0>} : vector<8x8xi32>
    %32 = tpu.iota {dimensions = array<i32: 1>} : vector<8x8xi32>
    %33 = arith.cmpi sge, %31, %32 : vector<8x8xi32>
    %cst_11 = arith.constant 0.000000e+00 : f32
    %34 = vector.broadcast %cst_11 : f32 to vector<8x32xf32>
    %c0_12 = arith.constant 0 : index
    %c0_13 = arith.constant 0 : index
    %c0_14 = arith.constant 0 : index
    %35 = vector.load %arg13[%c0_12, %c0_13, %c0_14] : memref<4x32x8xbf16, #tpu.memory_space<vmem>>, vector<1x32x8xbf16>
    %36 = vector.shape_cast %35 : vector<1x32x8xbf16> to vector<32x8xbf16>
    %cst_15 = arith.constant dense<0.000000e+00> : vector<8x8xf32>
    %37 = tpu.matmul %30, %36, %cst_15 {dimension_numbers = #tpu.dot_dimension_numbers<[1], [0], [0], [1], [0, 0, 1, 1], [], []>} : vector<8x32xbf16>, vector<32x8xbf16>, vector<8x8xf32> -> vector<8x8xf32>
    %c0_16 = arith.constant 0 : index
    %c0_17 = arith.constant 0 : index
    %c0_18 = arith.constant 0 : index
    %38 = vector.load %arg14[%c0_16, %c0_17, %c0_18] : memref<4x1x8xf32, #tpu.memory_space<vmem>>, vector<1x1x8xf32>
    %39 = vector.shape_cast %38 : vector<1x1x8xf32> to vector<1x8xf32>
    %40 = vector.broadcast %39 : vector<1x8xf32> to vector<8x8xf32>
    %41 = arith.addf %37, %40 : vector<8x8xf32>
    %c0_19 = arith.constant 0 : index
    %c0_20 = arith.constant 0 : index
    %c0_21 = arith.constant 0 : index
    %42 = vector.load %arg15[%c0_19, %c0_20, %c0_21] : memref<4x32x8xbf16, #tpu.memory_space<vmem>>, vector<1x32x8xbf16>
    %43 = vector.shape_cast %42 : vector<1x32x8xbf16> to vector<32x8xbf16>
    %cst_22 = arith.constant dense<0.000000e+00> : vector<8x8xf32>
    %44 = tpu.matmul %30, %43, %cst_22 {dimension_numbers = #tpu.dot_dimension_numbers<[1], [0], [0], [1], [0, 0, 1, 1], [], []>} : vector<8x32xbf16>, vector<32x8xbf16>, vector<8x8xf32> -> vector<8x8xf32>
    %c0_23 = arith.constant 0 : index
    %c0_24 = arith.constant 0 : index
    %c0_25 = arith.constant 0 : index
    %45 = vector.load %arg16[%c0_23, %c0_24, %c0_25] : memref<4x1x8xf32, #tpu.memory_space<vmem>>, vector<1x1x8xf32>
    %46 = vector.shape_cast %45 : vector<1x1x8xf32> to vector<1x8xf32>
    %47 = vector.broadcast %46 : vector<1x8xf32> to vector<8x8xf32>
    %48 = arith.addf %44, %47 : vector<8x8xf32>
    %c0_26 = arith.constant 0 : index
    %c0_27 = arith.constant 0 : index
    %c0_28 = arith.constant 0 : index
    %49 = vector.load %arg17[%c0_26, %c0_27, %c0_28] : memref<4x32x8xbf16, #tpu.memory_space<vmem>>, vector<1x32x8xbf16>
    %50 = vector.shape_cast %49 : vector<1x32x8xbf16> to vector<32x8xbf16>
    %cst_29 = arith.constant dense<0.000000e+00> : vector<8x8xf32>
    %51 = tpu.matmul %30, %50, %cst_29 {dimension_numbers = #tpu.dot_dimension_numbers<[1], [0], [0], [1], [0, 0, 1, 1], [], []>} : vector<8x32xbf16>, vector<32x8xbf16>, vector<8x8xf32> -> vector<8x8xf32>
    %c0_30 = arith.constant 0 : index
    %c0_31 = arith.constant 0 : index
    %c0_32 = arith.constant 0 : index
    %52 = vector.load %arg18[%c0_30, %c0_31, %c0_32] : memref<4x1x8xf32, #tpu.memory_space<vmem>>, vector<1x1x8xf32>
    %53 = vector.shape_cast %52 : vector<1x1x8xf32> to vector<1x8xf32>
    %54 = vector.broadcast %53 : vector<1x8xf32> to vector<8x8xf32>
    %55 = arith.addf %51, %54 : vector<8x8xf32>
    %c0_33 = arith.constant 0 : index
    %c0_34 = arith.constant 0 : index
    %c0_35 = arith.constant 0 : index
    %56 = vector.load %arg19[%c0_33, %c0_34, %c0_35] : memref<4x32x8xbf16, #tpu.memory_space<vmem>>, vector<1x32x8xbf16>
    %57 = vector.shape_cast %56 : vector<1x32x8xbf16> to vector<32x8xbf16>
    %cst_36 = arith.constant dense<0.000000e+00> : vector<8x8xf32>
    %58 = tpu.matmul %30, %57, %cst_36 {dimension_numbers = #tpu.dot_dimension_numbers<[1], [0], [0], [1], [0, 0, 1, 1], [], []>} : vector<8x32xbf16>, vector<32x8xbf16>, vector<8x8xf32> -> vector<8x8xf32>
    %c0_37 = arith.constant 0 : index
    %c0_38 = arith.constant 0 : index
    %c0_39 = arith.constant 0 : index
    %59 = vector.load %arg20[%c0_37, %c0_38, %c0_39] : memref<4x1x8xf32, #tpu.memory_space<vmem>>, vector<1x1x8xf32>
    %60 = vector.shape_cast %59 : vector<1x1x8xf32> to vector<1x8xf32>
    %61 = vector.broadcast %60 : vector<1x8xf32> to vector<8x8xf32>
    %62 = arith.addf %58, %61 : vector<8x8xf32>
    %c0_40 = arith.constant 0 : index
    %c0_41 = arith.constant 0 : index
    %c0_42 = arith.constant 0 : index
    %63 = vector.load %arg4[%c0_40, %c0_41, %c0_42] : memref<4x8x1xf32, #tpu.memory_space<vmem>>, vector<1x8x1xf32>
    %64 = vector.shape_cast %63 : vector<1x8x1xf32> to vector<8x1xf32>
    %65 = vector.broadcast %64 : vector<8x1xf32> to vector<8x8xf32>
    %66 = arith.mulf %41, %65 : vector<8x8xf32>
    %67 = arith.truncf %66 : vector<8x8xf32> to vector<8x8xbf16>
    %c0_43 = arith.constant 0 : index
    %c0_44 = arith.constant 0 : index
    %c0_45 = arith.constant 0 : index
    %68 = vector.load %arg5[%c0_43, %c0_44, %c0_45] : memref<4x8x1xf32, #tpu.memory_space<vmem>>, vector<1x8x1xf32>
    %69 = vector.shape_cast %68 : vector<1x8x1xf32> to vector<8x1xf32>
    %70 = vector.broadcast %69 : vector<8x1xf32> to vector<8x8xf32>
    %71 = arith.mulf %48, %70 : vector<8x8xf32>
    %72 = arith.truncf %71 : vector<8x8xf32> to vector<8x8xbf16>
    %c0_46 = arith.constant 0 : index
    %c0_47 = arith.constant 0 : index
    %c0_48 = arith.constant 0 : index
    %73 = vector.load %arg6[%c0_46, %c0_47, %c0_48] : memref<4x8x1xf32, #tpu.memory_space<vmem>>, vector<1x8x1xf32>
    %74 = vector.shape_cast %73 : vector<1x8x1xf32> to vector<8x1xf32>
    %75 = vector.broadcast %74 : vector<8x1xf32> to vector<8x8xf32>
    %76 = arith.mulf %48, %75 : vector<8x8xf32>
    %77 = arith.truncf %76 : vector<8x8xf32> to vector<8x8xbf16>
    %78 = arith.truncf %55 : vector<8x8xf32> to vector<8x8xbf16>
    %79 = arith.negf %62 : vector<8x8xf32>
    %80 = math.exp %79 : vector<8x8xf32>
    %cst_49 = arith.constant 1.000000e+00 : f32
    %81 = vector.broadcast %cst_49 : f32 to vector<8x8xf32>
    %82 = arith.addf %81, %80 : vector<8x8xf32>
    %83 = arith.divf %81, %82 : vector<8x8xf32>
    %84 = arith.mulf %62, %83 : vector<8x8xf32>
    %85 = arith.truncf %84 : vector<8x8xf32> to vector<8x8xbf16>
    %cst_50 = arith.constant dense<0.000000e+00> : vector<8x8xf32>
    %86 = tpu.matmul %67, %72, %cst_50 {dimension_numbers = #tpu.dot_dimension_numbers<[1], [1], [0], [0], [0, 0, 1, 0], [], []>} : vector<8x8xbf16>, vector<8x8xbf16>, vector<8x8xf32> -> vector<8x8xf32>
    %cst_51 = arith.constant 0.000000e+00 : f32
    %87 = vector.broadcast %cst_51 : f32 to vector<8x8xf32>
    %88 = arith.select %33, %86, %87 : vector<8x8xi1>, vector<8x8xf32>
    %89 = arith.truncf %88 : vector<8x8xf32> to vector<8x8xbf16>
    %cst_52 = arith.constant dense<0.000000e+00> : vector<8x8xf32>
    %90 = tpu.matmul %89, %78, %cst_52 {dimension_numbers = #tpu.dot_dimension_numbers<[1], [0], [0], [1], [0, 0, 1, 1], [], []>} : vector<8x8xbf16>, vector<8x8xbf16>, vector<8x8xf32> -> vector<8x8xf32>
    %c0_53 = arith.constant 0 : index
    %c0_54 = arith.constant 0 : index
    %c0_55 = arith.constant 0 : index
    %91 = vector.load %arg29[%c0_53, %c0_54, %c0_55] : memref<4x8x8xf32, #tpu.memory_space<vmem>>, vector<1x8x8xf32>
    %92 = vector.shape_cast %91 : vector<1x8x8xf32> to vector<8x8xf32>
    %93 = arith.truncf %92 : vector<8x8xf32> to vector<8x8xbf16>
    %cst_56 = arith.constant dense<0.000000e+00> : vector<8x8xf32>
    %94 = tpu.matmul %67, %93, %cst_56 {dimension_numbers = #tpu.dot_dimension_numbers<[1], [0], [0], [1], [0, 0, 1, 1], [], []>} : vector<8x8xbf16>, vector<8x8xbf16>, vector<8x8xf32> -> vector<8x8xf32>
    %c0_57 = arith.constant 0 : index
    %c0_58 = arith.constant 0 : index
    %c0_59 = arith.constant 0 : index
    %95 = vector.load %arg7[%c0_57, %c0_58, %c0_59] : memref<4x1x1xf32, #tpu.memory_space<vmem>>, vector<1x1x1xf32>
    %96 = vector.shape_cast %95 : vector<1x1x1xf32> to vector<1x1xf32>
    %97 = vector.broadcast %96 : vector<1x1xf32> to vector<8x8xf32>
    %98 = arith.mulf %94, %97 : vector<8x8xf32>
    %99 = arith.addf %90, %98 : vector<8x8xf32>
    %cst_60 = arith.constant dense<0.000000e+00> : vector<8x8xf32>
    %100 = tpu.matmul %77, %78, %cst_60 {dimension_numbers = #tpu.dot_dimension_numbers<[0], [0], [1], [1], [0, 1, 1, 1], [], []>} : vector<8x8xbf16>, vector<8x8xbf16>, vector<8x8xf32> -> vector<8x8xf32>
    %c0_61 = arith.constant 0 : index
    %c0_62 = arith.constant 0 : index
    %c0_63 = arith.constant 0 : index
    %101 = vector.load %arg8[%c0_61, %c0_62, %c0_63] : memref<4x1x1xf32, #tpu.memory_space<vmem>>, vector<1x1x1xf32>
    %102 = vector.shape_cast %101 : vector<1x1x1xf32> to vector<1x1xf32>
    %103 = vector.broadcast %102 : vector<1x1xf32> to vector<8x8xf32>
    %104 = arith.mulf %92, %103 : vector<8x8xf32>
    %105 = arith.addf %100, %104 : vector<8x8xf32>
    %c0_64 = arith.constant 0 : index
    %c0_65 = arith.constant 0 : index
    %c0_66 = arith.constant 0 : index
    %106 = vector.load %arg29[%c0_64, %c0_65, %c0_66] : memref<4x8x8xf32, #tpu.memory_space<vmem>>, vector<1x8x8xf32>
    %107 = vector.shape_cast %106 : vector<1x8x8xf32> to vector<8x8xf32>
    %108 = vector.shape_cast %105 : vector<8x8xf32> to vector<1x8x8xf32>
    tpu.vector_store %arg29[%c0_64, %c0_65, %c0_66], %108 {strides = array<i32>} : memref<4x8x8xf32, #tpu.memory_space<vmem>>, vector<1x8x8xf32>,
    %cst_67 = arith.constant dense<0.000000e+00> : vector<8xf32>
    %109 = vector.multi_reduction <add>, %99, %cst_67 [1] : vector<8x8xf32> to vector<8xf32>
    %110 = vector.shape_cast %109 : vector<8xf32> to vector<8x1xf32>
    %cst_68 = arith.constant 8.000000e+00 : f32
    %111 = vector.broadcast %cst_68 : f32 to vector<8x1xf32>
    %112 = arith.divf %110, %111 : vector<8x1xf32>
    %113 = vector.broadcast %112 : vector<8x1xf32> to vector<8x8xf32>
    %114 = arith.subf %99, %113 : vector<8x8xf32>
    %115 = arith.mulf %114, %114 : vector<8x8xf32>
    %cst_69 = arith.constant dense<0.000000e+00> : vector<8xf32>
    %116 = vector.multi_reduction <add>, %115, %cst_69 [1] : vector<8x8xf32> to vector<8xf32>
    %117 = vector.shape_cast %116 : vector<8xf32> to vector<8x1xf32>
    %cst_70 = arith.constant 8.000000e+00 : f32
    %118 = vector.broadcast %cst_70 : f32 to vector<8x1xf32>
    %119 = arith.divf %117, %118 : vector<8x1xf32>
    %120 = vector.broadcast %112 : vector<8x1xf32> to vector<8x8xf32>
    %121 = arith.subf %99, %120 : vector<8x8xf32>
    %cst_71 = arith.constant 9.99999997E-7 : f32
    %122 = vector.broadcast %cst_71 : f32 to vector<8x1xf32>
    %123 = arith.addf %119, %122 : vector<8x1xf32>
    %124 = math.rsqrt %123 : vector<8x1xf32>
    %125 = vector.broadcast %124 : vector<8x1xf32> to vector<8x8xf32>
    %126 = arith.mulf %121, %125 : vector<8x8xf32>
    %127 = arith.extf %85 : vector<8x8xbf16> to vector<8x8xf32>
    %128 = arith.mulf %126, %127 : vector<8x8xf32>
    %129 = arith.truncf %128 : vector<8x8xf32> to vector<8x8xbf16>
    %c0_72 = arith.constant 0 : index
    %c0_73 = arith.constant 0 : index
    %c0_74 = arith.constant 0 : index
    %130 = vector.load %arg21[%c0_72, %c0_73, %c0_74] : memref<4x8x32xbf16, #tpu.memory_space<vmem>>, vector<1x8x32xbf16>
    %131 = vector.shape_cast %130 : vector<1x8x32xbf16> to vector<8x32xbf16>
    %cst_75 = arith.constant dense<0.000000e+00> : vector<8x32xf32>
    %132 = tpu.matmul %129, %131, %cst_75 {dimension_numbers = #tpu.dot_dimension_numbers<[1], [0], [0], [1], [0, 0, 1, 1], [], []>} : vector<8x8xbf16>, vector<8x32xbf16>, vector<8x32xf32> -> vector<8x32xf32>
    %133 = arith.addf %34, %132 : vector<8x32xf32>
    %c1 = arith.constant 1 : index
    %c0_76 = arith.constant 0 : index
    %c0_77 = arith.constant 0 : index
    %134 = vector.load %arg13[%c1, %c0_76, %c0_77] : memref<4x32x8xbf16, #tpu.memory_space<vmem>>, vector<1x32x8xbf16>
    %135 = vector.shape_cast %134 : vector<1x32x8xbf16> to vector<32x8xbf16>
    %cst_78 = arith.constant dense<0.000000e+00> : vector<8x8xf32>
    %136 = tpu.matmul %30, %135, %cst_78 {dimension_numbers = #tpu.dot_dimension_numbers<[1], [0], [0], [1], [0, 0, 1, 1], [], []>} : vector<8x32xbf16>, vector<32x8xbf16>, vector<8x8xf32> -> vector<8x8xf32>
    %c1_79 = arith.constant 1 : index
    %c0_80 = arith.constant 0 : index
    %c0_81 = arith.constant 0 : index
    %137 = vector.load %arg14[%c1_79, %c0_80, %c0_81] : memref<4x1x8xf32, #tpu.memory_space<vmem>>, vector<1x1x8xf32>
    %138 = vector.shape_cast %137 : vector<1x1x8xf32> to vector<1x8xf32>
    %139 = vector.broadcast %138 : vector<1x8xf32> to vector<8x8xf32>
    %140 = arith.addf %136, %139 : vector<8x8xf32>
    %c1_82 = arith.constant 1 : index
    %c0_83 = arith.constant 0 : index
    %c0_84 = arith.constant 0 : index
    %141 = vector.load %arg15[%c1_82, %c0_83, %c0_84] : memref<4x32x8xbf16, #tpu.memory_space<vmem>>, vector<1x32x8xbf16>
    %142 = vector.shape_cast %141 : vector<1x32x8xbf16> to vector<32x8xbf16>
    %cst_85 = arith.constant dense<0.000000e+00> : vector<8x8xf32>
    %143 = tpu.matmul %30, %142, %cst_85 {dimension_numbers = #tpu.dot_dimension_numbers<[1], [0], [0], [1], [0, 0, 1, 1], [], []>} : vector<8x32xbf16>, vector<32x8xbf16>, vector<8x8xf32> -> vector<8x8xf32>
    %c1_86 = arith.constant 1 : index
    %c0_87 = arith.constant 0 : index
    %c0_88 = arith.constant 0 : index
    %144 = vector.load %arg16[%c1_86, %c0_87, %c0_88] : memref<4x1x8xf32, #tpu.memory_space<vmem>>, vector<1x1x8xf32>
    %145 = vector.shape_cast %144 : vector<1x1x8xf32> to vector<1x8xf32>
    %146 = vector.broadcast %145 : vector<1x8xf32> to vector<8x8xf32>
    %147 = arith.addf %143, %146 : vector<8x8xf32>
    %c1_89 = arith.constant 1 : index
    %c0_90 = arith.constant 0 : index
    %c0_91 = arith.constant 0 : index
    %148 = vector.load %arg17[%c1_89, %c0_90, %c0_91] : memref<4x32x8xbf16, #tpu.memory_space<vmem>>, vector<1x32x8xbf16>
    %149 = vector.shape_cast %148 : vector<1x32x8xbf16> to vector<32x8xbf16>
    %cst_92 = arith.constant dense<0.000000e+00> : vector<8x8xf32>
    %150 = tpu.matmul %30, %149, %cst_92 {dimension_numbers = #tpu.dot_dimension_numbers<[1], [0], [0], [1], [0, 0, 1, 1], [], []>} : vector<8x32xbf16>, vector<32x8xbf16>, vector<8x8xf32> -> vector<8x8xf32>
    %c1_93 = arith.constant 1 : index
    %c0_94 = arith.constant 0 : index
    %c0_95 = arith.constant 0 : index
    %151 = vector.load %arg18[%c1_93, %c0_94, %c0_95] : memref<4x1x8xf32, #tpu.memory_space<vmem>>, vector<1x1x8xf32>
    %152 = vector.shape_cast %151 : vector<1x1x8xf32> to vector<1x8xf32>
    %153 = vector.broadcast %152 : vector<1x8xf32> to vector<8x8xf32>
    %154 = arith.addf %150, %153 : vector<8x8xf32>
    %c1_96 = arith.constant 1 : index
    %c0_97 = arith.constant 0 : index
    %c0_98 = arith.constant 0 : index
    %155 = vector.load %arg19[%c1_96, %c0_97, %c0_98] : memref<4x32x8xbf16, #tpu.memory_space<vmem>>, vector<1x32x8xbf16>
    %156 = vector.shape_cast %155 : vector<1x32x8xbf16> to vector<32x8xbf16>
    %cst_99 = arith.constant dense<0.000000e+00> : vector<8x8xf32>
    %157 = tpu.matmul %30, %156, %cst_99 {dimension_numbers = #tpu.dot_dimension_numbers<[1], [0], [0], [1], [0, 0, 1, 1], [], []>} : vector<8x32xbf16>, vector<32x8xbf16>, vector<8x8xf32> -> vector<8x8xf32>
    %c1_100 = arith.constant 1 : index
    %c0_101 = arith.constant 0 : index
    %c0_102 = arith.constant 0 : index
    %158 = vector.load %arg20[%c1_100, %c0_101, %c0_102] : memref<4x1x8xf32, #tpu.memory_space<vmem>>, vector<1x1x8xf32>
    %159 = vector.shape_cast %158 : vector<1x1x8xf32> to vector<1x8xf32>
    %160 = vector.broadcast %159 : vector<1x8xf32> to vector<8x8xf32>
    %161 = arith.addf %157, %160 : vector<8x8xf32>
    %c1_103 = arith.constant 1 : index
    %c0_104 = arith.constant 0 : index
    %c0_105 = arith.constant 0 : index
    %162 = vector.load %arg4[%c1_103, %c0_104, %c0_105] : memref<4x8x1xf32, #tpu.memory_space<vmem>>, vector<1x8x1xf32>
    %163 = vector.shape_cast %162 : vector<1x8x1xf32> to vector<8x1xf32>
    %164 = vector.broadcast %163 : vector<8x1xf32> to vector<8x8xf32>
    %165 = arith.mulf %140, %164 : vector<8x8xf32>
    %166 = arith.truncf %165 : vector<8x8xf32> to vector<8x8xbf16>
    %c1_106 = arith.constant 1 : index
    %c0_107 = arith.constant 0 : index
    %c0_108 = arith.constant 0 : index
    %167 = vector.load %arg5[%c1_106, %c0_107, %c0_108] : memref<4x8x1xf32, #tpu.memory_space<vmem>>, vector<1x8x1xf32>
    %168 = vector.shape_cast %167 : vector<1x8x1xf32> to vector<8x1xf32>
    %169 = vector.broadcast %168 : vector<8x1xf32> to vector<8x8xf32>
    %170 = arith.mulf %147, %169 : vector<8x8xf32>
    %171 = arith.truncf %170 : vector<8x8xf32> to vector<8x8xbf16>
    %c1_109 = arith.constant 1 : index
    %c0_110 = arith.constant 0 : index
    %c0_111 = arith.constant 0 : index
    %172 = vector.load %arg6[%c1_109, %c0_110, %c0_111] : memref<4x8x1xf32, #tpu.memory_space<vmem>>, vector<1x8x1xf32>
    %173 = vector.shape_cast %172 : vector<1x8x1xf32> to vector<8x1xf32>
    %174 = vector.broadcast %173 : vector<8x1xf32> to vector<8x8xf32>
    %175 = arith.mulf %147, %174 : vector<8x8xf32>
    %176 = arith.truncf %175 : vector<8x8xf32> to vector<8x8xbf16>
    %177 = arith.truncf %154 : vector<8x8xf32> to vector<8x8xbf16>
    %178 = arith.negf %161 : vector<8x8xf32>
    %179 = math.exp %178 : vector<8x8xf32>
    %cst_112 = arith.constant 1.000000e+00 : f32
    %180 = vector.broadcast %cst_112 : f32 to vector<8x8xf32>
    %181 = arith.addf %180, %179 : vector<8x8xf32>
    %182 = arith.divf %180, %181 : vector<8x8xf32>
    %183 = arith.mulf %161, %182 : vector<8x8xf32>
    %184 = arith.truncf %183 : vector<8x8xf32> to vector<8x8xbf16>
    %cst_113 = arith.constant dense<0.000000e+00> : vector<8x8xf32>
    %185 = tpu.matmul %166, %171, %cst_113 {dimension_numbers = #tpu.dot_dimension_numbers<[1], [1], [0], [0], [0, 0, 1, 0], [], []>} : vector<8x8xbf16>, vector<8x8xbf16>, vector<8x8xf32> -> vector<8x8xf32>
    %cst_114 = arith.constant 0.000000e+00 : f32
    %186 = vector.broadcast %cst_114 : f32 to vector<8x8xf32>
    %187 = arith.select %33, %185, %186 : vector<8x8xi1>, vector<8x8xf32>
    %188 = arith.truncf %187 : vector<8x8xf32> to vector<8x8xbf16>
    %cst_115 = arith.constant dense<0.000000e+00> : vector<8x8xf32>
    %189 = tpu.matmul %188, %177, %cst_115 {dimension_numbers = #tpu.dot_dimension_numbers<[1], [0], [0], [1], [0, 0, 1, 1], [], []>} : vector<8x8xbf16>, vector<8x8xbf16>, vector<8x8xf32> -> vector<8x8xf32>
    %c1_116 = arith.constant 1 : index
    %c0_117 = arith.constant 0 : index
    %c0_118 = arith.constant 0 : index
    %190 = vector.load %arg29[%c1_116, %c0_117, %c0_118] : memref<4x8x8xf32, #tpu.memory_space<vmem>>, vector<1x8x8xf32>
    %191 = vector.shape_cast %190 : vector<1x8x8xf32> to vector<8x8xf32>
    %192 = arith.truncf %191 : vector<8x8xf32> to vector<8x8xbf16>
    %cst_119 = arith.constant dense<0.000000e+00> : vector<8x8xf32>
    %193 = tpu.matmul %166, %192, %cst_119 {dimension_numbers = #tpu.dot_dimension_numbers<[1], [0], [0], [1], [0, 0, 1, 1], [], []>} : vector<8x8xbf16>, vector<8x8xbf16>, vector<8x8xf32> -> vector<8x8xf32>
    %c1_120 = arith.constant 1 : index
    %c0_121 = arith.constant 0 : index
    %c0_122 = arith.constant 0 : index
    %194 = vector.load %arg7[%c1_120, %c0_121, %c0_122] : memref<4x1x1xf32, #tpu.memory_space<vmem>>, vector<1x1x1xf32>
    %195 = vector.shape_cast %194 : vector<1x1x1xf32> to vector<1x1xf32>
    %196 = vector.broadcast %195 : vector<1x1xf32> to vector<8x8xf32>
    %197 = arith.mulf %193, %196 : vector<8x8xf32>
    %198 = arith.addf %189, %197 : vector<8x8xf32>
    %cst_123 = arith.constant dense<0.000000e+00> : vector<8x8xf32>
    %199 = tpu.matmul %176, %177, %cst_123 {dimension_numbers = #tpu.dot_dimension_numbers<[0], [0], [1], [1], [0, 1, 1, 1], [], []>} : vector<8x8xbf16>, vector<8x8xbf16>, vector<8x8xf32> -> vector<8x8xf32>
    %c1_124 = arith.constant 1 : index
    %c0_125 = arith.constant 0 : index
    %c0_126 = arith.constant 0 : index
    %200 = vector.load %arg8[%c1_124, %c0_125, %c0_126] : memref<4x1x1xf32, #tpu.memory_space<vmem>>, vector<1x1x1xf32>
    %201 = vector.shape_cast %200 : vector<1x1x1xf32> to vector<1x1xf32>
    %202 = vector.broadcast %201 : vector<1x1xf32> to vector<8x8xf32>
    %203 = arith.mulf %191, %202 : vector<8x8xf32>
    %204 = arith.addf %199, %203 : vector<8x8xf32>
    %c1_127 = arith.constant 1 : index
    %c0_128 = arith.constant 0 : index
    %c0_129 = arith.constant 0 : index
    %205 = vector.load %arg29[%c1_127, %c0_128, %c0_129] : memref<4x8x8xf32, #tpu.memory_space<vmem>>, vector<1x8x8xf32>
    %206 = vector.shape_cast %205 : vector<1x8x8xf32> to vector<8x8xf32>
    %207 = vector.shape_cast %204 : vector<8x8xf32> to vector<1x8x8xf32>
    tpu.vector_store %arg29[%c1_127, %c0_128, %c0_129], %207 {strides = array<i32>} : memref<4x8x8xf32, #tpu.memory_space<vmem>>, vector<1x8x8xf32>,
    %cst_130 = arith.constant dense<0.000000e+00> : vector<8xf32>
    %208 = vector.multi_reduction <add>, %198, %cst_130 [1] : vector<8x8xf32> to vector<8xf32>
    %209 = vector.shape_cast %208 : vector<8xf32> to vector<8x1xf32>
    %cst_131 = arith.constant 8.000000e+00 : f32
    %210 = vector.broadcast %cst_131 : f32 to vector<8x1xf32>
    %211 = arith.divf %209, %210 : vector<8x1xf32>
    %212 = vector.broadcast %211 : vector<8x1xf32> to vector<8x8xf32>
    %213 = arith.subf %198, %212 : vector<8x8xf32>
    %214 = arith.mulf %213, %213 : vector<8x8xf32>
    %cst_132 = arith.constant dense<0.000000e+00> : vector<8xf32>
    %215 = vector.multi_reduction <add>, %214, %cst_132 [1] : vector<8x8xf32> to vector<8xf32>
    %216 = vector.shape_cast %215 : vector<8xf32> to vector<8x1xf32>
    %cst_133 = arith.constant 8.000000e+00 : f32
    %217 = vector.broadcast %cst_133 : f32 to vector<8x1xf32>
    %218 = arith.divf %216, %217 : vector<8x1xf32>
    %219 = vector.broadcast %211 : vector<8x1xf32> to vector<8x8xf32>
    %220 = arith.subf %198, %219 : vector<8x8xf32>
    %cst_134 = arith.constant 9.99999997E-7 : f32
    %221 = vector.broadcast %cst_134 : f32 to vector<8x1xf32>
    %222 = arith.addf %218, %221 : vector<8x1xf32>
    %223 = math.rsqrt %222 : vector<8x1xf32>
    %224 = vector.broadcast %223 : vector<8x1xf32> to vector<8x8xf32>
    %225 = arith.mulf %220, %224 : vector<8x8xf32>
    %226 = arith.extf %184 : vector<8x8xbf16> to vector<8x8xf32>
    %227 = arith.mulf %225, %226 : vector<8x8xf32>
    %228 = arith.truncf %227 : vector<8x8xf32> to vector<8x8xbf16>
    %c1_135 = arith.constant 1 : index
    %c0_136 = arith.constant 0 : index
    %c0_137 = arith.constant 0 : index
    %229 = vector.load %arg21[%c1_135, %c0_136, %c0_137] : memref<4x8x32xbf16, #tpu.memory_space<vmem>>, vector<1x8x32xbf16>
    %230 = vector.shape_cast %229 : vector<1x8x32xbf16> to vector<8x32xbf16>
    %cst_138 = arith.constant dense<0.000000e+00> : vector<8x32xf32>
    %231 = tpu.matmul %228, %230, %cst_138 {dimension_numbers = #tpu.dot_dimension_numbers<[1], [0], [0], [1], [0, 0, 1, 1], [], []>} : vector<8x8xbf16>, vector<8x32xbf16>, vector<8x32xf32> -> vector<8x32xf32>
    %232 = arith.addf %133, %231 : vector<8x32xf32>
    %c2 = arith.constant 2 : index
    %c0_139 = arith.constant 0 : index
    %c0_140 = arith.constant 0 : index
    %233 = vector.load %arg13[%c2, %c0_139, %c0_140] : memref<4x32x8xbf16, #tpu.memory_space<vmem>>, vector<1x32x8xbf16>
    %234 = vector.shape_cast %233 : vector<1x32x8xbf16> to vector<32x8xbf16>
    %cst_141 = arith.constant dense<0.000000e+00> : vector<8x8xf32>
    %235 = tpu.matmul %30, %234, %cst_141 {dimension_numbers = #tpu.dot_dimension_numbers<[1], [0], [0], [1], [0, 0, 1, 1], [], []>} : vector<8x32xbf16>, vector<32x8xbf16>, vector<8x8xf32> -> vector<8x8xf32>
    %c2_142 = arith.constant 2 : index
    %c0_143 = arith.constant 0 : index
    %c0_144 = arith.constant 0 : index
    %236 = vector.load %arg14[%c2_142, %c0_143, %c0_144] : memref<4x1x8xf32, #tpu.memory_space<vmem>>, vector<1x1x8xf32>
    %237 = vector.shape_cast %236 : vector<1x1x8xf32> to vector<1x8xf32>
    %238 = vector.broadcast %237 : vector<1x8xf32> to vector<8x8xf32>
    %239 = arith.addf %235, %238 : vector<8x8xf32>
    %c2_145 = arith.constant 2 : index
    %c0_146 = arith.constant 0 : index
    %c0_147 = arith.constant 0 : index
    %240 = vector.load %arg15[%c2_145, %c0_146, %c0_147] : memref<4x32x8xbf16, #tpu.memory_space<vmem>>, vector<1x32x8xbf16>
    %241 = vector.shape_cast %240 : vector<1x32x8xbf16> to vector<32x8xbf16>
    %cst_148 = arith.constant dense<0.000000e+00> : vector<8x8xf32>
    %242 = tpu.matmul %30, %241, %cst_148 {dimension_numbers = #tpu.dot_dimension_numbers<[1], [0], [0], [1], [0, 0, 1, 1], [], []>} : vector<8x32xbf16>, vector<32x8xbf16>, vector<8x8xf32> -> vector<8x8xf32>
    %c2_149 = arith.constant 2 : index
    %c0_150 = arith.constant 0 : index
    %c0_151 = arith.constant 0 : index
    %243 = vector.load %arg16[%c2_149, %c0_150, %c0_151] : memref<4x1x8xf32, #tpu.memory_space<vmem>>, vector<1x1x8xf32>
    %244 = vector.shape_cast %243 : vector<1x1x8xf32> to vector<1x8xf32>
    %245 = vector.broadcast %244 : vector<1x8xf32> to vector<8x8xf32>
    %246 = arith.addf %242, %245 : vector<8x8xf32>
    %c2_152 = arith.constant 2 : index
    %c0_153 = arith.constant 0 : index
    %c0_154 = arith.constant 0 : index
    %247 = vector.load %arg17[%c2_152, %c0_153, %c0_154] : memref<4x32x8xbf16, #tpu.memory_space<vmem>>, vector<1x32x8xbf16>
    %248 = vector.shape_cast %247 : vector<1x32x8xbf16> to vector<32x8xbf16>
    %cst_155 = arith.constant dense<0.000000e+00> : vector<8x8xf32>
    %249 = tpu.matmul %30, %248, %cst_155 {dimension_numbers = #tpu.dot_dimension_numbers<[1], [0], [0], [1], [0, 0, 1, 1], [], []>} : vector<8x32xbf16>, vector<32x8xbf16>, vector<8x8xf32> -> vector<8x8xf32>
    %c2_156 = arith.constant 2 : index
    %c0_157 = arith.constant 0 : index
    %c0_158 = arith.constant 0 : index
    %250 = vector.load %arg18[%c2_156, %c0_157, %c0_158] : memref<4x1x8xf32, #tpu.memory_space<vmem>>, vector<1x1x8xf32>
    %251 = vector.shape_cast %250 : vector<1x1x8xf32> to vector<1x8xf32>
    %252 = vector.broadcast %251 : vector<1x8xf32> to vector<8x8xf32>
    %253 = arith.addf %249, %252 : vector<8x8xf32>
    %c2_159 = arith.constant 2 : index
    %c0_160 = arith.constant 0 : index
    %c0_161 = arith.constant 0 : index
    %254 = vector.load %arg19[%c2_159, %c0_160, %c0_161] : memref<4x32x8xbf16, #tpu.memory_space<vmem>>, vector<1x32x8xbf16>
    %255 = vector.shape_cast %254 : vector<1x32x8xbf16> to vector<32x8xbf16>
    %cst_162 = arith.constant dense<0.000000e+00> : vector<8x8xf32>
    %256 = tpu.matmul %30, %255, %cst_162 {dimension_numbers = #tpu.dot_dimension_numbers<[1], [0], [0], [1], [0, 0, 1, 1], [], []>} : vector<8x32xbf16>, vector<32x8xbf16>, vector<8x8xf32> -> vector<8x8xf32>
    %c2_163 = arith.constant 2 : index
    %c0_164 = arith.constant 0 : index
    %c0_165 = arith.constant 0 : index
    %257 = vector.load %arg20[%c2_163, %c0_164, %c0_165] : memref<4x1x8xf32, #tpu.memory_space<vmem>>, vector<1x1x8xf32>
    %258 = vector.shape_cast %257 : vector<1x1x8xf32> to vector<1x8xf32>
    %259 = vector.broadcast %258 : vector<1x8xf32> to vector<8x8xf32>
    %260 = arith.addf %256, %259 : vector<8x8xf32>
    %c2_166 = arith.constant 2 : index
    %c0_167 = arith.constant 0 : index
    %c0_168 = arith.constant 0 : index
    %261 = vector.load %arg4[%c2_166, %c0_167, %c0_168] : memref<4x8x1xf32, #tpu.memory_space<vmem>>, vector<1x8x1xf32>
    %262 = vector.shape_cast %261 : vector<1x8x1xf32> to vector<8x1xf32>
    %263 = vector.broadcast %262 : vector<8x1xf32> to vector<8x8xf32>
    %264 = arith.mulf %239, %263 : vector<8x8xf32>
    %265 = arith.truncf %264 : vector<8x8xf32> to vector<8x8xbf16>
    %c2_169 = arith.constant 2 : index
    %c0_170 = arith.constant 0 : index
    %c0_171 = arith.constant 0 : index
    %266 = vector.load %arg5[%c2_169, %c0_170, %c0_171] : memref<4x8x1xf32, #tpu.memory_space<vmem>>, vector<1x8x1xf32>
    %267 = vector.shape_cast %266 : vector<1x8x1xf32> to vector<8x1xf32>
    %268 = vector.broadcast %267 : vector<8x1xf32> to vector<8x8xf32>
    %269 = arith.mulf %246, %268 : vector<8x8xf32>
    %270 = arith.truncf %269 : vector<8x8xf32> to vector<8x8xbf16>
    %c2_172 = arith.constant 2 : index
    %c0_173 = arith.constant 0 : index
    %c0_174 = arith.constant 0 : index
    %271 = vector.load %arg6[%c2_172, %c0_173, %c0_174] : memref<4x8x1xf32, #tpu.memory_space<vmem>>, vector<1x8x1xf32>
    %272 = vector.shape_cast %271 : vector<1x8x1xf32> to vector<8x1xf32>
    %273 = vector.broadcast %272 : vector<8x1xf32> to vector<8x8xf32>
    %274 = arith.mulf %246, %273 : vector<8x8xf32>
    %275 = arith.truncf %274 : vector<8x8xf32> to vector<8x8xbf16>
    %276 = arith.truncf %253 : vector<8x8xf32> to vector<8x8xbf16>
    %277 = arith.negf %260 : vector<8x8xf32>
    %278 = math.exp %277 : vector<8x8xf32>
    %cst_175 = arith.constant 1.000000e+00 : f32
    %279 = vector.broadcast %cst_175 : f32 to vector<8x8xf32>
    %280 = arith.addf %279, %278 : vector<8x8xf32>
    %281 = arith.divf %279, %280 : vector<8x8xf32>
    %282 = arith.mulf %260, %281 : vector<8x8xf32>
    %283 = arith.truncf %282 : vector<8x8xf32> to vector<8x8xbf16>
    %cst_176 = arith.constant dense<0.000000e+00> : vector<8x8xf32>
    %284 = tpu.matmul %265, %270, %cst_176 {dimension_numbers = #tpu.dot_dimension_numbers<[1], [1], [0], [0], [0, 0, 1, 0], [], []>} : vector<8x8xbf16>, vector<8x8xbf16>, vector<8x8xf32> -> vector<8x8xf32>
    %cst_177 = arith.constant 0.000000e+00 : f32
    %285 = vector.broadcast %cst_177 : f32 to vector<8x8xf32>
    %286 = arith.select %33, %284, %285 : vector<8x8xi1>, vector<8x8xf32>
    %287 = arith.truncf %286 : vector<8x8xf32> to vector<8x8xbf16>
    %cst_178 = arith.constant dense<0.000000e+00> : vector<8x8xf32>
    %288 = tpu.matmul %287, %276, %cst_178 {dimension_numbers = #tpu.dot_dimension_numbers<[1], [0], [0], [1], [0, 0, 1, 1], [], []>} : vector<8x8xbf16>, vector<8x8xbf16>, vector<8x8xf32> -> vector<8x8xf32>
    %c2_179 = arith.constant 2 : index
    %c0_180 = arith.constant 0 : index
    %c0_181 = arith.constant 0 : index
    %289 = vector.load %arg29[%c2_179, %c0_180, %c0_181] : memref<4x8x8xf32, #tpu.memory_space<vmem>>, vector<1x8x8xf32>
    %290 = vector.shape_cast %289 : vector<1x8x8xf32> to vector<8x8xf32>
    %291 = arith.truncf %290 : vector<8x8xf32> to vector<8x8xbf16>
    %cst_182 = arith.constant dense<0.000000e+00> : vector<8x8xf32>
    %292 = tpu.matmul %265, %291, %cst_182 {dimension_numbers = #tpu.dot_dimension_numbers<[1], [0], [0], [1], [0, 0, 1, 1], [], []>} : vector<8x8xbf16>, vector<8x8xbf16>, vector<8x8xf32> -> vector<8x8xf32>
    %c2_183 = arith.constant 2 : index
    %c0_184 = arith.constant 0 : index
    %c0_185 = arith.constant 0 : index
    %293 = vector.load %arg7[%c2_183, %c0_184, %c0_185] : memref<4x1x1xf32, #tpu.memory_space<vmem>>, vector<1x1x1xf32>
    %294 = vector.shape_cast %293 : vector<1x1x1xf32> to vector<1x1xf32>
    %295 = vector.broadcast %294 : vector<1x1xf32> to vector<8x8xf32>
    %296 = arith.mulf %292, %295 : vector<8x8xf32>
    %297 = arith.addf %288, %296 : vector<8x8xf32>
    %cst_186 = arith.constant dense<0.000000e+00> : vector<8x8xf32>
    %298 = tpu.matmul %275, %276, %cst_186 {dimension_numbers = #tpu.dot_dimension_numbers<[0], [0], [1], [1], [0, 1, 1, 1], [], []>} : vector<8x8xbf16>, vector<8x8xbf16>, vector<8x8xf32> -> vector<8x8xf32>
    %c2_187 = arith.constant 2 : index
    %c0_188 = arith.constant 0 : index
    %c0_189 = arith.constant 0 : index
    %299 = vector.load %arg8[%c2_187, %c0_188, %c0_189] : memref<4x1x1xf32, #tpu.memory_space<vmem>>, vector<1x1x1xf32>
    %300 = vector.shape_cast %299 : vector<1x1x1xf32> to vector<1x1xf32>
    %301 = vector.broadcast %300 : vector<1x1xf32> to vector<8x8xf32>
    %302 = arith.mulf %290, %301 : vector<8x8xf32>
    %303 = arith.addf %298, %302 : vector<8x8xf32>
    %c2_190 = arith.constant 2 : index
    %c0_191 = arith.constant 0 : index
    %c0_192 = arith.constant 0 : index
    %304 = vector.load %arg29[%c2_190, %c0_191, %c0_192] : memref<4x8x8xf32, #tpu.memory_space<vmem>>, vector<1x8x8xf32>
    %305 = vector.shape_cast %304 : vector<1x8x8xf32> to vector<8x8xf32>
    %306 = vector.shape_cast %303 : vector<8x8xf32> to vector<1x8x8xf32>
    tpu.vector_store %arg29[%c2_190, %c0_191, %c0_192], %306 {strides = array<i32>} : memref<4x8x8xf32, #tpu.memory_space<vmem>>, vector<1x8x8xf32>,
    %cst_193 = arith.constant dense<0.000000e+00> : vector<8xf32>
    %307 = vector.multi_reduction <add>, %297, %cst_193 [1] : vector<8x8xf32> to vector<8xf32>
    %308 = vector.shape_cast %307 : vector<8xf32> to vector<8x1xf32>
    %cst_194 = arith.constant 8.000000e+00 : f32
    %309 = vector.broadcast %cst_194 : f32 to vector<8x1xf32>
    %310 = arith.divf %308, %309 : vector<8x1xf32>
    %311 = vector.broadcast %310 : vector<8x1xf32> to vector<8x8xf32>
    %312 = arith.subf %297, %311 : vector<8x8xf32>
    %313 = arith.mulf %312, %312 : vector<8x8xf32>
    %cst_195 = arith.constant dense<0.000000e+00> : vector<8xf32>
    %314 = vector.multi_reduction <add>, %313, %cst_195 [1] : vector<8x8xf32> to vector<8xf32>
    %315 = vector.shape_cast %314 : vector<8xf32> to vector<8x1xf32>
    %cst_196 = arith.constant 8.000000e+00 : f32
    %316 = vector.broadcast %cst_196 : f32 to vector<8x1xf32>
    %317 = arith.divf %315, %316 : vector<8x1xf32>
    %318 = vector.broadcast %310 : vector<8x1xf32> to vector<8x8xf32>
    %319 = arith.subf %297, %318 : vector<8x8xf32>
    %cst_197 = arith.constant 9.99999997E-7 : f32
    %320 = vector.broadcast %cst_197 : f32 to vector<8x1xf32>
    %321 = arith.addf %317, %320 : vector<8x1xf32>
    %322 = math.rsqrt %321 : vector<8x1xf32>
    %323 = vector.broadcast %322 : vector<8x1xf32> to vector<8x8xf32>
    %324 = arith.mulf %319, %323 : vector<8x8xf32>
    %325 = arith.extf %283 : vector<8x8xbf16> to vector<8x8xf32>
    %326 = arith.mulf %324, %325 : vector<8x8xf32>
    %327 = arith.truncf %326 : vector<8x8xf32> to vector<8x8xbf16>
    %c2_198 = arith.constant 2 : index
    %c0_199 = arith.constant 0 : index
    %c0_200 = arith.constant 0 : index
    %328 = vector.load %arg21[%c2_198, %c0_199, %c0_200] : memref<4x8x32xbf16, #tpu.memory_space<vmem>>, vector<1x8x32xbf16>
    %329 = vector.shape_cast %328 : vector<1x8x32xbf16> to vector<8x32xbf16>
    %cst_201 = arith.constant dense<0.000000e+00> : vector<8x32xf32>
    %330 = tpu.matmul %327, %329, %cst_201 {dimension_numbers = #tpu.dot_dimension_numbers<[1], [0], [0], [1], [0, 0, 1, 1], [], []>} : vector<8x8xbf16>, vector<8x32xbf16>, vector<8x32xf32> -> vector<8x32xf32>
    %331 = arith.addf %232, %330 : vector<8x32xf32>
    %c3 = arith.constant 3 : index
    %c0_202 = arith.constant 0 : index
    %c0_203 = arith.constant 0 : index
    %332 = vector.load %arg13[%c3, %c0_202, %c0_203] : memref<4x32x8xbf16, #tpu.memory_space<vmem>>, vector<1x32x8xbf16>
    %333 = vector.shape_cast %332 : vector<1x32x8xbf16> to vector<32x8xbf16>
    %cst_204 = arith.constant dense<0.000000e+00> : vector<8x8xf32>
    %334 = tpu.matmul %30, %333, %cst_204 {dimension_numbers = #tpu.dot_dimension_numbers<[1], [0], [0], [1], [0, 0, 1, 1], [], []>} : vector<8x32xbf16>, vector<32x8xbf16>, vector<8x8xf32> -> vector<8x8xf32>
    %c3_205 = arith.constant 3 : index
    %c0_206 = arith.constant 0 : index
    %c0_207 = arith.constant 0 : index
    %335 = vector.load %arg14[%c3_205, %c0_206, %c0_207] : memref<4x1x8xf32, #tpu.memory_space<vmem>>, vector<1x1x8xf32>
    %336 = vector.shape_cast %335 : vector<1x1x8xf32> to vector<1x8xf32>
    %337 = vector.broadcast %336 : vector<1x8xf32> to vector<8x8xf32>
    %338 = arith.addf %334, %337 : vector<8x8xf32>
    %c3_208 = arith.constant 3 : index
    %c0_209 = arith.constant 0 : index
    %c0_210 = arith.constant 0 : index
    %339 = vector.load %arg15[%c3_208, %c0_209, %c0_210] : memref<4x32x8xbf16, #tpu.memory_space<vmem>>, vector<1x32x8xbf16>
    %340 = vector.shape_cast %339 : vector<1x32x8xbf16> to vector<32x8xbf16>
    %cst_211 = arith.constant dense<0.000000e+00> : vector<8x8xf32>
    %341 = tpu.matmul %30, %340, %cst_211 {dimension_numbers = #tpu.dot_dimension_numbers<[1], [0], [0], [1], [0, 0, 1, 1], [], []>} : vector<8x32xbf16>, vector<32x8xbf16>, vector<8x8xf32> -> vector<8x8xf32>
    %c3_212 = arith.constant 3 : index
    %c0_213 = arith.constant 0 : index
    %c0_214 = arith.constant 0 : index
    %342 = vector.load %arg16[%c3_212, %c0_213, %c0_214] : memref<4x1x8xf32, #tpu.memory_space<vmem>>, vector<1x1x8xf32>
    %343 = vector.shape_cast %342 : vector<1x1x8xf32> to vector<1x8xf32>
    %344 = vector.broadcast %343 : vector<1x8xf32> to vector<8x8xf32>
    %345 = arith.addf %341, %344 : vector<8x8xf32>
    %c3_215 = arith.constant 3 : index
    %c0_216 = arith.constant 0 : index
    %c0_217 = arith.constant 0 : index
    %346 = vector.load %arg17[%c3_215, %c0_216, %c0_217] : memref<4x32x8xbf16, #tpu.memory_space<vmem>>, vector<1x32x8xbf16>
    %347 = vector.shape_cast %346 : vector<1x32x8xbf16> to vector<32x8xbf16>
    %cst_218 = arith.constant dense<0.000000e+00> : vector<8x8xf32>
    %348 = tpu.matmul %30, %347, %cst_218 {dimension_numbers = #tpu.dot_dimension_numbers<[1], [0], [0], [1], [0, 0, 1, 1], [], []>} : vector<8x32xbf16>, vector<32x8xbf16>, vector<8x8xf32> -> vector<8x8xf32>
    %c3_219 = arith.constant 3 : index
    %c0_220 = arith.constant 0 : index
    %c0_221 = arith.constant 0 : index
    %349 = vector.load %arg18[%c3_219, %c0_220, %c0_221] : memref<4x1x8xf32, #tpu.memory_space<vmem>>, vector<1x1x8xf32>
    %350 = vector.shape_cast %349 : vector<1x1x8xf32> to vector<1x8xf32>
    %351 = vector.broadcast %350 : vector<1x8xf32> to vector<8x8xf32>
    %352 = arith.addf %348, %351 : vector<8x8xf32>
    %c3_222 = arith.constant 3 : index
    %c0_223 = arith.constant 0 : index
    %c0_224 = arith.constant 0 : index
    %353 = vector.load %arg19[%c3_222, %c0_223, %c0_224] : memref<4x32x8xbf16, #tpu.memory_space<vmem>>, vector<1x32x8xbf16>
    %354 = vector.shape_cast %353 : vector<1x32x8xbf16> to vector<32x8xbf16>
    %cst_225 = arith.constant dense<0.000000e+00> : vector<8x8xf32>
    %355 = tpu.matmul %30, %354, %cst_225 {dimension_numbers = #tpu.dot_dimension_numbers<[1], [0], [0], [1], [0, 0, 1, 1], [], []>} : vector<8x32xbf16>, vector<32x8xbf16>, vector<8x8xf32> -> vector<8x8xf32>
    %c3_226 = arith.constant 3 : index
    %c0_227 = arith.constant 0 : index
    %c0_228 = arith.constant 0 : index
    %356 = vector.load %arg20[%c3_226, %c0_227, %c0_228] : memref<4x1x8xf32, #tpu.memory_space<vmem>>, vector<1x1x8xf32>
    %357 = vector.shape_cast %356 : vector<1x1x8xf32> to vector<1x8xf32>
    %358 = vector.broadcast %357 : vector<1x8xf32> to vector<8x8xf32>
    %359 = arith.addf %355, %358 : vector<8x8xf32>
    %c3_229 = arith.constant 3 : index
    %c0_230 = arith.constant 0 : index
    %c0_231 = arith.constant 0 : index
    %360 = vector.load %arg4[%c3_229, %c0_230, %c0_231] : memref<4x8x1xf32, #tpu.memory_space<vmem>>, vector<1x8x1xf32>
    %361 = vector.shape_cast %360 : vector<1x8x1xf32> to vector<8x1xf32>
    %362 = vector.broadcast %361 : vector<8x1xf32> to vector<8x8xf32>
    %363 = arith.mulf %338, %362 : vector<8x8xf32>
    %364 = arith.truncf %363 : vector<8x8xf32> to vector<8x8xbf16>
    %c3_232 = arith.constant 3 : index
    %c0_233 = arith.constant 0 : index
    %c0_234 = arith.constant 0 : index
    %365 = vector.load %arg5[%c3_232, %c0_233, %c0_234] : memref<4x8x1xf32, #tpu.memory_space<vmem>>, vector<1x8x1xf32>
    %366 = vector.shape_cast %365 : vector<1x8x1xf32> to vector<8x1xf32>
    %367 = vector.broadcast %366 : vector<8x1xf32> to vector<8x8xf32>
    %368 = arith.mulf %345, %367 : vector<8x8xf32>
    %369 = arith.truncf %368 : vector<8x8xf32> to vector<8x8xbf16>
    %c3_235 = arith.constant 3 : index
    %c0_236 = arith.constant 0 : index
    %c0_237 = arith.constant 0 : index
    %370 = vector.load %arg6[%c3_235, %c0_236, %c0_237] : memref<4x8x1xf32, #tpu.memory_space<vmem>>, vector<1x8x1xf32>
    %371 = vector.shape_cast %370 : vector<1x8x1xf32> to vector<8x1xf32>
    %372 = vector.broadcast %371 : vector<8x1xf32> to vector<8x8xf32>
    %373 = arith.mulf %345, %372 : vector<8x8xf32>
    %374 = arith.truncf %373 : vector<8x8xf32> to vector<8x8xbf16>
    %375 = arith.truncf %352 : vector<8x8xf32> to vector<8x8xbf16>
    %376 = arith.negf %359 : vector<8x8xf32>
    %377 = math.exp %376 : vector<8x8xf32>
    %cst_238 = arith.constant 1.000000e+00 : f32
    %378 = vector.broadcast %cst_238 : f32 to vector<8x8xf32>
    %379 = arith.addf %378, %377 : vector<8x8xf32>
    %380 = arith.divf %378, %379 : vector<8x8xf32>
    %381 = arith.mulf %359, %380 : vector<8x8xf32>
    %382 = arith.truncf %381 : vector<8x8xf32> to vector<8x8xbf16>
    %cst_239 = arith.constant dense<0.000000e+00> : vector<8x8xf32>
    %383 = tpu.matmul %364, %369, %cst_239 {dimension_numbers = #tpu.dot_dimension_numbers<[1], [1], [0], [0], [0, 0, 1, 0], [], []>} : vector<8x8xbf16>, vector<8x8xbf16>, vector<8x8xf32> -> vector<8x8xf32>
    %cst_240 = arith.constant 0.000000e+00 : f32
    %384 = vector.broadcast %cst_240 : f32 to vector<8x8xf32>
    %385 = arith.select %33, %383, %384 : vector<8x8xi1>, vector<8x8xf32>
    %386 = arith.truncf %385 : vector<8x8xf32> to vector<8x8xbf16>
    %cst_241 = arith.constant dense<0.000000e+00> : vector<8x8xf32>
    %387 = tpu.matmul %386, %375, %cst_241 {dimension_numbers = #tpu.dot_dimension_numbers<[1], [0], [0], [1], [0, 0, 1, 1], [], []>} : vector<8x8xbf16>, vector<8x8xbf16>, vector<8x8xf32> -> vector<8x8xf32>
    %c3_242 = arith.constant 3 : index
    %c0_243 = arith.constant 0 : index
    %c0_244 = arith.constant 0 : index
    %388 = vector.load %arg29[%c3_242, %c0_243, %c0_244] : memref<4x8x8xf32, #tpu.memory_space<vmem>>, vector<1x8x8xf32>
    %389 = vector.shape_cast %388 : vector<1x8x8xf32> to vector<8x8xf32>
    %390 = arith.truncf %389 : vector<8x8xf32> to vector<8x8xbf16>
    %cst_245 = arith.constant dense<0.000000e+00> : vector<8x8xf32>
    %391 = tpu.matmul %364, %390, %cst_245 {dimension_numbers = #tpu.dot_dimension_numbers<[1], [0], [0], [1], [0, 0, 1, 1], [], []>} : vector<8x8xbf16>, vector<8x8xbf16>, vector<8x8xf32> -> vector<8x8xf32>
    %c3_246 = arith.constant 3 : index
    %c0_247 = arith.constant 0 : index
    %c0_248 = arith.constant 0 : index
    %392 = vector.load %arg7[%c3_246, %c0_247, %c0_248] : memref<4x1x1xf32, #tpu.memory_space<vmem>>, vector<1x1x1xf32>
    %393 = vector.shape_cast %392 : vector<1x1x1xf32> to vector<1x1xf32>
    %394 = vector.broadcast %393 : vector<1x1xf32> to vector<8x8xf32>
    %395 = arith.mulf %391, %394 : vector<8x8xf32>
    %396 = arith.addf %387, %395 : vector<8x8xf32>
    %cst_249 = arith.constant dense<0.000000e+00> : vector<8x8xf32>
    %397 = tpu.matmul %374, %375, %cst_249 {dimension_numbers = #tpu.dot_dimension_numbers<[0], [0], [1], [1], [0, 1, 1, 1], [], []>} : vector<8x8xbf16>, vector<8x8xbf16>, vector<8x8xf32> -> vector<8x8xf32>
    %c3_250 = arith.constant 3 : index
    %c0_251 = arith.constant 0 : index
    %c0_252 = arith.constant 0 : index
    %398 = vector.load %arg8[%c3_250, %c0_251, %c0_252] : memref<4x1x1xf32, #tpu.memory_space<vmem>>, vector<1x1x1xf32>
    %399 = vector.shape_cast %398 : vector<1x1x1xf32> to vector<1x1xf32>
    %400 = vector.broadcast %399 : vector<1x1xf32> to vector<8x8xf32>
    %401 = arith.mulf %389, %400 : vector<8x8xf32>
    %402 = arith.addf %397, %401 : vector<8x8xf32>
    %c3_253 = arith.constant 3 : index
    %c0_254 = arith.constant 0 : index
    %c0_255 = arith.constant 0 : index
    %403 = vector.load %arg29[%c3_253, %c0_254, %c0_255] : memref<4x8x8xf32, #tpu.memory_space<vmem>>, vector<1x8x8xf32>
    %404 = vector.shape_cast %403 : vector<1x8x8xf32> to vector<8x8xf32>
    %405 = vector.shape_cast %402 : vector<8x8xf32> to vector<1x8x8xf32>
    tpu.vector_store %arg29[%c3_253, %c0_254, %c0_255], %405 {strides = array<i32>} : memref<4x8x8xf32, #tpu.memory_space<vmem>>, vector<1x8x8xf32>,
    %cst_256 = arith.constant dense<0.000000e+00> : vector<8xf32>
    %406 = vector.multi_reduction <add>, %396, %cst_256 [1] : vector<8x8xf32> to vector<8xf32>
    %407 = vector.shape_cast %406 : vector<8xf32> to vector<8x1xf32>
    %cst_257 = arith.constant 8.000000e+00 : f32
    %408 = vector.broadcast %cst_257 : f32 to vector<8x1xf32>
    %409 = arith.divf %407, %408 : vector<8x1xf32>
    %410 = vector.broadcast %409 : vector<8x1xf32> to vector<8x8xf32>
    %411 = arith.subf %396, %410 : vector<8x8xf32>
    %412 = arith.mulf %411, %411 : vector<8x8xf32>
    %cst_258 = arith.constant dense<0.000000e+00> : vector<8xf32>
    %413 = vector.multi_reduction <add>, %412, %cst_258 [1] : vector<8x8xf32> to vector<8xf32>
    %414 = vector.shape_cast %413 : vector<8xf32> to vector<8x1xf32>
    %cst_259 = arith.constant 8.000000e+00 : f32
    %415 = vector.broadcast %cst_259 : f32 to vector<8x1xf32>
    %416 = arith.divf %414, %415 : vector<8x1xf32>
    %417 = vector.broadcast %409 : vector<8x1xf32> to vector<8x8xf32>
    %418 = arith.subf %396, %417 : vector<8x8xf32>
    %cst_260 = arith.constant 9.99999997E-7 : f32
    %419 = vector.broadcast %cst_260 : f32 to vector<8x1xf32>
    %420 = arith.addf %416, %419 : vector<8x1xf32>
    %421 = math.rsqrt %420 : vector<8x1xf32>
    %422 = vector.broadcast %421 : vector<8x1xf32> to vector<8x8xf32>
    %423 = arith.mulf %418, %422 : vector<8x8xf32>
    %424 = arith.extf %382 : vector<8x8xbf16> to vector<8x8xf32>
    %425 = arith.mulf %423, %424 : vector<8x8xf32>
    %426 = arith.truncf %425 : vector<8x8xf32> to vector<8x8xbf16>
    %c3_261 = arith.constant 3 : index
    %c0_262 = arith.constant 0 : index
    %c0_263 = arith.constant 0 : index
    %427 = vector.load %arg21[%c3_261, %c0_262, %c0_263] : memref<4x8x32xbf16, #tpu.memory_space<vmem>>, vector<1x8x32xbf16>
    %428 = vector.shape_cast %427 : vector<1x8x32xbf16> to vector<8x32xbf16>
    %cst_264 = arith.constant dense<0.000000e+00> : vector<8x32xf32>
    %429 = tpu.matmul %426, %428, %cst_264 {dimension_numbers = #tpu.dot_dimension_numbers<[1], [0], [0], [1], [0, 0, 1, 1], [], []>} : vector<8x8xbf16>, vector<8x32xbf16>, vector<8x32xf32> -> vector<8x32xf32>
    %430 = arith.addf %331, %429 : vector<8x32xf32>
    %c1_i32 = arith.constant 1 : i32
    %431 = arith.cmpi eq, %arg1, %c1_i32 : i32
    %432 = arith.extui %431 : i1 to i32
    %c0_i32_265 = arith.constant 0 : i32
    %433 = arith.cmpi ne, %432, %c0_i32_265 : i32
    scf.if %433 {
      %c0_291 = arith.constant 0 : index
      %c0_292 = arith.constant 0 : index
      %c0_293 = arith.constant 0 : index
      %487 = vector.load %arg29[%c0_291, %c0_292, %c0_293] : memref<4x8x8xf32, #tpu.memory_space<vmem>>, vector<4x8x8xf32>
      %488 = arith.truncf %487 : vector<4x8x8xf32> to vector<4x8x8xbf16>
      %c0_294 = arith.constant 0 : index
      %c0_295 = arith.constant 0 : index
      %c0_296 = arith.constant 0 : index
      %c0_297 = arith.constant 0 : index
      %489 = vector.load %arg28[%c0_294, %c0_295, %c0_296, %c0_297] : memref<1x4x8x8xbf16, #tpu.memory_space<vmem>>, vector<1x4x8x8xbf16>
      %490 = vector.shape_cast %489 : vector<1x4x8x8xbf16> to vector<4x8x8xbf16>
      %491 = vector.shape_cast %488 : vector<4x8x8xbf16> to vector<1x4x8x8xbf16>
      tpu.vector_store %arg28[%c0_294, %c0_295, %c0_296, %c0_297], %491 {strides = array<i32>} : memref<1x4x8x8xbf16, #tpu.memory_space<vmem>>, vector<1x4x8x8xbf16>,
    } else {
    }
    %c0_266 = arith.constant 0 : index
    %c0_267 = arith.constant 0 : index
    %434 = vector.load %arg22[%c0_266, %c0_267] : memref<1x32xf32, #tpu.memory_space<vmem>>, vector<1x32xf32>
    %435 = vector.broadcast %434 : vector<1x32xf32> to vector<8x32xf32>
    %436 = arith.addf %430, %435 : vector<8x32xf32>
    %437 = arith.truncf %436 : vector<8x32xf32> to vector<8x32xbf16>
    %438 = arith.addf %1, %437 : vector<8x32xbf16>
    %439 = arith.extf %438 : vector<8x32xbf16> to vector<8x32xf32>
    %c0_268 = arith.constant 0 : index
    %c0_269 = arith.constant 0 : index
    %440 = vector.load %arg11[%c0_268, %c0_269] : memref<1x32xf32, #tpu.memory_space<vmem>>, vector<1x32xf32>
    %c0_270 = arith.constant 0 : index
    %c0_271 = arith.constant 0 : index
    %441 = vector.load %arg12[%c0_270, %c0_271] : memref<1x32xf32, #tpu.memory_space<vmem>>, vector<1x32xf32>
    %cst_272 = arith.constant dense<0.000000e+00> : vector<8xf32>
    %442 = vector.multi_reduction <add>, %439, %cst_272 [1] : vector<8x32xf32> to vector<8xf32>
    %443 = vector.shape_cast %442 : vector<8xf32> to vector<8x1xf32>
    %cst_273 = arith.constant 3.200000e+01 : f32
    %444 = vector.broadcast %cst_273 : f32 to vector<8x1xf32>
    %445 = arith.divf %443, %444 : vector<8x1xf32>
    %446 = vector.broadcast %445 : vector<8x1xf32> to vector<8x32xf32>
    %447 = arith.subf %439, %446 : vector<8x32xf32>
    %448 = arith.mulf %447, %447 : vector<8x32xf32>
    %cst_274 = arith.constant dense<0.000000e+00> : vector<8xf32>
    %449 = vector.multi_reduction <add>, %448, %cst_274 [1] : vector<8x32xf32> to vector<8xf32>
    %450 = vector.shape_cast %449 : vector<8xf32> to vector<8x1xf32>
    %cst_275 = arith.constant 3.200000e+01 : f32
    %451 = vector.broadcast %cst_275 : f32 to vector<8x1xf32>
    %452 = arith.divf %450, %451 : vector<8x1xf32>
    %453 = vector.broadcast %445 : vector<8x1xf32> to vector<8x32xf32>
    %454 = arith.subf %439, %453 : vector<8x32xf32>
    %cst_276 = arith.constant 9.99999997E-7 : f32
    %455 = vector.broadcast %cst_276 : f32 to vector<8x1xf32>
    %456 = arith.addf %452, %455 : vector<8x1xf32>
    %457 = math.rsqrt %456 : vector<8x1xf32>
    %458 = vector.broadcast %457 : vector<8x1xf32> to vector<8x32xf32>
    %459 = arith.mulf %454, %458 : vector<8x32xf32>
    %460 = vector.broadcast %440 : vector<1x32xf32> to vector<8x32xf32>
    %461 = arith.mulf %459, %460 : vector<8x32xf32>
    %462 = vector.broadcast %441 : vector<1x32xf32> to vector<8x32xf32>
    %463 = arith.addf %461, %462 : vector<8x32xf32>
    %464 = arith.truncf %463 : vector<8x32xf32> to vector<8x32xbf16>
    %c0_277 = arith.constant 0 : index
    %c0_278 = arith.constant 0 : index
    %465 = vector.load %arg23[%c0_277, %c0_278] : memref<32x64xbf16, #tpu.memory_space<vmem>>, vector<32x64xbf16>
    %cst_279 = arith.constant dense<0.000000e+00> : vector<8x64xf32>
    %466 = tpu.matmul %464, %465, %cst_279 {dimension_numbers = #tpu.dot_dimension_numbers<[1], [0], [0], [1], [0, 0, 1, 1], [], []>} : vector<8x32xbf16>, vector<32x64xbf16>, vector<8x64xf32> -> vector<8x64xf32>
    %c0_280 = arith.constant 0 : index
    %c0_281 = arith.constant 0 : index
    %467 = vector.load %arg24[%c0_280, %c0_281] : memref<1x64xf32, #tpu.memory_space<vmem>>, vector<1x64xf32>
    %468 = vector.broadcast %467 : vector<1x64xf32> to vector<8x64xf32>
    %469 = arith.addf %466, %468 : vector<8x64xf32>
    %470 = arith.negf %469 : vector<8x64xf32>
    %471 = math.exp %470 : vector<8x64xf32>
    %cst_282 = arith.constant 1.000000e+00 : f32
    %472 = vector.broadcast %cst_282 : f32 to vector<8x64xf32>
    %473 = arith.addf %472, %471 : vector<8x64xf32>
    %474 = arith.divf %472, %473 : vector<8x64xf32>
    %475 = arith.mulf %469, %474 : vector<8x64xf32>
    %476 = arith.truncf %475 : vector<8x64xf32> to vector<8x64xbf16>
    %c0_283 = arith.constant 0 : index
    %c0_284 = arith.constant 0 : index
    %477 = vector.load %arg25[%c0_283, %c0_284] : memref<64x32xbf16, #tpu.memory_space<vmem>>, vector<64x32xbf16>
    %cst_285 = arith.constant dense<0.000000e+00> : vector<8x32xf32>
    %478 = tpu.matmul %476, %477, %cst_285 {dimension_numbers = #tpu.dot_dimension_numbers<[1], [0], [0], [1], [0, 0, 1, 1], [], []>} : vector<8x64xbf16>, vector<64x32xbf16>, vector<8x32xf32> -> vector<8x32xf32>
    %c0_286 = arith.constant 0 : index
    %c0_287 = arith.constant 0 : index
    %479 = vector.load %arg26[%c0_286, %c0_287] : memref<1x32xf32, #tpu.memory_space<vmem>>, vector<1x32xf32>
    %480 = vector.broadcast %479 : vector<1x32xf32> to vector<8x32xf32>
    %481 = arith.addf %478, %480 : vector<8x32xf32>
    %482 = arith.truncf %481 : vector<8x32xf32> to vector<8x32xbf16>
    %483 = arith.addf %438, %482 : vector<8x32xbf16>
    %c0_288 = arith.constant 0 : index
    %c0_289 = arith.constant 0 : index
    %c0_290 = arith.constant 0 : index
    %484 = vector.load %arg27[%c0_288, %c0_289, %c0_290] : memref<1x8x32xbf16, #tpu.memory_space<vmem>>, vector<1x8x32xbf16>
    %485 = vector.shape_cast %484 : vector<1x8x32xbf16> to vector<8x32xbf16>
    %486 = vector.shape_cast %483 : vector<8x32xbf16> to vector<1x8x32xbf16>
    tpu.vector_store %arg27[%c0_288, %c0_289, %c0_290], %486 {strides = array<i32>} : memref<1x8x32xbf16, #tpu.memory_space<vmem>>, vector<1x8x32xbf16>,
    return
  }
  func.func @transform_0(%arg0: i32, %arg1: i32) -> (i32, i32, i32) {
    %c0_i32 = arith.constant 0 : i32
    %c0_i32_0 = arith.constant 0 : i32
    return %arg0, %arg1, %c0_i32 : i32, i32, i32
  }
  func.func @transform_1(%arg0: i32, %arg1: i32) -> (i32, i32, i32, i32) {
    %c0_i32 = arith.constant 0 : i32
    %c0_i32_0 = arith.constant 0 : i32
    %c0_i32_1 = arith.constant 0 : i32
    %c0_i32_2 = arith.constant 0 : i32
    return %arg0, %c0_i32, %c0_i32_0, %c0_i32_1 : i32, i32, i32, i32
  }
  func.func @transform_2(%arg0: i32, %arg1: i32) -> (i32, i32, i32) {
    %c0_i32 = arith.constant 0 : i32
    %c0_i32_0 = arith.constant 0 : i32
    %c0_i32_1 = arith.constant 0 : i32
    %c0_i32_2 = arith.constant 0 : i32
    return %c0_i32, %c0_i32_0, %c0_i32_1 : i32, i32, i32
  }
  func.func @transform_3(%arg0: i32, %arg1: i32) -> (i32, i32, i32) {
    %c0_i32 = arith.constant 0 : i32
    %c0_i32_0 = arith.constant 0 : i32
    %c0_i32_1 = arith.constant 0 : i32
    %c0_i32_2 = arith.constant 0 : i32
    return %c0_i32, %c0_i32_0, %c0_i32_1 : i32, i32, i32
  }
  func.func @transform_4(%arg0: i32, %arg1: i32) -> (i32, i32, i32) {
    %c0_i32 = arith.constant 0 : i32
    %c0_i32_0 = arith.constant 0 : i32
    %c0_i32_1 = arith.constant 0 : i32
    %c0_i32_2 = arith.constant 0 : i32
    return %c0_i32, %c0_i32_0, %c0_i32_1 : i32, i32, i32
  }
  func.func @transform_5(%arg0: i32, %arg1: i32) -> (i32, i32, i32) {
    %c0_i32 = arith.constant 0 : i32
    %c0_i32_0 = arith.constant 0 : i32
    %c0_i32_1 = arith.constant 0 : i32
    %c0_i32_2 = arith.constant 0 : i32
    return %c0_i32, %c0_i32_0, %c0_i32_1 : i32, i32, i32
  }
  func.func @transform_6(%arg0: i32, %arg1: i32) -> (i32, i32, i32) {
    %c0_i32 = arith.constant 0 : i32
    %c0_i32_0 = arith.constant 0 : i32
    %c0_i32_1 = arith.constant 0 : i32
    %c0_i32_2 = arith.constant 0 : i32
    return %c0_i32, %c0_i32_0, %c0_i32_1 : i32, i32, i32
  }
  func.func @transform_7(%arg0: i32, %arg1: i32) -> (i32, i32) {
    %c0_i32 = arith.constant 0 : i32
    %c0_i32_0 = arith.constant 0 : i32
    %c0_i32_1 = arith.constant 0 : i32
    return %c0_i32, %c0_i32_0 : i32, i32
  }
  func.func @transform_8(%arg0: i32, %arg1: i32) -> (i32, i32) {
    %c0_i32 = arith.constant 0 : i32
    %c0_i32_0 = arith.constant 0 : i32
    %c0_i32_1 = arith.constant 0 : i32
    return %c0_i32, %c0_i32_0 : i32, i32
  }
  func.func @transform_9(%arg0: i32, %arg1: i32) -> (i32, i32) {
    %c0_i32 = arith.constant 0 : i32
    %c0_i32_0 = arith.constant 0 : i32
    %c0_i32_1 = arith.constant 0 : i32
    return %c0_i32, %c0_i32_0 : i32, i32
  }
  func.func @transform_10(%arg0: i32, %arg1: i32) -> (i32, i32) {
    %c0_i32 = arith.constant 0 : i32
    %c0_i32_0 = arith.constant 0 : i32
    %c0_i32_1 = arith.constant 0 : i32
    return %c0_i32, %c0_i32_0 : i32, i32
  }
  func.func @transform_11(%arg0: i32, %arg1: i32) -> (i32, i32, i32) {
    %c0_i32 = arith.constant 0 : i32
    %c0_i32_0 = arith.constant 0 : i32
    %c0_i32_1 = arith.constant 0 : i32
    %c0_i32_2 = arith.constant 0 : i32
    return %c0_i32, %c0_i32_0, %c0_i32_1 : i32, i32, i32
  }
  func.func @transform_12(%arg0: i32, %arg1: i32) -> (i32, i32, i32) {
    %c0_i32 = arith.constant 0 : i32
    %c0_i32_0 = arith.constant 0 : i32
    %c0_i32_1 = arith.constant 0 : i32
    %c0_i32_2 = arith.constant 0 : i32
    return %c0_i32, %c0_i32_0, %c0_i32_1 : i32, i32, i32
  }
  func.func @transform_13(%arg0: i32, %arg1: i32) -> (i32, i32, i32) {
    %c0_i32 = arith.constant 0 : i32
    %c0_i32_0 = arith.constant 0 : i32
    %c0_i32_1 = arith.constant 0 : i32
    %c0_i32_2 = arith.constant 0 : i32
    return %c0_i32, %c0_i32_0, %c0_i32_1 : i32, i32, i32
  }
  func.func @transform_14(%arg0: i32, %arg1: i32) -> (i32, i32, i32) {
    %c0_i32 = arith.constant 0 : i32
    %c0_i32_0 = arith.constant 0 : i32
    %c0_i32_1 = arith.constant 0 : i32
    %c0_i32_2 = arith.constant 0 : i32
    return %c0_i32, %c0_i32_0, %c0_i32_1 : i32, i32, i32
  }
  func.func @transform_15(%arg0: i32, %arg1: i32) -> (i32, i32, i32) {
    %c0_i32 = arith.constant 0 : i32
    %c0_i32_0 = arith.constant 0 : i32
    %c0_i32_1 = arith.constant 0 : i32
    %c0_i32_2 = arith.constant 0 : i32
    return %c0_i32, %c0_i32_0, %c0_i32_1 : i32, i32, i32
  }
  func.func @transform_16(%arg0: i32, %arg1: i32) -> (i32, i32, i32) {
    %c0_i32 = arith.constant 0 : i32
    %c0_i32_0 = arith.constant 0 : i32
    %c0_i32_1 = arith.constant 0 : i32
    %c0_i32_2 = arith.constant 0 : i32
    return %c0_i32, %c0_i32_0, %c0_i32_1 : i32, i32, i32
  }
  func.func @transform_17(%arg0: i32, %arg1: i32) -> (i32, i32, i32) {
    %c0_i32 = arith.constant 0 : i32
    %c0_i32_0 = arith.constant 0 : i32
    %c0_i32_1 = arith.constant 0 : i32
    %c0_i32_2 = arith.constant 0 : i32
    return %c0_i32, %c0_i32_0, %c0_i32_1 : i32, i32, i32
  }
  func.func @transform_18(%arg0: i32, %arg1: i32) -> (i32, i32, i32) {
    %c0_i32 = arith.constant 0 : i32
    %c0_i32_0 = arith.constant 0 : i32
    %c0_i32_1 = arith.constant 0 : i32
    %c0_i32_2 = arith.constant 0 : i32
    return %c0_i32, %c0_i32_0, %c0_i32_1 : i32, i32, i32
  }
  func.func @transform_19(%arg0: i32, %arg1: i32) -> (i32, i32, i32) {
    %c0_i32 = arith.constant 0 : i32
    %c0_i32_0 = arith.constant 0 : i32
    %c0_i32_1 = arith.constant 0 : i32
    %c0_i32_2 = arith.constant 0 : i32
    return %c0_i32, %c0_i32_0, %c0_i32_1 : i32, i32, i32
  }
  func.func @transform_20(%arg0: i32, %arg1: i32) -> (i32, i32) {
    %c0_i32 = arith.constant 0 : i32
    %c0_i32_0 = arith.constant 0 : i32
    %c0_i32_1 = arith.constant 0 : i32
    return %c0_i32, %c0_i32_0 : i32, i32
  }
  func.func @transform_21(%arg0: i32, %arg1: i32) -> (i32, i32) {
    %c0_i32 = arith.constant 0 : i32
    %c0_i32_0 = arith.constant 0 : i32
    %c0_i32_1 = arith.constant 0 : i32
    return %c0_i32, %c0_i32_0 : i32, i32
  }
  func.func @transform_22(%arg0: i32, %arg1: i32) -> (i32, i32) {
    %c0_i32 = arith.constant 0 : i32
    %c0_i32_0 = arith.constant 0 : i32
    %c0_i32_1 = arith.constant 0 : i32
    return %c0_i32, %c0_i32_0 : i32, i32
  }
  func.func @transform_23(%arg0: i32, %arg1: i32) -> (i32, i32) {
    %c0_i32 = arith.constant 0 : i32
    %c0_i32_0 = arith.constant 0 : i32
    %c0_i32_1 = arith.constant 0 : i32
    return %c0_i32, %c0_i32_0 : i32, i32
  }
  func.func @transform_24(%arg0: i32, %arg1: i32) -> (i32, i32) {
    %c0_i32 = arith.constant 0 : i32
    %c0_i32_0 = arith.constant 0 : i32
    %c0_i32_1 = arith.constant 0 : i32
    return %c0_i32, %c0_i32_0 : i32, i32
  }
  func.func @transform_25(%arg0: i32, %arg1: i32) -> (i32, i32, i32) {
    %c0_i32 = arith.constant 0 : i32
    %c0_i32_0 = arith.constant 0 : i32
    return %arg0, %arg1, %c0_i32 : i32, i32, i32
  }
  func.func @transform_26(%arg0: i32, %arg1: i32) -> (i32, i32, i32, i32) {
    %c0_i32 = arith.constant 0 : i32
    %c0_i32_0 = arith.constant 0 : i32
    %c0_i32_1 = arith.constant 0 : i32
    %c0_i32_2 = arith.constant 0 : i32
    return %arg0, %c0_i32, %c0_i32_0, %c0_i32_1 : i32, i32, i32, i32
  }
}

module attributes {stable_mosaic.version = 11 : i64} {
  func.func @retnet_layer_kernel(%arg0: i32, %arg1: i32, %arg2: memref<1x8x32xbf16, #tpu.memory_space<vmem>>, %arg3: memref<1x4x8x8xbf16, #tpu.memory_space<vmem>>, %arg4: memref<4x8x1xf32, #tpu.memory_space<vmem>>, %arg5: memref<4x8x1xf32, #tpu.memory_space<vmem>>, %arg6: memref<4x8x1xf32, #tpu.memory_space<vmem>>, %arg7: memref<4x1x1xf32, #tpu.memory_space<vmem>>, %arg8: memref<4x1x1xf32, #tpu.memory_space<vmem>>, %arg9: memref<1x32xf32, #tpu.memory_space<vmem>>, %arg10: memref<1x32xf32, #tpu.memory_space<vmem>>, %arg11: memref<1x32xf32, #tpu.memory_space<vmem>>, %arg12: memref<1x32xf32, #tpu.memory_space<vmem>>, %arg13: memref<4x32x8xbf16, #tpu.memory_space<vmem>>, %arg14: memref<4x1x8xf32, #tpu.memory_space<vmem>>, %arg15: memref<4x32x8xbf16, #tpu.memory_space<vmem>>, %arg16: memref<4x1x8xf32, #tpu.memory_space<vmem>>, %arg17: memref<4x32x8xbf16, #tpu.memory_space<vmem>>, %arg18: memref<4x1x8xf32, #tpu.memory_space<vmem>>, %arg19: memref<4x32x8xbf16, #tpu.memory_space<vmem>>, %arg20: memref<4x1x8xf32, #tpu.memory_space<vmem>>, %arg21: memref<4x8x32xbf16, #tpu.memory_space<vmem>>, %arg22: memref<1x32xf32, #tpu.memory_space<vmem>>, %arg23: memref<32x64xbf16, #tpu.memory_space<vmem>>, %arg24: memref<1x64xf32, #tpu.memory_space<vmem>>, %arg25: memref<64x32xbf16, #tpu.memory_space<vmem>>, %arg26: memref<1x32xf32, #tpu.memory_space<vmem>>, %arg27: memref<1x8x32xbf16, #tpu.memory_space<vmem>>, %arg28: memref<1x4x8x8xbf16, #tpu.memory_space<vmem>>, %arg29: memref<4x8x8xf32, #tpu.memory_space<vmem>>) attributes {dimension_semantics = [#tpu.dimension_semantics<parallel>, #tpu.dimension_semantics<arbitrary>], iteration_bounds = array<i64: 2, 2>, scalar_prefetch = 0 : i64, scratch_operands = 1 : i64, tpu.core_type = #tpu.core_type<tc>, window_params = [{transform_indices = @transform_0, window_bounds = array<i64: 1, 8, 32>}, {transform_indices = @transform_1, window_bounds = array<i64: 1, 4, 8, 8>}, {pipeline_mode = #tpu.pipeline_mode<synchronous>, transform_indices = @transform_2, window_bounds = array<i64: 4, 8, 1>}, {pipeline_mode = #tpu.pipeline_mode<synchronous>, transform_indices = @transform_3, window_bounds = array<i64: 4, 8, 1>}, {pipeline_mode = #tpu.pipeline_mode<synchronous>, transform_indices = @transform_4, window_bounds = array<i64: 4, 8, 1>}, {pipeline_mode = #tpu.pipeline_mode<synchronous>, transform_indices = @transform_5, window_bounds = array<i64: 4, 1, 1>}, {pipeline_mode = #tpu.pipeline_mode<synchronous>, transform_indices = @transform_6, window_bounds = array<i64: 4, 1, 1>}, {pipeline_mode = #tpu.pipeline_mode<synchronous>, transform_indices = @transform_7, window_bounds = array<i64: 1, 32>}, {pipeline_mode = #tpu.pipeline_mode<synchronous>, transform_indices = @transform_8, window_bounds = array<i64: 1, 32>}, {pipeline_mode = #tpu.pipeline_mode<synchronous>, transform_indices = @transform_9, window_bounds = array<i64: 1, 32>}, {pipeline_mode = #tpu.pipeline_mode<synchronous>, transform_indices = @transform_10, window_bounds = array<i64: 1, 32>}, {pipeline_mode = #tpu.pipeline_mode<synchronous>, transform_indices = @transform_11, window_bounds = array<i64: 4, 32, 8>}, {pipeline_mode = #tpu.pipeline_mode<synchronous>, transform_indices = @transform_12, window_bounds = array<i64: 4, 1, 8>}, {pipeline_mode = #tpu.pipeline_mode<synchronous>, transform_indices = @transform_13, window_bounds = array<i64: 4, 32, 8>}, {pipeline_mode = #tpu.pipeline_mode<synchronous>, transform_indices = @transform_14, window_bounds = array<i64: 4, 1, 8>}, {pipeline_mode = #tpu.pipeline_mode<synchronous>, transform_indices = @transform_15, window_bounds = array<i64: 4, 32, 8>}, {pipeline_mode = #tpu.pipeline_mode<synchronous>, transform_indices = @transform_16, window_bounds = array<i64: 4, 1, 8>}, {pipeline_mode = #tpu.pipeline_mode<synchronous>, transform_indices = @transform_17, window_bounds = array<i64: 4, 32, 8>}, {pipeline_mode = #tpu.pipeline_mode<synchronous>, transform_indices = @transform_18, window_bounds = array<i64: 4, 1, 8>}, {pipeline_mode = #tpu.pipeline_mode<synchronous>, transform_indices = @transform_19, window_bounds = array<i64: 4, 8, 32>}, {pipeline_mode = #tpu.pipeline_mode<synchronous>, transform_indices = @transform_20, window_bounds = array<i64: 1, 32>}, {pipeline_mode = #tpu.pipeline_mode<synchronous>, transform_indices = @transform_21, window_bounds = array<i64: 32, 64>}, {pipeline_mode = #tpu.pipeline_mode<synchronous>, transform_indices = @transform_22, window_bounds = array<i64: 1, 64>}, {pipeline_mode = #tpu.pipeline_mode<synchronous>, transform_indices = @transform_23, window_bounds = array<i64: 64, 32>}, {pipeline_mode = #tpu.pipeline_mode<synchronous>, transform_indices = @transform_24, window_bounds = array<i64: 1, 32>}, {transform_indices = @transform_25, window_bounds = array<i64: 1, 8, 32>}, {transform_indices = @transform_26, window_bounds = array<i64: 1, 4, 8, 8>}]} {
    %c0 = arith.constant 0 : index
    %c0_0 = arith.constant 0 : index
    %c0_1 = arith.constant 0 : index
    %0 = vector.load %arg2[%c0, %c0_0, %c0_1] : memref<1x8x32xbf16, #tpu.memory_space<vmem>>, vector<1x8x32xbf16>
    %1 = vector.shape_cast %0 : vector<1x8x32xbf16> to vector<8x32xbf16>
    %c0_i32 = arith.constant 0 : i32
    %2 = arith.cmpi eq, %arg1, %c0_i32 : i32
    %3 = arith.extui %2 : i1 to i32
    %c0_i32_2 = arith.constant 0 : i32
    %4 = arith.cmpi ne, %3, %c0_i32_2 : i32
    scf.if %4 {
      %c0_291 = arith.constant 0 : index
      %c0_292 = arith.constant 0 : index
      %c0_293 = arith.constant 0 : index
      %c0_294 = arith.constant 0 : index
      %487 = vector.load %arg3[%c0_291, %c0_292, %c0_293, %c0_294] : memref<1x4x8x8xbf16, #tpu.memory_space<vmem>>, vector<1x4x8x8xbf16>
      %488 = vector.shape_cast %487 : vector<1x4x8x8xbf16> to vector<4x8x8xbf16>
      %489 = arith.extf %488 : vector<4x8x8xbf16> to vector<4x8x8xf32>
      %c0_295 = arith.constant 0 : index
      %c0_296 = arith.constant 0 : index
      %c0_297 = arith.constant 0 : index
      %490 = vector.load %arg29[%c0_295, %c0_296, %c0_297] : memref<4x8x8xf32, #tpu.memory_space<vmem>>, vector<4x8x8xf32>
      tpu.vector_store %arg29[%c0_295, %c0_296, %c0_297], %489 {strides = array<i32>} : memref<4x8x8xf32, #tpu.memory_space<vmem>>, vector<4x8x8xf32>,
    } else {
    }
    %5 = arith.extf %1 : vector<8x32xbf16> to vector<8x32xf32>
    %c0_3 = arith.constant 0 : index
    %c0_4 = arith.constant 0 : index
    %6 = vector.load %arg9[%c0_3, %c0_4] : memref<1x32xf32, #tpu.memory_space<vmem>>, vector<1x32xf32>
    %c0_5 = arith.constant 0 : index
    %c0_6 = arith.constant 0 : index
    %7 = vector.load %arg10[%c0_5, %c0_6] : memref<1x32xf32, #tpu.memory_space<vmem>>, vector<1x32xf32>
    %cst = arith.constant dense<0.000000e+00> : vector<8xf32>
    %8 = vector.multi_reduction <add>, %5, %cst [1] : vector<8x32xf32> to vector<8xf32>
    %9 = vector.shape_cast %8 : vector<8xf32> to vector<8x1xf32>
    %cst_7 = arith.constant 3.200000e+01 : f32
    %10 = vector.broadcast %cst_7 : f32 to vector<8x1xf32>
    %11 = arith.divf %9, %10 : vector<8x1xf32>
    %12 = vector.broadcast %11 : vector<8x1xf32> to vector<8x32xf32>
    %13 = arith.subf %5, %12 : vector<8x32xf32>
    %14 = arith.mulf %13, %13 : vector<8x32xf32>
    %cst_8 = arith.constant dense<0.000000e+00> : vector<8xf32>
    %15 = vector.multi_reduction <add>, %14, %cst_8 [1] : vector<8x32xf32> to vector<8xf32>
    %16 = vector.shape_cast %15 : vector<8xf32> to vector<8x1xf32>
    %cst_9 = arith.constant 3.200000e+01 : f32
    %17 = vector.broadcast %cst_9 : f32 to vector<8x1xf32>
    %18 = arith.divf %16, %17 : vector<8x1xf32>
    %19 = vector.broadcast %11 : vector<8x1xf32> to vector<8x32xf32>
    %20 = arith.subf %5, %19 : vector<8x32xf32>
    %cst_10 = arith.constant 9.99999997E-7 : f32
    %21 = vector.broadcast %cst_10 : f32 to vector<8x1xf32>
    %22 = arith.addf %18, %21 : vector<8x1xf32>
    %23 = math.rsqrt %22 : vector<8x1xf32>
    %24 = vector.broadcast %23 : vector<8x1xf32> to vector<8x32xf32>
    %25 = arith.mulf %20, %24 : vector<8x32xf32>
    %26 = vector.broadcast %6 : vector<1x32xf32> to vector<8x32xf32>
    %27 = arith.mulf %25, %26 : vector<8x32xf32>
    %28 = vector.broadcast %7 : vector<1x32xf32> to vector<8x32xf32>
    %29 = arith.addf %27, %28 : vector<8x32xf32>
    %30 = arith.truncf %29 : vector<8x32xf32> to vector<8x32xbf16>
    %31 = tpu.iota {dimensions = array<i32: 0>} : vector<8x8xi32>
    %32 = tpu.iota {dimensions = array<i32: 1>} : vector<8x8xi32>
    %33 = arith.cmpi sge, %31, %32 : vector<8x8xi32>
    %cst_11 = arith.constant 0.000000e+00 : f32
    %34 = vector.broadcast %cst_11 : f32 to vector<8x32xf32>
    %c0_12 = arith.constant 0 : index
    %c0_13 = arith.constant 0 : index
    %c0_14 = arith.constant 0 : index
    %35 = vector.load %arg13[%c0_12, %c0_13, %c0_14] : memref<4x32x8xbf16, #tpu.memory_space<vmem>>, vector<1x32x8xbf16>
    %36 = vector.shape_cast %35 : vector<1x32x8xbf16> to vector<32x8xbf16>
    %cst_15 = arith.constant dense<0.000000e+00> : vector<8x8xf32>
    %37 = tpu.matmul %30, %36, %cst_15 {dimension_numbers = #tpu.dot_dimension_numbers<[1], [0], [0], [1], [0, 0, 1, 1], [], []>} : vector<8x32xbf16>, vector<32x8xbf16>, vector<8x8xf32> -> vector<8x8xf32>
    %c0_16 = arith.constant 0 : index
    %c0_17 = arith.constant 0 : index
    %c0_18 = arith.constant 0 : index
    %38 = vector.load %arg14[%c0_16, %c0_17, %c0_18] : memref<4x1x8xf32, #tpu.memory_space<vmem>>, vector<1x1x8xf32>
    %39 = vector.shape_cast %38 : vector<1x1x8xf32> to vector<1x8xf32>
    %40 = vector.broadcast %39 : vector<1x8xf32> to vector<8x8xf32>
    %41 = arith.addf %37, %40 : vector<8x8xf32>
    %c0_19 = arith.constant 0 : index
    %c0_20 = arith.constant 0 : index
    %c0_21 = arith.constant 0 : index
    %42 = vector.load %arg15[%c0_19, %c0_20, %c0_21] : memref<4x32x8xbf16, #tpu.memory_space<vmem>>, vector<1x32x8xbf16>
    %43 = vector.shape_cast %42 : vector<1x32x8xbf16> to vector<32x8xbf16>
    %cst_22 = arith.constant dense<0.000000e+00> : vector<8x8xf32>
    %44 = tpu.matmul %30, %43, %cst_22 {dimension_numbers = #tpu.dot_dimension_numbers<[1], [0], [0], [1], [0, 0, 1, 1], [], []>} : vector<8x32xbf16>, vector<32x8xbf16>, vector<8x8xf32> -> vector<8x8xf32>
    %c0_23 = arith.constant 0 : index
    %c0_24 = arith.constant 0 : index
    %c0_25 = arith.constant 0 : index
    %45 = vector.load %arg16[%c0_23, %c0_24, %c0_25] : memref<4x1x8xf32, #tpu.memory_space<vmem>>, vector<1x1x8xf32>
    %46 = vector.shape_cast %45 : vector<1x1x8xf32> to vector<1x8xf32>
    %47 = vector.broadcast %46 : vector<1x8xf32> to vector<8x8xf32>
    %48 = arith.addf %44, %47 : vector<8x8xf32>
    %c0_26 = arith.constant 0 : index
    %c0_27 = arith.constant 0 : index
    %c0_28 = arith.constant 0 : index
    %49 = vector.load %arg17[%c0_26, %c0_27, %c0_28] : memref<4x32x8xbf16, #tpu.memory_space<vmem>>, vector<1x32x8xbf16>
    %50 = vector.shape_cast %49 : vector<1x32x8xbf16> to vector<32x8xbf16>
    %cst_29 = arith.constant dense<0.000000e+00> : vector<8x8xf32>
    %51 = tpu.matmul %30, %50, %cst_29 {dimension_numbers = #tpu.dot_dimension_numbers<[1], [0], [0], [1], [0, 0, 1, 1], [], []>} : vector<8x32xbf16>, vector<32x8xbf16>, vector<8x8xf32> -> vector<8x8xf32>
    %c0_30 = arith.constant 0 : index
    %c0_31 = arith.constant 0 : index
    %c0_32 = arith.constant 0 : index
    %52 = vector.load %arg18[%c0_30, %c0_31, %c0_32] : memref<4x1x8xf32, #tpu.memory_space<vmem>>, vector<1x1x8xf32>
    %53 = vector.shape_cast %52 : vector<1x1x8xf32> to vector<1x8xf32>
    %54 = vector.broadcast %53 : vector<1x8xf32> to vector<8x8xf32>
    %55 = arith.addf %51, %54 : vector<8x8xf32>
    %c0_33 = arith.constant 0 : index
    %c0_34 = arith.constant 0 : index
    %c0_35 = arith.constant 0 : index
    %56 = vector.load %arg19[%c0_33, %c0_34, %c0_35] : memref<4x32x8xbf16, #tpu.memory_space<vmem>>, vector<1x32x8xbf16>
    %57 = vector.shape_cast %56 : vector<1x32x8xbf16> to vector<32x8xbf16>
    %cst_36 = arith.constant dense<0.000000e+00> : vector<8x8xf32>
    %58 = tpu.matmul %30, %57, %cst_36 {dimension_numbers = #tpu.dot_dimension_numbers<[1], [0], [0], [1], [0, 0, 1, 1], [], []>} : vector<8x32xbf16>, vector<32x8xbf16>, vector<8x8xf32> -> vector<8x8xf32>
    %c0_37 = arith.constant 0 : index
    %c0_38 = arith.constant 0 : index
    %c0_39 = arith.constant 0 : index
    %59 = vector.load %arg20[%c0_37, %c0_38, %c0_39] : memref<4x1x8xf32, #tpu.memory_space<vmem>>, vector<1x1x8xf32>
    %60 = vector.shape_cast %59 : vector<1x1x8xf32> to vector<1x8xf32>
    %61 = vector.broadcast %60 : vector<1x8xf32> to vector<8x8xf32>
    %62 = arith.addf %58, %61 : vector<8x8xf32>
    %c0_40 = arith.constant 0 : index
    %c0_41 = arith.constant 0 : index
    %c0_42 = arith.constant 0 : index
    %63 = vector.load %arg4[%c0_40, %c0_41, %c0_42] : memref<4x8x1xf32, #tpu.memory_space<vmem>>, vector<1x8x1xf32>
    %64 = vector.shape_cast %63 : vector<1x8x1xf32> to vector<8x1xf32>
    %65 = vector.broadcast %64 : vector<8x1xf32> to vector<8x8xf32>
    %66 = arith.mulf %41, %65 : vector<8x8xf32>
    %67 = arith.truncf %66 : vector<8x8xf32> to vector<8x8xbf16>
    %c0_43 = arith.constant 0 : index
    %c0_44 = arith.constant 0 : index
    %c0_45 = arith.constant 0 : index
    %68 = vector.load %arg5[%c0_43, %c0_44, %c0_45] : memref<4x8x1xf32, #tpu.memory_space<vmem>>, vector<1x8x1xf32>
    %69 = vector.shape_cast %68 : vector<1x8x1xf32> to vector<8x1xf32>
    %70 = vector.broadcast %69 : vector<8x1xf32> to vector<8x8xf32>
    %71 = arith.mulf %48, %70 : vector<8x8xf32>
    %72 = arith.truncf %71 : vector<8x8xf32> to vector<8x8xbf16>
    %c0_46 = arith.constant 0 : index
    %c0_47 = arith.constant 0 : index
    %c0_48 = arith.constant 0 : index
    %73 = vector.load %arg6[%c0_46, %c0_47, %c0_48] : memref<4x8x1xf32, #tpu.memory_space<vmem>>, vector<1x8x1xf32>
    %74 = vector.shape_cast %73 : vector<1x8x1xf32> to vector<8x1xf32>
    %75 = vector.broadcast %74 : vector<8x1xf32> to vector<8x8xf32>
    %76 = arith.mulf %48, %75 : vector<8x8xf32>
    %77 = arith.truncf %76 : vector<8x8xf32> to vector<8x8xbf16>
    %78 = arith.truncf %55 : vector<8x8xf32> to vector<8x8xbf16>
    %79 = arith.negf %62 : vector<8x8xf32>
    %80 = math.exp %79 : vector<8x8xf32>
    %cst_49 = arith.constant 1.000000e+00 : f32
    %81 = vector.broadcast %cst_49 : f32 to vector<8x8xf32>
    %82 = arith.addf %81, %80 : vector<8x8xf32>
    %83 = arith.divf %81, %82 : vector<8x8xf32>
    %84 = arith.mulf %62, %83 : vector<8x8xf32>
    %85 = arith.truncf %84 : vector<8x8xf32> to vector<8x8xbf16>
    %cst_50 = arith.constant dense<0.000000e+00> : vector<8x8xf32>
    %86 = tpu.matmul %67, %72, %cst_50 {dimension_numbers = #tpu.dot_dimension_numbers<[1], [1], [0], [0], [0, 0, 1, 0], [], []>} : vector<8x8xbf16>, vector<8x8xbf16>, vector<8x8xf32> -> vector<8x8xf32>
    %cst_51 = arith.constant 0.000000e+00 : f32
    %87 = vector.broadcast %cst_51 : f32 to vector<8x8xf32>
    %88 = arith.select %33, %86, %87 : vector<8x8xi1>, vector<8x8xf32>
    %89 = arith.truncf %88 : vector<8x8xf32> to vector<8x8xbf16>
    %cst_52 = arith.constant dense<0.000000e+00> : vector<8x8xf32>
    %90 = tpu.matmul %89, %78, %cst_52 {dimension_numbers = #tpu.dot_dimension_numbers<[1], [0], [0], [1], [0, 0, 1, 1], [], []>} : vector<8x8xbf16>, vector<8x8xbf16>, vector<8x8xf32> -> vector<8x8xf32>
    %c0_53 = arith.constant 0 : index
    %c0_54 = arith.constant 0 : index
    %c0_55 = arith.constant 0 : index
    %91 = vector.load %arg29[%c0_53, %c0_54, %c0_55] : memref<4x8x8xf32, #tpu.memory_space<vmem>>, vector<1x8x8xf32>
    %92 = vector.shape_cast %91 : vector<1x8x8xf32> to vector<8x8xf32>
    %93 = arith.truncf %92 : vector<8x8xf32> to vector<8x8xbf16>
    %cst_56 = arith.constant dense<0.000000e+00> : vector<8x8xf32>
    %94 = tpu.matmul %67, %93, %cst_56 {dimension_numbers = #tpu.dot_dimension_numbers<[1], [0], [0], [1], [0, 0, 1, 1], [], []>} : vector<8x8xbf16>, vector<8x8xbf16>, vector<8x8xf32> -> vector<8x8xf32>
    %c0_57 = arith.constant 0 : index
    %c0_58 = arith.constant 0 : index
    %c0_59 = arith.constant 0 : index
    %95 = vector.load %arg7[%c0_57, %c0_58, %c0_59] : memref<4x1x1xf32, #tpu.memory_space<vmem>>, vector<1x1x1xf32>
    %96 = vector.shape_cast %95 : vector<1x1x1xf32> to vector<1x1xf32>
    %97 = vector.broadcast %96 : vector<1x1xf32> to vector<8x8xf32>
    %98 = arith.mulf %94, %97 : vector<8x8xf32>
    %99 = arith.addf %90, %98 : vector<8x8xf32>
    %cst_60 = arith.constant dense<0.000000e+00> : vector<8x8xf32>
    %100 = tpu.matmul %77, %78, %cst_60 {dimension_numbers = #tpu.dot_dimension_numbers<[0], [0], [1], [1], [0, 1, 1, 1], [], []>} : vector<8x8xbf16>, vector<8x8xbf16>, vector<8x8xf32> -> vector<8x8xf32>
    %c0_61 = arith.constant 0 : index
    %c0_62 = arith.constant 0 : index
    %c0_63 = arith.constant 0 : index
    %101 = vector.load %arg8[%c0_61, %c0_62, %c0_63] : memref<4x1x1xf32, #tpu.memory_space<vmem>>, vector<1x1x1xf32>
    %102 = vector.shape_cast %101 : vector<1x1x1xf32> to vector<1x1xf32>
    %103 = vector.broadcast %102 : vector<1x1xf32> to vector<8x8xf32>
    %104 = arith.mulf %92, %103 : vector<8x8xf32>
    %105 = arith.addf %100, %104 : vector<8x8xf32>
    %c0_64 = arith.constant 0 : index
    %c0_65 = arith.constant 0 : index
    %c0_66 = arith.constant 0 : index
    %106 = vector.load %arg29[%c0_64, %c0_65, %c0_66] : memref<4x8x8xf32, #tpu.memory_space<vmem>>, vector<1x8x8xf32>
    %107 = vector.shape_cast %106 : vector<1x8x8xf32> to vector<8x8xf32>
    %108 = vector.shape_cast %105 : vector<8x8xf32> to vector<1x8x8xf32>
    tpu.vector_store %arg29[%c0_64, %c0_65, %c0_66], %108 {strides = array<i32>} : memref<4x8x8xf32, #tpu.memory_space<vmem>>, vector<1x8x8xf32>,
    %cst_67 = arith.constant dense<0.000000e+00> : vector<8xf32>
    %109 = vector.multi_reduction <add>, %99, %cst_67 [1] : vector<8x8xf32> to vector<8xf32>
    %110 = vector.shape_cast %109 : vector<8xf32> to vector<8x1xf32>
    %cst_68 = arith.constant 8.000000e+00 : f32
    %111 = vector.broadcast %cst_68 : f32 to vector<8x1xf32>
    %112 = arith.divf %110, %111 : vector<8x1xf32>
    %113 = vector.broadcast %112 : vector<8x1xf32> to vector<8x8xf32>
    %114 = arith.subf %99, %113 : vector<8x8xf32>
    %115 = arith.mulf %114, %114 : vector<8x8xf32>
    %cst_69 = arith.constant dense<0.000000e+00> : vector<8xf32>
    %116 = vector.multi_reduction <add>, %115, %cst_69 [1] : vector<8x8xf32> to vector<8xf32>
    %117 = vector.shape_cast %116 : vector<8xf32> to vector<8x1xf32>
    %cst_70 = arith.constant 8.000000e+00 : f32
    %118 = vector.broadcast %cst_70 : f32 to vector<8x1xf32>
    %119 = arith.divf %117, %118 : vector<8x1xf32>
    %120 = vector.broadcast %112 : vector<8x1xf32> to vector<8x8xf32>
    %121 = arith.subf %99, %120 : vector<8x8xf32>
    %cst_71 = arith.constant 9.99999997E-7 : f32
    %122 = vector.broadcast %cst_71 : f32 to vector<8x1xf32>
    %123 = arith.addf %119, %122 : vector<8x1xf32>
    %124 = math.rsqrt %123 : vector<8x1xf32>
    %125 = vector.broadcast %124 : vector<8x1xf32> to vector<8x8xf32>
    %126 = arith.mulf %121, %125 : vector<8x8xf32>
    %127 = arith.extf %85 : vector<8x8xbf16> to vector<8x8xf32>
    %128 = arith.mulf %126, %127 : vector<8x8xf32>
    %129 = arith.truncf %128 : vector<8x8xf32> to vector<8x8xbf16>
    %c0_72 = arith.constant 0 : index
    %c0_73 = arith.constant 0 : index
    %c0_74 = arith.constant 0 : index
    %130 = vector.load %arg21[%c0_72, %c0_73, %c0_74] : memref<4x8x32xbf16, #tpu.memory_space<vmem>>, vector<1x8x32xbf16>
    %131 = vector.shape_cast %130 : vector<1x8x32xbf16> to vector<8x32xbf16>
    %cst_75 = arith.constant dense<0.000000e+00> : vector<8x32xf32>
    %132 = tpu.matmul %129, %131, %cst_75 {dimension_numbers = #tpu.dot_dimension_numbers<[1], [0], [0], [1], [0, 0, 1, 1], [], []>} : vector<8x8xbf16>, vector<8x32xbf16>, vector<8x32xf32> -> vector<8x32xf32>
    %133 = arith.addf %34, %132 : vector<8x32xf32>
    %c1 = arith.constant 1 : index
    %c0_76 = arith.constant 0 : index
    %c0_77 = arith.constant 0 : index
    %134 = vector.load %arg13[%c1, %c0_76, %c0_77] : memref<4x32x8xbf16, #tpu.memory_space<vmem>>, vector<1x32x8xbf16>
    %135 = vector.shape_cast %134 : vector<1x32x8xbf16> to vector<32x8xbf16>
    %cst_78 = arith.constant dense<0.000000e+00> : vector<8x8xf32>
    %136 = tpu.matmul %30, %135, %cst_78 {dimension_numbers = #tpu.dot_dimension_numbers<[1], [0], [0], [1], [0, 0, 1, 1], [], []>} : vector<8x32xbf16>, vector<32x8xbf16>, vector<8x8xf32> -> vector<8x8xf32>
    %c1_79 = arith.constant 1 : index
    %c0_80 = arith.constant 0 : index
    %c0_81 = arith.constant 0 : index
    %137 = vector.load %arg14[%c1_79, %c0_80, %c0_81] : memref<4x1x8xf32, #tpu.memory_space<vmem>>, vector<1x1x8xf32>
    %138 = vector.shape_cast %137 : vector<1x1x8xf32> to vector<1x8xf32>
    %139 = vector.broadcast %138 : vector<1x8xf32> to vector<8x8xf32>
    %140 = arith.addf %136, %139 : vector<8x8xf32>
    %c1_82 = arith.constant 1 : index
    %c0_83 = arith.constant 0 : index
    %c0_84 = arith.constant 0 : index
    %141 = vector.load %arg15[%c1_82, %c0_83, %c0_84] : memref<4x32x8xbf16, #tpu.memory_space<vmem>>, vector<1x32x8xbf16>
    %142 = vector.shape_cast %141 : vector<1x32x8xbf16> to vector<32x8xbf16>
    %cst_85 = arith.constant dense<0.000000e+00> : vector<8x8xf32>
    %143 = tpu.matmul %30, %142, %cst_85 {dimension_numbers = #tpu.dot_dimension_numbers<[1], [0], [0], [1], [0, 0, 1, 1], [], []>} : vector<8x32xbf16>, vector<32x8xbf16>, vector<8x8xf32> -> vector<8x8xf32>
    %c1_86 = arith.constant 1 : index
    %c0_87 = arith.constant 0 : index
    %c0_88 = arith.constant 0 : index
    %144 = vector.load %arg16[%c1_86, %c0_87, %c0_88] : memref<4x1x8xf32, #tpu.memory_space<vmem>>, vector<1x1x8xf32>
    %145 = vector.shape_cast %144 : vector<1x1x8xf32> to vector<1x8xf32>
    %146 = vector.broadcast %145 : vector<1x8xf32> to vector<8x8xf32>
    %147 = arith.addf %143, %146 : vector<8x8xf32>
    %c1_89 = arith.constant 1 : index
    %c0_90 = arith.constant 0 : index
    %c0_91 = arith.constant 0 : index
    %148 = vector.load %arg17[%c1_89, %c0_90, %c0_91] : memref<4x32x8xbf16, #tpu.memory_space<vmem>>, vector<1x32x8xbf16>
    %149 = vector.shape_cast %148 : vector<1x32x8xbf16> to vector<32x8xbf16>
    %cst_92 = arith.constant dense<0.000000e+00> : vector<8x8xf32>
    %150 = tpu.matmul %30, %149, %cst_92 {dimension_numbers = #tpu.dot_dimension_numbers<[1], [0], [0], [1], [0, 0, 1, 1], [], []>} : vector<8x32xbf16>, vector<32x8xbf16>, vector<8x8xf32> -> vector<8x8xf32>
    %c1_93 = arith.constant 1 : index
    %c0_94 = arith.constant 0 : index
    %c0_95 = arith.constant 0 : index
    %151 = vector.load %arg18[%c1_93, %c0_94, %c0_95] : memref<4x1x8xf32, #tpu.memory_space<vmem>>, vector<1x1x8xf32>
    %152 = vector.shape_cast %151 : vector<1x1x8xf32> to vector<1x8xf32>
    %153 = vector.broadcast %152 : vector<1x8xf32> to vector<8x8xf32>
    %154 = arith.addf %150, %153 : vector<8x8xf32>
    %c1_96 = arith.constant 1 : index
    %c0_97 = arith.constant 0 : index
    %c0_98 = arith.constant 0 : index
    %155 = vector.load %arg19[%c1_96, %c0_97, %c0_98] : memref<4x32x8xbf16, #tpu.memory_space<vmem>>, vector<1x32x8xbf16>
    %156 = vector.shape_cast %155 : vector<1x32x8xbf16> to vector<32x8xbf16>
    %cst_99 = arith.constant dense<0.000000e+00> : vector<8x8xf32>
    %157 = tpu.matmul %30, %156, %cst_99 {dimension_numbers = #tpu.dot_dimension_numbers<[1], [0], [0], [1], [0, 0, 1, 1], [], []>} : vector<8x32xbf16>, vector<32x8xbf16>, vector<8x8xf32> -> vector<8x8xf32>
    %c1_100 = arith.constant 1 : index
    %c0_101 = arith.constant 0 : index
    %c0_102 = arith.constant 0 : index
    %158 = vector.load %arg20[%c1_100, %c0_101, %c0_102] : memref<4x1x8xf32, #tpu.memory_space<vmem>>, vector<1x1x8xf32>
    %159 = vector.shape_cast %158 : vector<1x1x8xf32> to vector<1x8xf32>
    %160 = vector.broadcast %159 : vector<1x8xf32> to vector<8x8xf32>
    %161 = arith.addf %157, %160 : vector<8x8xf32>
    %c1_103 = arith.constant 1 : index
    %c0_104 = arith.constant 0 : index
    %c0_105 = arith.constant 0 : index
    %162 = vector.load %arg4[%c1_103, %c0_104, %c0_105] : memref<4x8x1xf32, #tpu.memory_space<vmem>>, vector<1x8x1xf32>
    %163 = vector.shape_cast %162 : vector<1x8x1xf32> to vector<8x1xf32>
    %164 = vector.broadcast %163 : vector<8x1xf32> to vector<8x8xf32>
    %165 = arith.mulf %140, %164 : vector<8x8xf32>
    %166 = arith.truncf %165 : vector<8x8xf32> to vector<8x8xbf16>
    %c1_106 = arith.constant 1 : index
    %c0_107 = arith.constant 0 : index
    %c0_108 = arith.constant 0 : index
    %167 = vector.load %arg5[%c1_106, %c0_107, %c0_108] : memref<4x8x1xf32, #tpu.memory_space<vmem>>, vector<1x8x1xf32>
    %168 = vector.shape_cast %167 : vector<1x8x1xf32> to vector<8x1xf32>
    %169 = vector.broadcast %168 : vector<8x1xf32> to vector<8x8xf32>
    %170 = arith.mulf %147, %169 : vector<8x8xf32>
    %171 = arith.truncf %170 : vector<8x8xf32> to vector<8x8xbf16>
    %c1_109 = arith.constant 1 : index
    %c0_110 = arith.constant 0 : index
    %c0_111 = arith.constant 0 : index
    %172 = vector.load %arg6[%c1_109, %c0_110, %c0_111] : memref<4x8x1xf32, #tpu.memory_space<vmem>>, vector<1x8x1xf32>
    %173 = vector.shape_cast %172 : vector<1x8x1xf32> to vector<8x1xf32>
    %174 = vector.broadcast %173 : vector<8x1xf32> to vector<8x8xf32>
    %175 = arith.mulf %147, %174 : vector<8x8xf32>
    %176 = arith.truncf %175 : vector<8x8xf32> to vector<8x8xbf16>
    %177 = arith.truncf %154 : vector<8x8xf32> to vector<8x8xbf16>
    %178 = arith.negf %161 : vector<8x8xf32>
    %179 = math.exp %178 : vector<8x8xf32>
    %cst_112 = arith.constant 1.000000e+00 : f32
    %180 = vector.broadcast %cst_112 : f32 to vector<8x8xf32>
    %181 = arith.addf %180, %179 : vector<8x8xf32>
    %182 = arith.divf %180, %181 : vector<8x8xf32>
    %183 = arith.mulf %161, %182 : vector<8x8xf32>
    %184 = arith.truncf %183 : vector<8x8xf32> to vector<8x8xbf16>
    %cst_113 = arith.constant dense<0.000000e+00> : vector<8x8xf32>
    %185 = tpu.matmul %166, %171, %cst_113 {dimension_numbers = #tpu.dot_dimension_numbers<[1], [1], [0], [0], [0, 0, 1, 0], [], []>} : vector<8x8xbf16>, vector<8x8xbf16>, vector<8x8xf32> -> vector<8x8xf32>
    %cst_114 = arith.constant 0.000000e+00 : f32
    %186 = vector.broadcast %cst_114 : f32 to vector<8x8xf32>
    %187 = arith.select %33, %185, %186 : vector<8x8xi1>, vector<8x8xf32>
    %188 = arith.truncf %187 : vector<8x8xf32> to vector<8x8xbf16>
    %cst_115 = arith.constant dense<0.000000e+00> : vector<8x8xf32>
    %189 = tpu.matmul %188, %177, %cst_115 {dimension_numbers = #tpu.dot_dimension_numbers<[1], [0], [0], [1], [0, 0, 1, 1], [], []>} : vector<8x8xbf16>, vector<8x8xbf16>, vector<8x8xf32> -> vector<8x8xf32>
    %c1_116 = arith.constant 1 : index
    %c0_117 = arith.constant 0 : index
    %c0_118 = arith.constant 0 : index
    %190 = vector.load %arg29[%c1_116, %c0_117, %c0_118] : memref<4x8x8xf32, #tpu.memory_space<vmem>>, vector<1x8x8xf32>
    %191 = vector.shape_cast %190 : vector<1x8x8xf32> to vector<8x8xf32>
    %192 = arith.truncf %191 : vector<8x8xf32> to vector<8x8xbf16>
    %cst_119 = arith.constant dense<0.000000e+00> : vector<8x8xf32>
    %193 = tpu.matmul %166, %192, %cst_119 {dimension_numbers = #tpu.dot_dimension_numbers<[1], [0], [0], [1], [0, 0, 1, 1], [], []>} : vector<8x8xbf16>, vector<8x8xbf16>, vector<8x8xf32> -> vector<8x8xf32>
    %c1_120 = arith.constant 1 : index
    %c0_121 = arith.constant 0 : index
    %c0_122 = arith.constant 0 : index
    %194 = vector.load %arg7[%c1_120, %c0_121, %c0_122] : memref<4x1x1xf32, #tpu.memory_space<vmem>>, vector<1x1x1xf32>
    %195 = vector.shape_cast %194 : vector<1x1x1xf32> to vector<1x1xf32>
    %196 = vector.broadcast %195 : vector<1x1xf32> to vector<8x8xf32>
    %197 = arith.mulf %193, %196 : vector<8x8xf32>
    %198 = arith.addf %189, %197 : vector<8x8xf32>
    %cst_123 = arith.constant dense<0.000000e+00> : vector<8x8xf32>
    %199 = tpu.matmul %176, %177, %cst_123 {dimension_numbers = #tpu.dot_dimension_numbers<[0], [0], [1], [1], [0, 1, 1, 1], [], []>} : vector<8x8xbf16>, vector<8x8xbf16>, vector<8x8xf32> -> vector<8x8xf32>
    %c1_124 = arith.constant 1 : index
    %c0_125 = arith.constant 0 : index
    %c0_126 = arith.constant 0 : index
    %200 = vector.load %arg8[%c1_124, %c0_125, %c0_126] : memref<4x1x1xf32, #tpu.memory_space<vmem>>, vector<1x1x1xf32>
    %201 = vector.shape_cast %200 : vector<1x1x1xf32> to vector<1x1xf32>
    %202 = vector.broadcast %201 : vector<1x1xf32> to vector<8x8xf32>
    %203 = arith.mulf %191, %202 : vector<8x8xf32>
    %204 = arith.addf %199, %203 : vector<8x8xf32>
    %c1_127 = arith.constant 1 : index
    %c0_128 = arith.constant 0 : index
    %c0_129 = arith.constant 0 : index
    %205 = vector.load %arg29[%c1_127, %c0_128, %c0_129] : memref<4x8x8xf32, #tpu.memory_space<vmem>>, vector<1x8x8xf32>
    %206 = vector.shape_cast %205 : vector<1x8x8xf32> to vector<8x8xf32>
    %207 = vector.shape_cast %204 : vector<8x8xf32> to vector<1x8x8xf32>
    tpu.vector_store %arg29[%c1_127, %c0_128, %c0_129], %207 {strides = array<i32>} : memref<4x8x8xf32, #tpu.memory_space<vmem>>, vector<1x8x8xf32>,
    %cst_130 = arith.constant dense<0.000000e+00> : vector<8xf32>
    %208 = vector.multi_reduction <add>, %198, %cst_130 [1] : vector<8x8xf32> to vector<8xf32>
    %209 = vector.shape_cast %208 : vector<8xf32> to vector<8x1xf32>
    %cst_131 = arith.constant 8.000000e+00 : f32
    %210 = vector.broadcast %cst_131 : f32 to vector<8x1xf32>
    %211 = arith.divf %209, %210 : vector<8x1xf32>
    %212 = vector.broadcast %211 : vector<8x1xf32> to vector<8x8xf32>
    %213 = arith.subf %198, %212 : vector<8x8xf32>
    %214 = arith.mulf %213, %213 : vector<8x8xf32>
    %cst_132 = arith.constant dense<0.000000e+00> : vector<8xf32>
    %215 = vector.multi_reduction <add>, %214, %cst_132 [1] : vector<8x8xf32> to vector<8xf32>
    %216 = vector.shape_cast %215 : vector<8xf32> to vector<8x1xf32>
    %cst_133 = arith.constant 8.000000e+00 : f32
    %217 = vector.broadcast %cst_133 : f32 to vector<8x1xf32>
    %218 = arith.divf %216, %217 : vector<8x1xf32>
    %219 = vector.broadcast %211 : vector<8x1xf32> to vector<8x8xf32>
    %220 = arith.subf %198, %219 : vector<8x8xf32>
    %cst_134 = arith.constant 9.99999997E-7 : f32
    %221 = vector.broadcast %cst_134 : f32 to vector<8x1xf32>
    %222 = arith.addf %218, %221 : vector<8x1xf32>
    %223 = math.rsqrt %222 : vector<8x1xf32>
    %224 = vector.broadcast %223 : vector<8x1xf32> to vector<8x8xf32>
    %225 = arith.mulf %220, %224 : vector<8x8xf32>
    %226 = arith.extf %184 : vector<8x8xbf16> to vector<8x8xf32>
    %227 = arith.mulf %225, %226 : vector<8x8xf32>
    %228 = arith.truncf %227 : vector<8x8xf32> to vector<8x8xbf16>
    %c1_135 = arith.constant 1 : index
    %c0_136 = arith.constant 0 : index
    %c0_137 = arith.constant 0 : index
    %229 = vector.load %arg21[%c1_135, %c0_136, %c0_137] : memref<4x8x32xbf16, #tpu.memory_space<vmem>>, vector<1x8x32xbf16>
    %230 = vector.shape_cast %229 : vector<1x8x32xbf16> to vector<8x32xbf16>
    %cst_138 = arith.constant dense<0.000000e+00> : vector<8x32xf32>
    %231 = tpu.matmul %228, %230, %cst_138 {dimension_numbers = #tpu.dot_dimension_numbers<[1], [0], [0], [1], [0, 0, 1, 1], [], []>} : vector<8x8xbf16>, vector<8x32xbf16>, vector<8x32xf32> -> vector<8x32xf32>
    %232 = arith.addf %133, %231 : vector<8x32xf32>
    %c2 = arith.constant 2 : index
    %c0_139 = arith.constant 0 : index
    %c0_140 = arith.constant 0 : index
    %233 = vector.load %arg13[%c2, %c0_139, %c0_140] : memref<4x32x8xbf16, #tpu.memory_space<vmem>>, vector<1x32x8xbf16>
    %234 = vector.shape_cast %233 : vector<1x32x8xbf16> to vector<32x8xbf16>
    %cst_141 = arith.constant dense<0.000000e+00> : vector<8x8xf32>
    %235 = tpu.matmul %30, %234, %cst_141 {dimension_numbers = #tpu.dot_dimension_numbers<[1], [0], [0], [1], [0, 0, 1, 1], [], []>} : vector<8x32xbf16>, vector<32x8xbf16>, vector<8x8xf32> -> vector<8x8xf32>
    %c2_142 = arith.constant 2 : index
    %c0_143 = arith.constant 0 : index
    %c0_144 = arith.constant 0 : index
    %236 = vector.load %arg14[%c2_142, %c0_143, %c0_144] : memref<4x1x8xf32, #tpu.memory_space<vmem>>, vector<1x1x8xf32>
    %237 = vector.shape_cast %236 : vector<1x1x8xf32> to vector<1x8xf32>
    %238 = vector.broadcast %237 : vector<1x8xf32> to vector<8x8xf32>
    %239 = arith.addf %235, %238 : vector<8x8xf32>
    %c2_145 = arith.constant 2 : index
    %c0_146 = arith.constant 0 : index
    %c0_147 = arith.constant 0 : index
    %240 = vector.load %arg15[%c2_145, %c0_146, %c0_147] : memref<4x32x8xbf16, #tpu.memory_space<vmem>>, vector<1x32x8xbf16>
    %241 = vector.shape_cast %240 : vector<1x32x8xbf16> to vector<32x8xbf16>
    %cst_148 = arith.constant dense<0.000000e+00> : vector<8x8xf32>
    %242 = tpu.matmul %30, %241, %cst_148 {dimension_numbers = #tpu.dot_dimension_numbers<[1], [0], [0], [1], [0, 0, 1, 1], [], []>} : vector<8x32xbf16>, vector<32x8xbf16>, vector<8x8xf32> -> vector<8x8xf32>
    %c2_149 = arith.constant 2 : index
    %c0_150 = arith.constant 0 : index
    %c0_151 = arith.constant 0 : index
    %243 = vector.load %arg16[%c2_149, %c0_150, %c0_151] : memref<4x1x8xf32, #tpu.memory_space<vmem>>, vector<1x1x8xf32>
    %244 = vector.shape_cast %243 : vector<1x1x8xf32> to vector<1x8xf32>
    %245 = vector.broadcast %244 : vector<1x8xf32> to vector<8x8xf32>
    %246 = arith.addf %242, %245 : vector<8x8xf32>
    %c2_152 = arith.constant 2 : index
    %c0_153 = arith.constant 0 : index
    %c0_154 = arith.constant 0 : index
    %247 = vector.load %arg17[%c2_152, %c0_153, %c0_154] : memref<4x32x8xbf16, #tpu.memory_space<vmem>>, vector<1x32x8xbf16>
    %248 = vector.shape_cast %247 : vector<1x32x8xbf16> to vector<32x8xbf16>
    %cst_155 = arith.constant dense<0.000000e+00> : vector<8x8xf32>
    %249 = tpu.matmul %30, %248, %cst_155 {dimension_numbers = #tpu.dot_dimension_numbers<[1], [0], [0], [1], [0, 0, 1, 1], [], []>} : vector<8x32xbf16>, vector<32x8xbf16>, vector<8x8xf32> -> vector<8x8xf32>
    %c2_156 = arith.constant 2 : index
    %c0_157 = arith.constant 0 : index
    %c0_158 = arith.constant 0 : index
    %250 = vector.load %arg18[%c2_156, %c0_157, %c0_158] : memref<4x1x8xf32, #tpu.memory_space<vmem>>, vector<1x1x8xf32>
    %251 = vector.shape_cast %250 : vector<1x1x8xf32> to vector<1x8xf32>
    %252 = vector.broadcast %251 : vector<1x8xf32> to vector<8x8xf32>
    %253 = arith.addf %249, %252 : vector<8x8xf32>
    %c2_159 = arith.constant 2 : index
    %c0_160 = arith.constant 0 : index
    %c0_161 = arith.constant 0 : index
    %254 = vector.load %arg19[%c2_159, %c0_160, %c0_161] : memref<4x32x8xbf16, #tpu.memory_space<vmem>>, vector<1x32x8xbf16>
    %255 = vector.shape_cast %254 : vector<1x32x8xbf16> to vector<32x8xbf16>
    %cst_162 = arith.constant dense<0.000000e+00> : vector<8x8xf32>
    %256 = tpu.matmul %30, %255, %cst_162 {dimension_numbers = #tpu.dot_dimension_numbers<[1], [0], [0], [1], [0, 0, 1, 1], [], []>} : vector<8x32xbf16>, vector<32x8xbf16>, vector<8x8xf32> -> vector<8x8xf32>
    %c2_163 = arith.constant 2 : index
    %c0_164 = arith.constant 0 : index
    %c0_165 = arith.constant 0 : index
    %257 = vector.load %arg20[%c2_163, %c0_164, %c0_165] : memref<4x1x8xf32, #tpu.memory_space<vmem>>, vector<1x1x8xf32>
    %258 = vector.shape_cast %257 : vector<1x1x8xf32> to vector<1x8xf32>
    %259 = vector.broadcast %258 : vector<1x8xf32> to vector<8x8xf32>
    %260 = arith.addf %256, %259 : vector<8x8xf32>
    %c2_166 = arith.constant 2 : index
    %c0_167 = arith.constant 0 : index
    %c0_168 = arith.constant 0 : index
    %261 = vector.load %arg4[%c2_166, %c0_167, %c0_168] : memref<4x8x1xf32, #tpu.memory_space<vmem>>, vector<1x8x1xf32>
    %262 = vector.shape_cast %261 : vector<1x8x1xf32> to vector<8x1xf32>
    %263 = vector.broadcast %262 : vector<8x1xf32> to vector<8x8xf32>
    %264 = arith.mulf %239, %263 : vector<8x8xf32>
    %265 = arith.truncf %264 : vector<8x8xf32> to vector<8x8xbf16>
    %c2_169 = arith.constant 2 : index
    %c0_170 = arith.constant 0 : index
    %c0_171 = arith.constant 0 : index
    %266 = vector.load %arg5[%c2_169, %c0_170, %c0_171] : memref<4x8x1xf32, #tpu.memory_space<vmem>>, vector<1x8x1xf32>
    %267 = vector.shape_cast %266 : vector<1x8x1xf32> to vector<8x1xf32>
    %268 = vector.broadcast %267 : vector<8x1xf32> to vector<8x8xf32>
    %269 = arith.mulf %246, %268 : vector<8x8xf32>
    %270 = arith.truncf %269 : vector<8x8xf32> to vector<8x8xbf16>
    %c2_172 = arith.constant 2 : index
    %c0_173 = arith.constant 0 : index
    %c0_174 = arith.constant 0 : index
    %271 = vector.load %arg6[%c2_172, %c0_173, %c0_174] : memref<4x8x1xf32, #tpu.memory_space<vmem>>, vector<1x8x1xf32>
    %272 = vector.shape_cast %271 : vector<1x8x1xf32> to vector<8x1xf32>
    %273 = vector.broadcast %272 : vector<8x1xf32> to vector<8x8xf32>
    %274 = arith.mulf %246, %273 : vector<8x8xf32>
    %275 = arith.truncf %274 : vector<8x8xf32> to vector<8x8xbf16>
    %276 = arith.truncf %253 : vector<8x8xf32> to vector<8x8xbf16>
    %277 = arith.negf %260 : vector<8x8xf32>
    %278 = math.exp %277 : vector<8x8xf32>
    %cst_175 = arith.constant 1.000000e+00 : f32
    %279 = vector.broadcast %cst_175 : f32 to vector<8x8xf32>
    %280 = arith.addf %279, %278 : vector<8x8xf32>
    %281 = arith.divf %279, %280 : vector<8x8xf32>
    %282 = arith.mulf %260, %281 : vector<8x8xf32>
    %283 = arith.truncf %282 : vector<8x8xf32> to vector<8x8xbf16>
    %cst_176 = arith.constant dense<0.000000e+00> : vector<8x8xf32>
    %284 = tpu.matmul %265, %270, %cst_176 {dimension_numbers = #tpu.dot_dimension_numbers<[1], [1], [0], [0], [0, 0, 1, 0], [], []>} : vector<8x8xbf16>, vector<8x8xbf16>, vector<8x8xf32> -> vector<8x8xf32>
    %cst_177 = arith.constant 0.000000e+00 : f32
    %285 = vector.broadcast %cst_177 : f32 to vector<8x8xf32>
    %286 = arith.select %33, %284, %285 : vector<8x8xi1>, vector<8x8xf32>
    %287 = arith.truncf %286 : vector<8x8xf32> to vector<8x8xbf16>
    %cst_178 = arith.constant dense<0.000000e+00> : vector<8x8xf32>
    %288 = tpu.matmul %287, %276, %cst_178 {dimension_numbers = #tpu.dot_dimension_numbers<[1], [0], [0], [1], [0, 0, 1, 1], [], []>} : vector<8x8xbf16>, vector<8x8xbf16>, vector<8x8xf32> -> vector<8x8xf32>
    %c2_179 = arith.constant 2 : index
    %c0_180 = arith.constant 0 : index
    %c0_181 = arith.constant 0 : index
    %289 = vector.load %arg29[%c2_179, %c0_180, %c0_181] : memref<4x8x8xf32, #tpu.memory_space<vmem>>, vector<1x8x8xf32>
    %290 = vector.shape_cast %289 : vector<1x8x8xf32> to vector<8x8xf32>
    %291 = arith.truncf %290 : vector<8x8xf32> to vector<8x8xbf16>
    %cst_182 = arith.constant dense<0.000000e+00> : vector<8x8xf32>
    %292 = tpu.matmul %265, %291, %cst_182 {dimension_numbers = #tpu.dot_dimension_numbers<[1], [0], [0], [1], [0, 0, 1, 1], [], []>} : vector<8x8xbf16>, vector<8x8xbf16>, vector<8x8xf32> -> vector<8x8xf32>
    %c2_183 = arith.constant 2 : index
    %c0_184 = arith.constant 0 : index
    %c0_185 = arith.constant 0 : index
    %293 = vector.load %arg7[%c2_183, %c0_184, %c0_185] : memref<4x1x1xf32, #tpu.memory_space<vmem>>, vector<1x1x1xf32>
    %294 = vector.shape_cast %293 : vector<1x1x1xf32> to vector<1x1xf32>
    %295 = vector.broadcast %294 : vector<1x1xf32> to vector<8x8xf32>
    %296 = arith.mulf %292, %295 : vector<8x8xf32>
    %297 = arith.addf %288, %296 : vector<8x8xf32>
    %cst_186 = arith.constant dense<0.000000e+00> : vector<8x8xf32>
    %298 = tpu.matmul %275, %276, %cst_186 {dimension_numbers = #tpu.dot_dimension_numbers<[0], [0], [1], [1], [0, 1, 1, 1], [], []>} : vector<8x8xbf16>, vector<8x8xbf16>, vector<8x8xf32> -> vector<8x8xf32>
    %c2_187 = arith.constant 2 : index
    %c0_188 = arith.constant 0 : index
    %c0_189 = arith.constant 0 : index
    %299 = vector.load %arg8[%c2_187, %c0_188, %c0_189] : memref<4x1x1xf32, #tpu.memory_space<vmem>>, vector<1x1x1xf32>
    %300 = vector.shape_cast %299 : vector<1x1x1xf32> to vector<1x1xf32>
    %301 = vector.broadcast %300 : vector<1x1xf32> to vector<8x8xf32>
    %302 = arith.mulf %290, %301 : vector<8x8xf32>
    %303 = arith.addf %298, %302 : vector<8x8xf32>
    %c2_190 = arith.constant 2 : index
    %c0_191 = arith.constant 0 : index
    %c0_192 = arith.constant 0 : index
    %304 = vector.load %arg29[%c2_190, %c0_191, %c0_192] : memref<4x8x8xf32, #tpu.memory_space<vmem>>, vector<1x8x8xf32>
    %305 = vector.shape_cast %304 : vector<1x8x8xf32> to vector<8x8xf32>
    %306 = vector.shape_cast %303 : vector<8x8xf32> to vector<1x8x8xf32>
    tpu.vector_store %arg29[%c2_190, %c0_191, %c0_192], %306 {strides = array<i32>} : memref<4x8x8xf32, #tpu.memory_space<vmem>>, vector<1x8x8xf32>,
    %cst_193 = arith.constant dense<0.000000e+00> : vector<8xf32>
    %307 = vector.multi_reduction <add>, %297, %cst_193 [1] : vector<8x8xf32> to vector<8xf32>
    %308 = vector.shape_cast %307 : vector<8xf32> to vector<8x1xf32>
    %cst_194 = arith.constant 8.000000e+00 : f32
    %309 = vector.broadcast %cst_194 : f32 to vector<8x1xf32>
    %310 = arith.divf %308, %309 : vector<8x1xf32>
    %311 = vector.broadcast %310 : vector<8x1xf32> to vector<8x8xf32>
    %312 = arith.subf %297, %311 : vector<8x8xf32>
    %313 = arith.mulf %312, %312 : vector<8x8xf32>
    %cst_195 = arith.constant dense<0.000000e+00> : vector<8xf32>
    %314 = vector.multi_reduction <add>, %313, %cst_195 [1] : vector<8x8xf32> to vector<8xf32>
    %315 = vector.shape_cast %314 : vector<8xf32> to vector<8x1xf32>
    %cst_196 = arith.constant 8.000000e+00 : f32
    %316 = vector.broadcast %cst_196 : f32 to vector<8x1xf32>
    %317 = arith.divf %315, %316 : vector<8x1xf32>
    %318 = vector.broadcast %310 : vector<8x1xf32> to vector<8x8xf32>
    %319 = arith.subf %297, %318 : vector<8x8xf32>
    %cst_197 = arith.constant 9.99999997E-7 : f32
    %320 = vector.broadcast %cst_197 : f32 to vector<8x1xf32>
    %321 = arith.addf %317, %320 : vector<8x1xf32>
    %322 = math.rsqrt %321 : vector<8x1xf32>
    %323 = vector.broadcast %322 : vector<8x1xf32> to vector<8x8xf32>
    %324 = arith.mulf %319, %323 : vector<8x8xf32>
    %325 = arith.extf %283 : vector<8x8xbf16> to vector<8x8xf32>
    %326 = arith.mulf %324, %325 : vector<8x8xf32>
    %327 = arith.truncf %326 : vector<8x8xf32> to vector<8x8xbf16>
    %c2_198 = arith.constant 2 : index
    %c0_199 = arith.constant 0 : index
    %c0_200 = arith.constant 0 : index
    %328 = vector.load %arg21[%c2_198, %c0_199, %c0_200] : memref<4x8x32xbf16, #tpu.memory_space<vmem>>, vector<1x8x32xbf16>
    %329 = vector.shape_cast %328 : vector<1x8x32xbf16> to vector<8x32xbf16>
    %cst_201 = arith.constant dense<0.000000e+00> : vector<8x32xf32>
    %330 = tpu.matmul %327, %329, %cst_201 {dimension_numbers = #tpu.dot_dimension_numbers<[1], [0], [0], [1], [0, 0, 1, 1], [], []>} : vector<8x8xbf16>, vector<8x32xbf16>, vector<8x32xf32> -> vector<8x32xf32>
    %331 = arith.addf %232, %330 : vector<8x32xf32>
    %c3 = arith.constant 3 : index
    %c0_202 = arith.constant 0 : index
    %c0_203 = arith.constant 0 : index
    %332 = vector.load %arg13[%c3, %c0_202, %c0_203] : memref<4x32x8xbf16, #tpu.memory_space<vmem>>, vector<1x32x8xbf16>
    %333 = vector.shape_cast %332 : vector<1x32x8xbf16> to vector<32x8xbf16>
    %cst_204 = arith.constant dense<0.000000e+00> : vector<8x8xf32>
    %334 = tpu.matmul %30, %333, %cst_204 {dimension_numbers = #tpu.dot_dimension_numbers<[1], [0], [0], [1], [0, 0, 1, 1], [], []>} : vector<8x32xbf16>, vector<32x8xbf16>, vector<8x8xf32> -> vector<8x8xf32>
    %c3_205 = arith.constant 3 : index
    %c0_206 = arith.constant 0 : index
    %c0_207 = arith.constant 0 : index
    %335 = vector.load %arg14[%c3_205, %c0_206, %c0_207] : memref<4x1x8xf32, #tpu.memory_space<vmem>>, vector<1x1x8xf32>
    %336 = vector.shape_cast %335 : vector<1x1x8xf32> to vector<1x8xf32>
    %337 = vector.broadcast %336 : vector<1x8xf32> to vector<8x8xf32>
    %338 = arith.addf %334, %337 : vector<8x8xf32>
    %c3_208 = arith.constant 3 : index
    %c0_209 = arith.constant 0 : index
    %c0_210 = arith.constant 0 : index
    %339 = vector.load %arg15[%c3_208, %c0_209, %c0_210] : memref<4x32x8xbf16, #tpu.memory_space<vmem>>, vector<1x32x8xbf16>
    %340 = vector.shape_cast %339 : vector<1x32x8xbf16> to vector<32x8xbf16>
    %cst_211 = arith.constant dense<0.000000e+00> : vector<8x8xf32>
    %341 = tpu.matmul %30, %340, %cst_211 {dimension_numbers = #tpu.dot_dimension_numbers<[1], [0], [0], [1], [0, 0, 1, 1], [], []>} : vector<8x32xbf16>, vector<32x8xbf16>, vector<8x8xf32> -> vector<8x8xf32>
    %c3_212 = arith.constant 3 : index
    %c0_213 = arith.constant 0 : index
    %c0_214 = arith.constant 0 : index
    %342 = vector.load %arg16[%c3_212, %c0_213, %c0_214] : memref<4x1x8xf32, #tpu.memory_space<vmem>>, vector<1x1x8xf32>
    %343 = vector.shape_cast %342 : vector<1x1x8xf32> to vector<1x8xf32>
    %344 = vector.broadcast %343 : vector<1x8xf32> to vector<8x8xf32>
    %345 = arith.addf %341, %344 : vector<8x8xf32>
    %c3_215 = arith.constant 3 : index
    %c0_216 = arith.constant 0 : index
    %c0_217 = arith.constant 0 : index
    %346 = vector.load %arg17[%c3_215, %c0_216, %c0_217] : memref<4x32x8xbf16, #tpu.memory_space<vmem>>, vector<1x32x8xbf16>
    %347 = vector.shape_cast %346 : vector<1x32x8xbf16> to vector<32x8xbf16>
    %cst_218 = arith.constant dense<0.000000e+00> : vector<8x8xf32>
    %348 = tpu.matmul %30, %347, %cst_218 {dimension_numbers = #tpu.dot_dimension_numbers<[1], [0], [0], [1], [0, 0, 1, 1], [], []>} : vector<8x32xbf16>, vector<32x8xbf16>, vector<8x8xf32> -> vector<8x8xf32>
    %c3_219 = arith.constant 3 : index
    %c0_220 = arith.constant 0 : index
    %c0_221 = arith.constant 0 : index
    %349 = vector.load %arg18[%c3_219, %c0_220, %c0_221] : memref<4x1x8xf32, #tpu.memory_space<vmem>>, vector<1x1x8xf32>
    %350 = vector.shape_cast %349 : vector<1x1x8xf32> to vector<1x8xf32>
    %351 = vector.broadcast %350 : vector<1x8xf32> to vector<8x8xf32>
    %352 = arith.addf %348, %351 : vector<8x8xf32>
    %c3_222 = arith.constant 3 : index
    %c0_223 = arith.constant 0 : index
    %c0_224 = arith.constant 0 : index
    %353 = vector.load %arg19[%c3_222, %c0_223, %c0_224] : memref<4x32x8xbf16, #tpu.memory_space<vmem>>, vector<1x32x8xbf16>
    %354 = vector.shape_cast %353 : vector<1x32x8xbf16> to vector<32x8xbf16>
    %cst_225 = arith.constant dense<0.000000e+00> : vector<8x8xf32>
    %355 = tpu.matmul %30, %354, %cst_225 {dimension_numbers = #tpu.dot_dimension_numbers<[1], [0], [0], [1], [0, 0, 1, 1], [], []>} : vector<8x32xbf16>, vector<32x8xbf16>, vector<8x8xf32> -> vector<8x8xf32>
    %c3_226 = arith.constant 3 : index
    %c0_227 = arith.constant 0 : index
    %c0_228 = arith.constant 0 : index
    %356 = vector.load %arg20[%c3_226, %c0_227, %c0_228] : memref<4x1x8xf32, #tpu.memory_space<vmem>>, vector<1x1x8xf32>
    %357 = vector.shape_cast %356 : vector<1x1x8xf32> to vector<1x8xf32>
    %358 = vector.broadcast %357 : vector<1x8xf32> to vector<8x8xf32>
    %359 = arith.addf %355, %358 : vector<8x8xf32>
    %c3_229 = arith.constant 3 : index
    %c0_230 = arith.constant 0 : index
    %c0_231 = arith.constant 0 : index
    %360 = vector.load %arg4[%c3_229, %c0_230, %c0_231] : memref<4x8x1xf32, #tpu.memory_space<vmem>>, vector<1x8x1xf32>
    %361 = vector.shape_cast %360 : vector<1x8x1xf32> to vector<8x1xf32>
    %362 = vector.broadcast %361 : vector<8x1xf32> to vector<8x8xf32>
    %363 = arith.mulf %338, %362 : vector<8x8xf32>
    %364 = arith.truncf %363 : vector<8x8xf32> to vector<8x8xbf16>
    %c3_232 = arith.constant 3 : index
    %c0_233 = arith.constant 0 : index
    %c0_234 = arith.constant 0 : index
    %365 = vector.load %arg5[%c3_232, %c0_233, %c0_234] : memref<4x8x1xf32, #tpu.memory_space<vmem>>, vector<1x8x1xf32>
    %366 = vector.shape_cast %365 : vector<1x8x1xf32> to vector<8x1xf32>
    %367 = vector.broadcast %366 : vector<8x1xf32> to vector<8x8xf32>
    %368 = arith.mulf %345, %367 : vector<8x8xf32>
    %369 = arith.truncf %368 : vector<8x8xf32> to vector<8x8xbf16>
    %c3_235 = arith.constant 3 : index
    %c0_236 = arith.constant 0 : index
    %c0_237 = arith.constant 0 : index
    %370 = vector.load %arg6[%c3_235, %c0_236, %c0_237] : memref<4x8x1xf32, #tpu.memory_space<vmem>>, vector<1x8x1xf32>
    %371 = vector.shape_cast %370 : vector<1x8x1xf32> to vector<8x1xf32>
    %372 = vector.broadcast %371 : vector<8x1xf32> to vector<8x8xf32>
    %373 = arith.mulf %345, %372 : vector<8x8xf32>
    %374 = arith.truncf %373 : vector<8x8xf32> to vector<8x8xbf16>
    %375 = arith.truncf %352 : vector<8x8xf32> to vector<8x8xbf16>
    %376 = arith.negf %359 : vector<8x8xf32>
    %377 = math.exp %376 : vector<8x8xf32>
    %cst_238 = arith.constant 1.000000e+00 : f32
    %378 = vector.broadcast %cst_238 : f32 to vector<8x8xf32>
    %379 = arith.addf %378, %377 : vector<8x8xf32>
    %380 = arith.divf %378, %379 : vector<8x8xf32>
    %381 = arith.mulf %359, %380 : vector<8x8xf32>
    %382 = arith.truncf %381 : vector<8x8xf32> to vector<8x8xbf16>
    %cst_239 = arith.constant dense<0.000000e+00> : vector<8x8xf32>
    %383 = tpu.matmul %364, %369, %cst_239 {dimension_numbers = #tpu.dot_dimension_numbers<[1], [1], [0], [0], [0, 0, 1, 0], [], []>} : vector<8x8xbf16>, vector<8x8xbf16>, vector<8x8xf32> -> vector<8x8xf32>
    %cst_240 = arith.constant 0.000000e+00 : f32
    %384 = vector.broadcast %cst_240 : f32 to vector<8x8xf32>
    %385 = arith.select %33, %383, %384 : vector<8x8xi1>, vector<8x8xf32>
    %386 = arith.truncf %385 : vector<8x8xf32> to vector<8x8xbf16>
    %cst_241 = arith.constant dense<0.000000e+00> : vector<8x8xf32>
    %387 = tpu.matmul %386, %375, %cst_241 {dimension_numbers = #tpu.dot_dimension_numbers<[1], [0], [0], [1], [0, 0, 1, 1], [], []>} : vector<8x8xbf16>, vector<8x8xbf16>, vector<8x8xf32> -> vector<8x8xf32>
    %c3_242 = arith.constant 3 : index
    %c0_243 = arith.constant 0 : index
    %c0_244 = arith.constant 0 : index
    %388 = vector.load %arg29[%c3_242, %c0_243, %c0_244] : memref<4x8x8xf32, #tpu.memory_space<vmem>>, vector<1x8x8xf32>
    %389 = vector.shape_cast %388 : vector<1x8x8xf32> to vector<8x8xf32>
    %390 = arith.truncf %389 : vector<8x8xf32> to vector<8x8xbf16>
    %cst_245 = arith.constant dense<0.000000e+00> : vector<8x8xf32>
    %391 = tpu.matmul %364, %390, %cst_245 {dimension_numbers = #tpu.dot_dimension_numbers<[1], [0], [0], [1], [0, 0, 1, 1], [], []>} : vector<8x8xbf16>, vector<8x8xbf16>, vector<8x8xf32> -> vector<8x8xf32>
    %c3_246 = arith.constant 3 : index
    %c0_247 = arith.constant 0 : index
    %c0_248 = arith.constant 0 : index
    %392 = vector.load %arg7[%c3_246, %c0_247, %c0_248] : memref<4x1x1xf32, #tpu.memory_space<vmem>>, vector<1x1x1xf32>
    %393 = vector.shape_cast %392 : vector<1x1x1xf32> to vector<1x1xf32>
    %394 = vector.broadcast %393 : vector<1x1xf32> to vector<8x8xf32>
    %395 = arith.mulf %391, %394 : vector<8x8xf32>
    %396 = arith.addf %387, %395 : vector<8x8xf32>
    %cst_249 = arith.constant dense<0.000000e+00> : vector<8x8xf32>
    %397 = tpu.matmul %374, %375, %cst_249 {dimension_numbers = #tpu.dot_dimension_numbers<[0], [0], [1], [1], [0, 1, 1, 1], [], []>} : vector<8x8xbf16>, vector<8x8xbf16>, vector<8x8xf32> -> vector<8x8xf32>
    %c3_250 = arith.constant 3 : index
    %c0_251 = arith.constant 0 : index
    %c0_252 = arith.constant 0 : index
    %398 = vector.load %arg8[%c3_250, %c0_251, %c0_252] : memref<4x1x1xf32, #tpu.memory_space<vmem>>, vector<1x1x1xf32>
    %399 = vector.shape_cast %398 : vector<1x1x1xf32> to vector<1x1xf32>
    %400 = vector.broadcast %399 : vector<1x1xf32> to vector<8x8xf32>
    %401 = arith.mulf %389, %400 : vector<8x8xf32>
    %402 = arith.addf %397, %401 : vector<8x8xf32>
    %c3_253 = arith.constant 3 : index
    %c0_254 = arith.constant 0 : index
    %c0_255 = arith.constant 0 : index
    %403 = vector.load %arg29[%c3_253, %c0_254, %c0_255] : memref<4x8x8xf32, #tpu.memory_space<vmem>>, vector<1x8x8xf32>
    %404 = vector.shape_cast %403 : vector<1x8x8xf32> to vector<8x8xf32>
    %405 = vector.shape_cast %402 : vector<8x8xf32> to vector<1x8x8xf32>
    tpu.vector_store %arg29[%c3_253, %c0_254, %c0_255], %405 {strides = array<i32>} : memref<4x8x8xf32, #tpu.memory_space<vmem>>, vector<1x8x8xf32>,
    %cst_256 = arith.constant dense<0.000000e+00> : vector<8xf32>
    %406 = vector.multi_reduction <add>, %396, %cst_256 [1] : vector<8x8xf32> to vector<8xf32>
    %407 = vector.shape_cast %406 : vector<8xf32> to vector<8x1xf32>
    %cst_257 = arith.constant 8.000000e+00 : f32
    %408 = vector.broadcast %cst_257 : f32 to vector<8x1xf32>
    %409 = arith.divf %407, %408 : vector<8x1xf32>
    %410 = vector.broadcast %409 : vector<8x1xf32> to vector<8x8xf32>
    %411 = arith.subf %396, %410 : vector<8x8xf32>
    %412 = arith.mulf %411, %411 : vector<8x8xf32>
    %cst_258 = arith.constant dense<0.000000e+00> : vector<8xf32>
    %413 = vector.multi_reduction <add>, %412, %cst_258 [1] : vector<8x8xf32> to vector<8xf32>
    %414 = vector.shape_cast %413 : vector<8xf32> to vector<8x1xf32>
    %cst_259 = arith.constant 8.000000e+00 : f32
    %415 = vector.broadcast %cst_259 : f32 to vector<8x1xf32>
    %416 = arith.divf %414, %415 : vector<8x1xf32>
    %417 = vector.broadcast %409 : vector<8x1xf32> to vector<8x8xf32>
    %418 = arith.subf %396, %417 : vector<8x8xf32>
    %cst_260 = arith.constant 9.99999997E-7 : f32
    %419 = vector.broadcast %cst_260 : f32 to vector<8x1xf32>
    %420 = arith.addf %416, %419 : vector<8x1xf32>
    %421 = math.rsqrt %420 : vector<8x1xf32>
    %422 = vector.broadcast %421 : vector<8x1xf32> to vector<8x8xf32>
    %423 = arith.mulf %418, %422 : vector<8x8xf32>
    %424 = arith.extf %382 : vector<8x8xbf16> to vector<8x8xf32>
    %425 = arith.mulf %423, %424 : vector<8x8xf32>
    %426 = arith.truncf %425 : vector<8x8xf32> to vector<8x8xbf16>
    %c3_261 = arith.constant 3 : index
    %c0_262 = arith.constant 0 : index
    %c0_263 = arith.constant 0 : index
    %427 = vector.load %arg21[%c3_261, %c0_262, %c0_263] : memref<4x8x32xbf16, #tpu.memory_space<vmem>>, vector<1x8x32xbf16>
    %428 = vector.shape_cast %427 : vector<1x8x32xbf16> to vector<8x32xbf16>
    %cst_264 = arith.constant dense<0.000000e+00> : vector<8x32xf32>
    %429 = tpu.matmul %426, %428, %cst_264 {dimension_numbers = #tpu.dot_dimension_numbers<[1], [0], [0], [1], [0, 0, 1, 1], [], []>} : vector<8x8xbf16>, vector<8x32xbf16>, vector<8x32xf32> -> vector<8x32xf32>
    %430 = arith.addf %331, %429 : vector<8x32xf32>
    %c1_i32 = arith.constant 1 : i32
    %431 = arith.cmpi eq, %arg1, %c1_i32 : i32
    %432 = arith.extui %431 : i1 to i32
    %c0_i32_265 = arith.constant 0 : i32
    %433 = arith.cmpi ne, %432, %c0_i32_265 : i32
    scf.if %433 {
      %c0_291 = arith.constant 0 : index
      %c0_292 = arith.constant 0 : index
      %c0_293 = arith.constant 0 : index
      %487 = vector.load %arg29[%c0_291, %c0_292, %c0_293] : memref<4x8x8xf32, #tpu.memory_space<vmem>>, vector<4x8x8xf32>
      %488 = arith.truncf %487 : vector<4x8x8xf32> to vector<4x8x8xbf16>
      %c0_294 = arith.constant 0 : index
      %c0_295 = arith.constant 0 : index
      %c0_296 = arith.constant 0 : index
      %c0_297 = arith.constant 0 : index
      %489 = vector.load %arg28[%c0_294, %c0_295, %c0_296, %c0_297] : memref<1x4x8x8xbf16, #tpu.memory_space<vmem>>, vector<1x4x8x8xbf16>
      %490 = vector.shape_cast %489 : vector<1x4x8x8xbf16> to vector<4x8x8xbf16>
      %491 = vector.shape_cast %488 : vector<4x8x8xbf16> to vector<1x4x8x8xbf16>
      tpu.vector_store %arg28[%c0_294, %c0_295, %c0_296, %c0_297], %491 {strides = array<i32>} : memref<1x4x8x8xbf16, #tpu.memory_space<vmem>>, vector<1x4x8x8xbf16>,
    } else {
    }
    %c0_266 = arith.constant 0 : index
    %c0_267 = arith.constant 0 : index
    %434 = vector.load %arg22[%c0_266, %c0_267] : memref<1x32xf32, #tpu.memory_space<vmem>>, vector<1x32xf32>
    %435 = vector.broadcast %434 : vector<1x32xf32> to vector<8x32xf32>
    %436 = arith.addf %430, %435 : vector<8x32xf32>
    %437 = arith.truncf %436 : vector<8x32xf32> to vector<8x32xbf16>
    %438 = arith.addf %1, %437 : vector<8x32xbf16>
    %439 = arith.extf %438 : vector<8x32xbf16> to vector<8x32xf32>
    %c0_268 = arith.constant 0 : index
    %c0_269 = arith.constant 0 : index
    %440 = vector.load %arg11[%c0_268, %c0_269] : memref<1x32xf32, #tpu.memory_space<vmem>>, vector<1x32xf32>
    %c0_270 = arith.constant 0 : index
    %c0_271 = arith.constant 0 : index
    %441 = vector.load %arg12[%c0_270, %c0_271] : memref<1x32xf32, #tpu.memory_space<vmem>>, vector<1x32xf32>
    %cst_272 = arith.constant dense<0.000000e+00> : vector<8xf32>
    %442 = vector.multi_reduction <add>, %439, %cst_272 [1] : vector<8x32xf32> to vector<8xf32>
    %443 = vector.shape_cast %442 : vector<8xf32> to vector<8x1xf32>
    %cst_273 = arith.constant 3.200000e+01 : f32
    %444 = vector.broadcast %cst_273 : f32 to vector<8x1xf32>
    %445 = arith.divf %443, %444 : vector<8x1xf32>
    %446 = vector.broadcast %445 : vector<8x1xf32> to vector<8x32xf32>
    %447 = arith.subf %439, %446 : vector<8x32xf32>
    %448 = arith.mulf %447, %447 : vector<8x32xf32>
    %cst_274 = arith.constant dense<0.000000e+00> : vector<8xf32>
    %449 = vector.multi_reduction <add>, %448, %cst_274 [1] : vector<8x32xf32> to vector<8xf32>
    %450 = vector.shape_cast %449 : vector<8xf32> to vector<8x1xf32>
    %cst_275 = arith.constant 3.200000e+01 : f32
    %451 = vector.broadcast %cst_275 : f32 to vector<8x1xf32>
    %452 = arith.divf %450, %451 : vector<8x1xf32>
    %453 = vector.broadcast %445 : vector<8x1xf32> to vector<8x32xf32>
    %454 = arith.subf %439, %453 : vector<8x32xf32>
    %cst_276 = arith.constant 9.99999997E-7 : f32
    %455 = vector.broadcast %cst_276 : f32 to vector<8x1xf32>
    %456 = arith.addf %452, %455 : vector<8x1xf32>
    %457 = math.rsqrt %456 : vector<8x1xf32>
    %458 = vector.broadcast %457 : vector<8x1xf32> to vector<8x32xf32>
    %459 = arith.mulf %454, %458 : vector<8x32xf32>
    %460 = vector.broadcast %440 : vector<1x32xf32> to vector<8x32xf32>
    %461 = arith.mulf %459, %460 : vector<8x32xf32>
    %462 = vector.broadcast %441 : vector<1x32xf32> to vector<8x32xf32>
    %463 = arith.addf %461, %462 : vector<8x32xf32>
    %464 = arith.truncf %463 : vector<8x32xf32> to vector<8x32xbf16>
    %c0_277 = arith.constant 0 : index
    %c0_278 = arith.constant 0 : index
    %465 = vector.load %arg23[%c0_277, %c0_278] : memref<32x64xbf16, #tpu.memory_space<vmem>>, vector<32x64xbf16>
    %cst_279 = arith.constant dense<0.000000e+00> : vector<8x64xf32>
    %466 = tpu.matmul %464, %465, %cst_279 {dimension_numbers = #tpu.dot_dimension_numbers<[1], [0], [0], [1], [0, 0, 1, 1], [], []>} : vector<8x32xbf16>, vector<32x64xbf16>, vector<8x64xf32> -> vector<8x64xf32>
    %c0_280 = arith.constant 0 : index
    %c0_281 = arith.constant 0 : index
    %467 = vector.load %arg24[%c0_280, %c0_281] : memref<1x64xf32, #tpu.memory_space<vmem>>, vector<1x64xf32>
    %468 = vector.broadcast %467 : vector<1x64xf32> to vector<8x64xf32>
    %469 = arith.addf %466, %468 : vector<8x64xf32>
    %470 = arith.negf %469 : vector<8x64xf32>
    %471 = math.exp %470 : vector<8x64xf32>
    %cst_282 = arith.constant 1.000000e+00 : f32
    %472 = vector.broadcast %cst_282 : f32 to vector<8x64xf32>
    %473 = arith.addf %472, %471 : vector<8x64xf32>
    %474 = arith.divf %472, %473 : vector<8x64xf32>
    %475 = arith.mulf %469, %474 : vector<8x64xf32>
    %476 = arith.truncf %475 : vector<8x64xf32> to vector<8x64xbf16>
    %c0_283 = arith.constant 0 : index
    %c0_284 = arith.constant 0 : index
    %477 = vector.load %arg25[%c0_283, %c0_284] : memref<64x32xbf16, #tpu.memory_space<vmem>>, vector<64x32xbf16>
    %cst_285 = arith.constant dense<0.000000e+00> : vector<8x32xf32>
    %478 = tpu.matmul %476, %477, %cst_285 {dimension_numbers = #tpu.dot_dimension_numbers<[1], [0], [0], [1], [0, 0, 1, 1], [], []>} : vector<8x64xbf16>, vector<64x32xbf16>, vector<8x32xf32> -> vector<8x32xf32>
    %c0_286 = arith.constant 0 : index
    %c0_287 = arith.constant 0 : index
    %479 = vector.load %arg26[%c0_286, %c0_287] : memref<1x32xf32, #tpu.memory_space<vmem>>, vector<1x32xf32>
    %480 = vector.broadcast %479 : vector<1x32xf32> to vector<8x32xf32>
    %481 = arith.addf %478, %480 : vector<8x32xf32>
    %482 = arith.truncf %481 : vector<8x32xf32> to vector<8x32xbf16>
    %483 = arith.addf %438, %482 : vector<8x32xbf16>
    %c0_288 = arith.constant 0 : index
    %c0_289 = arith.constant 0 : index
    %c0_290 = arith.constant 0 : index
    %484 = vector.load %arg27[%c0_288, %c0_289, %c0_290] : memref<1x8x32xbf16, #tpu.memory_space<vmem>>, vector<1x8x32xbf16>
    %485 = vector.shape_cast %484 : vector<1x8x32xbf16> to vector<8x32xbf16>
    %486 = vector.shape_cast %483 : vector<8x32xbf16> to vector<1x8x32xbf16>
    tpu.vector_store %arg27[%c0_288, %c0_289, %c0_290], %486 {strides = array<i32>} : memref<1x8x32xbf16, #tpu.memory_space<vmem>>, vector<1x8x32xbf16>,
    return
  }
  func.func @transform_0(%arg0: i32, %arg1: i32) -> (i32, i32, i32) {
    %c0_i32 = arith.constant 0 : i32
    %c0_i32_0 = arith.constant 0 : i32
    return %arg0, %arg1, %c0_i32 : i32, i32, i32
  }
  func.func @transform_1(%arg0: i32, %arg1: i32) -> (i32, i32, i32, i32) {
    %c0_i32 = arith.constant 0 : i32
    %c0_i32_0 = arith.constant 0 : i32
    %c0_i32_1 = arith.constant 0 : i32
    %c0_i32_2 = arith.constant 0 : i32
    return %arg0, %c0_i32, %c0_i32_0, %c0_i32_1 : i32, i32, i32, i32
  }
  func.func @transform_2(%arg0: i32, %arg1: i32) -> (i32, i32, i32) {
    %c0_i32 = arith.constant 0 : i32
    %c0_i32_0 = arith.constant 0 : i32
    %c0_i32_1 = arith.constant 0 : i32
    %c0_i32_2 = arith.constant 0 : i32
    return %c0_i32, %c0_i32_0, %c0_i32_1 : i32, i32, i32
  }
  func.func @transform_3(%arg0: i32, %arg1: i32) -> (i32, i32, i32) {
    %c0_i32 = arith.constant 0 : i32
    %c0_i32_0 = arith.constant 0 : i32
    %c0_i32_1 = arith.constant 0 : i32
    %c0_i32_2 = arith.constant 0 : i32
    return %c0_i32, %c0_i32_0, %c0_i32_1 : i32, i32, i32
  }
  func.func @transform_4(%arg0: i32, %arg1: i32) -> (i32, i32, i32) {
    %c0_i32 = arith.constant 0 : i32
    %c0_i32_0 = arith.constant 0 : i32
    %c0_i32_1 = arith.constant 0 : i32
    %c0_i32_2 = arith.constant 0 : i32
    return %c0_i32, %c0_i32_0, %c0_i32_1 : i32, i32, i32
  }
  func.func @transform_5(%arg0: i32, %arg1: i32) -> (i32, i32, i32) {
    %c0_i32 = arith.constant 0 : i32
    %c0_i32_0 = arith.constant 0 : i32
    %c0_i32_1 = arith.constant 0 : i32
    %c0_i32_2 = arith.constant 0 : i32
    return %c0_i32, %c0_i32_0, %c0_i32_1 : i32, i32, i32
  }
  func.func @transform_6(%arg0: i32, %arg1: i32) -> (i32, i32, i32) {
    %c0_i32 = arith.constant 0 : i32
    %c0_i32_0 = arith.constant 0 : i32
    %c0_i32_1 = arith.constant 0 : i32
    %c0_i32_2 = arith.constant 0 : i32
    return %c0_i32, %c0_i32_0, %c0_i32_1 : i32, i32, i32
  }
  func.func @transform_7(%arg0: i32, %arg1: i32) -> (i32, i32) {
    %c0_i32 = arith.constant 0 : i32
    %c0_i32_0 = arith.constant 0 : i32
    %c0_i32_1 = arith.constant 0 : i32
    return %c0_i32, %c0_i32_0 : i32, i32
  }
  func.func @transform_8(%arg0: i32, %arg1: i32) -> (i32, i32) {
    %c0_i32 = arith.constant 0 : i32
    %c0_i32_0 = arith.constant 0 : i32
    %c0_i32_1 = arith.constant 0 : i32
    return %c0_i32, %c0_i32_0 : i32, i32
  }
  func.func @transform_9(%arg0: i32, %arg1: i32) -> (i32, i32) {
    %c0_i32 = arith.constant 0 : i32
    %c0_i32_0 = arith.constant 0 : i32
    %c0_i32_1 = arith.constant 0 : i32
    return %c0_i32, %c0_i32_0 : i32, i32
  }
  func.func @transform_10(%arg0: i32, %arg1: i32) -> (i32, i32) {
    %c0_i32 = arith.constant 0 : i32
    %c0_i32_0 = arith.constant 0 : i32
    %c0_i32_1 = arith.constant 0 : i32
    return %c0_i32, %c0_i32_0 : i32, i32
  }
  func.func @transform_11(%arg0: i32, %arg1: i32) -> (i32, i32, i32) {
    %c0_i32 = arith.constant 0 : i32
    %c0_i32_0 = arith.constant 0 : i32
    %c0_i32_1 = arith.constant 0 : i32
    %c0_i32_2 = arith.constant 0 : i32
    return %c0_i32, %c0_i32_0, %c0_i32_1 : i32, i32, i32
  }
  func.func @transform_12(%arg0: i32, %arg1: i32) -> (i32, i32, i32) {
    %c0_i32 = arith.constant 0 : i32
    %c0_i32_0 = arith.constant 0 : i32
    %c0_i32_1 = arith.constant 0 : i32
    %c0_i32_2 = arith.constant 0 : i32
    return %c0_i32, %c0_i32_0, %c0_i32_1 : i32, i32, i32
  }
  func.func @transform_13(%arg0: i32, %arg1: i32) -> (i32, i32, i32) {
    %c0_i32 = arith.constant 0 : i32
    %c0_i32_0 = arith.constant 0 : i32
    %c0_i32_1 = arith.constant 0 : i32
    %c0_i32_2 = arith.constant 0 : i32
    return %c0_i32, %c0_i32_0, %c0_i32_1 : i32, i32, i32
  }
  func.func @transform_14(%arg0: i32, %arg1: i32) -> (i32, i32, i32) {
    %c0_i32 = arith.constant 0 : i32
    %c0_i32_0 = arith.constant 0 : i32
    %c0_i32_1 = arith.constant 0 : i32
    %c0_i32_2 = arith.constant 0 : i32
    return %c0_i32, %c0_i32_0, %c0_i32_1 : i32, i32, i32
  }
  func.func @transform_15(%arg0: i32, %arg1: i32) -> (i32, i32, i32) {
    %c0_i32 = arith.constant 0 : i32
    %c0_i32_0 = arith.constant 0 : i32
    %c0_i32_1 = arith.constant 0 : i32
    %c0_i32_2 = arith.constant 0 : i32
    return %c0_i32, %c0_i32_0, %c0_i32_1 : i32, i32, i32
  }
  func.func @transform_16(%arg0: i32, %arg1: i32) -> (i32, i32, i32) {
    %c0_i32 = arith.constant 0 : i32
    %c0_i32_0 = arith.constant 0 : i32
    %c0_i32_1 = arith.constant 0 : i32
    %c0_i32_2 = arith.constant 0 : i32
    return %c0_i32, %c0_i32_0, %c0_i32_1 : i32, i32, i32
  }
  func.func @transform_17(%arg0: i32, %arg1: i32) -> (i32, i32, i32) {
    %c0_i32 = arith.constant 0 : i32
    %c0_i32_0 = arith.constant 0 : i32
    %c0_i32_1 = arith.constant 0 : i32
    %c0_i32_2 = arith.constant 0 : i32
    return %c0_i32, %c0_i32_0, %c0_i32_1 : i32, i32, i32
  }
  func.func @transform_18(%arg0: i32, %arg1: i32) -> (i32, i32, i32) {
    %c0_i32 = arith.constant 0 : i32
    %c0_i32_0 = arith.constant 0 : i32
    %c0_i32_1 = arith.constant 0 : i32
    %c0_i32_2 = arith.constant 0 : i32
    return %c0_i32, %c0_i32_0, %c0_i32_1 : i32, i32, i32
  }
  func.func @transform_19(%arg0: i32, %arg1: i32) -> (i32, i32, i32) {
    %c0_i32 = arith.constant 0 : i32
    %c0_i32_0 = arith.constant 0 : i32
    %c0_i32_1 = arith.constant 0 : i32
    %c0_i32_2 = arith.constant 0 : i32
    return %c0_i32, %c0_i32_0, %c0_i32_1 : i32, i32, i32
  }
  func.func @transform_20(%arg0: i32, %arg1: i32) -> (i32, i32) {
    %c0_i32 = arith.constant 0 : i32
    %c0_i32_0 = arith.constant 0 : i32
    %c0_i32_1 = arith.constant 0 : i32
    return %c0_i32, %c0_i32_0 : i32, i32
  }
  func.func @transform_21(%arg0: i32, %arg1: i32) -> (i32, i32) {
    %c0_i32 = arith.constant 0 : i32
    %c0_i32_0 = arith.constant 0 : i32
    %c0_i32_1 = arith.constant 0 : i32
    return %c0_i32, %c0_i32_0 : i32, i32
  }
  func.func @transform_22(%arg0: i32, %arg1: i32) -> (i32, i32) {
    %c0_i32 = arith.constant 0 : i32
    %c0_i32_0 = arith.constant 0 : i32
    %c0_i32_1 = arith.constant 0 : i32
    return %c0_i32, %c0_i32_0 : i32, i32
  }
  func.func @transform_23(%arg0: i32, %arg1: i32) -> (i32, i32) {
    %c0_i32 = arith.constant 0 : i32
    %c0_i32_0 = arith.constant 0 : i32
    %c0_i32_1 = arith.constant 0 : i32
    return %c0_i32, %c0_i32_0 : i32, i32
  }
  func.func @transform_24(%arg0: i32, %arg1: i32) -> (i32, i32) {
    %c0_i32 = arith.constant 0 : i32
    %c0_i32_0 = arith.constant 0 : i32
    %c0_i32_1 = arith.constant 0 : i32
    return %c0_i32, %c0_i32_0 : i32, i32
  }
  func.func @transform_25(%arg0: i32, %arg1: i32) -> (i32, i32, i32) {
    %c0_i32 = arith.constant 0 : i32
    %c0_i32_0 = arith.constant 0 : i32
    return %arg0, %arg1, %c0_i32 : i32, i32, i32
  }
  func.func @transform_26(%arg0: i32, %arg1: i32) -> (i32, i32, i32, i32) {
    %c0_i32 = arith.constant 0 : i32
    %c0_i32_0 = arith.constant 0 : i32
    %c0_i32_1 = arith.constant 0 : i32
    %c0_i32_2 = arith.constant 0 : i32
    return %arg0, %c0_i32, %c0_i32_0, %c0_i32_1 : i32, i32, i32, i32
  }
}

</mosaic_0001>

<llo_original>
// kernel: tpu_custom_call.1
$region0: #{tpu_custom_call.1}
  #allocation0 [shape = 'u32[]', space=smem, size = 0x4, offset = 0x4, fixed_abs, tag = 'smem constant byte address 0x4 - core index']
  #allocation1 [shape = 'u32[144,128]{1,0:T(1,128)}', space=vmem, size = 0x12000, scoped, tag = 'internal scratch']
  #allocation2 [shape = 'f32[4,8,8]{2,1,0:T(8,128)}', space=vmem, size = 0x4000, scoped, tag = 'scratch operand']
  %s0 = inlined_call_operand.vmem [shape: bf16[2,16,32], index: 0, kind: input, shape index: {}]
  %s1 = inlined_call_operand.hbm [shape: bf16[2,4,8,8], index: 1, kind: input, shape index: {}, may-alias: {1,26}]
  %s2 = inlined_call_operand.vmem [shape: f32[4,8,1], index: 2, kind: input, shape index: {}]
  %s3 = inlined_call_operand.vmem [shape: f32[4,8,1], index: 3, kind: input, shape index: {}]
  %s4 = inlined_call_operand.vmem [shape: f32[4,8,1], index: 4, kind: input, shape index: {}]
  %s5 = inlined_call_operand.vmem [shape: f32[4,1,1], index: 5, kind: input, shape index: {}]
  %s6 = inlined_call_operand.vmem [shape: f32[4,1,1], index: 6, kind: input, shape index: {}]
  %s7 = inlined_call_operand.vmem [shape: f32[1,32], index: 7, kind: input, shape index: {}]
  %s8 = inlined_call_operand.vmem [shape: f32[1,32], index: 8, kind: input, shape index: {}]
  %s9 = inlined_call_operand.vmem [shape: f32[1,32], index: 9, kind: input, shape index: {}]
  %s10 = inlined_call_operand.vmem [shape: f32[1,32], index: 10, kind: input, shape index: {}]
  %s11 = inlined_call_operand.vmem [shape: bf16[4,32,8], index: 11, kind: input, shape index: {}]
  %s12 = inlined_call_operand.vmem [shape: f32[4,1,8], index: 12, kind: input, shape index: {}]
  %s13 = inlined_call_operand.vmem [shape: bf16[4,32,8], index: 13, kind: input, shape index: {}]
  %s14 = inlined_call_operand.vmem [shape: f32[4,1,8], index: 14, kind: input, shape index: {}]
  %s15 = inlined_call_operand.vmem [shape: bf16[4,32,8], index: 15, kind: input, shape index: {}]
  %s16 = inlined_call_operand.vmem [shape: f32[4,1,8], index: 16, kind: input, shape index: {}]
  %s17 = inlined_call_operand.vmem [shape: bf16[4,32,8], index: 17, kind: input, shape index: {}]
  %s18 = inlined_call_operand.vmem [shape: f32[4,1,8], index: 18, kind: input, shape index: {}]
  %s19 = inlined_call_operand.vmem [shape: bf16[4,8,32], index: 19, kind: input, shape index: {}]
  %s20 = inlined_call_operand.vmem [shape: f32[1,32], index: 20, kind: input, shape index: {}]
  %s21 = inlined_call_operand.vmem [shape: bf16[32,64], index: 21, kind: input, shape index: {}]
  %s22 = inlined_call_operand.vmem [shape: f32[1,64], index: 22, kind: input, shape index: {}]
  %s23 = inlined_call_operand.vmem [shape: bf16[64,32], index: 23, kind: input, shape index: {}]
  %s24 = inlined_call_operand.vmem [shape: f32[1,32], index: 24, kind: input, shape index: {}]
  %s25 = inlined_call_operand.hbm [shape: bf16[2,16,32], index: 25, kind: output, shape index: {0}]
  %s26 = inlined_call_operand.hbm [shape: bf16[2,4,8,8], index: 26, kind: output, shape index: {1}, may-alias: {1,26}]
  %27 = xla_tuple %s25, %s26
  %s28 = sld [smem:[#allocation0]]
  $region153: #{tpu_custom_call.1} parent=0
    _
  %s30 = ssub.s32 1, %s28
  %s31 = scalar_select 0, %s30, %s28
  $region1: #{tpu_custom_call.1} parent=0
    #allocation3 [shape = 'u8[16384]{0}', space=vmem, size = 0x4000, scoped, tag = 'input window, operand 1']
    #allocation4 [shape = 's32[2]{0}', space=sflag, size = 0x8, scoped, tag = 'scoped memory for tpu_custom_call.1']
    #allocation5 [shape = 's32[2]{0}', space=sflag, size = 0x8, scoped, tag = 'scoped memory for tpu_custom_call.1']
    #allocation6 [shape = 'u8[4096]{0}', space=vmem, size = 0x1000, scoped, tag = 'output window, operand 0']
    #allocation7 [shape = 'u8[16384]{0}', space=vmem, size = 0x4000, scoped, tag = 'output window, operand 1']
    #allocation8 [shape = 's32[2]{0}', space=sflag, size = 0x8, scoped, tag = 'scoped memory for tpu_custom_call.1']
    %32 = vsyncpa [#allocation4], 0
    %s33 = scalar_lea.sflag [#allocation4], 1
    %34 = vsyncpa %s33, 0
    %35 = vsyncpa [#allocation5], 0
    %s36 = scalar_lea.sflag [#allocation5], 1
    %37 = vsyncpa %s36, 0
    %38 = vsyncpa [#allocation8], 0
    %s39 = scalar_lea.sflag [#allocation8], 1
    %40 = vsyncpa %s39, 0
    loop: start=0, step=1, limit=6
    $region2: #{tpu_custom_call.1} parent=1 // loop_pre_header
      _
    $region3: #{tpu_custom_call.1} parent=1 // loop_header
      %s42 = sphi 0, %s46
      %p43 = scmp.ge.s32.totalorder %s42, 6
      %s49 = sphi 0, %s61
      %s50 = sphi 0, %s57
      %s51 = sphi 0, %s49
      %s52 = sphi 0, %s50
      %s53 = sphi 0, %s51
      %s54 = sphi 0, %s52
      %s66 = sphi 0, %s68
      %s69 = sphi 0, %s66
      %s70 = sphi 0, %s69
      %s86 = sphi 0, %s70
      %s92 = sphi 0, %s94
      %s95 = sphi 0, %s92
      %s96 = sphi 0, %s95
      %s112 = sphi 0, %s96
      %s116 = sphi 0, %s116
      %s118 = sphi 0, %s116
      %s119 = sphi 0, %s118
      %s133 = sphi 0, %s119
      %s137 = sphi 0, %s137
      %s139 = sphi 0, %s137
      %s140 = sphi 0, %s139
      %s154 = sphi 0, %s140
      %s158 = sphi 0, %s158
      %s160 = sphi 0, %s158
      %s161 = sphi 0, %s160
      %s175 = sphi 0, %s161
      %s179 = sphi 0, %s179
      %s181 = sphi 0, %s179
      %s182 = sphi 0, %s181
      %s196 = sphi 0, %s182
      %s200 = sphi 0, %s200
      %s202 = sphi 0, %s200
      %s203 = sphi 0, %s202
      %s217 = sphi 0, %s203
      %s221 = sphi 0, %s221
      %s223 = sphi 0, %s221
      %s224 = sphi 0, %s223
      %s238 = sphi 0, %s224
      %s242 = sphi 0, %s242
      %s244 = sphi 0, %s242
      %s245 = sphi 0, %s244
      %s259 = sphi 0, %s245
      %s263 = sphi 0, %s263
      %s265 = sphi 0, %s263
      %s266 = sphi 0, %s265
      %s280 = sphi 0, %s266
      %s284 = sphi 0, %s284
      %s286 = sphi 0, %s284
      %s287 = sphi 0, %s286
      %s301 = sphi 0, %s287
      %s305 = sphi 0, %s305
      %s307 = sphi 0, %s305
      %s308 = sphi 0, %s307
      %s322 = sphi 0, %s308
      %s326 = sphi 0, %s326
      %s328 = sphi 0, %s326
      %s329 = sphi 0, %s328
      %s343 = sphi 0, %s329
      %s347 = sphi 0, %s347
      %s349 = sphi 0, %s347
      %s350 = sphi 0, %s349
      %s364 = sphi 0, %s350
      %s368 = sphi 0, %s368
      %s370 = sphi 0, %s368
      %s371 = sphi 0, %s370
      %s385 = sphi 0, %s371
      %s389 = sphi 0, %s389
      %s391 = sphi 0, %s389
      %s392 = sphi 0, %s391
      %s406 = sphi 0, %s392
      %s410 = sphi 0, %s410
      %s412 = sphi 0, %s410
      %s413 = sphi 0, %s412
      %s427 = sphi 0, %s413
      %s431 = sphi 0, %s431
      %s433 = sphi 0, %s431
      %s434 = sphi 0, %s433
      %s448 = sphi 0, %s434
      %s452 = sphi 0, %s452
      %s454 = sphi 0, %s452
      %s455 = sphi 0, %s454
      %s469 = sphi 0, %s455
      %s473 = sphi 0, %s473
      %s475 = sphi 0, %s473
      %s476 = sphi 0, %s475
      %s490 = sphi 0, %s476
      %s494 = sphi 0, %s494
      %s496 = sphi 0, %s494
      %s497 = sphi 0, %s496
      %s511 = sphi 0, %s497
      %s515 = sphi 0, %s515
      %s517 = sphi 0, %s515
      %s518 = sphi 0, %s517
      %s532 = sphi 0, %s518
      %s536 = sphi 0, %s536
      %s538 = sphi 0, %s536
      %s539 = sphi 0, %s538
      %s553 = sphi 0, %s539
      %s557 = sphi 0, %s557
      %s559 = sphi 0, %s557
      %s560 = sphi 0, %s559
      %s574 = sphi 0, %s560
      %s578 = sphi 0, %s578
      %s580 = sphi 0, %s578
      %s581 = sphi 0, %s580
      %s595 = sphi 0, %s581
      %s603 = sphi 0, %s605
      %s606 = sphi 0, %s603
      %s607 = sphi 0, %s606
      %s623 = sphi 0, %s607
      %s629 = sphi 0, %s631
      %s632 = sphi 0, %s629
      %s633 = sphi 0, %s632
      %s649 = sphi 0, %s633
    $region4: #{tpu_custom_call.1} parent=1 // loop_header_branch
      %45 = sbr.rel (%p43) target = $region8
    $region5: #{tpu_custom_call.1} parent=1 // loop_body
      %s47 = ssub.s32 %s42, 1
      %s48 = ssub.s32 %s42, 2
      %s55 = sadd.s32 1, %s50
      %p56 = scmp.ge.s32.totalorder %s55, 2
      %s57 = scalar_select %p56, 0, %s55
      %s58 = sadd.s32 1, %s49
      %s59 = scalar_select %p56, %s58, %s49
      %p60 = scmp.ge.s32.totalorder %s59, 2
      %s61 = scalar_select %p60, 0, %s59
      %s62 = ssub.s32 %s49, %s61
      %s63 = ssub.s32 %s50, %s57
      %s64 = sor.u32 %s62, %s63
      %p65 = scmp.eq.s32.totalorder %s64, 0
      %s67 = sadd.s32 %s66, 1
      %s68 = scalar_select %p65, %s66, %s67
      %p71 = pneg %p65
      %p72 = scmp.eq.s32.totalorder %s42, 3
      %p73 = por %p71, %p72
      %p74 = scmp.ne.s32.totalorder %s66, %s69
      %p75 = scmp.eq.s32.totalorder %s42, 0
      %p76 = por %p74, %p75
      %p77 = scmp.ne.s32.totalorder %s66, %s69
      %p78 = scmp.eq.s32.totalorder %s47, 3
      %p79 = por %p77, %p78
      %p80 = scmp.ne.s32.totalorder %s69, %s70
      %p81 = scmp.eq.s32.totalorder %s47, 0
      %p82 = por %p80, %p81
      %p83 = scmp.ne.s32.totalorder %s69, %s70
      %p84 = scmp.eq.s32.totalorder %s48, 3
      %p85 = por %p83, %p84
      %p87 = scmp.ne.s32.totalorder %s70, %s86
      %p88 = scmp.eq.s32.totalorder %s48, 0
      %p89 = por %p87, %p88
      %s90 = ssub.s32 %s49, %s61
      %p91 = scmp.eq.s32.totalorder %s90, 0
      %s93 = sadd.s32 %s92, 1
      %s94 = scalar_select %p91, %s92, %s93
      %p97 = pneg %p91
      %p98 = scmp.eq.s32.totalorder %s42, 3
      %p99 = por %p97, %p98
      %p100 = scmp.ne.s32.totalorder %s92, %s95
      %p101 = scmp.eq.s32.totalorder %s42, 0
      %p102 = por %p100, %p101
      %p103 = scmp.ne.s32.totalorder %s92, %s95
      %p104 = scmp.eq.s32.totalorder %s47, 3
      %p105 = por %p103, %p104
      %p106 = scmp.ne.s32.totalorder %s95, %s96
      %p107 = scmp.eq.s32.totalorder %s47, 0
      %p108 = por %p106, %p107
      %p109 = scmp.ne.s32.totalorder %s95, %s96
      %p110 = scmp.eq.s32.totalorder %s48, 3
      %p111 = por %p109, %p110
      %p113 = scmp.ne.s32.totalorder %s96, %s112
      %p114 = scmp.eq.s32.totalorder %s48, 0
      %p115 = por %p113, %p114
      %s117 = sadd.s32 %s116, 1
      %p120 = scmp.eq.s32.totalorder %s42, 3
      %p121 = scmp.ne.s32.totalorder %s116, %s118
      %p122 = scmp.eq.s32.totalorder %s42, 0
      %p123 = por %p121, %p122
      %p124 = scmp.ne.s32.totalorder %s116, %s118
      %p125 = scmp.eq.s32.totalorder %s47, 3
      %p126 = por %p124, %p125
      %p127 = scmp.ne.s32.totalorder %s118, %s119
      %p128 = scmp.eq.s32.totalorder %s47, 0
      %p129 = por %p127, %p128
      %p130 = scmp.ne.s32.totalorder %s118, %s119
      %p131 = scmp.eq.s32.totalorder %s48, 3
      %p132 = por %p130, %p131
      %p134 = scmp.ne.s32.totalorder %s119, %s133
      %p135 = scmp.eq.s32.totalorder %s48, 0
      %p136 = por %p134, %p135
      %s138 = sadd.s32 %s137, 1
      %p141 = scmp.eq.s32.totalorder %s42, 3
      %p142 = scmp.ne.s32.totalorder %s137, %s139
      %p143 = scmp.eq.s32.totalorder %s42, 0
      %p144 = por %p142, %p143
      %p145 = scmp.ne.s32.totalorder %s137, %s139
      %p146 = scmp.eq.s32.totalorder %s47, 3
      %p147 = por %p145, %p146
      %p148 = scmp.ne.s32.totalorder %s139, %s140
      %p149 = scmp.eq.s32.totalorder %s47, 0
      %p150 = por %p148, %p149
      %p151 = scmp.ne.s32.totalorder %s139, %s140
      %p152 = scmp.eq.s32.totalorder %s48, 3
      %p153 = por %p151, %p152
      %p155 = scmp.ne.s32.totalorder %s140, %s154
      %p156 = scmp.eq.s32.totalorder %s48, 0
      %p157 = por %p155, %p156
      %s159 = sadd.s32 %s158, 1
      %p162 = scmp.eq.s32.totalorder %s42, 3
      %p163 = scmp.ne.s32.totalorder %s158, %s160
      %p164 = scmp.eq.s32.totalorder %s42, 0
      %p165 = por %p163, %p164
      %p166 = scmp.ne.s32.totalorder %s158, %s160
      %p167 = scmp.eq.s32.totalorder %s47, 3
      %p168 = por %p166, %p167
      %p169 = scmp.ne.s32.totalorder %s160, %s161
      %p170 = scmp.eq.s32.totalorder %s47, 0
      %p171 = por %p169, %p170
      %p172 = scmp.ne.s32.totalorder %s160, %s161
      %p173 = scmp.eq.s32.totalorder %s48, 3
      %p174 = por %p172, %p173
      %p176 = scmp.ne.s32.totalorder %s161, %s175
      %p177 = scmp.eq.s32.totalorder %s48, 0
      %p178 = por %p176, %p177
      %s180 = sadd.s32 %s179, 1
      %p183 = scmp.eq.s32.totalorder %s42, 3
      %p184 = scmp.ne.s32.totalorder %s179, %s181
      %p185 = scmp.eq.s32.totalorder %s42, 0
      %p186 = por %p184, %p185
      %p187 = scmp.ne.s32.totalorder %s179, %s181
      %p188 = scmp.eq.s32.totalorder %s47, 3
      %p189 = por %p187, %p188
      %p190 = scmp.ne.s32.totalorder %s181, %s182
      %p191 = scmp.eq.s32.totalorder %s47, 0
      %p192 = por %p190, %p191
      %p193 = scmp.ne.s32.totalorder %s181, %s182
      %p194 = scmp.eq.s32.totalorder %s48, 3
      %p195 = por %p193, %p194
      %p197 = scmp.ne.s32.totalorder %s182, %s196
      %p198 = scmp.eq.s32.totalorder %s48, 0
      %p199 = por %p197, %p198
      %s201 = sadd.s32 %s200, 1
      %p204 = scmp.eq.s32.totalorder %s42, 3
      %p205 = scmp.ne.s32.totalorder %s200, %s202
      %p206 = scmp.eq.s32.totalorder %s42, 0
      %p207 = por %p205, %p206
      %p208 = scmp.ne.s32.totalorder %s200, %s202
      %p209 = scmp.eq.s32.totalorder %s47, 3
      %p210 = por %p208, %p209
      %p211 = scmp.ne.s32.totalorder %s202, %s203
      %p212 = scmp.eq.s32.totalorder %s47, 0
      %p213 = por %p211, %p212
      %p214 = scmp.ne.s32.totalorder %s202, %s203
      %p215 = scmp.eq.s32.totalorder %s48, 3
      %p216 = por %p214, %p215
      %p218 = scmp.ne.s32.totalorder %s203, %s217
      %p219 = scmp.eq.s32.totalorder %s48, 0
      %p220 = por %p218, %p219
      %s222 = sadd.s32 %s221, 1
      %p225 = scmp.eq.s32.totalorder %s42, 3
      %p226 = scmp.ne.s32.totalorder %s221, %s223
      %p227 = scmp.eq.s32.totalorder %s42, 0
      %p228 = por %p226, %p227
      %p229 = scmp.ne.s32.totalorder %s221, %s223
      %p230 = scmp.eq.s32.totalorder %s47, 3
      %p231 = por %p229, %p230
      %p232 = scmp.ne.s32.totalorder %s223, %s224
      %p233 = scmp.eq.s32.totalorder %s47, 0
      %p234 = por %p232, %p233
      %p235 = scmp.ne.s32.totalorder %s223, %s224
      %p236 = scmp.eq.s32.totalorder %s48, 3
      %p237 = por %p235, %p236
      %p239 = scmp.ne.s32.totalorder %s224, %s238
      %p240 = scmp.eq.s32.totalorder %s48, 0
      %p241 = por %p239, %p240
      %s243 = sadd.s32 %s242, 1
      %p246 = scmp.eq.s32.totalorder %s42, 3
      %p247 = scmp.ne.s32.totalorder %s242, %s244
      %p248 = scmp.eq.s32.totalorder %s42, 0
      %p249 = por %p247, %p248
      %p250 = scmp.ne.s32.totalorder %s242, %s244
      %p251 = scmp.eq.s32.totalorder %s47, 3
      %p252 = por %p250, %p251
      %p253 = scmp.ne.s32.totalorder %s244, %s245
      %p254 = scmp.eq.s32.totalorder %s47, 0
      %p255 = por %p253, %p254
      %p256 = scmp.ne.s32.totalorder %s244, %s245
      %p257 = scmp.eq.s32.totalorder %s48, 3
      %p258 = por %p256, %p257
      %p260 = scmp.ne.s32.totalorder %s245, %s259
      %p261 = scmp.eq.s32.totalorder %s48, 0
      %p262 = por %p260, %p261
      %s264 = sadd.s32 %s263, 1
      %p267 = scmp.eq.s32.totalorder %s42, 3
      %p268 = scmp.ne.s32.totalorder %s263, %s265
      %p269 = scmp.eq.s32.totalorder %s42, 0
      %p270 = por %p268, %p269
      %p271 = scmp.ne.s32.totalorder %s263, %s265
      %p272 = scmp.eq.s32.totalorder %s47, 3
      %p273 = por %p271, %p272
      %p274 = scmp.ne.s32.totalorder %s265, %s266
      %p275 = scmp.eq.s32.totalorder %s47, 0
      %p276 = por %p274, %p275
      %p277 = scmp.ne.s32.totalorder %s265, %s266
      %p278 = scmp.eq.s32.totalorder %s48, 3
      %p279 = por %p277, %p278
      %p281 = scmp.ne.s32.totalorder %s266, %s280
      %p282 = scmp.eq.s32.totalorder %s48, 0
      %p283 = por %p281, %p282
      %s285 = sadd.s32 %s284, 1
      %p288 = scmp.eq.s32.totalorder %s42, 3
      %p289 = scmp.ne.s32.totalorder %s284, %s286
      %p290 = scmp.eq.s32.totalorder %s42, 0
      %p291 = por %p289, %p290
      %p292 = scmp.ne.s32.totalorder %s284, %s286
      %p293 = scmp.eq.s32.totalorder %s47, 3
      %p294 = por %p292, %p293
      %p295 = scmp.ne.s32.totalorder %s286, %s287
      %p296 = scmp.eq.s32.totalorder %s47, 0
      %p297 = por %p295, %p296
      %p298 = scmp.ne.s32.totalorder %s286, %s287
      %p299 = scmp.eq.s32.totalorder %s48, 3
      %p300 = por %p298, %p299
      %p302 = scmp.ne.s32.totalorder %s287, %s301
      %p303 = scmp.eq.s32.totalorder %s48, 0
      %p304 = por %p302, %p303
      %s306 = sadd.s32 %s305, 1
      %p309 = scmp.eq.s32.totalorder %s42, 3
      %p310 = scmp.ne.s32.totalorder %s305, %s307
      %p311 = scmp.eq.s32.totalorder %s42, 0
      %p312 = por %p310, %p311
      %p313 = scmp.ne.s32.totalorder %s305, %s307
      %p314 = scmp.eq.s32.totalorder %s47, 3
      %p315 = por %p313, %p314
      %p316 = scmp.ne.s32.totalorder %s307, %s308
      %p317 = scmp.eq.s32.totalorder %s47, 0
      %p318 = por %p316, %p317
      %p319 = scmp.ne.s32.totalorder %s307, %s308
      %p320 = scmp.eq.s32.totalorder %s48, 3
      %p321 = por %p319, %p320
      %p323 = scmp.ne.s32.totalorder %s308, %s322
      %p324 = scmp.eq.s32.totalorder %s48, 0
      %p325 = por %p323, %p324
      %s327 = sadd.s32 %s326, 1
      %p330 = scmp.eq.s32.totalorder %s42, 3
      %p331 = scmp.ne.s32.totalorder %s326, %s328
      %p332 = scmp.eq.s32.totalorder %s42, 0
      %p333 = por %p331, %p332
      %p334 = scmp.ne.s32.totalorder %s326, %s328
      %p335 = scmp.eq.s32.totalorder %s47, 3
      %p336 = por %p334, %p335
      %p337 = scmp.ne.s32.totalorder %s328, %s329
      %p338 = scmp.eq.s32.totalorder %s47, 0
      %p339 = por %p337, %p338
      %p340 = scmp.ne.s32.totalorder %s328, %s329
      %p341 = scmp.eq.s32.totalorder %s48, 3
      %p342 = por %p340, %p341
      %p344 = scmp.ne.s32.totalorder %s329, %s343
      %p345 = scmp.eq.s32.totalorder %s48, 0
      %p346 = por %p344, %p345
      %s348 = sadd.s32 %s347, 1
      %p351 = scmp.eq.s32.totalorder %s42, 3
      %p352 = scmp.ne.s32.totalorder %s347, %s349
      %p353 = scmp.eq.s32.totalorder %s42, 0
      %p354 = por %p352, %p353
      %p355 = scmp.ne.s32.totalorder %s347, %s349
      %p356 = scmp.eq.s32.totalorder %s47, 3
      %p357 = por %p355, %p356
      %p358 = scmp.ne.s32.totalorder %s349, %s350
      %p359 = scmp.eq.s32.totalorder %s47, 0
      %p360 = por %p358, %p359
      %p361 = scmp.ne.s32.totalorder %s349, %s350
      %p362 = scmp.eq.s32.totalorder %s48, 3
      %p363 = por %p361, %p362
      %p365 = scmp.ne.s32.totalorder %s350, %s364
      %p366 = scmp.eq.s32.totalorder %s48, 0
      %p367 = por %p365, %p366
      %s369 = sadd.s32 %s368, 1
      %p372 = scmp.eq.s32.totalorder %s42, 3
      %p373 = scmp.ne.s32.totalorder %s368, %s370
      %p374 = scmp.eq.s32.totalorder %s42, 0
      %p375 = por %p373, %p374
      %p376 = scmp.ne.s32.totalorder %s368, %s370
      %p377 = scmp.eq.s32.totalorder %s47, 3
      %p378 = por %p376, %p377
      %p379 = scmp.ne.s32.totalorder %s370, %s371
      %p380 = scmp.eq.s32.totalorder %s47, 0
      %p381 = por %p379, %p380
      %p382 = scmp.ne.s32.totalorder %s370, %s371
      %p383 = scmp.eq.s32.totalorder %s48, 3
      %p384 = por %p382, %p383
      %p386 = scmp.ne.s32.totalorder %s371, %s385
      %p387 = scmp.eq.s32.totalorder %s48, 0
      %p388 = por %p386, %p387
      %s390 = sadd.s32 %s389, 1
      %p393 = scmp.eq.s32.totalorder %s42, 3
      %p394 = scmp.ne.s32.totalorder %s389, %s391
      %p395 = scmp.eq.s32.totalorder %s42, 0
      %p396 = por %p394, %p395
      %p397 = scmp.ne.s32.totalorder %s389, %s391
      %p398 = scmp.eq.s32.totalorder %s47, 3
      %p399 = por %p397, %p398
      %p400 = scmp.ne.s32.totalorder %s391, %s392
      %p401 = scmp.eq.s32.totalorder %s47, 0
      %p402 = por %p400, %p401
      %p403 = scmp.ne.s32.totalorder %s391, %s392
      %p404 = scmp.eq.s32.totalorder %s48, 3
      %p405 = por %p403, %p404
      %p407 = scmp.ne.s32.totalorder %s392, %s406
      %p408 = scmp.eq.s32.totalorder %s48, 0
      %p409 = por %p407, %p408
      %s411 = sadd.s32 %s410, 1
      %p414 = scmp.eq.s32.totalorder %s42, 3
      %p415 = scmp.ne.s32.totalorder %s410, %s412
      %p416 = scmp.eq.s32.totalorder %s42, 0
      %p417 = por %p415, %p416
      %p418 = scmp.ne.s32.totalorder %s410, %s412
      %p419 = scmp.eq.s32.totalorder %s47, 3
      %p420 = por %p418, %p419
      %p421 = scmp.ne.s32.totalorder %s412, %s413
      %p422 = scmp.eq.s32.totalorder %s47, 0
      %p423 = por %p421, %p422
      %p424 = scmp.ne.s32.totalorder %s412, %s413
      %p425 = scmp.eq.s32.totalorder %s48, 3
      %p426 = por %p424, %p425
      %p428 = scmp.ne.s32.totalorder %s413, %s427
      %p429 = scmp.eq.s32.totalorder %s48, 0
      %p430 = por %p428, %p429
      %s432 = sadd.s32 %s431, 1
      %p435 = scmp.eq.s32.totalorder %s42, 3
      %p436 = scmp.ne.s32.totalorder %s431, %s433
      %p437 = scmp.eq.s32.totalorder %s42, 0
      %p438 = por %p436, %p437
      %p439 = scmp.ne.s32.totalorder %s431, %s433
      %p440 = scmp.eq.s32.totalorder %s47, 3
      %p441 = por %p439, %p440
      %p442 = scmp.ne.s32.totalorder %s433, %s434
      %p443 = scmp.eq.s32.totalorder %s47, 0
      %p444 = por %p442, %p443
      %p445 = scmp.ne.s32.totalorder %s433, %s434
      %p446 = scmp.eq.s32.totalorder %s48, 3
      %p447 = por %p445, %p446
      %p449 = scmp.ne.s32.totalorder %s434, %s448
      %p450 = scmp.eq.s32.totalorder %s48, 0
      %p451 = por %p449, %p450
      %s453 = sadd.s32 %s452, 1
      %p456 = scmp.eq.s32.totalorder %s42, 3
      %p457 = scmp.ne.s32.totalorder %s452, %s454
      %p458 = scmp.eq.s32.totalorder %s42, 0
      %p459 = por %p457, %p458
      %p460 = scmp.ne.s32.totalorder %s452, %s454
      %p461 = scmp.eq.s32.totalorder %s47, 3
      %p462 = por %p460, %p461
      %p463 = scmp.ne.s32.totalorder %s454, %s455
      %p464 = scmp.eq.s32.totalorder %s47, 0
      %p465 = por %p463, %p464
      %p466 = scmp.ne.s32.totalorder %s454, %s455
      %p467 = scmp.eq.s32.totalorder %s48, 3
      %p468 = por %p466, %p467
      %p470 = scmp.ne.s32.totalorder %s455, %s469
      %p471 = scmp.eq.s32.totalorder %s48, 0
      %p472 = por %p470, %p471
      %s474 = sadd.s32 %s473, 1
      %p477 = scmp.eq.s32.totalorder %s42, 3
      %p478 = scmp.ne.s32.totalorder %s473, %s475
      %p479 = scmp.eq.s32.totalorder %s42, 0
      %p480 = por %p478, %p479
      %p481 = scmp.ne.s32.totalorder %s473, %s475
      %p482 = scmp.eq.s32.totalorder %s47, 3
      %p483 = por %p481, %p482
      %p484 = scmp.ne.s32.totalorder %s475, %s476
      %p485 = scmp.eq.s32.totalorder %s47, 0
      %p486 = por %p484, %p485
      %p487 = scmp.ne.s32.totalorder %s475, %s476
      %p488 = scmp.eq.s32.totalorder %s48, 3
      %p489 = por %p487, %p488
      %p491 = scmp.ne.s32.totalorder %s476, %s490
      %p492 = scmp.eq.s32.totalorder %s48, 0
      %p493 = por %p491, %p492
      %s495 = sadd.s32 %s494, 1
      %p498 = scmp.eq.s32.totalorder %s42, 3
      %p499 = scmp.ne.s32.totalorder %s494, %s496
      %p500 = scmp.eq.s32.totalorder %s42, 0
      %p501 = por %p499, %p500
      %p502 = scmp.ne.s32.totalorder %s494, %s496
      %p503 = scmp.eq.s32.totalorder %s47, 3
      %p504 = por %p502, %p503
      %p505 = scmp.ne.s32.totalorder %s496, %s497
      %p506 = scmp.eq.s32.totalorder %s47, 0
      %p507 = por %p505, %p506
      %p508 = scmp.ne.s32.totalorder %s496, %s497
      %p509 = scmp.eq.s32.totalorder %s48, 3
      %p510 = por %p508, %p509
      %p512 = scmp.ne.s32.totalorder %s497, %s511
      %p513 = scmp.eq.s32.totalorder %s48, 0
      %p514 = por %p512, %p513
      %s516 = sadd.s32 %s515, 1
      %p519 = scmp.eq.s32.totalorder %s42, 3
      %p520 = scmp.ne.s32.totalorder %s515, %s517
      %p521 = scmp.eq.s32.totalorder %s42, 0
      %p522 = por %p520, %p521
      %p523 = scmp.ne.s32.totalorder %s515, %s517
      %p524 = scmp.eq.s32.totalorder %s47, 3
      %p525 = por %p523, %p524
      %p526 = scmp.ne.s32.totalorder %s517, %s518
      %p527 = scmp.eq.s32.totalorder %s47, 0
      %p528 = por %p526, %p527
      %p529 = scmp.ne.s32.totalorder %s517, %s518
      %p530 = scmp.eq.s32.totalorder %s48, 3
      %p531 = por %p529, %p530
      %p533 = scmp.ne.s32.totalorder %s518, %s532
      %p534 = scmp.eq.s32.totalorder %s48, 0
      %p535 = por %p533, %p534
      %s537 = sadd.s32 %s536, 1
      %p540 = scmp.eq.s32.totalorder %s42, 3
      %p541 = scmp.ne.s32.totalorder %s536, %s538
      %p542 = scmp.eq.s32.totalorder %s42, 0
      %p543 = por %p541, %p542
      %p544 = scmp.ne.s32.totalorder %s536, %s538
      %p545 = scmp.eq.s32.totalorder %s47, 3
      %p546 = por %p544, %p545
      %p547 = scmp.ne.s32.totalorder %s538, %s539
      %p548 = scmp.eq.s32.totalorder %s47, 0
      %p549 = por %p547, %p548
      %p550 = scmp.ne.s32.totalorder %s538, %s539
      %p551 = scmp.eq.s32.totalorder %s48, 3
      %p552 = por %p550, %p551
      %p554 = scmp.ne.s32.totalorder %s539, %s553
      %p555 = scmp.eq.s32.totalorder %s48, 0
      %p556 = por %p554, %p555
      %s558 = sadd.s32 %s557, 1
      %p561 = scmp.eq.s32.totalorder %s42, 3
      %p562 = scmp.ne.s32.totalorder %s557, %s559
      %p563 = scmp.eq.s32.totalorder %s42, 0
      %p564 = por %p562, %p563
      %p565 = scmp.ne.s32.totalorder %s557, %s559
      %p566 = scmp.eq.s32.totalorder %s47, 3
      %p567 = por %p565, %p566
      %p568 = scmp.ne.s32.totalorder %s559, %s560
      %p569 = scmp.eq.s32.totalorder %s47, 0
      %p570 = por %p568, %p569
      %p571 = scmp.ne.s32.totalorder %s559, %s560
      %p572 = scmp.eq.s32.totalorder %s48, 3
      %p573 = por %p571, %p572
      %p575 = scmp.ne.s32.totalorder %s560, %s574
      %p576 = scmp.eq.s32.totalorder %s48, 0
      %p577 = por %p575, %p576
      %s579 = sadd.s32 %s578, 1
      %p582 = scmp.eq.s32.totalorder %s42, 3
      %p583 = scmp.ne.s32.totalorder %s578, %s580
      %p584 = scmp.eq.s32.totalorder %s42, 0
      %p585 = por %p583, %p584
      %p586 = scmp.ne.s32.totalorder %s578, %s580
      %p587 = scmp.eq.s32.totalorder %s47, 3
      %p588 = por %p586, %p587
      %p589 = scmp.ne.s32.totalorder %s580, %s581
      %p590 = scmp.eq.s32.totalorder %s47, 0
      %p591 = por %p589, %p590
      %p592 = scmp.ne.s32.totalorder %s580, %s581
      %p593 = scmp.eq.s32.totalorder %s48, 3
      %p594 = por %p592, %p593
      %p596 = scmp.ne.s32.totalorder %s581, %s595
      %p597 = scmp.eq.s32.totalorder %s48, 0
      %p598 = por %p596, %p597
      %s599 = ssub.s32 %s49, %s61
      %s600 = ssub.s32 %s50, %s57
      %s601 = sor.u32 %s599, %s600
      %p602 = scmp.eq.s32.totalorder %s601, 0
      %s604 = sadd.s32 %s603, 1
      %s605 = scalar_select %p602, %s603, %s604
      %p608 = pneg %p602
      %p609 = scmp.eq.s32.totalorder %s42, 3
      %p610 = por %p608, %p609
      %p611 = scmp.ne.s32.totalorder %s603, %s606
      %p612 = scmp.eq.s32.totalorder %s42, 0
      %p613 = por %p611, %p612
      %p614 = scmp.ne.s32.totalorder %s603, %s606
      %p615 = scmp.eq.s32.totalorder %s47, 3
      %p616 = por %p614, %p615
      %p617 = scmp.ne.s32.totalorder %s606, %s607
      %p618 = scmp.eq.s32.totalorder %s47, 0
      %p619 = por %p617, %p618
      %p620 = scmp.ne.s32.totalorder %s606, %s607
      %p621 = scmp.eq.s32.totalorder %s48, 3
      %p622 = por %p620, %p621
      %p624 = scmp.ne.s32.totalorder %s607, %s623
      %p625 = scmp.eq.s32.totalorder %s48, 0
      %p626 = por %p624, %p625
      %s627 = ssub.s32 %s49, %s61
      %p628 = scmp.eq.s32.totalorder %s627, 0
      %s630 = sadd.s32 %s629, 1
      %s631 = scalar_select %p628, %s629, %s630
      %p634 = pneg %p628
      %p635 = scmp.eq.s32.totalorder %s42, 3
      %p636 = por %p634, %p635
      %p637 = scmp.ne.s32.totalorder %s629, %s632
      %p638 = scmp.eq.s32.totalorder %s42, 0
      %p639 = por %p637, %p638
      %p640 = scmp.ne.s32.totalorder %s629, %s632
      %p641 = scmp.eq.s32.totalorder %s47, 3
      %p642 = por %p640, %p641
      %p643 = scmp.ne.s32.totalorder %s632, %s633
      %p644 = scmp.eq.s32.totalorder %s47, 0
      %p645 = por %p643, %p644
      %p646 = scmp.ne.s32.totalorder %s632, %s633
      %p647 = scmp.eq.s32.totalorder %s48, 3
      %p648 = por %p646, %p647
      %p650 = scmp.ne.s32.totalorder %s633, %s649
      %p651 = scmp.eq.s32.totalorder %s48, 0
      %p652 = por %p650, %p651
      %p653 = scmp.le.s32.totalorder 1, %s42
      %p654 = scmp.lt.s32.totalorder %s42, 5
      %p655 = pnand %p653, %p654
      %p656 = pneg %p655
      // Predicated region
      $region9: #{tpu_custom_call.1} parent=5 // pred_check
        _
      $region10: #{tpu_custom_call.1} parent=5 // pred_check_branch
        %658 = sbr.rel (%p655) target = $region12
      $region11: #{tpu_custom_call.1} parent=5 // pred_region
        %s659 = ssub.s32 %s42, 1
        // Predicated region
        $region13: #{tpu_custom_call.1} parent=11 // pred_check
          %p660 = pneg %p129
        $region14: #{tpu_custom_call.1} parent=11 // pred_check_branch
          %662 = sbr.rel (%p660) target = $region16
        $region15: #{tpu_custom_call.1} parent=11 // pred_region
          _
        $region16: #{tpu_custom_call.1} parent=11 // pred_fallthru
          _
        // Predicated region
        $region17: #{tpu_custom_call.1} parent=11 // pred_check
          %p663 = pneg %p150
        $region18: #{tpu_custom_call.1} parent=11 // pred_check_branch
          %665 = sbr.rel (%p663) target = $region20
        $region19: #{tpu_custom_call.1} parent=11 // pred_region
          _
        $region20: #{tpu_custom_call.1} parent=11 // pred_fallthru
          _
        // Predicated region
        $region21: #{tpu_custom_call.1} parent=11 // pred_check
          %p666 = pneg %p171
        $region22: #{tpu_custom_call.1} parent=11 // pred_check_branch
          %668 = sbr.rel (%p666) target = $region24
        $region23: #{tpu_custom_call.1} parent=11 // pred_region
          _
        $region24: #{tpu_custom_call.1} parent=11 // pred_fallthru
          _
        // Predicated region
        $region25: #{tpu_custom_call.1} parent=11 // pred_check
          %p669 = pneg %p192
        $region26: #{tpu_custom_call.1} parent=11 // pred_check_branch
          %671 = sbr.rel (%p669) target = $region28
        $region27: #{tpu_custom_call.1} parent=11 // pred_region
          _
        $region28: #{tpu_custom_call.1} parent=11 // pred_fallthru
          _
        // Predicated region
        $region29: #{tpu_custom_call.1} parent=11 // pred_check
          %p672 = pneg %p213
        $region30: #{tpu_custom_call.1} parent=11 // pred_check_branch
          %674 = sbr.rel (%p672) target = $region32
        $region31: #{tpu_custom_call.1} parent=11 // pred_region
          _
        $region32: #{tpu_custom_call.1} parent=11 // pred_fallthru
          _
        // Predicated region
        $region33: #{tpu_custom_call.1} parent=11 // pred_check
          %p675 = pneg %p234
        $region34: #{tpu_custom_call.1} parent=11 // pred_check_branch
          %677 = sbr.rel (%p675) target = $region36
        $region35: #{tpu_custom_call.1} parent=11 // pred_region
          _
        $region36: #{tpu_custom_call.1} parent=11 // pred_fallthru
          _
        // Predicated region
        $region37: #{tpu_custom_call.1} parent=11 // pred_check
          %p678 = pneg %p255
        $region38: #{tpu_custom_call.1} parent=11 // pred_check_branch
          %680 = sbr.rel (%p678) target = $region40
        $region39: #{tpu_custom_call.1} parent=11 // pred_region
          _
        $region40: #{tpu_custom_call.1} parent=11 // pred_fallthru
          _
        // Predicated region
        $region41: #{tpu_custom_call.1} parent=11 // pred_check
          %p681 = pneg %p276
        $region42: #{tpu_custom_call.1} parent=11 // pred_check_branch
          %683 = sbr.rel (%p681) target = $region44
        $region43: #{tpu_custom_call.1} parent=11 // pred_region
          _
        $region44: #{tpu_custom_call.1} parent=11 // pred_fallthru
          _
        // Predicated region
        $region45: #{tpu_custom_call.1} parent=11 // pred_check
          %p684 = pneg %p297
        $region46: #{tpu_custom_call.1} parent=11 // pred_check_branch
          %686 = sbr.rel (%p684) target = $region48
        $region47: #{tpu_custom_call.1} parent=11 // pred_region
          _
        $region48: #{tpu_custom_call.1} parent=11 // pred_fallthru
          _
        // Predicated region
        $region49: #{tpu_custom_call.1} parent=11 // pred_check
          %p687 = pneg %p318
        $region50: #{tpu_custom_call.1} parent=11 // pred_check_branch
          %689 = sbr.rel (%p687) target = $region52
        $region51: #{tpu_custom_call.1} parent=11 // pred_region
          _
        $region52: #{tpu_custom_call.1} parent=11 // pred_fallthru
          _
        // Predicated region
        $region53: #{tpu_custom_call.1} parent=11 // pred_check
          %p690 = pneg %p339
        $region54: #{tpu_custom_call.1} parent=11 // pred_check_branch
          %692 = sbr.rel (%p690) target = $region56
        $region55: #{tpu_custom_call.1} parent=11 // pred_region
          _
        $region56: #{tpu_custom_call.1} parent=11 // pred_fallthru
          _
        // Predicated region
        $region57: #{tpu_custom_call.1} parent=11 // pred_check
          %p693 = pneg %p360
        $region58: #{tpu_custom_call.1} parent=11 // pred_check_branch
          %695 = sbr.rel (%p693) target = $region60
        $region59: #{tpu_custom_call.1} parent=11 // pred_region
          _
        $region60: #{tpu_custom_call.1} parent=11 // pred_fallthru
          _
        // Predicated region
        $region61: #{tpu_custom_call.1} parent=11 // pred_check
          %p696 = pneg %p381
        $region62: #{tpu_custom_call.1} parent=11 // pred_check_branch
          %698 = sbr.rel (%p696) target = $region64
        $region63: #{tpu_custom_call.1} parent=11 // pred_region
          _
        $region64: #{tpu_custom_call.1} parent=11 // pred_fallthru
          _
        // Predicated region
        $region65: #{tpu_custom_call.1} parent=11 // pred_check
          %p699 = pneg %p402
        $region66: #{tpu_custom_call.1} parent=11 // pred_check_branch
          %701 = sbr.rel (%p699) target = $region68
        $region67: #{tpu_custom_call.1} parent=11 // pred_region
          _
        $region68: #{tpu_custom_call.1} parent=11 // pred_fallthru
          _
        // Predicated region
        $region69: #{tpu_custom_call.1} parent=11 // pred_check
          %p702 = pneg %p423
        $region70: #{tpu_custom_call.1} parent=11 // pred_check_branch
          %704 = sbr.rel (%p702) target = $region72
        $region71: #{tpu_custom_call.1} parent=11 // pred_region
          _
        $region72: #{tpu_custom_call.1} parent=11 // pred_fallthru
          _
        // Predicated region
        $region73: #{tpu_custom_call.1} parent=11 // pred_check
          %p705 = pneg %p444
        $region74: #{tpu_custom_call.1} parent=11 // pred_check_branch
          %707 = sbr.rel (%p705) target = $region76
        $region75: #{tpu_custom_call.1} parent=11 // pred_region
          _
        $region76: #{tpu_custom_call.1} parent=11 // pred_fallthru
          _
        // Predicated region
        $region77: #{tpu_custom_call.1} parent=11 // pred_check
          %p708 = pneg %p465
        $region78: #{tpu_custom_call.1} parent=11 // pred_check_branch
          %710 = sbr.rel (%p708) target = $region80
        $region79: #{tpu_custom_call.1} parent=11 // pred_region
          _
        $region80: #{tpu_custom_call.1} parent=11 // pred_fallthru
          _
        // Predicated region
        $region81: #{tpu_custom_call.1} parent=11 // pred_check
          %p711 = pneg %p486
        $region82: #{tpu_custom_call.1} parent=11 // pred_check_branch
          %713 = sbr.rel (%p711) target = $region84
        $region83: #{tpu_custom_call.1} parent=11 // pred_region
          _
        $region84: #{tpu_custom_call.1} parent=11 // pred_fallthru
          _
        // Predicated region
        $region85: #{tpu_custom_call.1} parent=11 // pred_check
          %p714 = pneg %p507
        $region86: #{tpu_custom_call.1} parent=11 // pred_check_branch
          %716 = sbr.rel (%p714) target = $region88
        $region87: #{tpu_custom_call.1} parent=11 // pred_region
          _
        $region88: #{tpu_custom_call.1} parent=11 // pred_fallthru
          _
        // Predicated region
        $region89: #{tpu_custom_call.1} parent=11 // pred_check
          %p717 = pneg %p528
        $region90: #{tpu_custom_call.1} parent=11 // pred_check_branch
          %719 = sbr.rel (%p717) target = $region92
        $region91: #{tpu_custom_call.1} parent=11 // pred_region
          _
        $region92: #{tpu_custom_call.1} parent=11 // pred_fallthru
          _
        // Predicated region
        $region93: #{tpu_custom_call.1} parent=11 // pred_check
          %p720 = pneg %p549
        $region94: #{tpu_custom_call.1} parent=11 // pred_check_branch
          %722 = sbr.rel (%p720) target = $region96
        $region95: #{tpu_custom_call.1} parent=11 // pred_region
          _
        $region96: #{tpu_custom_call.1} parent=11 // pred_fallthru
          _
        // Predicated region
        $region97: #{tpu_custom_call.1} parent=11 // pred_check
          %p723 = pneg %p570
        $region98: #{tpu_custom_call.1} parent=11 // pred_check_branch
          %725 = sbr.rel (%p723) target = $region100
        $region99: #{tpu_custom_call.1} parent=11 // pred_region
          _
        $region100: #{tpu_custom_call.1} parent=11 // pred_fallthru
          _
        // Predicated region
        $region101: #{tpu_custom_call.1} parent=11 // pred_check
          %p726 = pneg %p591
        $region102: #{tpu_custom_call.1} parent=11 // pred_check_branch
          %728 = sbr.rel (%p726) target = $region104
        $region103: #{tpu_custom_call.1} parent=11 // pred_region
          _
        $region104: #{tpu_custom_call.1} parent=11 // pred_fallthru
          _
      $region12: #{tpu_custom_call.1} parent=5 // pred_fallthru
        _
      %p729 = scmp.lt.s32.totalorder %s42, 4
      // Predicated region
      $region105: #{tpu_custom_call.1} parent=5 // pred_check
        %p730 = pneg %p729
      $region106: #{tpu_custom_call.1} parent=5 // pred_check_branch
        %732 = sbr.rel (%p730) target = $region108
      $region107: #{tpu_custom_call.1} parent=5 // pred_region
        // Predicated region
        $region109: #{tpu_custom_call.1} parent=107 // pred_check
          %p733 = pneg %p76
        $region110: #{tpu_custom_call.1} parent=107 // pred_check_branch
          %735 = sbr.rel (%p733) target = $region112
        $region111: #{tpu_custom_call.1} parent=107 // pred_region
          %p736 = scmp.lt.s32.totalorder %s49, 1
          %s737 = scalar_select %p736, %s49, 1
          %p738 = scmp.lt.s32.totalorder %s50, 1
          %s739 = scalar_select %p738, %s50, 1
          %s740 = smul.addr %s737, 2
          %s741 = sadd.s32 %s739, %s740
          %s742 = smul.addr %s741, 4
          %s743 = scalar_lea.vmem %s0, %s742
        $region112: #{tpu_custom_call.1} parent=107 // pred_fallthru
          _
        // Predicated region
        $region113: #{tpu_custom_call.1} parent=107 // pred_check
          %p744 = pneg %p102
        $region114: #{tpu_custom_call.1} parent=107 // pred_check_branch
          %746 = sbr.rel (%p744) target = $region116
        $region115: #{tpu_custom_call.1} parent=107 // pred_region
          %s747 = sand.u32 %s92, 1
          %s748 = scalar_lea.sflag [#allocation4], %s747
          %s749 = sand.u32 %s92, 1
          %s750 = smul.addr %s749, 16
          %s751 = scalar_lea.vmem [#allocation3], %s750
          %s753 = ssub.s32 256, 256
          %754 = vsyncadd %s748, %s753
          %s755 = smul.addr %s49, 4
          %s756 = smul.addr %s755, 64
          %s757 = scalar_lea.hbm %s1, %s756
          %s758 = sshll.u32 %s751, 4
          %s759 = int_to_ptr.vmem [resolvable:$true] %s758
          %764 = dma.hbm_to_vmem [thread:$0]  %s757, 256, %s759, %s748, 64, 64, 4
        $region116: #{tpu_custom_call.1} parent=107 // pred_fallthru
          _
      $region108: #{tpu_custom_call.1} parent=5 // pred_fallthru
        _
      %p765 = scmp.le.s32.totalorder 1, %s42
      %p766 = scmp.lt.s32.totalorder %s42, 5
      %p767 = pnand %p765, %p766
      %p768 = pneg %p767
      // Predicated region
      $region117: #{tpu_custom_call.1} parent=5 // pred_check
        _
      $region118: #{tpu_custom_call.1} parent=5 // pred_check_branch
        %770 = sbr.rel (%p767) target = $region120
      $region119: #{tpu_custom_call.1} parent=5 // pred_region
        %s771 = ssub.s32 %s42, 1
        %s772 = sand.u32 %s95, 1
        %s773 = scalar_lea.sflag [#allocation4], %s772
        %s774 = sand.u32 %s95, 1
        %s775 = smul.addr %s774, 16
        %s776 = scalar_lea.vmem [#allocation3], %s775
        // Predicated region
        $region121: #{tpu_custom_call.1} parent=119 // pred_check
          %p777 = pneg %p108
        $region122: #{tpu_custom_call.1} parent=119 // pred_check_branch
          %779 = sbr.rel (%p777) target = $region124
        $region123: #{tpu_custom_call.1} parent=119 // pred_region
          %780 = dma.done %s773, 256
        $region124: #{tpu_custom_call.1} parent=119 // pred_fallthru
          _
        %p781 = scmp.lt.s32.totalorder %s51, 1
        %s782 = scalar_select %p781, %s51, 1
        %p783 = scmp.lt.s32.totalorder %s52, 1
        %s784 = scalar_select %p783, %s52, 1
        %s785 = smul.addr %s782, 2
        %s786 = sadd.s32 %s784, %s785
        %s787 = smul.addr %s786, 4
        %s788 = scalar_lea.vmem %s0, %s787
        %p789 = pneg %p82
        %p790 = pneg %p79
        %s791 = sand.u32 %s95, 1
        %s792 = scalar_lea.sflag [#allocation4], %s791
        %s793 = sand.u32 %s95, 1
        %s794 = smul.addr %s793, 16
        %s795 = scalar_lea.vmem [#allocation3], %s794
        %p796 = pneg %p108
        %p797 = pneg %p105
        %p798 = pneg %p129
        %p799 = pneg %p126
        %p800 = pneg %p150
        %p801 = pneg %p147
        %p802 = pneg %p171
        %p803 = pneg %p168
        %p804 = pneg %p192
        %p805 = pneg %p189
        %p806 = pneg %p213
        %p807 = pneg %p210
        %p808 = pneg %p234
        %p809 = pneg %p231
        %p810 = pneg %p255
        %p811 = pneg %p252
        %p812 = pneg %p276
        %p813 = pneg %p273
        %p814 = pneg %p297
        %p815 = pneg %p294
        %p816 = pneg %p318
        %p817 = pneg %p315
        %p818 = pneg %p339
        %p819 = pneg %p336
        %p820 = pneg %p360
        %p821 = pneg %p357
        %p822 = pneg %p381
        %p823 = pneg %p378
        %p824 = pneg %p402
        %p825 = pneg %p399
        %p826 = pneg %p423
        %p827 = pneg %p420
        %p828 = pneg %p444
        %p829 = pneg %p441
        %p830 = pneg %p465
        %p831 = pneg %p462
        %p832 = pneg %p486
        %p833 = pneg %p483
        %p834 = pneg %p507
        %p835 = pneg %p504
        %p836 = pneg %p528
        %p837 = pneg %p525
        %p838 = pneg %p549
        %p839 = pneg %p546
        %p840 = pneg %p570
        %p841 = pneg %p567
        %p842 = pneg %p591
        %p843 = pneg %p588
        %p844 = pneg %p619
        %p845 = pneg %p616
        %s846 = sand.u32 %s606, 1
        %s847 = scalar_lea.sflag [#allocation5], %s846
        %s848 = sand.u32 %s606, 1
        %s849 = smul.addr %s848, 4
        %s850 = scalar_lea.vmem [#allocation6], %s849
        %p851 = pneg %p645
        %p852 = pneg %p642
        %s853 = sand.u32 %s632, 1
        %s854 = scalar_lea.sflag [#allocation8], %s853
        %s855 = sand.u32 %s632, 1
        %s856 = smul.addr %s855, 16
        %s857 = scalar_lea.vmem [#allocation7], %s856
        %p858 = scmp.lt.s32.totalorder %s51, 1
        %s859 = scalar_select %p858, %s51, 1
        %p860 = scmp.lt.s32.totalorder %s52, 1
        %s861 = scalar_select %p860, %s52, 1
        %s862 = smul.addr %s859, 2
        %s863 = sadd.s32 %s861, %s862
        %s864 = smul.addr %s863, 4
        %s865 = scalar_lea.vmem %s0, %s864
        %v867 = vld [vmem:[%s865] sm:$0xf]
        %p868 = scmp.eq.s32.totalorder %s52, 0
        // Predicated region
        $region125: #{tpu_custom_call.1} parent=119 // pred_check
          %p869 = pneg %p868
        $region126: #{tpu_custom_call.1} parent=119 // pred_check_branch
          %871 = sbr.rel (%p869) target = $region128
        $region127: #{tpu_custom_call.1} parent=119 // pred_region
          %v872 = vld [vmem:[%s776] sm:$0xf]
          %v873 = vld [vmem:[%s776 + $0x4] sm:$0xf]
          %v874 = vld [vmem:[%s776 + $0x8] sm:$0xf]
          %v875 = vld [vmem:[%s776 + $0xc] sm:$0xf]
          %v876 = vunpack.c.l.bf16 %v872
          %v877 = vunpack.c.l.bf16 %v873
          %v878 = vunpack.c.l.bf16 %v874
          %v879 = vunpack.c.l.bf16 %v875
          %vm880 = vcmask 64512
          %881 = vst.msk [vmem:[#allocation2] sm:$0xff] %vm880, %v876
          %882 = vst.msk [vmem:[#allocation2 + $0x8] sm:$0xff] %vm880, %v877
          %883 = vst.msk [vmem:[#allocation2 + $0x10] sm:$0xff] %vm880, %v878
          %884 = vst.msk [vmem:[#allocation2 + $0x18] sm:$0xff] %vm880, %v879
        $region128: #{tpu_custom_call.1} parent=119 // pred_fallthru
          _
        %v885 = vunpack.c.l.bf16 %v867
        %v886 = vld [vmem:[%s7] sm:$0x1]
        %v887 = vld [vmem:[%s8] sm:$0x1]
        %vm888 = vcmask 261120
        %v889 = vsel %vm888, %v885, 0.0
        %890 = vadd.xlane.f32.xlu0 %v889
        %v891 = vpop.xlane.xlu0 %890
        %v892 = vrcp.pop 32.0
        %v893 = vmul.f32 %v891, %v892
        %v894 = vsub.f32 %v885, %v893
        %v895 = vmul.f32 %v894, %v894
        %v896 = vsel %vm888, %v895, 0.0
        %897 = vadd.xlane.f32.xlu0 %v896
        %v898 = vpop.xlane.xlu0 %897
        %v899 = vmul.f32 %v898, %v892
        %v900 = vadd.f32 %v899, 1e-06
        %v901 = vrsqrt.pop %v900
        %v902 = vmul.f32 %v894, %v901
        %v904 = vlaneseq
        %v905 = vshrl.u32 %v904, 7
        %v906 = vsub.s32 0, %v905
        %v907 = vrot.slane %v886, %v906
        %v909 = vmul.f32 %v902, %v907
        %v911 = vlaneseq
        %v912 = vshrl.u32 %v911, 7
        %v913 = vsub.s32 0, %v912
        %v914 = vrot.slane %v887, %v913
        %v916 = vadd.f32 %v909, %v914
        %v917 = vpack.c.bf16 %v916, %v916
        %v918 = vlaneseq
        %v919 = vshrl.u32 %v918, 7
        %v920 = vlaneseq
        %v921 = vand.u32 %v920, 127
        %vm922 = vcmp.ge.s32.totalorder %v919, %v921
        %v923 = vld [vmem:[%s11] sm:$0xf]
        %v924 = vld [vmem:[%s11 + $0x4] sm:$0xf]
        %v925 = vld [vmem:[%s11 + $0x8] sm:$0xf]
        %v926 = vld [vmem:[%s11 + $0xc] sm:$0xf]
        %v927 = vld [vmem:[%s12] sm:$0x1]
        %v929 = vlaneseq
        %v930 = vshrl.u32 %v929, 7
        %v931 = vsub.s32 0, %v930
        %v932 = vrot.slane %v927, %v931
        %v938 = vunpack.c.l.b16 %v923
        %v939 = vunpack.c.l.b16 %v924
        %v940 = vunpack.c.l.b16 %v925
        %v941 = vunpack.c.l.b16 %v926
        %v942 = vpack.c.b16 %v939, %v938
        %v943 = vpack.c.b16 %v941, %v940
        %v947 = vsel %vm888, %v917, 0
        %949 = vmatprep.subr.bf16.mxu0 0
        %950 = vmatpush1.bf16.msra.mxu0 0
        %951 = vmatprep.subr.bf16.mxu0 0
        %952 = vmatpush1.bf16.msra.mxu0 0
        %953 = vmatprep.subr.bf16.mxu0 0
        %954 = vmatpush1.bf16.msra.mxu0 0
        %955 = vmatprep.subr.bf16.mxu0 0
        %956 = vmatpush1.bf16.msra.mxu0 0
        %957 = vmatprep.subr.bf16.mxu0 0
        %958 = vmatpush1.bf16.msra.mxu0 0
        %959 = vmatprep.subr.bf16.mxu0 0
        %960 = vmatpush1.bf16.msra.mxu0 0
        %961 = vmatprep.subr.bf16.mxu0 0
        %962 = vmatpush1.bf16.msra.mxu0 %v943
        %963 = vmatprep.subr.bf16.mxu0 0
        %964 = vmatpush1.bf16.msra.mxu0 %v942
        %965 = vmatprep.subr.bf16.mxu0 0
        %966 = vmatpush2.bf16.msra.mxu0 0
        %967 = vmatprep.subr.bf16.mxu0 0
        %968 = vmatpush2.bf16.msra.mxu0 0
        %969 = vmatprep.subr.bf16.mxu0 0
        %970 = vmatpush2.bf16.msra.mxu0 0
        %971 = vmatprep.subr.bf16.mxu0 0
        %972 = vmatpush2.bf16.msra.mxu0 0
        %973 = vmatprep.subr.bf16.mxu0 0
        %974 = vmatpush2.bf16.msra.mxu0 0
        %975 = vmatprep.subr.bf16.mxu0 0
        %976 = vmatpush2.bf16.msra.mxu0 0
        %977 = vmatprep.subr.bf16.mxu0 0
        %978 = vmatpush2.bf16.msra.mxu0 0
        %979 = vmatprep.subr.bf16.mxu0 0
        %980 = vmatpush2.bf16.msra.mxu0 0
        %981 = vmatprep.mubr.bf16.mxu0 0
        %982 = vmatmul.mubr.bf16.gmra.mxu0 %v947
        %v983 = vpop.f32.mrf.mxu0
        %v984 = vadd.f32 %v932, %v983
        %v985 = vpop.f32.mrf.mxu0
        %v986 = vpop.f32.mrf.mxu0
        %v987 = vpop.f32.mrf.mxu0
        %988 = vdwg.mxu0
        %v989 = vld [vmem:[%s13] sm:$0xf]
        %v990 = vld [vmem:[%s13 + $0x4] sm:$0xf]
        %v991 = vld [vmem:[%s13 + $0x8] sm:$0xf]
        %v992 = vld [vmem:[%s13 + $0xc] sm:$0xf]
        %v993 = vld [vmem:[%s14] sm:$0x1]
        %v995 = vlaneseq
        %v996 = vshrl.u32 %v995, 7
        %v997 = vsub.s32 0, %v996
        %v998 = vrot.slane %v993, %v997
        %v1004 = vunpack.c.l.b16 %v989
        %v1005 = vunpack.c.l.b16 %v990
        %v1006 = vunpack.c.l.b16 %v991
        %v1007 = vunpack.c.l.b16 %v992
        %v1008 = vpack.c.b16 %v1005, %v1004
        %v1009 = vpack.c.b16 %v1007, %v1006
        %1012 = vmatprep.subr.bf16.mxu0 0
        %1013 = vmatpush1.bf16.msra.mxu0 0
        %1014 = vmatprep.subr.bf16.mxu0 0
        %1015 = vmatpush1.bf16.msra.mxu0 0
        %1016 = vmatprep.subr.bf16.mxu0 0
        %1017 = vmatpush1.bf16.msra.mxu0 0
        %1018 = vmatprep.subr.bf16.mxu0 0
        %1019 = vmatpush1.bf16.msra.mxu0 0
        %1020 = vmatprep.subr.bf16.mxu0 0
        %1021 = vmatpush1.bf16.msra.mxu0 0
        %1022 = vmatprep.subr.bf16.mxu0 0
        %1023 = vmatpush1.bf16.msra.mxu0 0
        %1024 = vmatprep.subr.bf16.mxu0 0
        %1025 = vmatpush1.bf16.msra.mxu0 %v1009
        %1026 = vmatprep.subr.bf16.mxu0 0
        %1027 = vmatpush1.bf16.msra.mxu0 %v1008
        %1028 = vmatprep.subr.bf16.mxu0 0
        %1029 = vmatpush2.bf16.msra.mxu0 0
        %1030 = vmatprep.subr.bf16.mxu0 0
        %1031 = vmatpush2.bf16.msra.mxu0 0
        %1032 = vmatprep.subr.bf16.mxu0 0
        %1033 = vmatpush2.bf16.msra.mxu0 0
        %1034 = vmatprep.subr.bf16.mxu0 0
        %1035 = vmatpush2.bf16.msra.mxu0 0
        %1036 = vmatprep.subr.bf16.mxu0 0
        %1037 = vmatpush2.bf16.msra.mxu0 0
        %1038 = vmatprep.subr.bf16.mxu0 0
        %1039 = vmatpush2.bf16.msra.mxu0 0
        %1040 = vmatprep.subr.bf16.mxu0 0
        %1041 = vmatpush2.bf16.msra.mxu0 0
        %1042 = vmatprep.subr.bf16.mxu0 0
        %1043 = vmatpush2.bf16.msra.mxu0 0
        %1044 = vmatprep.mubr.bf16.mxu0 0
        %1045 = vmatmul.mubr.bf16.gmra.mxu0 %v947
        %v1046 = vpop.f32.mrf.mxu0
        %v1047 = vadd.f32 %v998, %v1046
        %v1048 = vpop.f32.mrf.mxu0
        %v1049 = vpop.f32.mrf.mxu0
        %v1050 = vpop.f32.mrf.mxu0
        %1051 = vdwg.mxu0
        %v1052 = vld [vmem:[%s15] sm:$0xf]
        %v1053 = vld [vmem:[%s15 + $0x4] sm:$0xf]
        %v1054 = vld [vmem:[%s15 + $0x8] sm:$0xf]
        %v1055 = vld [vmem:[%s15 + $0xc] sm:$0xf]
        %v1056 = vld [vmem:[%s16] sm:$0x1]
        %v1058 = vlaneseq
        %v1059 = vshrl.u32 %v1058, 7
        %v1060 = vsub.s32 0, %v1059
        %v1061 = vrot.slane %v1056, %v1060
        %v1067 = vunpack.c.l.b16 %v1052
        %v1068 = vunpack.c.l.b16 %v1053
        %v1069 = vunpack.c.l.b16 %v1054
        %v1070 = vunpack.c.l.b16 %v1055
        %v1071 = vpack.c.b16 %v1068, %v1067
        %v1072 = vpack.c.b16 %v1070, %v1069
        %1075 = vmatprep.subr.bf16.mxu0 0
        %1076 = vmatpush1.bf16.msra.mxu0 0
        %1077 = vmatprep.subr.bf16.mxu0 0
        %1078 = vmatpush1.bf16.msra.mxu0 0
        %1079 = vmatprep.subr.bf16.mxu0 0
        %1080 = vmatpush1.bf16.msra.mxu0 0
        %1081 = vmatprep.subr.bf16.mxu0 0
        %1082 = vmatpush1.bf16.msra.mxu0 0
        %1083 = vmatprep.subr.bf16.mxu0 0
        %1084 = vmatpush1.bf16.msra.mxu0 0
        %1085 = vmatprep.subr.bf16.mxu0 0
        %1086 = vmatpush1.bf16.msra.mxu0 0
        %1087 = vmatprep.subr.bf16.mxu0 0
        %1088 = vmatpush1.bf16.msra.mxu0 %v1072
        %1089 = vmatprep.subr.bf16.mxu0 0
        %1090 = vmatpush1.bf16.msra.mxu0 %v1071
        %1091 = vmatprep.subr.bf16.mxu0 0
        %1092 = vmatpush2.bf16.msra.mxu0 0
        %1093 = vmatprep.subr.bf16.mxu0 0
        %1094 = vmatpush2.bf16.msra.mxu0 0
        %1095 = vmatprep.subr.bf16.mxu0 0
        %1096 = vmatpush2.bf16.msra.mxu0 0
        %1097 = vmatprep.subr.bf16.mxu0 0
        %1098 = vmatpush2.bf16.msra.mxu0 0
        %1099 = vmatprep.subr.bf16.mxu0 0
        %1100 = vmatpush2.bf16.msra.mxu0 0
        %1101 = vmatprep.subr.bf16.mxu0 0
        %1102 = vmatpush2.bf16.msra.mxu0 0
        %1103 = vmatprep.subr.bf16.mxu0 0
        %1104 = vmatpush2.bf16.msra.mxu0 0
        %1105 = vmatprep.subr.bf16.mxu0 0
        %1106 = vmatpush2.bf16.msra.mxu0 0
        %1107 = vmatprep.mubr.bf16.mxu0 0
        %1108 = vmatmul.mubr.bf16.gmra.mxu0 %v947
        %v1109 = vpop.f32.mrf.mxu0
        %v1110 = vadd.f32 %v1061, %v1109
        %v1111 = vpop.f32.mrf.mxu0
        %v1112 = vpop.f32.mrf.mxu0
        %v1113 = vpop.f32.mrf.mxu0
        %1114 = vdwg.mxu0
        %v1115 = vld [vmem:[%s17] sm:$0xf]
        %v1116 = vld [vmem:[%s17 + $0x4] sm:$0xf]
        %v1117 = vld [vmem:[%s17 + $0x8] sm:$0xf]
        %v1118 = vld [vmem:[%s17 + $0xc] sm:$0xf]
        %v1119 = vld [vmem:[%s18] sm:$0x1]
        %v1121 = vlaneseq
        %v1122 = vshrl.u32 %v1121, 7
        %v1123 = vsub.s32 0, %v1122
        %v1124 = vrot.slane %v1119, %v1123
        %v1130 = vunpack.c.l.b16 %v1115
        %v1131 = vunpack.c.l.b16 %v1116
        %v1132 = vunpack.c.l.b16 %v1117
        %v1133 = vunpack.c.l.b16 %v1118
        %v1134 = vpack.c.b16 %v1131, %v1130
        %v1135 = vpack.c.b16 %v1133, %v1132
        %1138 = vmatprep.subr.bf16.mxu0 0
        %1139 = vmatpush1.bf16.msra.mxu0 0
        %1140 = vmatprep.subr.bf16.mxu0 0
        %1141 = vmatpush1.bf16.msra.mxu0 0
        %1142 = vmatprep.subr.bf16.mxu0 0
        %1143 = vmatpush1.bf16.msra.mxu0 0
        %1144 = vmatprep.subr.bf16.mxu0 0
        %1145 = vmatpush1.bf16.msra.mxu0 0
        %1146 = vmatprep.subr.bf16.mxu0 0
        %1147 = vmatpush1.bf16.msra.mxu0 0
        %1148 = vmatprep.subr.bf16.mxu0 0
        %1149 = vmatpush1.bf16.msra.mxu0 0
        %1150 = vmatprep.subr.bf16.mxu0 0
        %1151 = vmatpush1.bf16.msra.mxu0 %v1135
        %1152 = vmatprep.subr.bf16.mxu0 0
        %1153 = vmatpush1.bf16.msra.mxu0 %v1134
        %1154 = vmatprep.subr.bf16.mxu0 0
        %1155 = vmatpush2.bf16.msra.mxu0 0
        %1156 = vmatprep.subr.bf16.mxu0 0
        %1157 = vmatpush2.bf16.msra.mxu0 0
        %1158 = vmatprep.subr.bf16.mxu0 0
        %1159 = vmatpush2.bf16.msra.mxu0 0
        %1160 = vmatprep.subr.bf16.mxu0 0
        %1161 = vmatpush2.bf16.msra.mxu0 0
        %1162 = vmatprep.subr.bf16.mxu0 0
        %1163 = vmatpush2.bf16.msra.mxu0 0
        %1164 = vmatprep.subr.bf16.mxu0 0
        %1165 = vmatpush2.bf16.msra.mxu0 0
        %1166 = vmatprep.subr.bf16.mxu0 0
        %1167 = vmatpush2.bf16.msra.mxu0 0
        %1168 = vmatprep.subr.bf16.mxu0 0
        %1169 = vmatpush2.bf16.msra.mxu0 0
        %1170 = vmatprep.mubr.bf16.mxu0 0
        %1171 = vmatmul.mubr.bf16.gmra.mxu0 %v947
        %v1172 = vpop.f32.mrf.mxu0
        %v1173 = vadd.f32 %v1124, %v1172
        %v1174 = vpop.f32.mrf.mxu0
        %v1175 = vpop.f32.mrf.mxu0
        %v1176 = vpop.f32.mrf.mxu0
        %1177 = vdwg.mxu0
        %v1178 = vld [vmem:[%s2] sm:$0xff]
        %1180 = vset.pattern.permute.xlu0 0
        %1181 = vperm.xlu0 %1180, %v1178
        %v1182 = vpop.permute.xlu0 %1181
        %v1184 = vmul.f32 %v984, %v1182
        %v1185 = vpack.c.bf16 %v1184, %v1184
        %v1186 = vld [vmem:[%s3] sm:$0xff]
        %1188 = vset.pattern.permute.xlu0 0
        %1189 = vperm.xlu0 %1188, %v1186
        %v1190 = vpop.permute.xlu0 %1189
        %v1192 = vmul.f32 %v1047, %v1190
        %v1193 = vpack.c.bf16 %v1192, %v1192
        %v1194 = vld [vmem:[%s4] sm:$0xff]
        %1196 = vset.pattern.permute.xlu0 0
        %1197 = vperm.xlu0 %1196, %v1194
        %v1198 = vpop.permute.xlu0 %1197
        %v1200 = vmul.f32 %v1047, %v1198
        %v1201 = vpack.c.bf16 %v1200, %v1200
        %v1202 = vpack.c.bf16 %v1110, %v1110
        %v1203 = vxor.u32 %v1173, 2147483648
        %v1204 = vmul.f32 %v1203, 1.442695
        %v1205 = vpow.pop %v1204
        %v1206 = vadd.f32 %v1205, 1.0
        %v1207 = vrcp.pop %v1206
        %v1208 = vmul.f32 1.0, %v1207
        %v1209 = vmul.f32 %v1173, %v1208
        %v1210 = vpack.c.bf16 %v1209, %v1209
        %vm1211 = vcmask 64512
        %v1213 = vsel %vm1211, %v1185, 0
        %v1216 = vsel %vm1211, %v1193, 0
        %1218 = vmatprep.subr.bf16.mxu0 0
        %1219 = vmatpush1.bf16.xpose.msra.mxu0 0
        %1220 = vmatprep.subr.bf16.mxu0 0
        %1221 = vmatpush1.bf16.xpose.msra.mxu0 0
        %1222 = vmatprep.subr.bf16.mxu0 0
        %1223 = vmatpush1.bf16.xpose.msra.mxu0 0
        %1224 = vmatprep.subr.bf16.mxu0 0
        %1225 = vmatpush1.bf16.xpose.msra.mxu0 0
        %1226 = vmatprep.subr.bf16.mxu0 0
        %1227 = vmatpush1.bf16.xpose.msra.mxu0 0
        %1228 = vmatprep.subr.bf16.mxu0 0
        %1229 = vmatpush1.bf16.xpose.msra.mxu0 0
        %1230 = vmatprep.subr.bf16.mxu0 0
        %1231 = vmatpush1.bf16.xpose.msra.mxu0 0
        %1232 = vmatprep.subr.bf16.mxu0 0
        %1233 = vmatpush1.bf16.xpose.msra.mxu0 %v1216
        %1234 = vmatprep.subr.bf16.mxu0 0
        %1235 = vmatpush2.bf16.xpose.msra.mxu0 0
        %1236 = vmatprep.subr.bf16.mxu0 0
        %1237 = vmatpush2.bf16.xpose.msra.mxu0 0
        %1238 = vmatprep.subr.bf16.mxu0 0
        %1239 = vmatpush2.bf16.xpose.msra.mxu0 0
        %1240 = vmatprep.subr.bf16.mxu0 0
        %1241 = vmatpush2.bf16.xpose.msra.mxu0 0
        %1242 = vmatprep.subr.bf16.mxu0 0
        %1243 = vmatpush2.bf16.xpose.msra.mxu0 0
        %1244 = vmatprep.subr.bf16.mxu0 0
        %1245 = vmatpush2.bf16.xpose.msra.mxu0 0
        %1246 = vmatprep.subr.bf16.mxu0 0
        %1247 = vmatpush2.bf16.xpose.msra.mxu0 0
        %1248 = vmatprep.subr.bf16.mxu0 0
        %1249 = vmatpush2.bf16.xpose.msra.mxu0 0
        %1250 = vmatprep.mubr.bf16.mxu0 0
        %1251 = vmatmul.mubr.bf16.gmra.mxu0 %v1213
        %v1252 = vpop.f32.mrf.mxu0
        %v1253 = vadd.f32 0.0, %v1252
        %v1254 = vpop.f32.mrf.mxu0
        %v1255 = vpop.f32.mrf.mxu0
        %v1256 = vpop.f32.mrf.mxu0
        %1257 = vdwg.mxu0
        %v1258 = vsel %vm922, %v1253, 0.0
        %v1259 = vpack.c.bf16 %v1258, %v1258
        %v1260 = vld [vmem:[#allocation2] sm:$0xff]
        %v1261 = vpack.c.bf16 %v1260, %v1260
        %vm1262 = vcmask 1043456
        %v1264 = vsel %vm1262, %v1261, 0
        %1266 = vmatprep.subr.bf16.mxu0 0
        %1267 = vmatpush1.bf16.msra.mxu0 0
        %1268 = vmatprep.subr.bf16.mxu0 0
        %1269 = vmatpush1.bf16.msra.mxu0 0
        %1270 = vmatprep.subr.bf16.mxu0 0
        %1271 = vmatpush1.bf16.msra.mxu0 0
        %1272 = vmatprep.subr.bf16.mxu0 0
        %1273 = vmatpush1.bf16.msra.mxu0 0
        %1274 = vmatprep.subr.bf16.mxu0 0
        %1275 = vmatpush1.bf16.msra.mxu0 0
        %1276 = vmatprep.subr.bf16.mxu0 0
        %1277 = vmatpush1.bf16.msra.mxu0 0
        %1278 = vmatprep.subr.bf16.mxu0 0
        %1279 = vmatpush1.bf16.msra.mxu0 0
        %1280 = vmatprep.subr.bf16.mxu0 0
        %1281 = vmatpush1.bf16.msra.mxu0 %v1264
        %1282 = vmatprep.subr.bf16.mxu0 0
        %1283 = vmatpush2.bf16.msra.mxu0 0
        %1284 = vmatprep.subr.bf16.mxu0 0
        %1285 = vmatpush2.bf16.msra.mxu0 0
        %1286 = vmatprep.subr.bf16.mxu0 0
        %1287 = vmatpush2.bf16.msra.mxu0 0
        %1288 = vmatprep.subr.bf16.mxu0 0
        %1289 = vmatpush2.bf16.msra.mxu0 0
        %1290 = vmatprep.subr.bf16.mxu0 0
        %1291 = vmatpush2.bf16.msra.mxu0 0
        %1292 = vmatprep.subr.bf16.mxu0 0
        %1293 = vmatpush2.bf16.msra.mxu0 0
        %1294 = vmatprep.subr.bf16.mxu0 0
        %1295 = vmatpush2.bf16.msra.mxu0 0
        %1296 = vmatprep.subr.bf16.mxu0 0
        %1297 = vmatpush2.bf16.msra.mxu0 0
        %1298 = vmatprep.mubr.bf16.mxu0 0
        %1299 = vmatmul.mubr.bf16.gmra.mxu0 %v1213
        %v1300 = vpop.f32.mrf.mxu0
        %v1301 = vadd.f32 0.0, %v1300
        %v1302 = vpop.f32.mrf.mxu0
        %v1303 = vpop.f32.mrf.mxu0
        %v1304 = vpop.f32.mrf.mxu0
        %1305 = vdwg.mxu0
        %v1306 = vld [vmem:[%s5] sm:$0x1]
        %v1308 = vlaneseq
        %v1309 = vshrl.u32 %v1308, 7
        %v1310 = vsub.s32 0, %v1309
        %v1311 = vrot.slane %v1306, %v1310
        %1312 = vset.pattern.permute.xlu0 0
        %1313 = vperm.xlu0 %1312, %v1311
        %v1314 = vpop.permute.xlu0 %1313
        %v1316 = vmul.f32 %v1301, %v1314
        %v1318 = vsel %vm1211, %v1259, 0
        %v1321 = vsel %vm1262, %v1202, 0
        %1323 = vmatprep.subr.bf16.mxu0 0
        %1324 = vmatpush1.bf16.msra.mxu0 0
        %1325 = vmatprep.subr.bf16.mxu0 0
        %1326 = vmatpush1.bf16.msra.mxu0 0
        %1327 = vmatprep.subr.bf16.mxu0 0
        %1328 = vmatpush1.bf16.msra.mxu0 0
        %1329 = vmatprep.subr.bf16.mxu0 0
        %1330 = vmatpush1.bf16.msra.mxu0 0
        %1331 = vmatprep.subr.bf16.mxu0 0
        %1332 = vmatpush1.bf16.msra.mxu0 0
        %1333 = vmatprep.subr.bf16.mxu0 0
        %1334 = vmatpush1.bf16.msra.mxu0 0
        %1335 = vmatprep.subr.bf16.mxu0 0
        %1336 = vmatpush1.bf16.msra.mxu0 0
        %1337 = vmatprep.subr.bf16.mxu0 0
        %1338 = vmatpush1.bf16.msra.mxu0 %v1321
        %1339 = vmatprep.subr.bf16.mxu0 0
        %1340 = vmatpush2.bf16.msra.mxu0 0
        %1341 = vmatprep.subr.bf16.mxu0 0
        %1342 = vmatpush2.bf16.msra.mxu0 0
        %1343 = vmatprep.subr.bf16.mxu0 0
        %1344 = vmatpush2.bf16.msra.mxu0 0
        %1345 = vmatprep.subr.bf16.mxu0 0
        %1346 = vmatpush2.bf16.msra.mxu0 0
        %1347 = vmatprep.subr.bf16.mxu0 0
        %1348 = vmatpush2.bf16.msra.mxu0 0
        %1349 = vmatprep.subr.bf16.mxu0 0
        %1350 = vmatpush2.bf16.msra.mxu0 0
        %1351 = vmatprep.subr.bf16.mxu0 0
        %1352 = vmatpush2.bf16.msra.mxu0 0
        %1353 = vmatprep.subr.bf16.mxu0 0
        %1354 = vmatpush2.bf16.msra.mxu0 0
        %1355 = vmatprep.mubr.bf16.mxu0 0
        %1356 = vmatmul.mubr.bf16.gmra.mxu0 %v1318
        %v1357 = vpop.f32.mrf.mxu0
        %v1358 = vadd.f32 %v1316, %v1357
        %v1359 = vpop.f32.mrf.mxu0
        %v1360 = vpop.f32.mrf.mxu0
        %v1361 = vpop.f32.mrf.mxu0
        %1362 = vdwg.mxu0
        %v1363 = vld [vmem:[%s6] sm:$0x1]
        %v1365 = vlaneseq
        %v1366 = vshrl.u32 %v1365, 7
        %v1367 = vsub.s32 0, %v1366
        %v1368 = vrot.slane %v1363, %v1367
        %1369 = vset.pattern.permute.xlu0 0
        %1370 = vperm.xlu0 %1369, %v1368
        %v1371 = vpop.permute.xlu0 %1370
        %v1373 = vmul.f32 %v1260, %v1371
        %1374 = vxpose.xlu0.c.b16.start [1/8] %v1201, 128
        %1375 = vxpose.xlu0.c.b16.cont [2/8] 0, 128
        %1376 = vxpose.xlu0.c.b16.cont [3/8] 0, 128
        %1377 = vxpose.xlu0.c.b16.cont [4/8] 0, 128
        %1378 = vxpose.xlu0.c.b16.cont [5/8] 0, 128
        %1379 = vxpose.xlu0.c.b16.cont [6/8] 0, 128
        %1380 = vxpose.xlu0.c.b16.cont [7/8] 0, 128
        %1381 = vxpose.xlu0.c.b16.end [8/8] 0, 128
        %v1382 = vpop.trf.xlu0
        %v1383 = vpop.trf.xlu0
        %v1384 = vpop.trf.xlu0
        %v1385 = vpop.trf.xlu0
        %v1386 = vpop.trf.xlu0
        %v1387 = vpop.trf.xlu0
        %v1388 = vpop.trf.xlu0
        %v1389 = vpop.trf.xlu0
        %v1391 = vsel %vm1211, %v1382, 0
        %1393 = vmatprep.subr.bf16.mxu0 0
        %1394 = vmatpush1.bf16.msra.mxu0 0
        %1395 = vmatprep.subr.bf16.mxu0 0
        %1396 = vmatpush1.bf16.msra.mxu0 0
        %1397 = vmatprep.subr.bf16.mxu0 0
        %1398 = vmatpush1.bf16.msra.mxu0 0
        %1399 = vmatprep.subr.bf16.mxu0 0
        %1400 = vmatpush1.bf16.msra.mxu0 0
        %1401 = vmatprep.subr.bf16.mxu0 0
        %1402 = vmatpush1.bf16.msra.mxu0 0
        %1403 = vmatprep.subr.bf16.mxu0 0
        %1404 = vmatpush1.bf16.msra.mxu0 0
        %1405 = vmatprep.subr.bf16.mxu0 0
        %1406 = vmatpush1.bf16.msra.mxu0 0
        %1407 = vmatprep.subr.bf16.mxu0 0
        %1408 = vmatpush1.bf16.msra.mxu0 %v1321
        %1409 = vmatprep.subr.bf16.mxu0 0
        %1410 = vmatpush2.bf16.msra.mxu0 0
        %1411 = vmatprep.subr.bf16.mxu0 0
        %1412 = vmatpush2.bf16.msra.mxu0 0
        %1413 = vmatprep.subr.bf16.mxu0 0
        %1414 = vmatpush2.bf16.msra.mxu0 0
        %1415 = vmatprep.subr.bf16.mxu0 0
        %1416 = vmatpush2.bf16.msra.mxu0 0
        %1417 = vmatprep.subr.bf16.mxu0 0
        %1418 = vmatpush2.bf16.msra.mxu0 0
        %1419 = vmatprep.subr.bf16.mxu0 0
        %1420 = vmatpush2.bf16.msra.mxu0 0
        %1421 = vmatprep.subr.bf16.mxu0 0
        %1422 = vmatpush2.bf16.msra.mxu0 0
        %1423 = vmatprep.subr.bf16.mxu0 0
        %1424 = vmatpush2.bf16.msra.mxu0 0
        %1425 = vmatprep.mubr.bf16.mxu0 0
        %1426 = vmatmul.mubr.bf16.gmra.mxu0 %v1391
        %v1427 = vpop.f32.mrf.mxu0
        %v1428 = vadd.f32 %v1373, %v1427
        %v1429 = vpop.f32.mrf.mxu0
        %v1430 = vpop.f32.mrf.mxu0
        %v1431 = vpop.f32.mrf.mxu0
        %1432 = vdwg.mxu0
        %1433 = vst.msk [vmem:[#allocation2] sm:$0xff] %vm1211, %v1428
        %v1434 = vsel %vm1211, %v1358, 0.0
        %1435 = vadd.xlane.f32.xlu0 %v1434
        %v1436 = vpop.xlane.xlu0 %1435
        %v1437 = vrcp.pop 8.0
        %v1438 = vmul.f32 %v1436, %v1437
        %v1439 = vsub.f32 %v1358, %v1438
        %v1440 = vmul.f32 %v1439, %v1439
        %v1441 = vsel %vm1211, %v1440, 0.0
        %1442 = vadd.xlane.f32.xlu0 %v1441
        %v1443 = vpop.xlane.xlu0 %1442
        %v1444 = vmul.f32 %v1443, %v1437
        %v1445 = vadd.f32 %v1444, 1e-06
        %v1446 = vrsqrt.pop %v1445
        %v1447 = vmul.f32 %v1439, %v1446
        %v1448 = vunpack.c.l.bf16 %v1210
        %v1449 = vmul.f32 %v1447, %v1448
        %v1450 = vpack.c.bf16 %v1449, %v1449
        %v1451 = vld [vmem:[%s19] sm:$0xf]
        %s1452 = scalar_lea.vmem %s11, 16
        %v1453 = vld [vmem:[%s1452] sm:$0xf]
        %v1454 = vld [vmem:[%s1452 + $0x4] sm:$0xf]
        %v1455 = vld [vmem:[%s1452 + $0x8] sm:$0xf]
        %v1456 = vld [vmem:[%s1452 + $0xc] sm:$0xf]
        %s1457 = scalar_lea.vmem %s12, 1
        %v1458 = vld [vmem:[%s1457] sm:$0x1]
        %v1460 = vlaneseq
        %v1461 = vshrl.u32 %v1460, 7
        %v1462 = vsub.s32 0, %v1461
        %v1463 = vrot.slane %v1458, %v1462
        %v1469 = vunpack.c.l.b16 %v1453
        %v1470 = vunpack.c.l.b16 %v1454
        %v1471 = vunpack.c.l.b16 %v1455
        %v1472 = vunpack.c.l.b16 %v1456
        %v1473 = vpack.c.b16 %v1470, %v1469
        %v1474 = vpack.c.b16 %v1472, %v1471
        %1477 = vmatprep.subr.bf16.mxu0 0
        %1478 = vmatpush1.bf16.msra.mxu0 0
        %1479 = vmatprep.subr.bf16.mxu0 0
        %1480 = vmatpush1.bf16.msra.mxu0 0
        %1481 = vmatprep.subr.bf16.mxu0 0
        %1482 = vmatpush1.bf16.msra.mxu0 0
        %1483 = vmatprep.subr.bf16.mxu0 0
        %1484 = vmatpush1.bf16.msra.mxu0 0
        %1485 = vmatprep.subr.bf16.mxu0 0
        %1486 = vmatpush1.bf16.msra.mxu0 0
        %1487 = vmatprep.subr.bf16.mxu0 0
        %1488 = vmatpush1.bf16.msra.mxu0 0
        %1489 = vmatprep.subr.bf16.mxu0 0
        %1490 = vmatpush1.bf16.msra.mxu0 %v1474
        %1491 = vmatprep.subr.bf16.mxu0 0
        %1492 = vmatpush1.bf16.msra.mxu0 %v1473
        %1493 = vmatprep.subr.bf16.mxu0 0
        %1494 = vmatpush2.bf16.msra.mxu0 0
        %1495 = vmatprep.subr.bf16.mxu0 0
        %1496 = vmatpush2.bf16.msra.mxu0 0
        %1497 = vmatprep.subr.bf16.mxu0 0
        %1498 = vmatpush2.bf16.msra.mxu0 0
        %1499 = vmatprep.subr.bf16.mxu0 0
        %1500 = vmatpush2.bf16.msra.mxu0 0
        %1501 = vmatprep.subr.bf16.mxu0 0
        %1502 = vmatpush2.bf16.msra.mxu0 0
        %1503 = vmatprep.subr.bf16.mxu0 0
        %1504 = vmatpush2.bf16.msra.mxu0 0
        %1505 = vmatprep.subr.bf16.mxu0 0
        %1506 = vmatpush2.bf16.msra.mxu0 0
        %1507 = vmatprep.subr.bf16.mxu0 0
        %1508 = vmatpush2.bf16.msra.mxu0 0
        %1509 = vmatprep.mubr.bf16.mxu0 0
        %1510 = vmatmul.mubr.bf16.gmra.mxu0 %v947
        %v1511 = vpop.f32.mrf.mxu0
        %v1512 = vadd.f32 %v1463, %v1511
        %v1513 = vpop.f32.mrf.mxu0
        %v1514 = vpop.f32.mrf.mxu0
        %v1515 = vpop.f32.mrf.mxu0
        %1516 = vdwg.mxu0
        %s1517 = scalar_lea.vmem %s13, 16
        %v1518 = vld [vmem:[%s1517] sm:$0xf]
        %v1519 = vld [vmem:[%s1517 + $0x4] sm:$0xf]
        %v1520 = vld [vmem:[%s1517 + $0x8] sm:$0xf]
        %v1521 = vld [vmem:[%s1517 + $0xc] sm:$0xf]
        %s1522 = scalar_lea.vmem %s14, 1
        %v1523 = vld [vmem:[%s1522] sm:$0x1]
        %v1525 = vlaneseq
        %v1526 = vshrl.u32 %v1525, 7
        %v1527 = vsub.s32 0, %v1526
        %v1528 = vrot.slane %v1523, %v1527
        %v1534 = vunpack.c.l.b16 %v1518
        %v1535 = vunpack.c.l.b16 %v1519
        %v1536 = vunpack.c.l.b16 %v1520
        %v1537 = vunpack.c.l.b16 %v1521
        %v1538 = vpack.c.b16 %v1535, %v1534
        %v1539 = vpack.c.b16 %v1537, %v1536
        %1542 = vmatprep.subr.bf16.mxu0 0
        %1543 = vmatpush1.bf16.msra.mxu0 0
        %1544 = vmatprep.subr.bf16.mxu0 0
        %1545 = vmatpush1.bf16.msra.mxu0 0
        %1546 = vmatprep.subr.bf16.mxu0 0
        %1547 = vmatpush1.bf16.msra.mxu0 0
        %1548 = vmatprep.subr.bf16.mxu0 0
        %1549 = vmatpush1.bf16.msra.mxu0 0
        %1550 = vmatprep.subr.bf16.mxu0 0
        %1551 = vmatpush1.bf16.msra.mxu0 0
        %1552 = vmatprep.subr.bf16.mxu0 0
        %1553 = vmatpush1.bf16.msra.mxu0 0
        %1554 = vmatprep.subr.bf16.mxu0 0
        %1555 = vmatpush1.bf16.msra.mxu0 %v1539
        %1556 = vmatprep.subr.bf16.mxu0 0
        %1557 = vmatpush1.bf16.msra.mxu0 %v1538
        %1558 = vmatprep.subr.bf16.mxu0 0
        %1559 = vmatpush2.bf16.msra.mxu0 0
        %1560 = vmatprep.subr.bf16.mxu0 0
        %1561 = vmatpush2.bf16.msra.mxu0 0
        %1562 = vmatprep.subr.bf16.mxu0 0
        %1563 = vmatpush2.bf16.msra.mxu0 0
        %1564 = vmatprep.subr.bf16.mxu0 0
        %1565 = vmatpush2.bf16.msra.mxu0 0
        %1566 = vmatprep.subr.bf16.mxu0 0
        %1567 = vmatpush2.bf16.msra.mxu0 0
        %1568 = vmatprep.subr.bf16.mxu0 0
        %1569 = vmatpush2.bf16.msra.mxu0 0
        %1570 = vmatprep.subr.bf16.mxu0 0
        %1571 = vmatpush2.bf16.msra.mxu0 0
        %1572 = vmatprep.subr.bf16.mxu0 0
        %1573 = vmatpush2.bf16.msra.mxu0 0
        %1574 = vmatprep.mubr.bf16.mxu0 0
        %1575 = vmatmul.mubr.bf16.gmra.mxu0 %v947
        %v1576 = vpop.f32.mrf.mxu0
        %v1577 = vadd.f32 %v1528, %v1576
        %v1578 = vpop.f32.mrf.mxu0
        %v1579 = vpop.f32.mrf.mxu0
        %v1580 = vpop.f32.mrf.mxu0
        %1581 = vdwg.mxu0
        %s1582 = scalar_lea.vmem %s15, 16
        %v1583 = vld [vmem:[%s1582] sm:$0xf]
        %v1584 = vld [vmem:[%s1582 + $0x4] sm:$0xf]
        %v1585 = vld [vmem:[%s1582 + $0x8] sm:$0xf]
        %v1586 = vld [vmem:[%s1582 + $0xc] sm:$0xf]
        %s1587 = scalar_lea.vmem %s16, 1
        %v1588 = vld [vmem:[%s1587] sm:$0x1]
        %v1590 = vlaneseq
        %v1591 = vshrl.u32 %v1590, 7
        %v1592 = vsub.s32 0, %v1591
        %v1593 = vrot.slane %v1588, %v1592
        %v1599 = vunpack.c.l.b16 %v1583
        %v1600 = vunpack.c.l.b16 %v1584
        %v1601 = vunpack.c.l.b16 %v1585
        %v1602 = vunpack.c.l.b16 %v1586
        %v1603 = vpack.c.b16 %v1600, %v1599
        %v1604 = vpack.c.b16 %v1602, %v1601
        %1607 = vmatprep.subr.bf16.mxu0 0
        %1608 = vmatpush1.bf16.msra.mxu0 0
        %1609 = vmatprep.subr.bf16.mxu0 0
        %1610 = vmatpush1.bf16.msra.mxu0 0
        %1611 = vmatprep.subr.bf16.mxu0 0
        %1612 = vmatpush1.bf16.msra.mxu0 0
        %1613 = vmatprep.subr.bf16.mxu0 0
        %1614 = vmatpush1.bf16.msra.mxu0 0
        %1615 = vmatprep.subr.bf16.mxu0 0
        %1616 = vmatpush1.bf16.msra.mxu0 0
        %1617 = vmatprep.subr.bf16.mxu0 0
        %1618 = vmatpush1.bf16.msra.mxu0 0
        %1619 = vmatprep.subr.bf16.mxu0 0
        %1620 = vmatpush1.bf16.msra.mxu0 %v1604
        %1621 = vmatprep.subr.bf16.mxu0 0
        %1622 = vmatpush1.bf16.msra.mxu0 %v1603
        %1623 = vmatprep.subr.bf16.mxu0 0
        %1624 = vmatpush2.bf16.msra.mxu0 0
        %1625 = vmatprep.subr.bf16.mxu0 0
        %1626 = vmatpush2.bf16.msra.mxu0 0
        %1627 = vmatprep.subr.bf16.mxu0 0
        %1628 = vmatpush2.bf16.msra.mxu0 0
        %1629 = vmatprep.subr.bf16.mxu0 0
        %1630 = vmatpush2.bf16.msra.mxu0 0
        %1631 = vmatprep.subr.bf16.mxu0 0
        %1632 = vmatpush2.bf16.msra.mxu0 0
        %1633 = vmatprep.subr.bf16.mxu0 0
        %1634 = vmatpush2.bf16.msra.mxu0 0
        %1635 = vmatprep.subr.bf16.mxu0 0
        %1636 = vmatpush2.bf16.msra.mxu0 0
        %1637 = vmatprep.subr.bf16.mxu0 0
        %1638 = vmatpush2.bf16.msra.mxu0 0
        %1639 = vmatprep.mubr.bf16.mxu0 0
        %1640 = vmatmul.mubr.bf16.gmra.mxu0 %v947
        %v1641 = vpop.f32.mrf.mxu0
        %v1642 = vadd.f32 %v1593, %v1641
        %v1643 = vpop.f32.mrf.mxu0
        %v1644 = vpop.f32.mrf.mxu0
        %v1645 = vpop.f32.mrf.mxu0
        %1646 = vdwg.mxu0
        %s1647 = scalar_lea.vmem %s17, 16
        %v1648 = vld [vmem:[%s1647] sm:$0xf]
        %v1649 = vld [vmem:[%s1647 + $0x4] sm:$0xf]
        %v1650 = vld [vmem:[%s1647 + $0x8] sm:$0xf]
        %v1651 = vld [vmem:[%s1647 + $0xc] sm:$0xf]
        %s1652 = scalar_lea.vmem %s18, 1
        %v1653 = vld [vmem:[%s1652] sm:$0x1]
        %v1655 = vlaneseq
        %v1656 = vshrl.u32 %v1655, 7
        %v1657 = vsub.s32 0, %v1656
        %v1658 = vrot.slane %v1653, %v1657
        %v1664 = vunpack.c.l.b16 %v1648
        %v1665 = vunpack.c.l.b16 %v1649
        %v1666 = vunpack.c.l.b16 %v1650
        %v1667 = vunpack.c.l.b16 %v1651
        %v1668 = vpack.c.b16 %v1665, %v1664
        %v1669 = vpack.c.b16 %v1667, %v1666
        %1672 = vmatprep.subr.bf16.mxu0 0
        %1673 = vmatpush1.bf16.msra.mxu0 0
        %1674 = vmatprep.subr.bf16.mxu0 0
        %1675 = vmatpush1.bf16.msra.mxu0 0
        %1676 = vmatprep.subr.bf16.mxu0 0
        %1677 = vmatpush1.bf16.msra.mxu0 0
        %1678 = vmatprep.subr.bf16.mxu0 0
        %1679 = vmatpush1.bf16.msra.mxu0 0
        %1680 = vmatprep.subr.bf16.mxu0 0
        %1681 = vmatpush1.bf16.msra.mxu0 0
        %1682 = vmatprep.subr.bf16.mxu0 0
        %1683 = vmatpush1.bf16.msra.mxu0 0
        %1684 = vmatprep.subr.bf16.mxu0 0
        %1685 = vmatpush1.bf16.msra.mxu0 %v1669
        %1686 = vmatprep.subr.bf16.mxu0 0
        %1687 = vmatpush1.bf16.msra.mxu0 %v1668
        %1688 = vmatprep.subr.bf16.mxu0 0
        %1689 = vmatpush2.bf16.msra.mxu0 0
        %1690 = vmatprep.subr.bf16.mxu0 0
        %1691 = vmatpush2.bf16.msra.mxu0 0
        %1692 = vmatprep.subr.bf16.mxu0 0
        %1693 = vmatpush2.bf16.msra.mxu0 0
        %1694 = vmatprep.subr.bf16.mxu0 0
        %1695 = vmatpush2.bf16.msra.mxu0 0
        %1696 = vmatprep.subr.bf16.mxu0 0
        %1697 = vmatpush2.bf16.msra.mxu0 0
        %1698 = vmatprep.subr.bf16.mxu0 0
        %1699 = vmatpush2.bf16.msra.mxu0 0
        %1700 = vmatprep.subr.bf16.mxu0 0
        %1701 = vmatpush2.bf16.msra.mxu0 0
        %1702 = vmatprep.subr.bf16.mxu0 0
        %1703 = vmatpush2.bf16.msra.mxu0 0
        %1704 = vmatprep.mubr.bf16.mxu0 0
        %1705 = vmatmul.mubr.bf16.gmra.mxu0 %v947
        %v1706 = vpop.f32.mrf.mxu0
        %v1707 = vadd.f32 %v1658, %v1706
        %v1708 = vpop.f32.mrf.mxu0
        %v1709 = vpop.f32.mrf.mxu0
        %v1710 = vpop.f32.mrf.mxu0
        %1711 = vdwg.mxu0
        %s1712 = scalar_lea.vmem %s2, 8
        %v1713 = vld [vmem:[%s1712] sm:$0xff]
        %1715 = vset.pattern.permute.xlu0 0
        %1716 = vperm.xlu0 %1715, %v1713
        %v1717 = vpop.permute.xlu0 %1716
        %v1719 = vmul.f32 %v1512, %v1717
        %v1720 = vpack.c.bf16 %v1719, %v1719
        %s1721 = scalar_lea.vmem %s3, 8
        %v1722 = vld [vmem:[%s1721] sm:$0xff]
        %1724 = vset.pattern.permute.xlu0 0
        %1725 = vperm.xlu0 %1724, %v1722
        %v1726 = vpop.permute.xlu0 %1725
        %v1728 = vmul.f32 %v1577, %v1726
        %v1729 = vpack.c.bf16 %v1728, %v1728
        %s1730 = scalar_lea.vmem %s4, 8
        %v1731 = vld [vmem:[%s1730] sm:$0xff]
        %1733 = vset.pattern.permute.xlu0 0
        %1734 = vperm.xlu0 %1733, %v1731
        %v1735 = vpop.permute.xlu0 %1734
        %v1737 = vmul.f32 %v1577, %v1735
        %v1738 = vpack.c.bf16 %v1737, %v1737
        %v1739 = vpack.c.bf16 %v1642, %v1642
        %v1740 = vxor.u32 %v1707, 2147483648
        %v1741 = vmul.f32 %v1740, 1.442695
        %v1742 = vpow.pop %v1741
        %v1743 = vadd.f32 %v1742, 1.0
        %v1744 = vrcp.pop %v1743
        %v1745 = vmul.f32 1.0, %v1744
        %v1746 = vmul.f32 %v1707, %v1745
        %v1747 = vpack.c.bf16 %v1746, %v1746
        %v1749 = vsel %vm1211, %v1720, 0
        %v1752 = vsel %vm1211, %v1729, 0
        %1754 = vmatprep.subr.bf16.mxu0 0
        %1755 = vmatpush1.bf16.xpose.msra.mxu0 0
        %1756 = vmatprep.subr.bf16.mxu0 0
        %1757 = vmatpush1.bf16.xpose.msra.mxu0 0
        %1758 = vmatprep.subr.bf16.mxu0 0
        %1759 = vmatpush1.bf16.xpose.msra.mxu0 0
        %1760 = vmatprep.subr.bf16.mxu0 0
        %1761 = vmatpush1.bf16.xpose.msra.mxu0 0
        %1762 = vmatprep.subr.bf16.mxu0 0
        %1763 = vmatpush1.bf16.xpose.msra.mxu0 0
        %1764 = vmatprep.subr.bf16.mxu0 0
        %1765 = vmatpush1.bf16.xpose.msra.mxu0 0
        %1766 = vmatprep.subr.bf16.mxu0 0
        %1767 = vmatpush1.bf16.xpose.msra.mxu0 0
        %1768 = vmatprep.subr.bf16.mxu0 0
        %1769 = vmatpush1.bf16.xpose.msra.mxu0 %v1752
        %1770 = vmatprep.subr.bf16.mxu0 0
        %1771 = vmatpush2.bf16.xpose.msra.mxu0 0
        %1772 = vmatprep.subr.bf16.mxu0 0
        %1773 = vmatpush2.bf16.xpose.msra.mxu0 0
        %1774 = vmatprep.subr.bf16.mxu0 0
        %1775 = vmatpush2.bf16.xpose.msra.mxu0 0
        %1776 = vmatprep.subr.bf16.mxu0 0
        %1777 = vmatpush2.bf16.xpose.msra.mxu0 0
        %1778 = vmatprep.subr.bf16.mxu0 0
        %1779 = vmatpush2.bf16.xpose.msra.mxu0 0
        %1780 = vmatprep.subr.bf16.mxu0 0
        %1781 = vmatpush2.bf16.xpose.msra.mxu0 0
        %1782 = vmatprep.subr.bf16.mxu0 0
        %1783 = vmatpush2.bf16.xpose.msra.mxu0 0
        %1784 = vmatprep.subr.bf16.mxu0 0
        %1785 = vmatpush2.bf16.xpose.msra.mxu0 0
        %1786 = vmatprep.mubr.bf16.mxu0 0
        %1787 = vmatmul.mubr.bf16.gmra.mxu0 %v1749
        %v1788 = vpop.f32.mrf.mxu0
        %v1789 = vadd.f32 0.0, %v1788
        %v1790 = vpop.f32.mrf.mxu0
        %v1791 = vpop.f32.mrf.mxu0
        %v1792 = vpop.f32.mrf.mxu0
        %1793 = vdwg.mxu0
        %v1794 = vsel %vm922, %v1789, 0.0
        %v1795 = vpack.c.bf16 %v1794, %v1794
        %s1796 = scalar_lea.vmem [#allocation2], 8
        %v1797 = vld [vmem:[%s1796] sm:$0xff]
        %v1798 = vpack.c.bf16 %v1797, %v1797
        %v1800 = vsel %vm1262, %v1798, 0
        %1802 = vmatprep.subr.bf16.mxu0 0
        %1803 = vmatpush1.bf16.msra.mxu0 0
        %1804 = vmatprep.subr.bf16.mxu0 0
        %1805 = vmatpush1.bf16.msra.mxu0 0
        %1806 = vmatprep.subr.bf16.mxu0 0
        %1807 = vmatpush1.bf16.msra.mxu0 0
        %1808 = vmatprep.subr.bf16.mxu0 0
        %1809 = vmatpush1.bf16.msra.mxu0 0
        %1810 = vmatprep.subr.bf16.mxu0 0
        %1811 = vmatpush1.bf16.msra.mxu0 0
        %1812 = vmatprep.subr.bf16.mxu0 0
        %1813 = vmatpush1.bf16.msra.mxu0 0
        %1814 = vmatprep.subr.bf16.mxu0 0
        %1815 = vmatpush1.bf16.msra.mxu0 0
        %1816 = vmatprep.subr.bf16.mxu0 0
        %1817 = vmatpush1.bf16.msra.mxu0 %v1800
        %1818 = vmatprep.subr.bf16.mxu0 0
        %1819 = vmatpush2.bf16.msra.mxu0 0
        %1820 = vmatprep.subr.bf16.mxu0 0
        %1821 = vmatpush2.bf16.msra.mxu0 0
        %1822 = vmatprep.subr.bf16.mxu0 0
        %1823 = vmatpush2.bf16.msra.mxu0 0
        %1824 = vmatprep.subr.bf16.mxu0 0
        %1825 = vmatpush2.bf16.msra.mxu0 0
        %1826 = vmatprep.subr.bf16.mxu0 0
        %1827 = vmatpush2.bf16.msra.mxu0 0
        %1828 = vmatprep.subr.bf16.mxu0 0
        %1829 = vmatpush2.bf16.msra.mxu0 0
        %1830 = vmatprep.subr.bf16.mxu0 0
        %1831 = vmatpush2.bf16.msra.mxu0 0
        %1832 = vmatprep.subr.bf16.mxu0 0
        %1833 = vmatpush2.bf16.msra.mxu0 0
        %1834 = vmatprep.mubr.bf16.mxu0 0
        %1835 = vmatmul.mubr.bf16.gmra.mxu0 %v1749
        %v1836 = vpop.f32.mrf.mxu0
        %v1837 = vadd.f32 0.0, %v1836
        %v1838 = vpop.f32.mrf.mxu0
        %v1839 = vpop.f32.mrf.mxu0
        %v1840 = vpop.f32.mrf.mxu0
        %1841 = vdwg.mxu0
        %s1842 = scalar_lea.vmem %s5, 1
        %v1843 = vld [vmem:[%s1842] sm:$0x1]
        %v1845 = vlaneseq
        %v1846 = vshrl.u32 %v1845, 7
        %v1847 = vsub.s32 0, %v1846
        %v1848 = vrot.slane %v1843, %v1847
        %1849 = vset.pattern.permute.xlu0 0
        %1850 = vperm.xlu0 %1849, %v1848
        %v1851 = vpop.permute.xlu0 %1850
        %v1853 = vmul.f32 %v1837, %v1851
        %v1855 = vsel %vm1211, %v1795, 0
        %v1858 = vsel %vm1262, %v1739, 0
        %1860 = vmatprep.subr.bf16.mxu0 0
        %1861 = vmatpush1.bf16.msra.mxu0 0
        %1862 = vmatprep.subr.bf16.mxu0 0
        %1863 = vmatpush1.bf16.msra.mxu0 0
        %1864 = vmatprep.subr.bf16.mxu0 0
        %1865 = vmatpush1.bf16.msra.mxu0 0
        %1866 = vmatprep.subr.bf16.mxu0 0
        %1867 = vmatpush1.bf16.msra.mxu0 0
        %1868 = vmatprep.subr.bf16.mxu0 0
        %1869 = vmatpush1.bf16.msra.mxu0 0
        %1870 = vmatprep.subr.bf16.mxu0 0
        %1871 = vmatpush1.bf16.msra.mxu0 0
        %1872 = vmatprep.subr.bf16.mxu0 0
        %1873 = vmatpush1.bf16.msra.mxu0 0
        %1874 = vmatprep.subr.bf16.mxu0 0
        %1875 = vmatpush1.bf16.msra.mxu0 %v1858
        %1876 = vmatprep.subr.bf16.mxu0 0
        %1877 = vmatpush2.bf16.msra.mxu0 0
        %1878 = vmatprep.subr.bf16.mxu0 0
        %1879 = vmatpush2.bf16.msra.mxu0 0
        %1880 = vmatprep.subr.bf16.mxu0 0
        %1881 = vmatpush2.bf16.msra.mxu0 0
        %1882 = vmatprep.subr.bf16.mxu0 0
        %1883 = vmatpush2.bf16.msra.mxu0 0
        %1884 = vmatprep.subr.bf16.mxu0 0
        %1885 = vmatpush2.bf16.msra.mxu0 0
        %1886 = vmatprep.subr.bf16.mxu0 0
        %1887 = vmatpush2.bf16.msra.mxu0 0
        %1888 = vmatprep.subr.bf16.mxu0 0
        %1889 = vmatpush2.bf16.msra.mxu0 0
        %1890 = vmatprep.subr.bf16.mxu0 0
        %1891 = vmatpush2.bf16.msra.mxu0 0
        %1892 = vmatprep.mubr.bf16.mxu0 0
        %1893 = vmatmul.mubr.bf16.gmra.mxu0 %v1855
        %v1894 = vpop.f32.mrf.mxu0
        %v1895 = vadd.f32 %v1853, %v1894
        %v1896 = vpop.f32.mrf.mxu0
        %v1897 = vpop.f32.mrf.mxu0
        %v1898 = vpop.f32.mrf.mxu0
        %1899 = vdwg.mxu0
        %s1900 = scalar_lea.vmem %s6, 1
        %v1901 = vld [vmem:[%s1900] sm:$0x1]
        %v1903 = vlaneseq
        %v1904 = vshrl.u32 %v1903, 7
        %v1905 = vsub.s32 0, %v1904
        %v1906 = vrot.slane %v1901, %v1905
        %1907 = vset.pattern.permute.xlu0 0
        %1908 = vperm.xlu0 %1907, %v1906
        %v1909 = vpop.permute.xlu0 %1908
        %v1911 = vmul.f32 %v1797, %v1909
        %1912 = vxpose.xlu0.c.b16.start [1/8] %v1738, 128
        %1913 = vxpose.xlu0.c.b16.cont [2/8] 0, 128
        %1914 = vxpose.xlu0.c.b16.cont [3/8] 0, 128
        %1915 = vxpose.xlu0.c.b16.cont [4/8] 0, 128
        %1916 = vxpose.xlu0.c.b16.cont [5/8] 0, 128
        %1917 = vxpose.xlu0.c.b16.cont [6/8] 0, 128
        %1918 = vxpose.xlu0.c.b16.cont [7/8] 0, 128
        %1919 = vxpose.xlu0.c.b16.end [8/8] 0, 128
        %v1920 = vpop.trf.xlu0
        %v1921 = vpop.trf.xlu0
        %v1922 = vpop.trf.xlu0
        %v1923 = vpop.trf.xlu0
        %v1924 = vpop.trf.xlu0
        %v1925 = vpop.trf.xlu0
        %v1926 = vpop.trf.xlu0
        %v1927 = vpop.trf.xlu0
        %v1929 = vsel %vm1211, %v1920, 0
        %1931 = vmatprep.subr.bf16.mxu0 0
        %1932 = vmatpush1.bf16.msra.mxu0 0
        %1933 = vmatprep.subr.bf16.mxu0 0
        %1934 = vmatpush1.bf16.msra.mxu0 0
        %1935 = vmatprep.subr.bf16.mxu0 0
        %1936 = vmatpush1.bf16.msra.mxu0 0
        %1937 = vmatprep.subr.bf16.mxu0 0
        %1938 = vmatpush1.bf16.msra.mxu0 0
        %1939 = vmatprep.subr.bf16.mxu0 0
        %1940 = vmatpush1.bf16.msra.mxu0 0
        %1941 = vmatprep.subr.bf16.mxu0 0
        %1942 = vmatpush1.bf16.msra.mxu0 0
        %1943 = vmatprep.subr.bf16.mxu0 0
        %1944 = vmatpush1.bf16.msra.mxu0 0
        %1945 = vmatprep.subr.bf16.mxu0 0
        %1946 = vmatpush1.bf16.msra.mxu0 %v1858
        %1947 = vmatprep.subr.bf16.mxu0 0
        %1948 = vmatpush2.bf16.msra.mxu0 0
        %1949 = vmatprep.subr.bf16.mxu0 0
        %1950 = vmatpush2.bf16.msra.mxu0 0
        %1951 = vmatprep.subr.bf16.mxu0 0
        %1952 = vmatpush2.bf16.msra.mxu0 0
        %1953 = vmatprep.subr.bf16.mxu0 0
        %1954 = vmatpush2.bf16.msra.mxu0 0
        %1955 = vmatprep.subr.bf16.mxu0 0
        %1956 = vmatpush2.bf16.msra.mxu0 0
        %1957 = vmatprep.subr.bf16.mxu0 0
        %1958 = vmatpush2.bf16.msra.mxu0 0
        %1959 = vmatprep.subr.bf16.mxu0 0
        %1960 = vmatpush2.bf16.msra.mxu0 0
        %1961 = vmatprep.subr.bf16.mxu0 0
        %1962 = vmatpush2.bf16.msra.mxu0 0
        %1963 = vmatprep.mubr.bf16.mxu0 0
        %1964 = vmatmul.mubr.bf16.gmra.mxu0 %v1929
        %v1965 = vpop.f32.mrf.mxu0
        %v1966 = vadd.f32 %v1911, %v1965
        %v1967 = vpop.f32.mrf.mxu0
        %v1968 = vpop.f32.mrf.mxu0
        %v1969 = vpop.f32.mrf.mxu0
        %1970 = vdwg.mxu0
        %1971 = vst.msk [vmem:[%s1796] sm:$0xff] %vm1211, %v1966
        %v1972 = vsel %vm1211, %v1895, 0.0
        %1973 = vadd.xlane.f32.xlu0 %v1972
        %v1974 = vpop.xlane.xlu0 %1973
        %v1975 = vmul.f32 %v1974, %v1437
        %v1976 = vsub.f32 %v1895, %v1975
        %v1977 = vmul.f32 %v1976, %v1976
        %v1978 = vsel %vm1211, %v1977, 0.0
        %1979 = vadd.xlane.f32.xlu0 %v1978
        %v1980 = vpop.xlane.xlu0 %1979
        %v1981 = vmul.f32 %v1980, %v1437
        %v1982 = vadd.f32 %v1981, 1e-06
        %v1983 = vrsqrt.pop %v1982
        %v1984 = vmul.f32 %v1976, %v1983
        %v1985 = vunpack.c.l.bf16 %v1747
        %v1986 = vmul.f32 %v1984, %v1985
        %v1987 = vpack.c.bf16 %v1986, %v1986
        %s1988 = scalar_lea.vmem %s19, 4
        %v1989 = vld [vmem:[%s1988] sm:$0xf]
        %v1991 = vsel %vm1211, %v1987, 0
        %v1994 = vsel %vm1262, %v1989, 0
        %1996 = vmatprep.subr.bf16.mxu0 0
        %1997 = vmatpush1.bf16.msra.mxu0 0
        %1998 = vmatprep.subr.bf16.mxu0 0
        %1999 = vmatpush1.bf16.msra.mxu0 0
        %2000 = vmatprep.subr.bf16.mxu0 0
        %2001 = vmatpush1.bf16.msra.mxu0 0
        %2002 = vmatprep.subr.bf16.mxu0 0
        %2003 = vmatpush1.bf16.msra.mxu0 0
        %2004 = vmatprep.subr.bf16.mxu0 0
        %2005 = vmatpush1.bf16.msra.mxu0 0
        %2006 = vmatprep.subr.bf16.mxu0 0
        %2007 = vmatpush1.bf16.msra.mxu0 0
        %2008 = vmatprep.subr.bf16.mxu0 0
        %2009 = vmatpush1.bf16.msra.mxu0 0
        %2010 = vmatprep.subr.bf16.mxu0 0
        %2011 = vmatpush1.bf16.msra.mxu0 %v1994
        %2012 = vmatprep.subr.bf16.mxu0 0
        %2013 = vmatpush2.bf16.msra.mxu0 0
        %2014 = vmatprep.subr.bf16.mxu0 0
        %2015 = vmatpush2.bf16.msra.mxu0 0
        %2016 = vmatprep.subr.bf16.mxu0 0
        %2017 = vmatpush2.bf16.msra.mxu0 0
        %2018 = vmatprep.subr.bf16.mxu0 0
        %2019 = vmatpush2.bf16.msra.mxu0 0
        %2020 = vmatprep.subr.bf16.mxu0 0
        %2021 = vmatpush2.bf16.msra.mxu0 0
        %2022 = vmatprep.subr.bf16.mxu0 0
        %2023 = vmatpush2.bf16.msra.mxu0 0
        %2024 = vmatprep.subr.bf16.mxu0 0
        %2025 = vmatpush2.bf16.msra.mxu0 0
        %2026 = vmatprep.subr.bf16.mxu0 0
        %2027 = vmatpush2.bf16.msra.mxu0 0
        %2028 = vmatprep.mubr.bf16.mxu0 0
        %2029 = vmatmul.mubr.bf16.gmra.mxu0 %v1991
        %v2030 = vpop.f32.mrf.mxu0
        %v2031 = vadd.f32 0.0, %v2030
        %v2032 = vpop.f32.mrf.mxu0
        %v2033 = vpop.f32.mrf.mxu0
        %v2034 = vpop.f32.mrf.mxu0
        %2035 = vdwg.mxu0
        %v2037 = vsel %vm1211, %v1450, 0
        %v2040 = vsel %vm1262, %v1451, 0
        %2042 = vmatprep.subr.bf16.mxu0 0
        %2043 = vmatpush1.bf16.msra.mxu0 0
        %2044 = vmatprep.subr.bf16.mxu0 0
        %2045 = vmatpush1.bf16.msra.mxu0 0
        %2046 = vmatprep.subr.bf16.mxu0 0
        %2047 = vmatpush1.bf16.msra.mxu0 0
        %2048 = vmatprep.subr.bf16.mxu0 0
        %2049 = vmatpush1.bf16.msra.mxu0 0
        %2050 = vmatprep.subr.bf16.mxu0 0
        %2051 = vmatpush1.bf16.msra.mxu0 0
        %2052 = vmatprep.subr.bf16.mxu0 0
        %2053 = vmatpush1.bf16.msra.mxu0 0
        %2054 = vmatprep.subr.bf16.mxu0 0
        %2055 = vmatpush1.bf16.msra.mxu0 0
        %2056 = vmatprep.subr.bf16.mxu0 0
        %2057 = vmatpush1.bf16.msra.mxu0 %v2040
        %2058 = vmatprep.subr.bf16.mxu0 0
        %2059 = vmatpush2.bf16.msra.mxu0 0
        %2060 = vmatprep.subr.bf16.mxu0 0
        %2061 = vmatpush2.bf16.msra.mxu0 0
        %2062 = vmatprep.subr.bf16.mxu0 0
        %2063 = vmatpush2.bf16.msra.mxu0 0
        %2064 = vmatprep.subr.bf16.mxu0 0
        %2065 = vmatpush2.bf16.msra.mxu0 0
        %2066 = vmatprep.subr.bf16.mxu0 0
        %2067 = vmatpush2.bf16.msra.mxu0 0
        %2068 = vmatprep.subr.bf16.mxu0 0
        %2069 = vmatpush2.bf16.msra.mxu0 0
        %2070 = vmatprep.subr.bf16.mxu0 0
        %2071 = vmatpush2.bf16.msra.mxu0 0
        %2072 = vmatprep.subr.bf16.mxu0 0
        %2073 = vmatpush2.bf16.msra.mxu0 0
        %2074 = vmatprep.mubr.bf16.mxu0 0
        %2075 = vmatmul.mubr.bf16.gmra.mxu0 %v2037
        %v2076 = vpop.f32.mrf.mxu0
        %v2077 = vadd.f32 %v2031, %v2076
        %v2078 = vpop.f32.mrf.mxu0
        %v2079 = vpop.f32.mrf.mxu0
        %v2080 = vpop.f32.mrf.mxu0
        %2081 = vdwg.mxu0
        %s2082 = scalar_lea.vmem %s11, 32
        %v2083 = vld [vmem:[%s2082] sm:$0xf]
        %v2084 = vld [vmem:[%s2082 + $0x4] sm:$0xf]
        %v2085 = vld [vmem:[%s2082 + $0x8] sm:$0xf]
        %v2086 = vld [vmem:[%s2082 + $0xc] sm:$0xf]
        %s2087 = scalar_lea.vmem %s12, 2
        %v2088 = vld [vmem:[%s2087] sm:$0x1]
        %v2090 = vlaneseq
        %v2091 = vshrl.u32 %v2090, 7
        %v2092 = vsub.s32 0, %v2091
        %v2093 = vrot.slane %v2088, %v2092
        %v2099 = vunpack.c.l.b16 %v2083
        %v2100 = vunpack.c.l.b16 %v2084
        %v2101 = vunpack.c.l.b16 %v2085
        %v2102 = vunpack.c.l.b16 %v2086
        %v2103 = vpack.c.b16 %v2100, %v2099
        %v2104 = vpack.c.b16 %v2102, %v2101
        %2107 = vmatprep.subr.bf16.mxu0 0
        %2108 = vmatpush1.bf16.msra.mxu0 0
        %2109 = vmatprep.subr.bf16.mxu0 0
        %2110 = vmatpush1.bf16.msra.mxu0 0
        %2111 = vmatprep.subr.bf16.mxu0 0
        %2112 = vmatpush1.bf16.msra.mxu0 0
        %2113 = vmatprep.subr.bf16.mxu0 0
        %2114 = vmatpush1.bf16.msra.mxu0 0
        %2115 = vmatprep.subr.bf16.mxu0 0
        %2116 = vmatpush1.bf16.msra.mxu0 0
        %2117 = vmatprep.subr.bf16.mxu0 0
        %2118 = vmatpush1.bf16.msra.mxu0 0
        %2119 = vmatprep.subr.bf16.mxu0 0
        %2120 = vmatpush1.bf16.msra.mxu0 %v2104
        %2121 = vmatprep.subr.bf16.mxu0 0
        %2122 = vmatpush1.bf16.msra.mxu0 %v2103
        %2123 = vmatprep.subr.bf16.mxu0 0
        %2124 = vmatpush2.bf16.msra.mxu0 0
        %2125 = vmatprep.subr.bf16.mxu0 0
        %2126 = vmatpush2.bf16.msra.mxu0 0
        %2127 = vmatprep.subr.bf16.mxu0 0
        %2128 = vmatpush2.bf16.msra.mxu0 0
        %2129 = vmatprep.subr.bf16.mxu0 0
        %2130 = vmatpush2.bf16.msra.mxu0 0
        %2131 = vmatprep.subr.bf16.mxu0 0
        %2132 = vmatpush2.bf16.msra.mxu0 0
        %2133 = vmatprep.subr.bf16.mxu0 0
        %2134 = vmatpush2.bf16.msra.mxu0 0
        %2135 = vmatprep.subr.bf16.mxu0 0
        %2136 = vmatpush2.bf16.msra.mxu0 0
        %2137 = vmatprep.subr.bf16.mxu0 0
        %2138 = vmatpush2.bf16.msra.mxu0 0
        %2139 = vmatprep.mubr.bf16.mxu0 0
        %2140 = vmatmul.mubr.bf16.gmra.mxu0 %v947
        %v2141 = vpop.f32.mrf.mxu0
        %v2142 = vadd.f32 %v2093, %v2141
        %v2143 = vpop.f32.mrf.mxu0
        %v2144 = vpop.f32.mrf.mxu0
        %v2145 = vpop.f32.mrf.mxu0
        %2146 = vdwg.mxu0
        %s2147 = scalar_lea.vmem %s13, 32
        %v2148 = vld [vmem:[%s2147] sm:$0xf]
        %v2149 = vld [vmem:[%s2147 + $0x4] sm:$0xf]
        %v2150 = vld [vmem:[%s2147 + $0x8] sm:$0xf]
        %v2151 = vld [vmem:[%s2147 + $0xc] sm:$0xf]
        %s2152 = scalar_lea.vmem %s14, 2
        %v2153 = vld [vmem:[%s2152] sm:$0x1]
        %v2155 = vlaneseq
        %v2156 = vshrl.u32 %v2155, 7
        %v2157 = vsub.s32 0, %v2156
        %v2158 = vrot.slane %v2153, %v2157
        %v2164 = vunpack.c.l.b16 %v2148
        %v2165 = vunpack.c.l.b16 %v2149
        %v2166 = vunpack.c.l.b16 %v2150
        %v2167 = vunpack.c.l.b16 %v2151
        %v2168 = vpack.c.b16 %v2165, %v2164
        %v2169 = vpack.c.b16 %v2167, %v2166
        %2172 = vmatprep.subr.bf16.mxu0 0
        %2173 = vmatpush1.bf16.msra.mxu0 0
        %2174 = vmatprep.subr.bf16.mxu0 0
        %2175 = vmatpush1.bf16.msra.mxu0 0
        %2176 = vmatprep.subr.bf16.mxu0 0
        %2177 = vmatpush1.bf16.msra.mxu0 0
        %2178 = vmatprep.subr.bf16.mxu0 0
        %2179 = vmatpush1.bf16.msra.mxu0 0
        %2180 = vmatprep.subr.bf16.mxu0 0
        %2181 = vmatpush1.bf16.msra.mxu0 0
        %2182 = vmatprep.subr.bf16.mxu0 0
        %2183 = vmatpush1.bf16.msra.mxu0 0
        %2184 = vmatprep.subr.bf16.mxu0 0
        %2185 = vmatpush1.bf16.msra.mxu0 %v2169
        %2186 = vmatprep.subr.bf16.mxu0 0
        %2187 = vmatpush1.bf16.msra.mxu0 %v2168
        %2188 = vmatprep.subr.bf16.mxu0 0
        %2189 = vmatpush2.bf16.msra.mxu0 0
        %2190 = vmatprep.subr.bf16.mxu0 0
        %2191 = vmatpush2.bf16.msra.mxu0 0
        %2192 = vmatprep.subr.bf16.mxu0 0
        %2193 = vmatpush2.bf16.msra.mxu0 0
        %2194 = vmatprep.subr.bf16.mxu0 0
        %2195 = vmatpush2.bf16.msra.mxu0 0
        %2196 = vmatprep.subr.bf16.mxu0 0
        %2197 = vmatpush2.bf16.msra.mxu0 0
        %2198 = vmatprep.subr.bf16.mxu0 0
        %2199 = vmatpush2.bf16.msra.mxu0 0
        %2200 = vmatprep.subr.bf16.mxu0 0
        %2201 = vmatpush2.bf16.msra.mxu0 0
        %2202 = vmatprep.subr.bf16.mxu0 0
        %2203 = vmatpush2.bf16.msra.mxu0 0
        %2204 = vmatprep.mubr.bf16.mxu0 0
        %2205 = vmatmul.mubr.bf16.gmra.mxu0 %v947
        %v2206 = vpop.f32.mrf.mxu0
        %v2207 = vadd.f32 %v2158, %v2206
        %v2208 = vpop.f32.mrf.mxu0
        %v2209 = vpop.f32.mrf.mxu0
        %v2210 = vpop.f32.mrf.mxu0
        %2211 = vdwg.mxu0
        %s2212 = scalar_lea.vmem %s15, 32
        %v2213 = vld [vmem:[%s2212] sm:$0xf]
        %v2214 = vld [vmem:[%s2212 + $0x4] sm:$0xf]
        %v2215 = vld [vmem:[%s2212 + $0x8] sm:$0xf]
        %v2216 = vld [vmem:[%s2212 + $0xc] sm:$0xf]
        %s2217 = scalar_lea.vmem %s16, 2
        %v2218 = vld [vmem:[%s2217] sm:$0x1]
        %v2220 = vlaneseq
        %v2221 = vshrl.u32 %v2220, 7
        %v2222 = vsub.s32 0, %v2221
        %v2223 = vrot.slane %v2218, %v2222
        %v2229 = vunpack.c.l.b16 %v2213
        %v2230 = vunpack.c.l.b16 %v2214
        %v2231 = vunpack.c.l.b16 %v2215
        %v2232 = vunpack.c.l.b16 %v2216
        %v2233 = vpack.c.b16 %v2230, %v2229
        %v2234 = vpack.c.b16 %v2232, %v2231
        %2237 = vmatprep.subr.bf16.mxu0 0
        %2238 = vmatpush1.bf16.msra.mxu0 0
        %2239 = vmatprep.subr.bf16.mxu0 0
        %2240 = vmatpush1.bf16.msra.mxu0 0
        %2241 = vmatprep.subr.bf16.mxu0 0
        %2242 = vmatpush1.bf16.msra.mxu0 0
        %2243 = vmatprep.subr.bf16.mxu0 0
        %2244 = vmatpush1.bf16.msra.mxu0 0
        %2245 = vmatprep.subr.bf16.mxu0 0
        %2246 = vmatpush1.bf16.msra.mxu0 0
        %2247 = vmatprep.subr.bf16.mxu0 0
        %2248 = vmatpush1.bf16.msra.mxu0 0
        %2249 = vmatprep.subr.bf16.mxu0 0
        %2250 = vmatpush1.bf16.msra.mxu0 %v2234
        %2251 = vmatprep.subr.bf16.mxu0 0
        %2252 = vmatpush1.bf16.msra.mxu0 %v2233
        %2253 = vmatprep.subr.bf16.mxu0 0
        %2254 = vmatpush2.bf16.msra.mxu0 0
        %2255 = vmatprep.subr.bf16.mxu0 0
        %2256 = vmatpush2.bf16.msra.mxu0 0
        %2257 = vmatprep.subr.bf16.mxu0 0
        %2258 = vmatpush2.bf16.msra.mxu0 0
        %2259 = vmatprep.subr.bf16.mxu0 0
        %2260 = vmatpush2.bf16.msra.mxu0 0
        %2261 = vmatprep.subr.bf16.mxu0 0
        %2262 = vmatpush2.bf16.msra.mxu0 0
        %2263 = vmatprep.subr.bf16.mxu0 0
        %2264 = vmatpush2.bf16.msra.mxu0 0
        %2265 = vmatprep.subr.bf16.mxu0 0
        %2266 = vmatpush2.bf16.msra.mxu0 0
        %2267 = vmatprep.subr.bf16.mxu0 0
        %2268 = vmatpush2.bf16.msra.mxu0 0
        %2269 = vmatprep.mubr.bf16.mxu0 0
        %2270 = vmatmul.mubr.bf16.gmra.mxu0 %v947
        %v2271 = vpop.f32.mrf.mxu0
        %v2272 = vadd.f32 %v2223, %v2271
        %v2273 = vpop.f32.mrf.mxu0
        %v2274 = vpop.f32.mrf.mxu0
        %v2275 = vpop.f32.mrf.mxu0
        %2276 = vdwg.mxu0
        %s2277 = scalar_lea.vmem %s17, 32
        %v2278 = vld [vmem:[%s2277] sm:$0xf]
        %v2279 = vld [vmem:[%s2277 + $0x4] sm:$0xf]
        %v2280 = vld [vmem:[%s2277 + $0x8] sm:$0xf]
        %v2281 = vld [vmem:[%s2277 + $0xc] sm:$0xf]
        %s2282 = scalar_lea.vmem %s18, 2
        %v2283 = vld [vmem:[%s2282] sm:$0x1]
        %v2285 = vlaneseq
        %v2286 = vshrl.u32 %v2285, 7
        %v2287 = vsub.s32 0, %v2286
        %v2288 = vrot.slane %v2283, %v2287
        %v2294 = vunpack.c.l.b16 %v2278
        %v2295 = vunpack.c.l.b16 %v2279
        %v2296 = vunpack.c.l.b16 %v2280
        %v2297 = vunpack.c.l.b16 %v2281
        %v2298 = vpack.c.b16 %v2295, %v2294
        %v2299 = vpack.c.b16 %v2297, %v2296
        %2302 = vmatprep.subr.bf16.mxu0 0
        %2303 = vmatpush1.bf16.msra.mxu0 0
        %2304 = vmatprep.subr.bf16.mxu0 0
        %2305 = vmatpush1.bf16.msra.mxu0 0
        %2306 = vmatprep.subr.bf16.mxu0 0
        %2307 = vmatpush1.bf16.msra.mxu0 0
        %2308 = vmatprep.subr.bf16.mxu0 0
        %2309 = vmatpush1.bf16.msra.mxu0 0
        %2310 = vmatprep.subr.bf16.mxu0 0
        %2311 = vmatpush1.bf16.msra.mxu0 0
        %2312 = vmatprep.subr.bf16.mxu0 0
        %2313 = vmatpush1.bf16.msra.mxu0 0
        %2314 = vmatprep.subr.bf16.mxu0 0
        %2315 = vmatpush1.bf16.msra.mxu0 %v2299
        %2316 = vmatprep.subr.bf16.mxu0 0
        %2317 = vmatpush1.bf16.msra.mxu0 %v2298
        %2318 = vmatprep.subr.bf16.mxu0 0
        %2319 = vmatpush2.bf16.msra.mxu0 0
        %2320 = vmatprep.subr.bf16.mxu0 0
        %2321 = vmatpush2.bf16.msra.mxu0 0
        %2322 = vmatprep.subr.bf16.mxu0 0
        %2323 = vmatpush2.bf16.msra.mxu0 0
        %2324 = vmatprep.subr.bf16.mxu0 0
        %2325 = vmatpush2.bf16.msra.mxu0 0
        %2326 = vmatprep.subr.bf16.mxu0 0
        %2327 = vmatpush2.bf16.msra.mxu0 0
        %2328 = vmatprep.subr.bf16.mxu0 0
        %2329 = vmatpush2.bf16.msra.mxu0 0
        %2330 = vmatprep.subr.bf16.mxu0 0
        %2331 = vmatpush2.bf16.msra.mxu0 0
        %2332 = vmatprep.subr.bf16.mxu0 0
        %2333 = vmatpush2.bf16.msra.mxu0 0
        %2334 = vmatprep.mubr.bf16.mxu0 0
        %2335 = vmatmul.mubr.bf16.gmra.mxu0 %v947
        %v2336 = vpop.f32.mrf.mxu0
        %v2337 = vadd.f32 %v2288, %v2336
        %v2338 = vpop.f32.mrf.mxu0
        %v2339 = vpop.f32.mrf.mxu0
        %v2340 = vpop.f32.mrf.mxu0
        %2341 = vdwg.mxu0
        %s2342 = scalar_lea.vmem %s2, 16
        %v2343 = vld [vmem:[%s2342] sm:$0xff]
        %2345 = vset.pattern.permute.xlu0 0
        %2346 = vperm.xlu0 %2345, %v2343
        %v2347 = vpop.permute.xlu0 %2346
        %v2349 = vmul.f32 %v2142, %v2347
        %v2350 = vpack.c.bf16 %v2349, %v2349
        %s2351 = scalar_lea.vmem %s3, 16
        %v2352 = vld [vmem:[%s2351] sm:$0xff]
        %2354 = vset.pattern.permute.xlu0 0
        %2355 = vperm.xlu0 %2354, %v2352
        %v2356 = vpop.permute.xlu0 %2355
        %v2358 = vmul.f32 %v2207, %v2356
        %v2359 = vpack.c.bf16 %v2358, %v2358
        %s2360 = scalar_lea.vmem %s4, 16
        %v2361 = vld [vmem:[%s2360] sm:$0xff]
        %2363 = vset.pattern.permute.xlu0 0
        %2364 = vperm.xlu0 %2363, %v2361
        %v2365 = vpop.permute.xlu0 %2364
        %v2367 = vmul.f32 %v2207, %v2365
        %v2368 = vpack.c.bf16 %v2367, %v2367
        %v2369 = vpack.c.bf16 %v2272, %v2272
        %v2370 = vxor.u32 %v2337, 2147483648
        %v2371 = vmul.f32 %v2370, 1.442695
        %v2372 = vpow.pop %v2371
        %v2373 = vadd.f32 %v2372, 1.0
        %v2374 = vrcp.pop %v2373
        %v2375 = vmul.f32 1.0, %v2374
        %v2376 = vmul.f32 %v2337, %v2375
        %v2377 = vpack.c.bf16 %v2376, %v2376
        %v2379 = vsel %vm1211, %v2350, 0
        %v2382 = vsel %vm1211, %v2359, 0
        %2384 = vmatprep.subr.bf16.mxu0 0
        %2385 = vmatpush1.bf16.xpose.msra.mxu0 0
        %2386 = vmatprep.subr.bf16.mxu0 0
        %2387 = vmatpush1.bf16.xpose.msra.mxu0 0
        %2388 = vmatprep.subr.bf16.mxu0 0
        %2389 = vmatpush1.bf16.xpose.msra.mxu0 0
        %2390 = vmatprep.subr.bf16.mxu0 0
        %2391 = vmatpush1.bf16.xpose.msra.mxu0 0
        %2392 = vmatprep.subr.bf16.mxu0 0
        %2393 = vmatpush1.bf16.xpose.msra.mxu0 0
        %2394 = vmatprep.subr.bf16.mxu0 0
        %2395 = vmatpush1.bf16.xpose.msra.mxu0 0
        %2396 = vmatprep.subr.bf16.mxu0 0
        %2397 = vmatpush1.bf16.xpose.msra.mxu0 0
        %2398 = vmatprep.subr.bf16.mxu0 0
        %2399 = vmatpush1.bf16.xpose.msra.mxu0 %v2382
        %2400 = vmatprep.subr.bf16.mxu0 0
        %2401 = vmatpush2.bf16.xpose.msra.mxu0 0
        %2402 = vmatprep.subr.bf16.mxu0 0
        %2403 = vmatpush2.bf16.xpose.msra.mxu0 0
        %2404 = vmatprep.subr.bf16.mxu0 0
        %2405 = vmatpush2.bf16.xpose.msra.mxu0 0
        %2406 = vmatprep.subr.bf16.mxu0 0
        %2407 = vmatpush2.bf16.xpose.msra.mxu0 0
        %2408 = vmatprep.subr.bf16.mxu0 0
        %2409 = vmatpush2.bf16.xpose.msra.mxu0 0
        %2410 = vmatprep.subr.bf16.mxu0 0
        %2411 = vmatpush2.bf16.xpose.msra.mxu0 0
        %2412 = vmatprep.subr.bf16.mxu0 0
        %2413 = vmatpush2.bf16.xpose.msra.mxu0 0
        %2414 = vmatprep.subr.bf16.mxu0 0
        %2415 = vmatpush2.bf16.xpose.msra.mxu0 0
        %2416 = vmatprep.mubr.bf16.mxu0 0
        %2417 = vmatmul.mubr.bf16.gmra.mxu0 %v2379
        %v2418 = vpop.f32.mrf.mxu0
        %v2419 = vadd.f32 0.0, %v2418
        %v2420 = vpop.f32.mrf.mxu0
        %v2421 = vpop.f32.mrf.mxu0
        %v2422 = vpop.f32.mrf.mxu0
        %2423 = vdwg.mxu0
        %v2424 = vsel %vm922, %v2419, 0.0
        %v2425 = vpack.c.bf16 %v2424, %v2424
        %s2426 = scalar_lea.vmem [#allocation2], 16
        %v2427 = vld [vmem:[%s2426] sm:$0xff]
        %v2428 = vpack.c.bf16 %v2427, %v2427
        %v2430 = vsel %vm1262, %v2428, 0
        %2432 = vmatprep.subr.bf16.mxu0 0
        %2433 = vmatpush1.bf16.msra.mxu0 0
        %2434 = vmatprep.subr.bf16.mxu0 0
        %2435 = vmatpush1.bf16.msra.mxu0 0
        %2436 = vmatprep.subr.bf16.mxu0 0
        %2437 = vmatpush1.bf16.msra.mxu0 0
        %2438 = vmatprep.subr.bf16.mxu0 0
        %2439 = vmatpush1.bf16.msra.mxu0 0
        %2440 = vmatprep.subr.bf16.mxu0 0
        %2441 = vmatpush1.bf16.msra.mxu0 0
        %2442 = vmatprep.subr.bf16.mxu0 0
        %2443 = vmatpush1.bf16.msra.mxu0 0
        %2444 = vmatprep.subr.bf16.mxu0 0
        %2445 = vmatpush1.bf16.msra.mxu0 0
        %2446 = vmatprep.subr.bf16.mxu0 0
        %2447 = vmatpush1.bf16.msra.mxu0 %v2430
        %2448 = vmatprep.subr.bf16.mxu0 0
        %2449 = vmatpush2.bf16.msra.mxu0 0
        %2450 = vmatprep.subr.bf16.mxu0 0
        %2451 = vmatpush2.bf16.msra.mxu0 0
        %2452 = vmatprep.subr.bf16.mxu0 0
        %2453 = vmatpush2.bf16.msra.mxu0 0
        %2454 = vmatprep.subr.bf16.mxu0 0
        %2455 = vmatpush2.bf16.msra.mxu0 0
        %2456 = vmatprep.subr.bf16.mxu0 0
        %2457 = vmatpush2.bf16.msra.mxu0 0
        %2458 = vmatprep.subr.bf16.mxu0 0
        %2459 = vmatpush2.bf16.msra.mxu0 0
        %2460 = vmatprep.subr.bf16.mxu0 0
        %2461 = vmatpush2.bf16.msra.mxu0 0
        %2462 = vmatprep.subr.bf16.mxu0 0
        %2463 = vmatpush2.bf16.msra.mxu0 0
        %2464 = vmatprep.mubr.bf16.mxu0 0
        %2465 = vmatmul.mubr.bf16.gmra.mxu0 %v2379
        %v2466 = vpop.f32.mrf.mxu0
        %v2467 = vadd.f32 0.0, %v2466
        %v2468 = vpop.f32.mrf.mxu0
        %v2469 = vpop.f32.mrf.mxu0
        %v2470 = vpop.f32.mrf.mxu0
        %2471 = vdwg.mxu0
        %s2472 = scalar_lea.vmem %s5, 2
        %v2473 = vld [vmem:[%s2472] sm:$0x1]
        %v2475 = vlaneseq
        %v2476 = vshrl.u32 %v2475, 7
        %v2477 = vsub.s32 0, %v2476
        %v2478 = vrot.slane %v2473, %v2477
        %2479 = vset.pattern.permute.xlu0 0
        %2480 = vperm.xlu0 %2479, %v2478
        %v2481 = vpop.permute.xlu0 %2480
        %v2483 = vmul.f32 %v2467, %v2481
        %v2485 = vsel %vm1211, %v2425, 0
        %v2488 = vsel %vm1262, %v2369, 0
        %2490 = vmatprep.subr.bf16.mxu0 0
        %2491 = vmatpush1.bf16.msra.mxu0 0
        %2492 = vmatprep.subr.bf16.mxu0 0
        %2493 = vmatpush1.bf16.msra.mxu0 0
        %2494 = vmatprep.subr.bf16.mxu0 0
        %2495 = vmatpush1.bf16.msra.mxu0 0
        %2496 = vmatprep.subr.bf16.mxu0 0
        %2497 = vmatpush1.bf16.msra.mxu0 0
        %2498 = vmatprep.subr.bf16.mxu0 0
        %2499 = vmatpush1.bf16.msra.mxu0 0
        %2500 = vmatprep.subr.bf16.mxu0 0
        %2501 = vmatpush1.bf16.msra.mxu0 0
        %2502 = vmatprep.subr.bf16.mxu0 0
        %2503 = vmatpush1.bf16.msra.mxu0 0
        %2504 = vmatprep.subr.bf16.mxu0 0
        %2505 = vmatpush1.bf16.msra.mxu0 %v2488
        %2506 = vmatprep.subr.bf16.mxu0 0
        %2507 = vmatpush2.bf16.msra.mxu0 0
        %2508 = vmatprep.subr.bf16.mxu0 0
        %2509 = vmatpush2.bf16.msra.mxu0 0
        %2510 = vmatprep.subr.bf16.mxu0 0
        %2511 = vmatpush2.bf16.msra.mxu0 0
        %2512 = vmatprep.subr.bf16.mxu0 0
        %2513 = vmatpush2.bf16.msra.mxu0 0
        %2514 = vmatprep.subr.bf16.mxu0 0
        %2515 = vmatpush2.bf16.msra.mxu0 0
        %2516 = vmatprep.subr.bf16.mxu0 0
        %2517 = vmatpush2.bf16.msra.mxu0 0
        %2518 = vmatprep.subr.bf16.mxu0 0
        %2519 = vmatpush2.bf16.msra.mxu0 0
        %2520 = vmatprep.subr.bf16.mxu0 0
        %2521 = vmatpush2.bf16.msra.mxu0 0
        %2522 = vmatprep.mubr.bf16.mxu0 0
        %2523 = vmatmul.mubr.bf16.gmra.mxu0 %v2485
        %v2524 = vpop.f32.mrf.mxu0
        %v2525 = vadd.f32 %v2483, %v2524
        %v2526 = vpop.f32.mrf.mxu0
        %v2527 = vpop.f32.mrf.mxu0
        %v2528 = vpop.f32.mrf.mxu0
        %2529 = vdwg.mxu0
        %s2530 = scalar_lea.vmem %s6, 2
        %v2531 = vld [vmem:[%s2530] sm:$0x1]
        %v2533 = vlaneseq
        %v2534 = vshrl.u32 %v2533, 7
        %v2535 = vsub.s32 0, %v2534
        %v2536 = vrot.slane %v2531, %v2535
        %2537 = vset.pattern.permute.xlu0 0
        %2538 = vperm.xlu0 %2537, %v2536
        %v2539 = vpop.permute.xlu0 %2538
        %v2541 = vmul.f32 %v2427, %v2539
        %2542 = vxpose.xlu0.c.b16.start [1/8] %v2368, 128
        %2543 = vxpose.xlu0.c.b16.cont [2/8] 0, 128
        %2544 = vxpose.xlu0.c.b16.cont [3/8] 0, 128
        %2545 = vxpose.xlu0.c.b16.cont [4/8] 0, 128
        %2546 = vxpose.xlu0.c.b16.cont [5/8] 0, 128
        %2547 = vxpose.xlu0.c.b16.cont [6/8] 0, 128
        %2548 = vxpose.xlu0.c.b16.cont [7/8] 0, 128
        %2549 = vxpose.xlu0.c.b16.end [8/8] 0, 128
        %v2550 = vpop.trf.xlu0
        %v2551 = vpop.trf.xlu0
        %v2552 = vpop.trf.xlu0
        %v2553 = vpop.trf.xlu0
        %v2554 = vpop.trf.xlu0
        %v2555 = vpop.trf.xlu0
        %v2556 = vpop.trf.xlu0
        %v2557 = vpop.trf.xlu0
        %v2559 = vsel %vm1211, %v2550, 0
        %2561 = vmatprep.subr.bf16.mxu0 0
        %2562 = vmatpush1.bf16.msra.mxu0 0
        %2563 = vmatprep.subr.bf16.mxu0 0
        %2564 = vmatpush1.bf16.msra.mxu0 0
        %2565 = vmatprep.subr.bf16.mxu0 0
        %2566 = vmatpush1.bf16.msra.mxu0 0
        %2567 = vmatprep.subr.bf16.mxu0 0
        %2568 = vmatpush1.bf16.msra.mxu0 0
        %2569 = vmatprep.subr.bf16.mxu0 0
        %2570 = vmatpush1.bf16.msra.mxu0 0
        %2571 = vmatprep.subr.bf16.mxu0 0
        %2572 = vmatpush1.bf16.msra.mxu0 0
        %2573 = vmatprep.subr.bf16.mxu0 0
        %2574 = vmatpush1.bf16.msra.mxu0 0
        %2575 = vmatprep.subr.bf16.mxu0 0
        %2576 = vmatpush1.bf16.msra.mxu0 %v2488
        %2577 = vmatprep.subr.bf16.mxu0 0
        %2578 = vmatpush2.bf16.msra.mxu0 0
        %2579 = vmatprep.subr.bf16.mxu0 0
        %2580 = vmatpush2.bf16.msra.mxu0 0
        %2581 = vmatprep.subr.bf16.mxu0 0
        %2582 = vmatpush2.bf16.msra.mxu0 0
        %2583 = vmatprep.subr.bf16.mxu0 0
        %2584 = vmatpush2.bf16.msra.mxu0 0
        %2585 = vmatprep.subr.bf16.mxu0 0
        %2586 = vmatpush2.bf16.msra.mxu0 0
        %2587 = vmatprep.subr.bf16.mxu0 0
        %2588 = vmatpush2.bf16.msra.mxu0 0
        %2589 = vmatprep.subr.bf16.mxu0 0
        %2590 = vmatpush2.bf16.msra.mxu0 0
        %2591 = vmatprep.subr.bf16.mxu0 0
        %2592 = vmatpush2.bf16.msra.mxu0 0
        %2593 = vmatprep.mubr.bf16.mxu0 0
        %2594 = vmatmul.mubr.bf16.gmra.mxu0 %v2559
        %v2595 = vpop.f32.mrf.mxu0
        %v2596 = vadd.f32 %v2541, %v2595
        %v2597 = vpop.f32.mrf.mxu0
        %v2598 = vpop.f32.mrf.mxu0
        %v2599 = vpop.f32.mrf.mxu0
        %2600 = vdwg.mxu0
        %2601 = vst.msk [vmem:[%s2426] sm:$0xff] %vm1211, %v2596
        %v2602 = vsel %vm1211, %v2525, 0.0
        %2603 = vadd.xlane.f32.xlu0 %v2602
        %v2604 = vpop.xlane.xlu0 %2603
        %v2605 = vmul.f32 %v2604, %v1437
        %v2606 = vsub.f32 %v2525, %v2605
        %v2607 = vmul.f32 %v2606, %v2606
        %v2608 = vsel %vm1211, %v2607, 0.0
        %2609 = vadd.xlane.f32.xlu0 %v2608
        %v2610 = vpop.xlane.xlu0 %2609
        %v2611 = vmul.f32 %v2610, %v1437
        %v2612 = vadd.f32 %v2611, 1e-06
        %v2613 = vrsqrt.pop %v2612
        %v2614 = vmul.f32 %v2606, %v2613
        %v2615 = vunpack.c.l.bf16 %v2377
        %v2616 = vmul.f32 %v2614, %v2615
        %v2617 = vpack.c.bf16 %v2616, %v2616
        %s2618 = scalar_lea.vmem %s19, 8
        %v2619 = vld [vmem:[%s2618] sm:$0xf]
        %v2621 = vsel %vm1211, %v2617, 0
        %v2624 = vsel %vm1262, %v2619, 0
        %2626 = vmatprep.subr.bf16.mxu0 0
        %2627 = vmatpush1.bf16.msra.mxu0 0
        %2628 = vmatprep.subr.bf16.mxu0 0
        %2629 = vmatpush1.bf16.msra.mxu0 0
        %2630 = vmatprep.subr.bf16.mxu0 0
        %2631 = vmatpush1.bf16.msra.mxu0 0
        %2632 = vmatprep.subr.bf16.mxu0 0
        %2633 = vmatpush1.bf16.msra.mxu0 0
        %2634 = vmatprep.subr.bf16.mxu0 0
        %2635 = vmatpush1.bf16.msra.mxu0 0
        %2636 = vmatprep.subr.bf16.mxu0 0
        %2637 = vmatpush1.bf16.msra.mxu0 0
        %2638 = vmatprep.subr.bf16.mxu0 0
        %2639 = vmatpush1.bf16.msra.mxu0 0
        %2640 = vmatprep.subr.bf16.mxu0 0
        %2641 = vmatpush1.bf16.msra.mxu0 %v2624
        %2642 = vmatprep.subr.bf16.mxu0 0
        %2643 = vmatpush2.bf16.msra.mxu0 0
        %2644 = vmatprep.subr.bf16.mxu0 0
        %2645 = vmatpush2.bf16.msra.mxu0 0
        %2646 = vmatprep.subr.bf16.mxu0 0
        %2647 = vmatpush2.bf16.msra.mxu0 0
        %2648 = vmatprep.subr.bf16.mxu0 0
        %2649 = vmatpush2.bf16.msra.mxu0 0
        %2650 = vmatprep.subr.bf16.mxu0 0
        %2651 = vmatpush2.bf16.msra.mxu0 0
        %2652 = vmatprep.subr.bf16.mxu0 0
        %2653 = vmatpush2.bf16.msra.mxu0 0
        %2654 = vmatprep.subr.bf16.mxu0 0
        %2655 = vmatpush2.bf16.msra.mxu0 0
        %2656 = vmatprep.subr.bf16.mxu0 0
        %2657 = vmatpush2.bf16.msra.mxu0 0
        %2658 = vmatprep.mubr.bf16.mxu0 0
        %2659 = vmatmul.mubr.bf16.gmra.mxu0 %v2621
        %v2660 = vpop.f32.mrf.mxu0
        %v2661 = vadd.f32 0.0, %v2660
        %v2662 = vpop.f32.mrf.mxu0
        %v2663 = vpop.f32.mrf.mxu0
        %v2664 = vpop.f32.mrf.mxu0
        %2665 = vdwg.mxu0
        %v2666 = vadd.f32 %v2077, %v2661
        %s2667 = scalar_lea.vmem %s11, 48
        %v2668 = vld [vmem:[%s2667] sm:$0xf]
        %v2669 = vld [vmem:[%s2667 + $0x4] sm:$0xf]
        %v2670 = vld [vmem:[%s2667 + $0x8] sm:$0xf]
        %v2671 = vld [vmem:[%s2667 + $0xc] sm:$0xf]
        %s2672 = scalar_lea.vmem %s12, 3
        %v2673 = vld [vmem:[%s2672] sm:$0x1]
        %v2675 = vlaneseq
        %v2676 = vshrl.u32 %v2675, 7
        %v2677 = vsub.s32 0, %v2676
        %v2678 = vrot.slane %v2673, %v2677
        %v2684 = vunpack.c.l.b16 %v2668
        %v2685 = vunpack.c.l.b16 %v2669
        %v2686 = vunpack.c.l.b16 %v2670
        %v2687 = vunpack.c.l.b16 %v2671
        %v2688 = vpack.c.b16 %v2685, %v2684
        %v2689 = vpack.c.b16 %v2687, %v2686
        %2692 = vmatprep.subr.bf16.mxu0 0
        %2693 = vmatpush1.bf16.msra.mxu0 0
        %2694 = vmatprep.subr.bf16.mxu0 0
        %2695 = vmatpush1.bf16.msra.mxu0 0
        %2696 = vmatprep.subr.bf16.mxu0 0
        %2697 = vmatpush1.bf16.msra.mxu0 0
        %2698 = vmatprep.subr.bf16.mxu0 0
        %2699 = vmatpush1.bf16.msra.mxu0 0
        %2700 = vmatprep.subr.bf16.mxu0 0
        %2701 = vmatpush1.bf16.msra.mxu0 0
        %2702 = vmatprep.subr.bf16.mxu0 0
        %2703 = vmatpush1.bf16.msra.mxu0 0
        %2704 = vmatprep.subr.bf16.mxu0 0
        %2705 = vmatpush1.bf16.msra.mxu0 %v2689
        %2706 = vmatprep.subr.bf16.mxu0 0
        %2707 = vmatpush1.bf16.msra.mxu0 %v2688
        %2708 = vmatprep.subr.bf16.mxu0 0
        %2709 = vmatpush2.bf16.msra.mxu0 0
        %2710 = vmatprep.subr.bf16.mxu0 0
        %2711 = vmatpush2.bf16.msra.mxu0 0
        %2712 = vmatprep.subr.bf16.mxu0 0
        %2713 = vmatpush2.bf16.msra.mxu0 0
        %2714 = vmatprep.subr.bf16.mxu0 0
        %2715 = vmatpush2.bf16.msra.mxu0 0
        %2716 = vmatprep.subr.bf16.mxu0 0
        %2717 = vmatpush2.bf16.msra.mxu0 0
        %2718 = vmatprep.subr.bf16.mxu0 0
        %2719 = vmatpush2.bf16.msra.mxu0 0
        %2720 = vmatprep.subr.bf16.mxu0 0
        %2721 = vmatpush2.bf16.msra.mxu0 0
        %2722 = vmatprep.subr.bf16.mxu0 0
        %2723 = vmatpush2.bf16.msra.mxu0 0
        %2724 = vmatprep.mubr.bf16.mxu0 0
        %2725 = vmatmul.mubr.bf16.gmra.mxu0 %v947
        %v2726 = vpop.f32.mrf.mxu0
        %v2727 = vadd.f32 %v2678, %v2726
        %v2728 = vpop.f32.mrf.mxu0
        %v2729 = vpop.f32.mrf.mxu0
        %v2730 = vpop.f32.mrf.mxu0
        %2731 = vdwg.mxu0
        %s2732 = scalar_lea.vmem %s13, 48
        %v2733 = vld [vmem:[%s2732] sm:$0xf]
        %v2734 = vld [vmem:[%s2732 + $0x4] sm:$0xf]
        %v2735 = vld [vmem:[%s2732 + $0x8] sm:$0xf]
        %v2736 = vld [vmem:[%s2732 + $0xc] sm:$0xf]
        %s2737 = scalar_lea.vmem %s14, 3
        %v2738 = vld [vmem:[%s2737] sm:$0x1]
        %v2740 = vlaneseq
        %v2741 = vshrl.u32 %v2740, 7
        %v2742 = vsub.s32 0, %v2741
        %v2743 = vrot.slane %v2738, %v2742
        %v2749 = vunpack.c.l.b16 %v2733
        %v2750 = vunpack.c.l.b16 %v2734
        %v2751 = vunpack.c.l.b16 %v2735
        %v2752 = vunpack.c.l.b16 %v2736
        %v2753 = vpack.c.b16 %v2750, %v2749
        %v2754 = vpack.c.b16 %v2752, %v2751
        %2757 = vmatprep.subr.bf16.mxu0 0
        %2758 = vmatpush1.bf16.msra.mxu0 0
        %2759 = vmatprep.subr.bf16.mxu0 0
        %2760 = vmatpush1.bf16.msra.mxu0 0
        %2761 = vmatprep.subr.bf16.mxu0 0
        %2762 = vmatpush1.bf16.msra.mxu0 0
        %2763 = vmatprep.subr.bf16.mxu0 0
        %2764 = vmatpush1.bf16.msra.mxu0 0
        %2765 = vmatprep.subr.bf16.mxu0 0
        %2766 = vmatpush1.bf16.msra.mxu0 0
        %2767 = vmatprep.subr.bf16.mxu0 0
        %2768 = vmatpush1.bf16.msra.mxu0 0
        %2769 = vmatprep.subr.bf16.mxu0 0
        %2770 = vmatpush1.bf16.msra.mxu0 %v2754
        %2771 = vmatprep.subr.bf16.mxu0 0
        %2772 = vmatpush1.bf16.msra.mxu0 %v2753
        %2773 = vmatprep.subr.bf16.mxu0 0
        %2774 = vmatpush2.bf16.msra.mxu0 0
        %2775 = vmatprep.subr.bf16.mxu0 0
        %2776 = vmatpush2.bf16.msra.mxu0 0
        %2777 = vmatprep.subr.bf16.mxu0 0
        %2778 = vmatpush2.bf16.msra.mxu0 0
        %2779 = vmatprep.subr.bf16.mxu0 0
        %2780 = vmatpush2.bf16.msra.mxu0 0
        %2781 = vmatprep.subr.bf16.mxu0 0
        %2782 = vmatpush2.bf16.msra.mxu0 0
        %2783 = vmatprep.subr.bf16.mxu0 0
        %2784 = vmatpush2.bf16.msra.mxu0 0
        %2785 = vmatprep.subr.bf16.mxu0 0
        %2786 = vmatpush2.bf16.msra.mxu0 0
        %2787 = vmatprep.subr.bf16.mxu0 0
        %2788 = vmatpush2.bf16.msra.mxu0 0
        %2789 = vmatprep.mubr.bf16.mxu0 0
        %2790 = vmatmul.mubr.bf16.gmra.mxu0 %v947
        %v2791 = vpop.f32.mrf.mxu0
        %v2792 = vadd.f32 %v2743, %v2791
        %v2793 = vpop.f32.mrf.mxu0
        %v2794 = vpop.f32.mrf.mxu0
        %v2795 = vpop.f32.mrf.mxu0
        %2796 = vdwg.mxu0
        %s2797 = scalar_lea.vmem %s15, 48
        %v2798 = vld [vmem:[%s2797] sm:$0xf]
        %v2799 = vld [vmem:[%s2797 + $0x4] sm:$0xf]
        %v2800 = vld [vmem:[%s2797 + $0x8] sm:$0xf]
        %v2801 = vld [vmem:[%s2797 + $0xc] sm:$0xf]
        %s2802 = scalar_lea.vmem %s16, 3
        %v2803 = vld [vmem:[%s2802] sm:$0x1]
        %v2805 = vlaneseq
        %v2806 = vshrl.u32 %v2805, 7
        %v2807 = vsub.s32 0, %v2806
        %v2808 = vrot.slane %v2803, %v2807
        %v2814 = vunpack.c.l.b16 %v2798
        %v2815 = vunpack.c.l.b16 %v2799
        %v2816 = vunpack.c.l.b16 %v2800
        %v2817 = vunpack.c.l.b16 %v2801
        %v2818 = vpack.c.b16 %v2815, %v2814
        %v2819 = vpack.c.b16 %v2817, %v2816
        %2822 = vmatprep.subr.bf16.mxu0 0
        %2823 = vmatpush1.bf16.msra.mxu0 0
        %2824 = vmatprep.subr.bf16.mxu0 0
        %2825 = vmatpush1.bf16.msra.mxu0 0
        %2826 = vmatprep.subr.bf16.mxu0 0
        %2827 = vmatpush1.bf16.msra.mxu0 0
        %2828 = vmatprep.subr.bf16.mxu0 0
        %2829 = vmatpush1.bf16.msra.mxu0 0
        %2830 = vmatprep.subr.bf16.mxu0 0
        %2831 = vmatpush1.bf16.msra.mxu0 0
        %2832 = vmatprep.subr.bf16.mxu0 0
        %2833 = vmatpush1.bf16.msra.mxu0 0
        %2834 = vmatprep.subr.bf16.mxu0 0
        %2835 = vmatpush1.bf16.msra.mxu0 %v2819
        %2836 = vmatprep.subr.bf16.mxu0 0
        %2837 = vmatpush1.bf16.msra.mxu0 %v2818
        %2838 = vmatprep.subr.bf16.mxu0 0
        %2839 = vmatpush2.bf16.msra.mxu0 0
        %2840 = vmatprep.subr.bf16.mxu0 0
        %2841 = vmatpush2.bf16.msra.mxu0 0
        %2842 = vmatprep.subr.bf16.mxu0 0
        %2843 = vmatpush2.bf16.msra.mxu0 0
        %2844 = vmatprep.subr.bf16.mxu0 0
        %2845 = vmatpush2.bf16.msra.mxu0 0
        %2846 = vmatprep.subr.bf16.mxu0 0
        %2847 = vmatpush2.bf16.msra.mxu0 0
        %2848 = vmatprep.subr.bf16.mxu0 0
        %2849 = vmatpush2.bf16.msra.mxu0 0
        %2850 = vmatprep.subr.bf16.mxu0 0
        %2851 = vmatpush2.bf16.msra.mxu0 0
        %2852 = vmatprep.subr.bf16.mxu0 0
        %2853 = vmatpush2.bf16.msra.mxu0 0
        %2854 = vmatprep.mubr.bf16.mxu0 0
        %2855 = vmatmul.mubr.bf16.gmra.mxu0 %v947
        %v2856 = vpop.f32.mrf.mxu0
        %v2857 = vadd.f32 %v2808, %v2856
        %v2858 = vpop.f32.mrf.mxu0
        %v2859 = vpop.f32.mrf.mxu0
        %v2860 = vpop.f32.mrf.mxu0
        %2861 = vdwg.mxu0
        %s2862 = scalar_lea.vmem %s17, 48
        %v2863 = vld [vmem:[%s2862] sm:$0xf]
        %v2864 = vld [vmem:[%s2862 + $0x4] sm:$0xf]
        %v2865 = vld [vmem:[%s2862 + $0x8] sm:$0xf]
        %v2866 = vld [vmem:[%s2862 + $0xc] sm:$0xf]
        %s2867 = scalar_lea.vmem %s18, 3
        %v2868 = vld [vmem:[%s2867] sm:$0x1]
        %v2870 = vlaneseq
        %v2871 = vshrl.u32 %v2870, 7
        %v2872 = vsub.s32 0, %v2871
        %v2873 = vrot.slane %v2868, %v2872
        %v2879 = vunpack.c.l.b16 %v2863
        %v2880 = vunpack.c.l.b16 %v2864
        %v2881 = vunpack.c.l.b16 %v2865
        %v2882 = vunpack.c.l.b16 %v2866
        %v2883 = vpack.c.b16 %v2880, %v2879
        %v2884 = vpack.c.b16 %v2882, %v2881
        %2887 = vmatprep.subr.bf16.mxu0 0
        %2888 = vmatpush1.bf16.msra.mxu0 0
        %2889 = vmatprep.subr.bf16.mxu0 0
        %2890 = vmatpush1.bf16.msra.mxu0 0
        %2891 = vmatprep.subr.bf16.mxu0 0
        %2892 = vmatpush1.bf16.msra.mxu0 0
        %2893 = vmatprep.subr.bf16.mxu0 0
        %2894 = vmatpush1.bf16.msra.mxu0 0
        %2895 = vmatprep.subr.bf16.mxu0 0
        %2896 = vmatpush1.bf16.msra.mxu0 0
        %2897 = vmatprep.subr.bf16.mxu0 0
        %2898 = vmatpush1.bf16.msra.mxu0 0
        %2899 = vmatprep.subr.bf16.mxu0 0
        %2900 = vmatpush1.bf16.msra.mxu0 %v2884
        %2901 = vmatprep.subr.bf16.mxu0 0
        %2902 = vmatpush1.bf16.msra.mxu0 %v2883
        %2903 = vmatprep.subr.bf16.mxu0 0
        %2904 = vmatpush2.bf16.msra.mxu0 0
        %2905 = vmatprep.subr.bf16.mxu0 0
        %2906 = vmatpush2.bf16.msra.mxu0 0
        %2907 = vmatprep.subr.bf16.mxu0 0
        %2908 = vmatpush2.bf16.msra.mxu0 0
        %2909 = vmatprep.subr.bf16.mxu0 0
        %2910 = vmatpush2.bf16.msra.mxu0 0
        %2911 = vmatprep.subr.bf16.mxu0 0
        %2912 = vmatpush2.bf16.msra.mxu0 0
        %2913 = vmatprep.subr.bf16.mxu0 0
        %2914 = vmatpush2.bf16.msra.mxu0 0
        %2915 = vmatprep.subr.bf16.mxu0 0
        %2916 = vmatpush2.bf16.msra.mxu0 0
        %2917 = vmatprep.subr.bf16.mxu0 0
        %2918 = vmatpush2.bf16.msra.mxu0 0
        %2919 = vmatprep.mubr.bf16.mxu0 0
        %2920 = vmatmul.mubr.bf16.gmra.mxu0 %v947
        %v2921 = vpop.f32.mrf.mxu0
        %v2922 = vadd.f32 %v2873, %v2921
        %v2923 = vpop.f32.mrf.mxu0
        %v2924 = vpop.f32.mrf.mxu0
        %v2925 = vpop.f32.mrf.mxu0
        %2926 = vdwg.mxu0
        %s2927 = scalar_lea.vmem %s2, 24
        %v2928 = vld [vmem:[%s2927] sm:$0xff]
        %2930 = vset.pattern.permute.xlu0 0
        %2931 = vperm.xlu0 %2930, %v2928
        %v2932 = vpop.permute.xlu0 %2931
        %v2934 = vmul.f32 %v2727, %v2932
        %v2935 = vpack.c.bf16 %v2934, %v2934
        %s2936 = scalar_lea.vmem %s3, 24
        %v2937 = vld [vmem:[%s2936] sm:$0xff]
        %2939 = vset.pattern.permute.xlu0 0
        %2940 = vperm.xlu0 %2939, %v2937
        %v2941 = vpop.permute.xlu0 %2940
        %v2943 = vmul.f32 %v2792, %v2941
        %v2944 = vpack.c.bf16 %v2943, %v2943
        %s2945 = scalar_lea.vmem %s4, 24
        %v2946 = vld [vmem:[%s2945] sm:$0xff]
        %2948 = vset.pattern.permute.xlu0 0
        %2949 = vperm.xlu0 %2948, %v2946
        %v2950 = vpop.permute.xlu0 %2949
        %v2952 = vmul.f32 %v2792, %v2950
        %v2953 = vpack.c.bf16 %v2952, %v2952
        %v2954 = vpack.c.bf16 %v2857, %v2857
        %v2955 = vxor.u32 %v2922, 2147483648
        %v2956 = vmul.f32 %v2955, 1.442695
        %v2957 = vpow.pop %v2956
        %v2958 = vadd.f32 %v2957, 1.0
        %v2959 = vrcp.pop %v2958
        %v2960 = vmul.f32 1.0, %v2959
        %v2961 = vmul.f32 %v2922, %v2960
        %v2962 = vpack.c.bf16 %v2961, %v2961
        %v2964 = vsel %vm1211, %v2935, 0
        %v2967 = vsel %vm1211, %v2944, 0
        %2969 = vmatprep.subr.bf16.mxu0 0
        %2970 = vmatpush1.bf16.xpose.msra.mxu0 0
        %2971 = vmatprep.subr.bf16.mxu0 0
        %2972 = vmatpush1.bf16.xpose.msra.mxu0 0
        %2973 = vmatprep.subr.bf16.mxu0 0
        %2974 = vmatpush1.bf16.xpose.msra.mxu0 0
        %2975 = vmatprep.subr.bf16.mxu0 0
        %2976 = vmatpush1.bf16.xpose.msra.mxu0 0
        %2977 = vmatprep.subr.bf16.mxu0 0
        %2978 = vmatpush1.bf16.xpose.msra.mxu0 0
        %2979 = vmatprep.subr.bf16.mxu0 0
        %2980 = vmatpush1.bf16.xpose.msra.mxu0 0
        %2981 = vmatprep.subr.bf16.mxu0 0
        %2982 = vmatpush1.bf16.xpose.msra.mxu0 0
        %2983 = vmatprep.subr.bf16.mxu0 0
        %2984 = vmatpush1.bf16.xpose.msra.mxu0 %v2967
        %2985 = vmatprep.subr.bf16.mxu0 0
        %2986 = vmatpush2.bf16.xpose.msra.mxu0 0
        %2987 = vmatprep.subr.bf16.mxu0 0
        %2988 = vmatpush2.bf16.xpose.msra.mxu0 0
        %2989 = vmatprep.subr.bf16.mxu0 0
        %2990 = vmatpush2.bf16.xpose.msra.mxu0 0
        %2991 = vmatprep.subr.bf16.mxu0 0
        %2992 = vmatpush2.bf16.xpose.msra.mxu0 0
        %2993 = vmatprep.subr.bf16.mxu0 0
        %2994 = vmatpush2.bf16.xpose.msra.mxu0 0
        %2995 = vmatprep.subr.bf16.mxu0 0
        %2996 = vmatpush2.bf16.xpose.msra.mxu0 0
        %2997 = vmatprep.subr.bf16.mxu0 0
        %2998 = vmatpush2.bf16.xpose.msra.mxu0 0
        %2999 = vmatprep.subr.bf16.mxu0 0
        %3000 = vmatpush2.bf16.xpose.msra.mxu0 0
        %3001 = vmatprep.mubr.bf16.mxu0 0
        %3002 = vmatmul.mubr.bf16.gmra.mxu0 %v2964
        %v3003 = vpop.f32.mrf.mxu0
        %v3004 = vadd.f32 0.0, %v3003
        %v3005 = vpop.f32.mrf.mxu0
        %v3006 = vpop.f32.mrf.mxu0
        %v3007 = vpop.f32.mrf.mxu0
        %3008 = vdwg.mxu0
        %v3009 = vsel %vm922, %v3004, 0.0
        %v3010 = vpack.c.bf16 %v3009, %v3009
        %s3011 = scalar_lea.vmem [#allocation2], 24
        %v3012 = vld [vmem:[%s3011] sm:$0xff]
        %v3013 = vpack.c.bf16 %v3012, %v3012
        %v3015 = vsel %vm1262, %v3013, 0
        %3017 = vmatprep.subr.bf16.mxu0 0
        %3018 = vmatpush1.bf16.msra.mxu0 0
        %3019 = vmatprep.subr.bf16.mxu0 0
        %3020 = vmatpush1.bf16.msra.mxu0 0
        %3021 = vmatprep.subr.bf16.mxu0 0
        %3022 = vmatpush1.bf16.msra.mxu0 0
        %3023 = vmatprep.subr.bf16.mxu0 0
        %3024 = vmatpush1.bf16.msra.mxu0 0
        %3025 = vmatprep.subr.bf16.mxu0 0
        %3026 = vmatpush1.bf16.msra.mxu0 0
        %3027 = vmatprep.subr.bf16.mxu0 0
        %3028 = vmatpush1.bf16.msra.mxu0 0
        %3029 = vmatprep.subr.bf16.mxu0 0
        %3030 = vmatpush1.bf16.msra.mxu0 0
        %3031 = vmatprep.subr.bf16.mxu0 0
        %3032 = vmatpush1.bf16.msra.mxu0 %v3015
        %3033 = vmatprep.subr.bf16.mxu0 0
        %3034 = vmatpush2.bf16.msra.mxu0 0
        %3035 = vmatprep.subr.bf16.mxu0 0
        %3036 = vmatpush2.bf16.msra.mxu0 0
        %3037 = vmatprep.subr.bf16.mxu0 0
        %3038 = vmatpush2.bf16.msra.mxu0 0
        %3039 = vmatprep.subr.bf16.mxu0 0
        %3040 = vmatpush2.bf16.msra.mxu0 0
        %3041 = vmatprep.subr.bf16.mxu0 0
        %3042 = vmatpush2.bf16.msra.mxu0 0
        %3043 = vmatprep.subr.bf16.mxu0 0
        %3044 = vmatpush2.bf16.msra.mxu0 0
        %3045 = vmatprep.subr.bf16.mxu0 0
        %3046 = vmatpush2.bf16.msra.mxu0 0
        %3047 = vmatprep.subr.bf16.mxu0 0
        %3048 = vmatpush2.bf16.msra.mxu0 0
        %3049 = vmatprep.mubr.bf16.mxu0 0
        %3050 = vmatmul.mubr.bf16.gmra.mxu0 %v2964
        %v3051 = vpop.f32.mrf.mxu0
        %v3052 = vadd.f32 0.0, %v3051
        %v3053 = vpop.f32.mrf.mxu0
        %v3054 = vpop.f32.mrf.mxu0
        %v3055 = vpop.f32.mrf.mxu0
        %3056 = vdwg.mxu0
        %s3057 = scalar_lea.vmem %s5, 3
        %v3058 = vld [vmem:[%s3057] sm:$0x1]
        %v3060 = vlaneseq
        %v3061 = vshrl.u32 %v3060, 7
        %v3062 = vsub.s32 0, %v3061
        %v3063 = vrot.slane %v3058, %v3062
        %3064 = vset.pattern.permute.xlu0 0
        %3065 = vperm.xlu0 %3064, %v3063
        %v3066 = vpop.permute.xlu0 %3065
        %v3068 = vmul.f32 %v3052, %v3066
        %v3070 = vsel %vm1211, %v3010, 0
        %v3073 = vsel %vm1262, %v2954, 0
        %3075 = vmatprep.subr.bf16.mxu0 0
        %3076 = vmatpush1.bf16.msra.mxu0 0
        %3077 = vmatprep.subr.bf16.mxu0 0
        %3078 = vmatpush1.bf16.msra.mxu0 0
        %3079 = vmatprep.subr.bf16.mxu0 0
        %3080 = vmatpush1.bf16.msra.mxu0 0
        %3081 = vmatprep.subr.bf16.mxu0 0
        %3082 = vmatpush1.bf16.msra.mxu0 0
        %3083 = vmatprep.subr.bf16.mxu0 0
        %3084 = vmatpush1.bf16.msra.mxu0 0
        %3085 = vmatprep.subr.bf16.mxu0 0
        %3086 = vmatpush1.bf16.msra.mxu0 0
        %3087 = vmatprep.subr.bf16.mxu0 0
        %3088 = vmatpush1.bf16.msra.mxu0 0
        %3089 = vmatprep.subr.bf16.mxu0 0
        %3090 = vmatpush1.bf16.msra.mxu0 %v3073
        %3091 = vmatprep.subr.bf16.mxu0 0
        %3092 = vmatpush2.bf16.msra.mxu0 0
        %3093 = vmatprep.subr.bf16.mxu0 0
        %3094 = vmatpush2.bf16.msra.mxu0 0
        %3095 = vmatprep.subr.bf16.mxu0 0
        %3096 = vmatpush2.bf16.msra.mxu0 0
        %3097 = vmatprep.subr.bf16.mxu0 0
        %3098 = vmatpush2.bf16.msra.mxu0 0
        %3099 = vmatprep.subr.bf16.mxu0 0
        %3100 = vmatpush2.bf16.msra.mxu0 0
        %3101 = vmatprep.subr.bf16.mxu0 0
        %3102 = vmatpush2.bf16.msra.mxu0 0
        %3103 = vmatprep.subr.bf16.mxu0 0
        %3104 = vmatpush2.bf16.msra.mxu0 0
        %3105 = vmatprep.subr.bf16.mxu0 0
        %3106 = vmatpush2.bf16.msra.mxu0 0
        %3107 = vmatprep.mubr.bf16.mxu0 0
        %3108 = vmatmul.mubr.bf16.gmra.mxu0 %v3070
        %v3109 = vpop.f32.mrf.mxu0
        %v3110 = vadd.f32 %v3068, %v3109
        %v3111 = vpop.f32.mrf.mxu0
        %v3112 = vpop.f32.mrf.mxu0
        %v3113 = vpop.f32.mrf.mxu0
        %3114 = vdwg.mxu0
        %s3115 = scalar_lea.vmem %s6, 3
        %v3116 = vld [vmem:[%s3115] sm:$0x1]
        %v3118 = vlaneseq
        %v3119 = vshrl.u32 %v3118, 7
        %v3120 = vsub.s32 0, %v3119
        %v3121 = vrot.slane %v3116, %v3120
        %3122 = vset.pattern.permute.xlu0 0
        %3123 = vperm.xlu0 %3122, %v3121
        %v3124 = vpop.permute.xlu0 %3123
        %v3126 = vmul.f32 %v3012, %v3124
        %3127 = vxpose.xlu0.c.b16.start [1/8] %v2953, 128
        %3128 = vxpose.xlu0.c.b16.cont [2/8] 0, 128
        %3129 = vxpose.xlu0.c.b16.cont [3/8] 0, 128
        %3130 = vxpose.xlu0.c.b16.cont [4/8] 0, 128
        %3131 = vxpose.xlu0.c.b16.cont [5/8] 0, 128
        %3132 = vxpose.xlu0.c.b16.cont [6/8] 0, 128
        %3133 = vxpose.xlu0.c.b16.cont [7/8] 0, 128
        %3134 = vxpose.xlu0.c.b16.end [8/8] 0, 128
        %v3135 = vpop.trf.xlu0
        %v3136 = vpop.trf.xlu0
        %v3137 = vpop.trf.xlu0
        %v3138 = vpop.trf.xlu0
        %v3139 = vpop.trf.xlu0
        %v3140 = vpop.trf.xlu0
        %v3141 = vpop.trf.xlu0
        %v3142 = vpop.trf.xlu0
        %v3144 = vsel %vm1211, %v3135, 0
        %3146 = vmatprep.subr.bf16.mxu0 0
        %3147 = vmatpush1.bf16.msra.mxu0 0
        %3148 = vmatprep.subr.bf16.mxu0 0
        %3149 = vmatpush1.bf16.msra.mxu0 0
        %3150 = vmatprep.subr.bf16.mxu0 0
        %3151 = vmatpush1.bf16.msra.mxu0 0
        %3152 = vmatprep.subr.bf16.mxu0 0
        %3153 = vmatpush1.bf16.msra.mxu0 0
        %3154 = vmatprep.subr.bf16.mxu0 0
        %3155 = vmatpush1.bf16.msra.mxu0 0
        %3156 = vmatprep.subr.bf16.mxu0 0
        %3157 = vmatpush1.bf16.msra.mxu0 0
        %3158 = vmatprep.subr.bf16.mxu0 0
        %3159 = vmatpush1.bf16.msra.mxu0 0
        %3160 = vmatprep.subr.bf16.mxu0 0
        %3161 = vmatpush1.bf16.msra.mxu0 %v3073
        %3162 = vmatprep.subr.bf16.mxu0 0
        %3163 = vmatpush2.bf16.msra.mxu0 0
        %3164 = vmatprep.subr.bf16.mxu0 0
        %3165 = vmatpush2.bf16.msra.mxu0 0
        %3166 = vmatprep.subr.bf16.mxu0 0
        %3167 = vmatpush2.bf16.msra.mxu0 0
        %3168 = vmatprep.subr.bf16.mxu0 0
        %3169 = vmatpush2.bf16.msra.mxu0 0
        %3170 = vmatprep.subr.bf16.mxu0 0
        %3171 = vmatpush2.bf16.msra.mxu0 0
        %3172 = vmatprep.subr.bf16.mxu0 0
        %3173 = vmatpush2.bf16.msra.mxu0 0
        %3174 = vmatprep.subr.bf16.mxu0 0
        %3175 = vmatpush2.bf16.msra.mxu0 0
        %3176 = vmatprep.subr.bf16.mxu0 0
        %3177 = vmatpush2.bf16.msra.mxu0 0
        %3178 = vmatprep.mubr.bf16.mxu0 0
        %3179 = vmatmul.mubr.bf16.gmra.mxu0 %v3144
        %v3180 = vpop.f32.mrf.mxu0
        %v3181 = vadd.f32 %v3126, %v3180
        %v3182 = vpop.f32.mrf.mxu0
        %v3183 = vpop.f32.mrf.mxu0
        %v3184 = vpop.f32.mrf.mxu0
        %3185 = vdwg.mxu0
        %3186 = vst.msk [vmem:[%s3011] sm:$0xff] %vm1211, %v3181
        %v3187 = vsel %vm1211, %v3110, 0.0
        %3188 = vadd.xlane.f32.xlu0 %v3187
        %v3189 = vpop.xlane.xlu0 %3188
        %v3190 = vmul.f32 %v3189, %v1437
        %v3191 = vsub.f32 %v3110, %v3190
        %v3192 = vmul.f32 %v3191, %v3191
        %v3193 = vsel %vm1211, %v3192, 0.0
        %3194 = vadd.xlane.f32.xlu0 %v3193
        %v3195 = vpop.xlane.xlu0 %3194
        %v3196 = vmul.f32 %v3195, %v1437
        %v3197 = vadd.f32 %v3196, 1e-06
        %v3198 = vrsqrt.pop %v3197
        %v3199 = vmul.f32 %v3191, %v3198
        %v3200 = vunpack.c.l.bf16 %v2962
        %v3201 = vmul.f32 %v3199, %v3200
        %v3202 = vpack.c.bf16 %v3201, %v3201
        %s3203 = scalar_lea.vmem %s19, 12
        %v3204 = vld [vmem:[%s3203] sm:$0xf]
        %v3206 = vsel %vm1211, %v3202, 0
        %v3209 = vsel %vm1262, %v3204, 0
        %3211 = vmatprep.subr.bf16.mxu0 0
        %3212 = vmatpush1.bf16.msra.mxu0 0
        %3213 = vmatprep.subr.bf16.mxu0 0
        %3214 = vmatpush1.bf16.msra.mxu0 0
        %3215 = vmatprep.subr.bf16.mxu0 0
        %3216 = vmatpush1.bf16.msra.mxu0 0
        %3217 = vmatprep.subr.bf16.mxu0 0
        %3218 = vmatpush1.bf16.msra.mxu0 0
        %3219 = vmatprep.subr.bf16.mxu0 0
        %3220 = vmatpush1.bf16.msra.mxu0 0
        %3221 = vmatprep.subr.bf16.mxu0 0
        %3222 = vmatpush1.bf16.msra.mxu0 0
        %3223 = vmatprep.subr.bf16.mxu0 0
        %3224 = vmatpush1.bf16.msra.mxu0 0
        %3225 = vmatprep.subr.bf16.mxu0 0
        %3226 = vmatpush1.bf16.msra.mxu0 %v3209
        %3227 = vmatprep.subr.bf16.mxu0 0
        %3228 = vmatpush2.bf16.msra.mxu0 0
        %3229 = vmatprep.subr.bf16.mxu0 0
        %3230 = vmatpush2.bf16.msra.mxu0 0
        %3231 = vmatprep.subr.bf16.mxu0 0
        %3232 = vmatpush2.bf16.msra.mxu0 0
        %3233 = vmatprep.subr.bf16.mxu0 0
        %3234 = vmatpush2.bf16.msra.mxu0 0
        %3235 = vmatprep.subr.bf16.mxu0 0
        %3236 = vmatpush2.bf16.msra.mxu0 0
        %3237 = vmatprep.subr.bf16.mxu0 0
        %3238 = vmatpush2.bf16.msra.mxu0 0
        %3239 = vmatprep.subr.bf16.mxu0 0
        %3240 = vmatpush2.bf16.msra.mxu0 0
        %3241 = vmatprep.subr.bf16.mxu0 0
        %3242 = vmatpush2.bf16.msra.mxu0 0
        %3243 = vmatprep.mubr.bf16.mxu0 0
        %3244 = vmatmul.mubr.bf16.gmra.mxu0 %v3206
        %v3245 = vpop.f32.mrf.mxu0
        %v3246 = vadd.f32 0.0, %v3245
        %v3247 = vpop.f32.mrf.mxu0
        %v3248 = vpop.f32.mrf.mxu0
        %v3249 = vpop.f32.mrf.mxu0
        %3250 = vdwg.mxu0
        %v3251 = vadd.f32 %v2666, %v3246
        %p3252 = scmp.eq.s32.totalorder %s52, 1
        // Predicated region
        $region129: #{tpu_custom_call.1} parent=119 // pred_check
          %p3253 = pneg %p3252
        $region130: #{tpu_custom_call.1} parent=119 // pred_check_branch
          %3255 = sbr.rel (%p3253) target = $region132
        $region131: #{tpu_custom_call.1} parent=119 // pred_region
          %v3256 = vld [vmem:[#allocation2] sm:$0xff]
          %v3257 = vld [vmem:[#allocation2 + $0x8] sm:$0xff]
          %v3258 = vld [vmem:[#allocation2 + $0x10] sm:$0xff]
          %v3259 = vld [vmem:[#allocation2 + $0x18] sm:$0xff]
          %v3260 = vpack.c.bf16 %v3256, %v3256
          %v3261 = vpack.c.bf16 %v3257, %v3257
          %v3262 = vpack.c.bf16 %v3258, %v3258
          %v3263 = vpack.c.bf16 %v3259, %v3259
          %vm3264 = vcmask 60416
          %3265 = vst.msk [vmem:[%s857] sm:$0xf] %vm3264, %v3260
          %3266 = vst.msk [vmem:[%s857 + $0x4] sm:$0xf] %vm3264, %v3261
          %3267 = vst.msk [vmem:[%s857 + $0x8] sm:$0xf] %vm3264, %v3262
          %3268 = vst.msk [vmem:[%s857 + $0xc] sm:$0xf] %vm3264, %v3263
        $region132: #{tpu_custom_call.1} parent=119 // pred_fallthru
          _
        %v3269 = vld [vmem:[%s20] sm:$0x1]
        %v3271 = vlaneseq
        %v3272 = vshrl.u32 %v3271, 7
        %v3273 = vsub.s32 0, %v3272
        %v3274 = vrot.slane %v3269, %v3273
        %v3276 = vadd.f32 %v3251, %v3274
        %v3277 = vpack.c.bf16 %v3276, %v3276
        %v3278 = vadd.bf16 %v867, %v3277
        %v3279 = vunpack.c.l.bf16 %v3278
        %v3280 = vld [vmem:[%s9] sm:$0x1]
        %v3281 = vld [vmem:[%s10] sm:$0x1]
        %v3282 = vsel %vm888, %v3279, 0.0
        %3283 = vadd.xlane.f32.xlu0 %v3282
        %v3284 = vpop.xlane.xlu0 %3283
        %v3285 = vmul.f32 %v3284, %v892
        %v3286 = vsub.f32 %v3279, %v3285
        %v3287 = vmul.f32 %v3286, %v3286
        %v3288 = vsel %vm888, %v3287, 0.0
        %3289 = vadd.xlane.f32.xlu0 %v3288
        %v3290 = vpop.xlane.xlu0 %3289
        %v3291 = vmul.f32 %v3290, %v892
        %v3292 = vadd.f32 %v3291, 1e-06
        %v3293 = vrsqrt.pop %v3292
        %v3294 = vmul.f32 %v3286, %v3293
        %v3296 = vlaneseq
        %v3297 = vshrl.u32 %v3296, 7
        %v3298 = vsub.s32 0, %v3297
        %v3299 = vrot.slane %v3280, %v3298
        %v3301 = vmul.f32 %v3294, %v3299
        %v3303 = vlaneseq
        %v3304 = vshrl.u32 %v3303, 7
        %v3305 = vsub.s32 0, %v3304
        %v3306 = vrot.slane %v3281, %v3305
        %v3308 = vadd.f32 %v3301, %v3306
        %v3309 = vpack.c.bf16 %v3308, %v3308
        %v3310 = vld [vmem:[%s21] sm:$0xf]
        %v3311 = vld [vmem:[%s21 + $0x4] sm:$0xf]
        %v3312 = vld [vmem:[%s21 + $0x8] sm:$0xf]
        %v3313 = vld [vmem:[%s21 + $0xc] sm:$0xf]
        %v3314 = vld [vmem:[%s22] sm:$0x1]
        %v3316 = vlaneseq
        %v3317 = vshrl.u32 %v3316, 7
        %v3318 = vsub.s32 0, %v3317
        %v3319 = vrot.slane %v3314, %v3318
        %v3325 = vunpack.c.l.b16 %v3310
        %v3326 = vunpack.c.l.b16 %v3311
        %v3327 = vunpack.c.l.b16 %v3312
        %v3328 = vunpack.c.l.b16 %v3313
        %v3329 = vpack.c.b16 %v3326, %v3325
        %v3330 = vpack.c.b16 %v3328, %v3327
        %v3334 = vsel %vm888, %v3309, 0
        %3336 = vmatprep.subr.bf16.mxu0 0
        %3337 = vmatpush1.bf16.msra.mxu0 0
        %3338 = vmatprep.subr.bf16.mxu0 0
        %3339 = vmatpush1.bf16.msra.mxu0 0
        %3340 = vmatprep.subr.bf16.mxu0 0
        %3341 = vmatpush1.bf16.msra.mxu0 0
        %3342 = vmatprep.subr.bf16.mxu0 0
        %3343 = vmatpush1.bf16.msra.mxu0 0
        %3344 = vmatprep.subr.bf16.mxu0 0
        %3345 = vmatpush1.bf16.msra.mxu0 0
        %3346 = vmatprep.subr.bf16.mxu0 0
        %3347 = vmatpush1.bf16.msra.mxu0 0
        %3348 = vmatprep.subr.bf16.mxu0 0
        %3349 = vmatpush1.bf16.msra.mxu0 %v3330
        %3350 = vmatprep.subr.bf16.mxu0 0
        %3351 = vmatpush1.bf16.msra.mxu0 %v3329
        %3352 = vmatprep.subr.bf16.mxu0 0
        %3353 = vmatpush2.bf16.msra.mxu0 0
        %3354 = vmatprep.subr.bf16.mxu0 0
        %3355 = vmatpush2.bf16.msra.mxu0 0
        %3356 = vmatprep.subr.bf16.mxu0 0
        %3357 = vmatpush2.bf16.msra.mxu0 0
        %3358 = vmatprep.subr.bf16.mxu0 0
        %3359 = vmatpush2.bf16.msra.mxu0 0
        %3360 = vmatprep.subr.bf16.mxu0 0
        %3361 = vmatpush2.bf16.msra.mxu0 0
        %3362 = vmatprep.subr.bf16.mxu0 0
        %3363 = vmatpush2.bf16.msra.mxu0 0
        %3364 = vmatprep.subr.bf16.mxu0 0
        %3365 = vmatpush2.bf16.msra.mxu0 0
        %3366 = vmatprep.subr.bf16.mxu0 0
        %3367 = vmatpush2.bf16.msra.mxu0 0
        %3368 = vmatprep.mubr.bf16.mxu0 0
        %3369 = vmatmul.mubr.bf16.gmra.mxu0 %v3334
        %v3370 = vpop.f32.mrf.mxu0
        %v3371 = vadd.f32 %v3319, %v3370
        %v3372 = vpop.f32.mrf.mxu0
        %v3373 = vpop.f32.mrf.mxu0
        %v3374 = vpop.f32.mrf.mxu0
        %3375 = vdwg.mxu0
        %v3376 = vxor.u32 %v3371, 2147483648
        %v3377 = vmul.f32 %v3376, 1.442695
        %v3378 = vpow.pop %v3377
        %v3379 = vadd.f32 %v3378, 1.0
        %v3380 = vrcp.pop %v3379
        %v3381 = vmul.f32 1.0, %v3380
        %v3382 = vmul.f32 %v3371, %v3381
        %v3383 = vpack.c.bf16 %v3382, %v3382
        %v3384 = vld [vmem:[%s23] sm:$0xf]
        %v3385 = vld [vmem:[%s23 + $0x4] sm:$0xf]
        %v3386 = vld [vmem:[%s23 + $0x8] sm:$0xf]
        %v3387 = vld [vmem:[%s23 + $0xc] sm:$0xf]
        %v3388 = vld [vmem:[%s23 + $0x10] sm:$0xf]
        %v3389 = vld [vmem:[%s23 + $0x14] sm:$0xf]
        %v3390 = vld [vmem:[%s23 + $0x18] sm:$0xf]
        %v3391 = vld [vmem:[%s23 + $0x1c] sm:$0xf]
        %v3392 = vld [vmem:[%s24] sm:$0x1]
        %v3394 = vlaneseq
        %v3395 = vshrl.u32 %v3394, 7
        %v3396 = vsub.s32 0, %v3395
        %v3397 = vrot.slane %v3392, %v3396
        %v3407 = vunpack.c.l.b16 %v3384
        %v3408 = vunpack.c.l.b16 %v3385
        %v3409 = vunpack.c.l.b16 %v3386
        %v3410 = vunpack.c.l.b16 %v3387
        %v3411 = vunpack.c.l.b16 %v3388
        %v3412 = vunpack.c.l.b16 %v3389
        %v3413 = vunpack.c.l.b16 %v3390
        %v3414 = vunpack.c.l.b16 %v3391
        %v3415 = vpack.c.b16 %v3408, %v3407
        %v3416 = vpack.c.b16 %v3410, %v3409
        %v3417 = vpack.c.b16 %v3412, %v3411
        %v3418 = vpack.c.b16 %v3414, %v3413
        %vm3423 = vcmask 523264
        %v3425 = vsel %vm3423, %v3383, 0
        %3427 = vmatprep.subr.bf16.mxu0 0
        %3428 = vmatpush1.bf16.msra.mxu0 0
        %3429 = vmatprep.subr.bf16.mxu0 0
        %3430 = vmatpush1.bf16.msra.mxu0 0
        %3431 = vmatprep.subr.bf16.mxu0 0
        %3432 = vmatpush1.bf16.msra.mxu0 0
        %3433 = vmatprep.subr.bf16.mxu0 0
        %3434 = vmatpush1.bf16.msra.mxu0 0
        %3435 = vmatprep.subr.bf16.mxu0 0
        %3436 = vmatpush1.bf16.msra.mxu0 %v3418
        %3437 = vmatprep.subr.bf16.mxu0 0
        %3438 = vmatpush1.bf16.msra.mxu0 %v3417
        %3439 = vmatprep.subr.bf16.mxu0 0
        %3440 = vmatpush1.bf16.msra.mxu0 %v3416
        %3441 = vmatprep.subr.bf16.mxu0 0
        %3442 = vmatpush1.bf16.msra.mxu0 %v3415
        %3443 = vmatprep.subr.bf16.mxu0 0
        %3444 = vmatpush2.bf16.msra.mxu0 0
        %3445 = vmatprep.subr.bf16.mxu0 0
        %3446 = vmatpush2.bf16.msra.mxu0 0
        %3447 = vmatprep.subr.bf16.mxu0 0
        %3448 = vmatpush2.bf16.msra.mxu0 0
        %3449 = vmatprep.subr.bf16.mxu0 0
        %3450 = vmatpush2.bf16.msra.mxu0 0
        %3451 = vmatprep.subr.bf16.mxu0 0
        %3452 = vmatpush2.bf16.msra.mxu0 0
        %3453 = vmatprep.subr.bf16.mxu0 0
        %3454 = vmatpush2.bf16.msra.mxu0 0
        %3455 = vmatprep.subr.bf16.mxu0 0
        %3456 = vmatpush2.bf16.msra.mxu0 0
        %3457 = vmatprep.subr.bf16.mxu0 0
        %3458 = vmatpush2.bf16.msra.mxu0 0
        %3459 = vmatprep.mubr.bf16.mxu0 0
        %3460 = vmatmul.mubr.bf16.gmra.mxu0 %v3425
        %v3461 = vpop.f32.mrf.mxu0
        %v3462 = vadd.f32 %v3397, %v3461
        %v3463 = vpop.f32.mrf.mxu0
        %v3464 = vpop.f32.mrf.mxu0
        %v3465 = vpop.f32.mrf.mxu0
        %3466 = vdwg.mxu0
        %v3467 = vpack.c.bf16 %v3462, %v3462
        %v3468 = vadd.bf16 %v3278, %v3467
        %vm3469 = vcmask 257024
        %3470 = vst.msk [vmem:[%s850] sm:$0xf] %vm3469, %v3468
        %s3471 = sand.u32 %s606, 1
        %s3472 = scalar_lea.sflag [#allocation5], %s3471
        %s3473 = sand.u32 %s606, 1
        %s3474 = smul.addr %s3473, 4
        %s3475 = scalar_lea.vmem [#allocation6], %s3474
        %s3476 = sand.u32 %s632, 1
        %s3477 = scalar_lea.sflag [#allocation8], %s3476
        %s3478 = sand.u32 %s632, 1
        %s3479 = smul.addr %s3478, 16
        %s3480 = scalar_lea.vmem [#allocation7], %s3479
        // Predicated region
        $region133: #{tpu_custom_call.1} parent=119 // pred_check
          %p3481 = pneg %p616
        $region134: #{tpu_custom_call.1} parent=119 // pred_check_branch
          %3483 = sbr.rel (%p3481) target = $region136
        $region135: #{tpu_custom_call.1} parent=119 // pred_region
          %s3485 = ssub.s32 64, 64
          %3486 = vsyncadd %s3472, %s3485
          %s3487 = smul.addr %s51, 2
          %s3488 = sadd.s32 %s52, %s3487
          %s3489 = smul.addr %s3488, 64
          %s3490 = scalar_lea.hbm %s25, %s3489
          %s3492 = sshll.u32 %s3475, 4
          %s3493 = int_to_ptr.vmem [resolvable:$true] %s3492
          %3495 = dma.vmem_to_hbm [thread:$0]  %s3493, 64, %s3490, %s3472
        $region136: #{tpu_custom_call.1} parent=119 // pred_fallthru
          _
        // Predicated region
        $region137: #{tpu_custom_call.1} parent=119 // pred_check
          %p3496 = pneg %p642
        $region138: #{tpu_custom_call.1} parent=119 // pred_check_branch
          %3498 = sbr.rel (%p3496) target = $region140
        $region139: #{tpu_custom_call.1} parent=119 // pred_region
          %s3500 = ssub.s32 256, 256
          %3501 = vsyncadd %s3477, %s3500
          %s3502 = smul.addr %s51, 4
          %s3503 = smul.addr %s3502, 64
          %s3504 = scalar_lea.hbm %s26, %s3503
          %s3505 = sshll.u32 %s3480, 4
          %s3506 = int_to_ptr.vmem [resolvable:$true] %s3505
          %3511 = dma.vmem_to_hbm [thread:$0]  %s3506, 256, %s3504, %s3477, 64, 64, 4
        $region140: #{tpu_custom_call.1} parent=119 // pred_fallthru
          _
      $region120: #{tpu_custom_call.1} parent=5 // pred_fallthru
        _
      %p3512 = scmp.le.s32.totalorder 2, %s42
      // Predicated region
      $region141: #{tpu_custom_call.1} parent=5 // pred_check
        %p3513 = pneg %p3512
      $region142: #{tpu_custom_call.1} parent=5 // pred_check_branch
        %3515 = sbr.rel (%p3513) target = $region144
      $region143: #{tpu_custom_call.1} parent=5 // pred_region
        %s3516 = ssub.s32 %s42, 2
        // Predicated region
        $region145: #{tpu_custom_call.1} parent=143 // pred_check
          %p3517 = pneg %p622
        $region146: #{tpu_custom_call.1} parent=143 // pred_check_branch
          %3519 = sbr.rel (%p3517) target = $region148
        $region147: #{tpu_custom_call.1} parent=143 // pred_region
          %s3520 = sand.u32 %s607, 1
          %s3521 = scalar_lea.sflag [#allocation5], %s3520
          %s3522 = sand.u32 %s607, 1
          %s3523 = smul.addr %s3522, 4
          %s3524 = scalar_lea.vmem [#allocation6], %s3523
          %3525 = dma.done %s3521, 64
        $region148: #{tpu_custom_call.1} parent=143 // pred_fallthru
          _
        // Predicated region
        $region149: #{tpu_custom_call.1} parent=143 // pred_check
          %p3526 = pneg %p648
        $region150: #{tpu_custom_call.1} parent=143 // pred_check_branch
          %3528 = sbr.rel (%p3526) target = $region152
        $region151: #{tpu_custom_call.1} parent=143 // pred_region
          %s3529 = sand.u32 %s633, 1
          %s3530 = scalar_lea.sflag [#allocation8], %s3529
          %s3531 = sand.u32 %s633, 1
          %s3532 = smul.addr %s3531, 16
          %s3533 = scalar_lea.vmem [#allocation7], %s3532
          %3534 = dma.done %s3530, 256
        $region152: #{tpu_custom_call.1} parent=143 // pred_fallthru
          _
      $region144: #{tpu_custom_call.1} parent=5 // pred_fallthru
        _
    $region6: #{tpu_custom_call.1} parent=1 // loop_footer
      %s46 = sadd.s32 1, %s42
    $region7: #{tpu_custom_call.1} parent=1 // loop_footer_branch
      %41 = sbr.rel target = $region3
    $region8: #{tpu_custom_call.1} parent=1 // loop_exit
      _
    %3535 = vsyncpa [#allocation4], 1
    %s3536 = scalar_lea.sflag [#allocation4], 1
    %3537 = vsyncpa %s3536, 1
    %3538 = vsyncpa [#allocation5], 1
    %s3539 = scalar_lea.sflag [#allocation5], 1
    %3540 = vsyncpa %s3539, 1
    %3541 = vsyncpa [#allocation8], 1
    %s3542 = scalar_lea.sflag [#allocation8], 1
    %3543 = vsyncpa %s3542, 1

// kernel: tpu_custom_call.1
$region0: #{tpu_custom_call.1}
  #allocation0 [shape = 'u32[]', space=smem, size = 0x4, offset = 0x4, fixed_abs, tag = 'smem constant byte address 0x4 - core index']
  #allocation1 [shape = 'u32[144,128]{1,0:T(1,128)}', space=vmem, size = 0x12000, scoped, tag = 'internal scratch']
  #allocation2 [shape = 'f32[4,8,8]{2,1,0:T(8,128)}', space=vmem, size = 0x4000, scoped, tag = 'scratch operand']
  %s0 = inlined_call_operand.vmem [shape: bf16[2,16,32], index: 0, kind: input, shape index: {}]
  %s1 = inlined_call_operand.hbm [shape: bf16[2,4,8,8], index: 1, kind: input, shape index: {}, may-alias: {1,26}]
  %s2 = inlined_call_operand.vmem [shape: f32[4,8,1], index: 2, kind: input, shape index: {}]
  %s3 = inlined_call_operand.vmem [shape: f32[4,8,1], index: 3, kind: input, shape index: {}]
  %s4 = inlined_call_operand.vmem [shape: f32[4,8,1], index: 4, kind: input, shape index: {}]
  %s5 = inlined_call_operand.vmem [shape: f32[4,1,1], index: 5, kind: input, shape index: {}]
  %s6 = inlined_call_operand.vmem [shape: f32[4,1,1], index: 6, kind: input, shape index: {}]
  %s7 = inlined_call_operand.vmem [shape: f32[1,32], index: 7, kind: input, shape index: {}]
  %s8 = inlined_call_operand.vmem [shape: f32[1,32], index: 8, kind: input, shape index: {}]
  %s9 = inlined_call_operand.vmem [shape: f32[1,32], index: 9, kind: input, shape index: {}]
  %s10 = inlined_call_operand.vmem [shape: f32[1,32], index: 10, kind: input, shape index: {}]
  %s11 = inlined_call_operand.vmem [shape: bf16[4,32,8], index: 11, kind: input, shape index: {}]
  %s12 = inlined_call_operand.vmem [shape: f32[4,1,8], index: 12, kind: input, shape index: {}]
  %s13 = inlined_call_operand.vmem [shape: bf16[4,32,8], index: 13, kind: input, shape index: {}]
  %s14 = inlined_call_operand.vmem [shape: f32[4,1,8], index: 14, kind: input, shape index: {}]
  %s15 = inlined_call_operand.vmem [shape: bf16[4,32,8], index: 15, kind: input, shape index: {}]
  %s16 = inlined_call_operand.vmem [shape: f32[4,1,8], index: 16, kind: input, shape index: {}]
  %s17 = inlined_call_operand.vmem [shape: bf16[4,32,8], index: 17, kind: input, shape index: {}]
  %s18 = inlined_call_operand.vmem [shape: f32[4,1,8], index: 18, kind: input, shape index: {}]
  %s19 = inlined_call_operand.vmem [shape: bf16[4,8,32], index: 19, kind: input, shape index: {}]
  %s20 = inlined_call_operand.vmem [shape: f32[1,32], index: 20, kind: input, shape index: {}]
  %s21 = inlined_call_operand.vmem [shape: bf16[32,64], index: 21, kind: input, shape index: {}]
  %s22 = inlined_call_operand.vmem [shape: f32[1,64], index: 22, kind: input, shape index: {}]
  %s23 = inlined_call_operand.vmem [shape: bf16[64,32], index: 23, kind: input, shape index: {}]
  %s24 = inlined_call_operand.vmem [shape: f32[1,32], index: 24, kind: input, shape index: {}]
  %s25 = inlined_call_operand.hbm [shape: bf16[2,16,32], index: 25, kind: output, shape index: {0}]
  %s26 = inlined_call_operand.hbm [shape: bf16[2,4,8,8], index: 26, kind: output, shape index: {1}, may-alias: {1,26}]
  %27 = xla_tuple %s25, %s26
  %s28 = sld [smem:[#allocation0]]
  $region153: #{tpu_custom_call.1} parent=0
    _
  %s30 = ssub.s32 1, %s28
  %s31 = scalar_select 0, %s30, %s28
  $region1: #{tpu_custom_call.1} parent=0
    #allocation3 [shape = 'u8[16384]{0}', space=vmem, size = 0x4000, scoped, tag = 'input window, operand 1']
    #allocation4 [shape = 's32[2]{0}', space=sflag, size = 0x8, scoped, tag = 'scoped memory for tpu_custom_call.1']
    #allocation5 [shape = 's32[2]{0}', space=sflag, size = 0x8, scoped, tag = 'scoped memory for tpu_custom_call.1']
    #allocation6 [shape = 'u8[4096]{0}', space=vmem, size = 0x1000, scoped, tag = 'output window, operand 0']
    #allocation7 [shape = 'u8[16384]{0}', space=vmem, size = 0x4000, scoped, tag = 'output window, operand 1']
    #allocation8 [shape = 's32[2]{0}', space=sflag, size = 0x8, scoped, tag = 'scoped memory for tpu_custom_call.1']
    %32 = vsyncpa [#allocation4], 0
    %s33 = scalar_lea.sflag [#allocation4], 1
    %34 = vsyncpa %s33, 0
    %35 = vsyncpa [#allocation5], 0
    %s36 = scalar_lea.sflag [#allocation5], 1
    %37 = vsyncpa %s36, 0
    %38 = vsyncpa [#allocation8], 0
    %s39 = scalar_lea.sflag [#allocation8], 1
    %40 = vsyncpa %s39, 0
    loop: start=0, step=1, limit=6
    $region2: #{tpu_custom_call.1} parent=1 // loop_pre_header
      _
    $region3: #{tpu_custom_call.1} parent=1 // loop_header
      %s42 = sphi 0, %s46
      %p43 = scmp.ge.s32.totalorder %s42, 6
      %s49 = sphi 0, %s61
      %s50 = sphi 0, %s57
      %s51 = sphi 0, %s49
      %s52 = sphi 0, %s50
      %s53 = sphi 0, %s51
      %s54 = sphi 0, %s52
      %s66 = sphi 0, %s68
      %s69 = sphi 0, %s66
      %s70 = sphi 0, %s69
      %s86 = sphi 0, %s70
      %s92 = sphi 0, %s94
      %s95 = sphi 0, %s92
      %s96 = sphi 0, %s95
      %s112 = sphi 0, %s96
      %s116 = sphi 0, %s116
      %s118 = sphi 0, %s116
      %s119 = sphi 0, %s118
      %s133 = sphi 0, %s119
      %s137 = sphi 0, %s137
      %s139 = sphi 0, %s137
      %s140 = sphi 0, %s139
      %s154 = sphi 0, %s140
      %s158 = sphi 0, %s158
      %s160 = sphi 0, %s158
      %s161 = sphi 0, %s160
      %s175 = sphi 0, %s161
      %s179 = sphi 0, %s179
      %s181 = sphi 0, %s179
      %s182 = sphi 0, %s181
      %s196 = sphi 0, %s182
      %s200 = sphi 0, %s200
      %s202 = sphi 0, %s200
      %s203 = sphi 0, %s202
      %s217 = sphi 0, %s203
      %s221 = sphi 0, %s221
      %s223 = sphi 0, %s221
      %s224 = sphi 0, %s223
      %s238 = sphi 0, %s224
      %s242 = sphi 0, %s242
      %s244 = sphi 0, %s242
      %s245 = sphi 0, %s244
      %s259 = sphi 0, %s245
      %s263 = sphi 0, %s263
      %s265 = sphi 0, %s263
      %s266 = sphi 0, %s265
      %s280 = sphi 0, %s266
      %s284 = sphi 0, %s284
      %s286 = sphi 0, %s284
      %s287 = sphi 0, %s286
      %s301 = sphi 0, %s287
      %s305 = sphi 0, %s305
      %s307 = sphi 0, %s305
      %s308 = sphi 0, %s307
      %s322 = sphi 0, %s308
      %s326 = sphi 0, %s326
      %s328 = sphi 0, %s326
      %s329 = sphi 0, %s328
      %s343 = sphi 0, %s329
      %s347 = sphi 0, %s347
      %s349 = sphi 0, %s347
      %s350 = sphi 0, %s349
      %s364 = sphi 0, %s350
      %s368 = sphi 0, %s368
      %s370 = sphi 0, %s368
      %s371 = sphi 0, %s370
      %s385 = sphi 0, %s371
      %s389 = sphi 0, %s389
      %s391 = sphi 0, %s389
      %s392 = sphi 0, %s391
      %s406 = sphi 0, %s392
      %s410 = sphi 0, %s410
      %s412 = sphi 0, %s410
      %s413 = sphi 0, %s412
      %s427 = sphi 0, %s413
      %s431 = sphi 0, %s431
      %s433 = sphi 0, %s431
      %s434 = sphi 0, %s433
      %s448 = sphi 0, %s434
      %s452 = sphi 0, %s452
      %s454 = sphi 0, %s452
      %s455 = sphi 0, %s454
      %s469 = sphi 0, %s455
      %s473 = sphi 0, %s473
      %s475 = sphi 0, %s473
      %s476 = sphi 0, %s475
      %s490 = sphi 0, %s476
      %s494 = sphi 0, %s494
      %s496 = sphi 0, %s494
      %s497 = sphi 0, %s496
      %s511 = sphi 0, %s497
      %s515 = sphi 0, %s515
      %s517 = sphi 0, %s515
      %s518 = sphi 0, %s517
      %s532 = sphi 0, %s518
      %s536 = sphi 0, %s536
      %s538 = sphi 0, %s536
      %s539 = sphi 0, %s538
      %s553 = sphi 0, %s539
      %s557 = sphi 0, %s557
      %s559 = sphi 0, %s557
      %s560 = sphi 0, %s559
      %s574 = sphi 0, %s560
      %s578 = sphi 0, %s578
      %s580 = sphi 0, %s578
      %s581 = sphi 0, %s580
      %s595 = sphi 0, %s581
      %s603 = sphi 0, %s605
      %s606 = sphi 0, %s603
      %s607 = sphi 0, %s606
      %s623 = sphi 0, %s607
      %s629 = sphi 0, %s631
      %s632 = sphi 0, %s629
      %s633 = sphi 0, %s632
      %s649 = sphi 0, %s633
    $region4: #{tpu_custom_call.1} parent=1 // loop_header_branch
      %45 = sbr.rel (%p43) target = $region8
    $region5: #{tpu_custom_call.1} parent=1 // loop_body
      %s47 = ssub.s32 %s42, 1
      %s48 = ssub.s32 %s42, 2
      %s55 = sadd.s32 1, %s50
      %p56 = scmp.ge.s32.totalorder %s55, 2
      %s57 = scalar_select %p56, 0, %s55
      %s58 = sadd.s32 1, %s49
      %s59 = scalar_select %p56, %s58, %s49
      %p60 = scmp.ge.s32.totalorder %s59, 2
      %s61 = scalar_select %p60, 0, %s59
      %s62 = ssub.s32 %s49, %s61
      %s63 = ssub.s32 %s50, %s57
      %s64 = sor.u32 %s62, %s63
      %p65 = scmp.eq.s32.totalorder %s64, 0
      %s67 = sadd.s32 %s66, 1
      %s68 = scalar_select %p65, %s66, %s67
      %p71 = pneg %p65
      %p72 = scmp.eq.s32.totalorder %s42, 3
      %p73 = por %p71, %p72
      %p74 = scmp.ne.s32.totalorder %s66, %s69
      %p75 = scmp.eq.s32.totalorder %s42, 0
      %p76 = por %p74, %p75
      %p77 = scmp.ne.s32.totalorder %s66, %s69
      %p78 = scmp.eq.s32.totalorder %s47, 3
      %p79 = por %p77, %p78
      %p80 = scmp.ne.s32.totalorder %s69, %s70
      %p81 = scmp.eq.s32.totalorder %s47, 0
      %p82 = por %p80, %p81
      %p83 = scmp.ne.s32.totalorder %s69, %s70
      %p84 = scmp.eq.s32.totalorder %s48, 3
      %p85 = por %p83, %p84
      %p87 = scmp.ne.s32.totalorder %s70, %s86
      %p88 = scmp.eq.s32.totalorder %s48, 0
      %p89 = por %p87, %p88
      %s90 = ssub.s32 %s49, %s61
      %p91 = scmp.eq.s32.totalorder %s90, 0
      %s93 = sadd.s32 %s92, 1
      %s94 = scalar_select %p91, %s92, %s93
      %p97 = pneg %p91
      %p98 = scmp.eq.s32.totalorder %s42, 3
      %p99 = por %p97, %p98
      %p100 = scmp.ne.s32.totalorder %s92, %s95
      %p101 = scmp.eq.s32.totalorder %s42, 0
      %p102 = por %p100, %p101
      %p103 = scmp.ne.s32.totalorder %s92, %s95
      %p104 = scmp.eq.s32.totalorder %s47, 3
      %p105 = por %p103, %p104
      %p106 = scmp.ne.s32.totalorder %s95, %s96
      %p107 = scmp.eq.s32.totalorder %s47, 0
      %p108 = por %p106, %p107
      %p109 = scmp.ne.s32.totalorder %s95, %s96
      %p110 = scmp.eq.s32.totalorder %s48, 3
      %p111 = por %p109, %p110
      %p113 = scmp.ne.s32.totalorder %s96, %s112
      %p114 = scmp.eq.s32.totalorder %s48, 0
      %p115 = por %p113, %p114
      %s117 = sadd.s32 %s116, 1
      %p120 = scmp.eq.s32.totalorder %s42, 3
      %p121 = scmp.ne.s32.totalorder %s116, %s118
      %p122 = scmp.eq.s32.totalorder %s42, 0
      %p123 = por %p121, %p122
      %p124 = scmp.ne.s32.totalorder %s116, %s118
      %p125 = scmp.eq.s32.totalorder %s47, 3
      %p126 = por %p124, %p125
      %p127 = scmp.ne.s32.totalorder %s118, %s119
      %p128 = scmp.eq.s32.totalorder %s47, 0
      %p129 = por %p127, %p128
      %p130 = scmp.ne.s32.totalorder %s118, %s119
      %p131 = scmp.eq.s32.totalorder %s48, 3
      %p132 = por %p130, %p131
      %p134 = scmp.ne.s32.totalorder %s119, %s133
      %p135 = scmp.eq.s32.totalorder %s48, 0
      %p136 = por %p134, %p135
      %s138 = sadd.s32 %s137, 1
      %p141 = scmp.eq.s32.totalorder %s42, 3
      %p142 = scmp.ne.s32.totalorder %s137, %s139
      %p143 = scmp.eq.s32.totalorder %s42, 0
      %p144 = por %p142, %p143
      %p145 = scmp.ne.s32.totalorder %s137, %s139
      %p146 = scmp.eq.s32.totalorder %s47, 3
      %p147 = por %p145, %p146
      %p148 = scmp.ne.s32.totalorder %s139, %s140
      %p149 = scmp.eq.s32.totalorder %s47, 0
      %p150 = por %p148, %p149
      %p151 = scmp.ne.s32.totalorder %s139, %s140
      %p152 = scmp.eq.s32.totalorder %s48, 3
      %p153 = por %p151, %p152
      %p155 = scmp.ne.s32.totalorder %s140, %s154
      %p156 = scmp.eq.s32.totalorder %s48, 0
      %p157 = por %p155, %p156
      %s159 = sadd.s32 %s158, 1
      %p162 = scmp.eq.s32.totalorder %s42, 3
      %p163 = scmp.ne.s32.totalorder %s158, %s160
      %p164 = scmp.eq.s32.totalorder %s42, 0
      %p165 = por %p163, %p164
      %p166 = scmp.ne.s32.totalorder %s158, %s160
      %p167 = scmp.eq.s32.totalorder %s47, 3
      %p168 = por %p166, %p167
      %p169 = scmp.ne.s32.totalorder %s160, %s161
      %p170 = scmp.eq.s32.totalorder %s47, 0
      %p171 = por %p169, %p170
      %p172 = scmp.ne.s32.totalorder %s160, %s161
      %p173 = scmp.eq.s32.totalorder %s48, 3
      %p174 = por %p172, %p173
      %p176 = scmp.ne.s32.totalorder %s161, %s175
      %p177 = scmp.eq.s32.totalorder %s48, 0
      %p178 = por %p176, %p177
      %s180 = sadd.s32 %s179, 1
      %p183 = scmp.eq.s32.totalorder %s42, 3
      %p184 = scmp.ne.s32.totalorder %s179, %s181
      %p185 = scmp.eq.s32.totalorder %s42, 0
      %p186 = por %p184, %p185
      %p187 = scmp.ne.s32.totalorder %s179, %s181
      %p188 = scmp.eq.s32.totalorder %s47, 3
      %p189 = por %p187, %p188
      %p190 = scmp.ne.s32.totalorder %s181, %s182
      %p191 = scmp.eq.s32.totalorder %s47, 0
      %p192 = por %p190, %p191
      %p193 = scmp.ne.s32.totalorder %s181, %s182
      %p194 = scmp.eq.s32.totalorder %s48, 3
      %p195 = por %p193, %p194
      %p197 = scmp.ne.s32.totalorder %s182, %s196
      %p198 = scmp.eq.s32.totalorder %s48, 0
      %p199 = por %p197, %p198
      %s201 = sadd.s32 %s200, 1
      %p204 = scmp.eq.s32.totalorder %s42, 3
      %p205 = scmp.ne.s32.totalorder %s200, %s202
      %p206 = scmp.eq.s32.totalorder %s42, 0
      %p207 = por %p205, %p206
      %p208 = scmp.ne.s32.totalorder %s200, %s202
      %p209 = scmp.eq.s32.totalorder %s47, 3
      %p210 = por %p208, %p209
      %p211 = scmp.ne.s32.totalorder %s202, %s203
      %p212 = scmp.eq.s32.totalorder %s47, 0
      %p213 = por %p211, %p212
      %p214 = scmp.ne.s32.totalorder %s202, %s203
      %p215 = scmp.eq.s32.totalorder %s48, 3
      %p216 = por %p214, %p215
      %p218 = scmp.ne.s32.totalorder %s203, %s217
      %p219 = scmp.eq.s32.totalorder %s48, 0
      %p220 = por %p218, %p219
      %s222 = sadd.s32 %s221, 1
      %p225 = scmp.eq.s32.totalorder %s42, 3
      %p226 = scmp.ne.s32.totalorder %s221, %s223
      %p227 = scmp.eq.s32.totalorder %s42, 0
      %p228 = por %p226, %p227
      %p229 = scmp.ne.s32.totalorder %s221, %s223
      %p230 = scmp.eq.s32.totalorder %s47, 3
      %p231 = por %p229, %p230
      %p232 = scmp.ne.s32.totalorder %s223, %s224
      %p233 = scmp.eq.s32.totalorder %s47, 0
      %p234 = por %p232, %p233
      %p235 = scmp.ne.s32.totalorder %s223, %s224
      %p236 = scmp.eq.s32.totalorder %s48, 3
      %p237 = por %p235, %p236
      %p239 = scmp.ne.s32.totalorder %s224, %s238
      %p240 = scmp.eq.s32.totalorder %s48, 0
      %p241 = por %p239, %p240
      %s243 = sadd.s32 %s242, 1
      %p246 = scmp.eq.s32.totalorder %s42, 3
      %p247 = scmp.ne.s32.totalorder %s242, %s244
      %p248 = scmp.eq.s32.totalorder %s42, 0
      %p249 = por %p247, %p248
      %p250 = scmp.ne.s32.totalorder %s242, %s244
      %p251 = scmp.eq.s32.totalorder %s47, 3
      %p252 = por %p250, %p251
      %p253 = scmp.ne.s32.totalorder %s244, %s245
      %p254 = scmp.eq.s32.totalorder %s47, 0
      %p255 = por %p253, %p254
      %p256 = scmp.ne.s32.totalorder %s244, %s245
      %p257 = scmp.eq.s32.totalorder %s48, 3
      %p258 = por %p256, %p257
      %p260 = scmp.ne.s32.totalorder %s245, %s259
      %p261 = scmp.eq.s32.totalorder %s48, 0
      %p262 = por %p260, %p261
      %s264 = sadd.s32 %s263, 1
      %p267 = scmp.eq.s32.totalorder %s42, 3
      %p268 = scmp.ne.s32.totalorder %s263, %s265
      %p269 = scmp.eq.s32.totalorder %s42, 0
      %p270 = por %p268, %p269
      %p271 = scmp.ne.s32.totalorder %s263, %s265
      %p272 = scmp.eq.s32.totalorder %s47, 3
      %p273 = por %p271, %p272
      %p274 = scmp.ne.s32.totalorder %s265, %s266
      %p275 = scmp.eq.s32.totalorder %s47, 0
      %p276 = por %p274, %p275
      %p277 = scmp.ne.s32.totalorder %s265, %s266
      %p278 = scmp.eq.s32.totalorder %s48, 3
      %p279 = por %p277, %p278
      %p281 = scmp.ne.s32.totalorder %s266, %s280
      %p282 = scmp.eq.s32.totalorder %s48, 0
      %p283 = por %p281, %p282
      %s285 = sadd.s32 %s284, 1
      %p288 = scmp.eq.s32.totalorder %s42, 3
      %p289 = scmp.ne.s32.totalorder %s284, %s286
      %p290 = scmp.eq.s32.totalorder %s42, 0
      %p291 = por %p289, %p290
      %p292 = scmp.ne.s32.totalorder %s284, %s286
      %p293 = scmp.eq.s32.totalorder %s47, 3
      %p294 = por %p292, %p293
      %p295 = scmp.ne.s32.totalorder %s286, %s287
      %p296 = scmp.eq.s32.totalorder %s47, 0
      %p297 = por %p295, %p296
      %p298 = scmp.ne.s32.totalorder %s286, %s287
      %p299 = scmp.eq.s32.totalorder %s48, 3
      %p300 = por %p298, %p299
      %p302 = scmp.ne.s32.totalorder %s287, %s301
      %p303 = scmp.eq.s32.totalorder %s48, 0
      %p304 = por %p302, %p303
      %s306 = sadd.s32 %s305, 1
      %p309 = scmp.eq.s32.totalorder %s42, 3
      %p310 = scmp.ne.s32.totalorder %s305, %s307
      %p311 = scmp.eq.s32.totalorder %s42, 0
      %p312 = por %p310, %p311
      %p313 = scmp.ne.s32.totalorder %s305, %s307
      %p314 = scmp.eq.s32.totalorder %s47, 3
      %p315 = por %p313, %p314
      %p316 = scmp.ne.s32.totalorder %s307, %s308
      %p317 = scmp.eq.s32.totalorder %s47, 0
      %p318 = por %p316, %p317
      %p319 = scmp.ne.s32.totalorder %s307, %s308
      %p320 = scmp.eq.s32.totalorder %s48, 3
      %p321 = por %p319, %p320
      %p323 = scmp.ne.s32.totalorder %s308, %s322
      %p324 = scmp.eq.s32.totalorder %s48, 0
      %p325 = por %p323, %p324
      %s327 = sadd.s32 %s326, 1
      %p330 = scmp.eq.s32.totalorder %s42, 3
      %p331 = scmp.ne.s32.totalorder %s326, %s328
      %p332 = scmp.eq.s32.totalorder %s42, 0
      %p333 = por %p331, %p332
      %p334 = scmp.ne.s32.totalorder %s326, %s328
      %p335 = scmp.eq.s32.totalorder %s47, 3
      %p336 = por %p334, %p335
      %p337 = scmp.ne.s32.totalorder %s328, %s329
      %p338 = scmp.eq.s32.totalorder %s47, 0
      %p339 = por %p337, %p338
      %p340 = scmp.ne.s32.totalorder %s328, %s329
      %p341 = scmp.eq.s32.totalorder %s48, 3
      %p342 = por %p340, %p341
      %p344 = scmp.ne.s32.totalorder %s329, %s343
      %p345 = scmp.eq.s32.totalorder %s48, 0
      %p346 = por %p344, %p345
      %s348 = sadd.s32 %s347, 1
      %p351 = scmp.eq.s32.totalorder %s42, 3
      %p352 = scmp.ne.s32.totalorder %s347, %s349
      %p353 = scmp.eq.s32.totalorder %s42, 0
      %p354 = por %p352, %p353
      %p355 = scmp.ne.s32.totalorder %s347, %s349
      %p356 = scmp.eq.s32.totalorder %s47, 3
      %p357 = por %p355, %p356
      %p358 = scmp.ne.s32.totalorder %s349, %s350
      %p359 = scmp.eq.s32.totalorder %s47, 0
      %p360 = por %p358, %p359
      %p361 = scmp.ne.s32.totalorder %s349, %s350
      %p362 = scmp.eq.s32.totalorder %s48, 3
      %p363 = por %p361, %p362
      %p365 = scmp.ne.s32.totalorder %s350, %s364
      %p366 = scmp.eq.s32.totalorder %s48, 0
      %p367 = por %p365, %p366
      %s369 = sadd.s32 %s368, 1
      %p372 = scmp.eq.s32.totalorder %s42, 3
      %p373 = scmp.ne.s32.totalorder %s368, %s370
      %p374 = scmp.eq.s32.totalorder %s42, 0
      %p375 = por %p373, %p374
      %p376 = scmp.ne.s32.totalorder %s368, %s370
      %p377 = scmp.eq.s32.totalorder %s47, 3
      %p378 = por %p376, %p377
      %p379 = scmp.ne.s32.totalorder %s370, %s371
      %p380 = scmp.eq.s32.totalorder %s47, 0
      %p381 = por %p379, %p380
      %p382 = scmp.ne.s32.totalorder %s370, %s371
      %p383 = scmp.eq.s32.totalorder %s48, 3
      %p384 = por %p382, %p383
      %p386 = scmp.ne.s32.totalorder %s371, %s385
      %p387 = scmp.eq.s32.totalorder %s48, 0
      %p388 = por %p386, %p387
      %s390 = sadd.s32 %s389, 1
      %p393 = scmp.eq.s32.totalorder %s42, 3
      %p394 = scmp.ne.s32.totalorder %s389, %s391
      %p395 = scmp.eq.s32.totalorder %s42, 0
      %p396 = por %p394, %p395
      %p397 = scmp.ne.s32.totalorder %s389, %s391
      %p398 = scmp.eq.s32.totalorder %s47, 3
      %p399 = por %p397, %p398
      %p400 = scmp.ne.s32.totalorder %s391, %s392
      %p401 = scmp.eq.s32.totalorder %s47, 0
      %p402 = por %p400, %p401
      %p403 = scmp.ne.s32.totalorder %s391, %s392
      %p404 = scmp.eq.s32.totalorder %s48, 3
      %p405 = por %p403, %p404
      %p407 = scmp.ne.s32.totalorder %s392, %s406
      %p408 = scmp.eq.s32.totalorder %s48, 0
      %p409 = por %p407, %p408
      %s411 = sadd.s32 %s410, 1
      %p414 = scmp.eq.s32.totalorder %s42, 3
      %p415 = scmp.ne.s32.totalorder %s410, %s412
      %p416 = scmp.eq.s32.totalorder %s42, 0
      %p417 = por %p415, %p416
      %p418 = scmp.ne.s32.totalorder %s410, %s412
      %p419 = scmp.eq.s32.totalorder %s47, 3
      %p420 = por %p418, %p419
      %p421 = scmp.ne.s32.totalorder %s412, %s413
      %p422 = scmp.eq.s32.totalorder %s47, 0
      %p423 = por %p421, %p422
      %p424 = scmp.ne.s32.totalorder %s412, %s413
      %p425 = scmp.eq.s32.totalorder %s48, 3
      %p426 = por %p424, %p425
      %p428 = scmp.ne.s32.totalorder %s413, %s427
      %p429 = scmp.eq.s32.totalorder %s48, 0
      %p430 = por %p428, %p429
      %s432 = sadd.s32 %s431, 1
      %p435 = scmp.eq.s32.totalorder %s42, 3
      %p436 = scmp.ne.s32.totalorder %s431, %s433
      %p437 = scmp.eq.s32.totalorder %s42, 0
      %p438 = por %p436, %p437
      %p439 = scmp.ne.s32.totalorder %s431, %s433
      %p440 = scmp.eq.s32.totalorder %s47, 3
      %p441 = por %p439, %p440
      %p442 = scmp.ne.s32.totalorder %s433, %s434
      %p443 = scmp.eq.s32.totalorder %s47, 0
      %p444 = por %p442, %p443
      %p445 = scmp.ne.s32.totalorder %s433, %s434
      %p446 = scmp.eq.s32.totalorder %s48, 3
      %p447 = por %p445, %p446
      %p449 = scmp.ne.s32.totalorder %s434, %s448
      %p450 = scmp.eq.s32.totalorder %s48, 0
      %p451 = por %p449, %p450
      %s453 = sadd.s32 %s452, 1
      %p456 = scmp.eq.s32.totalorder %s42, 3
      %p457 = scmp.ne.s32.totalorder %s452, %s454
      %p458 = scmp.eq.s32.totalorder %s42, 0
      %p459 = por %p457, %p458
      %p460 = scmp.ne.s32.totalorder %s452, %s454
      %p461 = scmp.eq.s32.totalorder %s47, 3
      %p462 = por %p460, %p461
      %p463 = scmp.ne.s32.totalorder %s454, %s455
      %p464 = scmp.eq.s32.totalorder %s47, 0
      %p465 = por %p463, %p464
      %p466 = scmp.ne.s32.totalorder %s454, %s455
      %p467 = scmp.eq.s32.totalorder %s48, 3
      %p468 = por %p466, %p467
      %p470 = scmp.ne.s32.totalorder %s455, %s469
      %p471 = scmp.eq.s32.totalorder %s48, 0
      %p472 = por %p470, %p471
      %s474 = sadd.s32 %s473, 1
      %p477 = scmp.eq.s32.totalorder %s42, 3
      %p478 = scmp.ne.s32.totalorder %s473, %s475
      %p479 = scmp.eq.s32.totalorder %s42, 0
      %p480 = por %p478, %p479
      %p481 = scmp.ne.s32.totalorder %s473, %s475
      %p482 = scmp.eq.s32.totalorder %s47, 3
      %p483 = por %p481, %p482
      %p484 = scmp.ne.s32.totalorder %s475, %s476
      %p485 = scmp.eq.s32.totalorder %s47, 0
      %p486 = por %p484, %p485
      %p487 = scmp.ne.s32.totalorder %s475, %s476
      %p488 = scmp.eq.s32.totalorder %s48, 3
      %p489 = por %p487, %p488
      %p491 = scmp.ne.s32.totalorder %s476, %s490
      %p492 = scmp.eq.s32.totalorder %s48, 0
      %p493 = por %p491, %p492
      %s495 = sadd.s32 %s494, 1
      %p498 = scmp.eq.s32.totalorder %s42, 3
      %p499 = scmp.ne.s32.totalorder %s494, %s496
      %p500 = scmp.eq.s32.totalorder %s42, 0
      %p501 = por %p499, %p500
      %p502 = scmp.ne.s32.totalorder %s494, %s496
      %p503 = scmp.eq.s32.totalorder %s47, 3
      %p504 = por %p502, %p503
      %p505 = scmp.ne.s32.totalorder %s496, %s497
      %p506 = scmp.eq.s32.totalorder %s47, 0
      %p507 = por %p505, %p506
      %p508 = scmp.ne.s32.totalorder %s496, %s497
      %p509 = scmp.eq.s32.totalorder %s48, 3
      %p510 = por %p508, %p509
      %p512 = scmp.ne.s32.totalorder %s497, %s511
      %p513 = scmp.eq.s32.totalorder %s48, 0
      %p514 = por %p512, %p513
      %s516 = sadd.s32 %s515, 1
      %p519 = scmp.eq.s32.totalorder %s42, 3
      %p520 = scmp.ne.s32.totalorder %s515, %s517
      %p521 = scmp.eq.s32.totalorder %s42, 0
      %p522 = por %p520, %p521
      %p523 = scmp.ne.s32.totalorder %s515, %s517
      %p524 = scmp.eq.s32.totalorder %s47, 3
      %p525 = por %p523, %p524
      %p526 = scmp.ne.s32.totalorder %s517, %s518
      %p527 = scmp.eq.s32.totalorder %s47, 0
      %p528 = por %p526, %p527
      %p529 = scmp.ne.s32.totalorder %s517, %s518
      %p530 = scmp.eq.s32.totalorder %s48, 3
      %p531 = por %p529, %p530
      %p533 = scmp.ne.s32.totalorder %s518, %s532
      %p534 = scmp.eq.s32.totalorder %s48, 0
      %p535 = por %p533, %p534
      %s537 = sadd.s32 %s536, 1
      %p540 = scmp.eq.s32.totalorder %s42, 3
      %p541 = scmp.ne.s32.totalorder %s536, %s538
      %p542 = scmp.eq.s32.totalorder %s42, 0
      %p543 = por %p541, %p542
      %p544 = scmp.ne.s32.totalorder %s536, %s538
      %p545 = scmp.eq.s32.totalorder %s47, 3
      %p546 = por %p544, %p545
      %p547 = scmp.ne.s32.totalorder %s538, %s539
      %p548 = scmp.eq.s32.totalorder %s47, 0
      %p549 = por %p547, %p548
      %p550 = scmp.ne.s32.totalorder %s538, %s539
      %p551 = scmp.eq.s32.totalorder %s48, 3
      %p552 = por %p550, %p551
      %p554 = scmp.ne.s32.totalorder %s539, %s553
      %p555 = scmp.eq.s32.totalorder %s48, 0
      %p556 = por %p554, %p555
      %s558 = sadd.s32 %s557, 1
      %p561 = scmp.eq.s32.totalorder %s42, 3
      %p562 = scmp.ne.s32.totalorder %s557, %s559
      %p563 = scmp.eq.s32.totalorder %s42, 0
      %p564 = por %p562, %p563
      %p565 = scmp.ne.s32.totalorder %s557, %s559
      %p566 = scmp.eq.s32.totalorder %s47, 3
      %p567 = por %p565, %p566
      %p568 = scmp.ne.s32.totalorder %s559, %s560
      %p569 = scmp.eq.s32.totalorder %s47, 0
      %p570 = por %p568, %p569
      %p571 = scmp.ne.s32.totalorder %s559, %s560
      %p572 = scmp.eq.s32.totalorder %s48, 3
      %p573 = por %p571, %p572
      %p575 = scmp.ne.s32.totalorder %s560, %s574
      %p576 = scmp.eq.s32.totalorder %s48, 0
      %p577 = por %p575, %p576
      %s579 = sadd.s32 %s578, 1
      %p582 = scmp.eq.s32.totalorder %s42, 3
      %p583 = scmp.ne.s32.totalorder %s578, %s580
      %p584 = scmp.eq.s32.totalorder %s42, 0
      %p585 = por %p583, %p584
      %p586 = scmp.ne.s32.totalorder %s578, %s580
      %p587 = scmp.eq.s32.totalorder %s47, 3
      %p588 = por %p586, %p587
      %p589 = scmp.ne.s32.totalorder %s580, %s581
      %p590 = scmp.eq.s32.totalorder %s47, 0
      %p591 = por %p589, %p590
      %p592 = scmp.ne.s32.totalorder %s580, %s581
      %p593 = scmp.eq.s32.totalorder %s48, 3
      %p594 = por %p592, %p593
      %p596 = scmp.ne.s32.totalorder %s581, %s595
      %p597 = scmp.eq.s32.totalorder %s48, 0
      %p598 = por %p596, %p597
      %s599 = ssub.s32 %s49, %s61
      %s600 = ssub.s32 %s50, %s57
      %s601 = sor.u32 %s599, %s600
      %p602 = scmp.eq.s32.totalorder %s601, 0
      %s604 = sadd.s32 %s603, 1
      %s605 = scalar_select %p602, %s603, %s604
      %p608 = pneg %p602
      %p609 = scmp.eq.s32.totalorder %s42, 3
      %p610 = por %p608, %p609
      %p611 = scmp.ne.s32.totalorder %s603, %s606
      %p612 = scmp.eq.s32.totalorder %s42, 0
      %p613 = por %p611, %p612
      %p614 = scmp.ne.s32.totalorder %s603, %s606
      %p615 = scmp.eq.s32.totalorder %s47, 3
      %p616 = por %p614, %p615
      %p617 = scmp.ne.s32.totalorder %s606, %s607
      %p618 = scmp.eq.s32.totalorder %s47, 0
      %p619 = por %p617, %p618
      %p620 = scmp.ne.s32.totalorder %s606, %s607
      %p621 = scmp.eq.s32.totalorder %s48, 3
      %p622 = por %p620, %p621
      %p624 = scmp.ne.s32.totalorder %s607, %s623
      %p625 = scmp.eq.s32.totalorder %s48, 0
      %p626 = por %p624, %p625
      %s627 = ssub.s32 %s49, %s61
      %p628 = scmp.eq.s32.totalorder %s627, 0
      %s630 = sadd.s32 %s629, 1
      %s631 = scalar_select %p628, %s629, %s630
      %p634 = pneg %p628
      %p635 = scmp.eq.s32.totalorder %s42, 3
      %p636 = por %p634, %p635
      %p637 = scmp.ne.s32.totalorder %s629, %s632
      %p638 = scmp.eq.s32.totalorder %s42, 0
      %p639 = por %p637, %p638
      %p640 = scmp.ne.s32.totalorder %s629, %s632
      %p641 = scmp.eq.s32.totalorder %s47, 3
      %p642 = por %p640, %p641
      %p643 = scmp.ne.s32.totalorder %s632, %s633
      %p644 = scmp.eq.s32.totalorder %s47, 0
      %p645 = por %p643, %p644
      %p646 = scmp.ne.s32.totalorder %s632, %s633
      %p647 = scmp.eq.s32.totalorder %s48, 3
      %p648 = por %p646, %p647
      %p650 = scmp.ne.s32.totalorder %s633, %s649
      %p651 = scmp.eq.s32.totalorder %s48, 0
      %p652 = por %p650, %p651
      %p653 = scmp.le.s32.totalorder 1, %s42
      %p654 = scmp.lt.s32.totalorder %s42, 5
      %p655 = pnand %p653, %p654
      %p656 = pneg %p655
      // Predicated region
      $region9: #{tpu_custom_call.1} parent=5 // pred_check
        _
      $region10: #{tpu_custom_call.1} parent=5 // pred_check_branch
        %658 = sbr.rel (%p655) target = $region12
      $region11: #{tpu_custom_call.1} parent=5 // pred_region
        %s659 = ssub.s32 %s42, 1
        // Predicated region
        $region13: #{tpu_custom_call.1} parent=11 // pred_check
          %p660 = pneg %p129
        $region14: #{tpu_custom_call.1} parent=11 // pred_check_branch
          %662 = sbr.rel (%p660) target = $region16
        $region15: #{tpu_custom_call.1} parent=11 // pred_region
          _
        $region16: #{tpu_custom_call.1} parent=11 // pred_fallthru
          _
        // Predicated region
        $region17: #{tpu_custom_call.1} parent=11 // pred_check
          %p663 = pneg %p150
        $region18: #{tpu_custom_call.1} parent=11 // pred_check_branch
          %665 = sbr.rel (%p663) target = $region20
        $region19: #{tpu_custom_call.1} parent=11 // pred_region
          _
        $region20: #{tpu_custom_call.1} parent=11 // pred_fallthru
          _
        // Predicated region
        $region21: #{tpu_custom_call.1} parent=11 // pred_check
          %p666 = pneg %p171
        $region22: #{tpu_custom_call.1} parent=11 // pred_check_branch
          %668 = sbr.rel (%p666) target = $region24
        $region23: #{tpu_custom_call.1} parent=11 // pred_region
          _
        $region24: #{tpu_custom_call.1} parent=11 // pred_fallthru
          _
        // Predicated region
        $region25: #{tpu_custom_call.1} parent=11 // pred_check
          %p669 = pneg %p192
        $region26: #{tpu_custom_call.1} parent=11 // pred_check_branch
          %671 = sbr.rel (%p669) target = $region28
        $region27: #{tpu_custom_call.1} parent=11 // pred_region
          _
        $region28: #{tpu_custom_call.1} parent=11 // pred_fallthru
          _
        // Predicated region
        $region29: #{tpu_custom_call.1} parent=11 // pred_check
          %p672 = pneg %p213
        $region30: #{tpu_custom_call.1} parent=11 // pred_check_branch
          %674 = sbr.rel (%p672) target = $region32
        $region31: #{tpu_custom_call.1} parent=11 // pred_region
          _
        $region32: #{tpu_custom_call.1} parent=11 // pred_fallthru
          _
        // Predicated region
        $region33: #{tpu_custom_call.1} parent=11 // pred_check
          %p675 = pneg %p234
        $region34: #{tpu_custom_call.1} parent=11 // pred_check_branch
          %677 = sbr.rel (%p675) target = $region36
        $region35: #{tpu_custom_call.1} parent=11 // pred_region
          _
        $region36: #{tpu_custom_call.1} parent=11 // pred_fallthru
          _
        // Predicated region
        $region37: #{tpu_custom_call.1} parent=11 // pred_check
          %p678 = pneg %p255
        $region38: #{tpu_custom_call.1} parent=11 // pred_check_branch
          %680 = sbr.rel (%p678) target = $region40
        $region39: #{tpu_custom_call.1} parent=11 // pred_region
          _
        $region40: #{tpu_custom_call.1} parent=11 // pred_fallthru
          _
        // Predicated region
        $region41: #{tpu_custom_call.1} parent=11 // pred_check
          %p681 = pneg %p276
        $region42: #{tpu_custom_call.1} parent=11 // pred_check_branch
          %683 = sbr.rel (%p681) target = $region44
        $region43: #{tpu_custom_call.1} parent=11 // pred_region
          _
        $region44: #{tpu_custom_call.1} parent=11 // pred_fallthru
          _
        // Predicated region
        $region45: #{tpu_custom_call.1} parent=11 // pred_check
          %p684 = pneg %p297
        $region46: #{tpu_custom_call.1} parent=11 // pred_check_branch
          %686 = sbr.rel (%p684) target = $region48
        $region47: #{tpu_custom_call.1} parent=11 // pred_region
          _
        $region48: #{tpu_custom_call.1} parent=11 // pred_fallthru
          _
        // Predicated region
        $region49: #{tpu_custom_call.1} parent=11 // pred_check
          %p687 = pneg %p318
        $region50: #{tpu_custom_call.1} parent=11 // pred_check_branch
          %689 = sbr.rel (%p687) target = $region52
        $region51: #{tpu_custom_call.1} parent=11 // pred_region
          _
        $region52: #{tpu_custom_call.1} parent=11 // pred_fallthru
          _
        // Predicated region
        $region53: #{tpu_custom_call.1} parent=11 // pred_check
          %p690 = pneg %p339
        $region54: #{tpu_custom_call.1} parent=11 // pred_check_branch
          %692 = sbr.rel (%p690) target = $region56
        $region55: #{tpu_custom_call.1} parent=11 // pred_region
          _
        $region56: #{tpu_custom_call.1} parent=11 // pred_fallthru
          _
        // Predicated region
        $region57: #{tpu_custom_call.1} parent=11 // pred_check
          %p693 = pneg %p360
        $region58: #{tpu_custom_call.1} parent=11 // pred_check_branch
          %695 = sbr.rel (%p693) target = $region60
        $region59: #{tpu_custom_call.1} parent=11 // pred_region
          _
        $region60: #{tpu_custom_call.1} parent=11 // pred_fallthru
          _
        // Predicated region
        $region61: #{tpu_custom_call.1} parent=11 // pred_check
          %p696 = pneg %p381
        $region62: #{tpu_custom_call.1} parent=11 // pred_check_branch
          %698 = sbr.rel (%p696) target = $region64
        $region63: #{tpu_custom_call.1} parent=11 // pred_region
          _
        $region64: #{tpu_custom_call.1} parent=11 // pred_fallthru
          _
        // Predicated region
        $region65: #{tpu_custom_call.1} parent=11 // pred_check
          %p699 = pneg %p402
        $region66: #{tpu_custom_call.1} parent=11 // pred_check_branch
          %701 = sbr.rel (%p699) target = $region68
        $region67: #{tpu_custom_call.1} parent=11 // pred_region
          _
        $region68: #{tpu_custom_call.1} parent=11 // pred_fallthru
          _
        // Predicated region
        $region69: #{tpu_custom_call.1} parent=11 // pred_check
          %p702 = pneg %p423
        $region70: #{tpu_custom_call.1} parent=11 // pred_check_branch
          %704 = sbr.rel (%p702) target = $region72
        $region71: #{tpu_custom_call.1} parent=11 // pred_region
          _
        $region72: #{tpu_custom_call.1} parent=11 // pred_fallthru
          _
        // Predicated region
        $region73: #{tpu_custom_call.1} parent=11 // pred_check
          %p705 = pneg %p444
        $region74: #{tpu_custom_call.1} parent=11 // pred_check_branch
          %707 = sbr.rel (%p705) target = $region76
        $region75: #{tpu_custom_call.1} parent=11 // pred_region
          _
        $region76: #{tpu_custom_call.1} parent=11 // pred_fallthru
          _
        // Predicated region
        $region77: #{tpu_custom_call.1} parent=11 // pred_check
          %p708 = pneg %p465
        $region78: #{tpu_custom_call.1} parent=11 // pred_check_branch
          %710 = sbr.rel (%p708) target = $region80
        $region79: #{tpu_custom_call.1} parent=11 // pred_region
          _
        $region80: #{tpu_custom_call.1} parent=11 // pred_fallthru
          _
        // Predicated region
        $region81: #{tpu_custom_call.1} parent=11 // pred_check
          %p711 = pneg %p486
        $region82: #{tpu_custom_call.1} parent=11 // pred_check_branch
          %713 = sbr.rel (%p711) target = $region84
        $region83: #{tpu_custom_call.1} parent=11 // pred_region
          _
        $region84: #{tpu_custom_call.1} parent=11 // pred_fallthru
          _
        // Predicated region
        $region85: #{tpu_custom_call.1} parent=11 // pred_check
          %p714 = pneg %p507
        $region86: #{tpu_custom_call.1} parent=11 // pred_check_branch
          %716 = sbr.rel (%p714) target = $region88
        $region87: #{tpu_custom_call.1} parent=11 // pred_region
          _
        $region88: #{tpu_custom_call.1} parent=11 // pred_fallthru
          _
        // Predicated region
        $region89: #{tpu_custom_call.1} parent=11 // pred_check
          %p717 = pneg %p528
        $region90: #{tpu_custom_call.1} parent=11 // pred_check_branch
          %719 = sbr.rel (%p717) target = $region92
        $region91: #{tpu_custom_call.1} parent=11 // pred_region
          _
        $region92: #{tpu_custom_call.1} parent=11 // pred_fallthru
          _
        // Predicated region
        $region93: #{tpu_custom_call.1} parent=11 // pred_check
          %p720 = pneg %p549
        $region94: #{tpu_custom_call.1} parent=11 // pred_check_branch
          %722 = sbr.rel (%p720) target = $region96
        $region95: #{tpu_custom_call.1} parent=11 // pred_region
          _
        $region96: #{tpu_custom_call.1} parent=11 // pred_fallthru
          _
        // Predicated region
        $region97: #{tpu_custom_call.1} parent=11 // pred_check
          %p723 = pneg %p570
        $region98: #{tpu_custom_call.1} parent=11 // pred_check_branch
          %725 = sbr.rel (%p723) target = $region100
        $region99: #{tpu_custom_call.1} parent=11 // pred_region
          _
        $region100: #{tpu_custom_call.1} parent=11 // pred_fallthru
          _
        // Predicated region
        $region101: #{tpu_custom_call.1} parent=11 // pred_check
          %p726 = pneg %p591
        $region102: #{tpu_custom_call.1} parent=11 // pred_check_branch
          %728 = sbr.rel (%p726) target = $region104
        $region103: #{tpu_custom_call.1} parent=11 // pred_region
          _
        $region104: #{tpu_custom_call.1} parent=11 // pred_fallthru
          _
      $region12: #{tpu_custom_call.1} parent=5 // pred_fallthru
        _
      %p729 = scmp.lt.s32.totalorder %s42, 4
      // Predicated region
      $region105: #{tpu_custom_call.1} parent=5 // pred_check
        %p730 = pneg %p729
      $region106: #{tpu_custom_call.1} parent=5 // pred_check_branch
        %732 = sbr.rel (%p730) target = $region108
      $region107: #{tpu_custom_call.1} parent=5 // pred_region
        // Predicated region
        $region109: #{tpu_custom_call.1} parent=107 // pred_check
          %p733 = pneg %p76
        $region110: #{tpu_custom_call.1} parent=107 // pred_check_branch
          %735 = sbr.rel (%p733) target = $region112
        $region111: #{tpu_custom_call.1} parent=107 // pred_region
          %p736 = scmp.lt.s32.totalorder %s49, 1
          %s737 = scalar_select %p736, %s49, 1
          %p738 = scmp.lt.s32.totalorder %s50, 1
          %s739 = scalar_select %p738, %s50, 1
          %s740 = smul.addr %s737, 2
          %s741 = sadd.s32 %s739, %s740
          %s742 = smul.addr %s741, 4
          %s743 = scalar_lea.vmem %s0, %s742
        $region112: #{tpu_custom_call.1} parent=107 // pred_fallthru
          _
        // Predicated region
        $region113: #{tpu_custom_call.1} parent=107 // pred_check
          %p744 = pneg %p102
        $region114: #{tpu_custom_call.1} parent=107 // pred_check_branch
          %746 = sbr.rel (%p744) target = $region116
        $region115: #{tpu_custom_call.1} parent=107 // pred_region
          %s747 = sand.u32 %s92, 1
          %s748 = scalar_lea.sflag [#allocation4], %s747
          %s749 = sand.u32 %s92, 1
          %s750 = smul.addr %s749, 16
          %s751 = scalar_lea.vmem [#allocation3], %s750
          %s753 = ssub.s32 256, 256
          %754 = vsyncadd %s748, %s753
          %s755 = smul.addr %s49, 4
          %s756 = smul.addr %s755, 64
          %s757 = scalar_lea.hbm %s1, %s756
          %s758 = sshll.u32 %s751, 4
          %s759 = int_to_ptr.vmem [resolvable:$true] %s758
          %764 = dma.hbm_to_vmem [thread:$0]  %s757, 256, %s759, %s748, 64, 64, 4
        $region116: #{tpu_custom_call.1} parent=107 // pred_fallthru
          _
      $region108: #{tpu_custom_call.1} parent=5 // pred_fallthru
        _
      %p765 = scmp.le.s32.totalorder 1, %s42
      %p766 = scmp.lt.s32.totalorder %s42, 5
      %p767 = pnand %p765, %p766
      %p768 = pneg %p767
      // Predicated region
      $region117: #{tpu_custom_call.1} parent=5 // pred_check
        _
      $region118: #{tpu_custom_call.1} parent=5 // pred_check_branch
        %770 = sbr.rel (%p767) target = $region120
      $region119: #{tpu_custom_call.1} parent=5 // pred_region
        %s771 = ssub.s32 %s42, 1
        %s772 = sand.u32 %s95, 1
        %s773 = scalar_lea.sflag [#allocation4], %s772
        %s774 = sand.u32 %s95, 1
        %s775 = smul.addr %s774, 16
        %s776 = scalar_lea.vmem [#allocation3], %s775
        // Predicated region
        $region121: #{tpu_custom_call.1} parent=119 // pred_check
          %p777 = pneg %p108
        $region122: #{tpu_custom_call.1} parent=119 // pred_check_branch
          %779 = sbr.rel (%p777) target = $region124
        $region123: #{tpu_custom_call.1} parent=119 // pred_region
          %780 = dma.done %s773, 256
        $region124: #{tpu_custom_call.1} parent=119 // pred_fallthru
          _
        %p781 = scmp.lt.s32.totalorder %s51, 1
        %s782 = scalar_select %p781, %s51, 1
        %p783 = scmp.lt.s32.totalorder %s52, 1
        %s784 = scalar_select %p783, %s52, 1
        %s785 = smul.addr %s782, 2
        %s786 = sadd.s32 %s784, %s785
        %s787 = smul.addr %s786, 4
        %s788 = scalar_lea.vmem %s0, %s787
        %p789 = pneg %p82
        %p790 = pneg %p79
        %s791 = sand.u32 %s95, 1
        %s792 = scalar_lea.sflag [#allocation4], %s791
        %s793 = sand.u32 %s95, 1
        %s794 = smul.addr %s793, 16
        %s795 = scalar_lea.vmem [#allocation3], %s794
        %p796 = pneg %p108
        %p797 = pneg %p105
        %p798 = pneg %p129
        %p799 = pneg %p126
        %p800 = pneg %p150
        %p801 = pneg %p147
        %p802 = pneg %p171
        %p803 = pneg %p168
        %p804 = pneg %p192
        %p805 = pneg %p189
        %p806 = pneg %p213
        %p807 = pneg %p210
        %p808 = pneg %p234
        %p809 = pneg %p231
        %p810 = pneg %p255
        %p811 = pneg %p252
        %p812 = pneg %p276
        %p813 = pneg %p273
        %p814 = pneg %p297
        %p815 = pneg %p294
        %p816 = pneg %p318
        %p817 = pneg %p315
        %p818 = pneg %p339
        %p819 = pneg %p336
        %p820 = pneg %p360
        %p821 = pneg %p357
        %p822 = pneg %p381
        %p823 = pneg %p378
        %p824 = pneg %p402
        %p825 = pneg %p399
        %p826 = pneg %p423
        %p827 = pneg %p420
        %p828 = pneg %p444
        %p829 = pneg %p441
        %p830 = pneg %p465
        %p831 = pneg %p462
        %p832 = pneg %p486
        %p833 = pneg %p483
        %p834 = pneg %p507
        %p835 = pneg %p504
        %p836 = pneg %p528
        %p837 = pneg %p525
        %p838 = pneg %p549
        %p839 = pneg %p546
        %p840 = pneg %p570
        %p841 = pneg %p567
        %p842 = pneg %p591
        %p843 = pneg %p588
        %p844 = pneg %p619
        %p845 = pneg %p616
        %s846 = sand.u32 %s606, 1
        %s847 = scalar_lea.sflag [#allocation5], %s846
        %s848 = sand.u32 %s606, 1
        %s849 = smul.addr %s848, 4
        %s850 = scalar_lea.vmem [#allocation6], %s849
        %p851 = pneg %p645
        %p852 = pneg %p642
        %s853 = sand.u32 %s632, 1
        %s854 = scalar_lea.sflag [#allocation8], %s853
        %s855 = sand.u32 %s632, 1
        %s856 = smul.addr %s855, 16
        %s857 = scalar_lea.vmem [#allocation7], %s856
        %p858 = scmp.lt.s32.totalorder %s51, 1
        %s859 = scalar_select %p858, %s51, 1
        %p860 = scmp.lt.s32.totalorder %s52, 1
        %s861 = scalar_select %p860, %s52, 1
        %s862 = smul.addr %s859, 2
        %s863 = sadd.s32 %s861, %s862
        %s864 = smul.addr %s863, 4
        %s865 = scalar_lea.vmem %s0, %s864
        %v867 = vld [vmem:[%s865] sm:$0xf]
        %p868 = scmp.eq.s32.totalorder %s52, 0
        // Predicated region
        $region125: #{tpu_custom_call.1} parent=119 // pred_check
          %p869 = pneg %p868
        $region126: #{tpu_custom_call.1} parent=119 // pred_check_branch
          %871 = sbr.rel (%p869) target = $region128
        $region127: #{tpu_custom_call.1} parent=119 // pred_region
          %v872 = vld [vmem:[%s776] sm:$0xf]
          %v873 = vld [vmem:[%s776 + $0x4] sm:$0xf]
          %v874 = vld [vmem:[%s776 + $0x8] sm:$0xf]
          %v875 = vld [vmem:[%s776 + $0xc] sm:$0xf]
          %v876 = vunpack.c.l.bf16 %v872
          %v877 = vunpack.c.l.bf16 %v873
          %v878 = vunpack.c.l.bf16 %v874
          %v879 = vunpack.c.l.bf16 %v875
          %vm880 = vcmask 64512
          %881 = vst.msk [vmem:[#allocation2] sm:$0xff] %vm880, %v876
          %882 = vst.msk [vmem:[#allocation2 + $0x8] sm:$0xff] %vm880, %v877
          %883 = vst.msk [vmem:[#allocation2 + $0x10] sm:$0xff] %vm880, %v878
          %884 = vst.msk [vmem:[#allocation2 + $0x18] sm:$0xff] %vm880, %v879
        $region128: #{tpu_custom_call.1} parent=119 // pred_fallthru
          _
        %v885 = vunpack.c.l.bf16 %v867
        %v886 = vld [vmem:[%s7] sm:$0x1]
        %v887 = vld [vmem:[%s8] sm:$0x1]
        %vm888 = vcmask 261120
        %v889 = vsel %vm888, %v885, 0.0
        %890 = vadd.xlane.f32.xlu0 %v889
        %v891 = vpop.xlane.xlu0 %890
        %v892 = vrcp.pop 32.0
        %v893 = vmul.f32 %v891, %v892
        %v894 = vsub.f32 %v885, %v893
        %v895 = vmul.f32 %v894, %v894
        %v896 = vsel %vm888, %v895, 0.0
        %897 = vadd.xlane.f32.xlu0 %v896
        %v898 = vpop.xlane.xlu0 %897
        %v899 = vmul.f32 %v898, %v892
        %v900 = vadd.f32 %v899, 1e-06
        %v901 = vrsqrt.pop %v900
        %v902 = vmul.f32 %v894, %v901
        %v904 = vlaneseq
        %v905 = vshrl.u32 %v904, 7
        %v906 = vsub.s32 0, %v905
        %v907 = vrot.slane %v886, %v906
        %v909 = vmul.f32 %v902, %v907
        %v911 = vlaneseq
        %v912 = vshrl.u32 %v911, 7
        %v913 = vsub.s32 0, %v912
        %v914 = vrot.slane %v887, %v913
        %v916 = vadd.f32 %v909, %v914
        %v917 = vpack.c.bf16 %v916, %v916
        %v918 = vlaneseq
        %v919 = vshrl.u32 %v918, 7
        %v920 = vlaneseq
        %v921 = vand.u32 %v920, 127
        %vm922 = vcmp.ge.s32.totalorder %v919, %v921
        %v923 = vld [vmem:[%s11] sm:$0xf]
        %v924 = vld [vmem:[%s11 + $0x4] sm:$0xf]
        %v925 = vld [vmem:[%s11 + $0x8] sm:$0xf]
        %v926 = vld [vmem:[%s11 + $0xc] sm:$0xf]
        %v927 = vld [vmem:[%s12] sm:$0x1]
        %v929 = vlaneseq
        %v930 = vshrl.u32 %v929, 7
        %v931 = vsub.s32 0, %v930
        %v932 = vrot.slane %v927, %v931
        %v938 = vunpack.c.l.b16 %v923
        %v939 = vunpack.c.l.b16 %v924
        %v940 = vunpack.c.l.b16 %v925
        %v941 = vunpack.c.l.b16 %v926
        %v942 = vpack.c.b16 %v939, %v938
        %v943 = vpack.c.b16 %v941, %v940
        %v947 = vsel %vm888, %v917, 0
        %949 = vmatprep.subr.bf16.mxu0 0
        %950 = vmatpush1.bf16.msra.mxu0 0
        %951 = vmatprep.subr.bf16.mxu0 0
        %952 = vmatpush1.bf16.msra.mxu0 0
        %953 = vmatprep.subr.bf16.mxu0 0
        %954 = vmatpush1.bf16.msra.mxu0 0
        %955 = vmatprep.subr.bf16.mxu0 0
        %956 = vmatpush1.bf16.msra.mxu0 0
        %957 = vmatprep.subr.bf16.mxu0 0
        %958 = vmatpush1.bf16.msra.mxu0 0
        %959 = vmatprep.subr.bf16.mxu0 0
        %960 = vmatpush1.bf16.msra.mxu0 0
        %961 = vmatprep.subr.bf16.mxu0 0
        %962 = vmatpush1.bf16.msra.mxu0 %v943
        %963 = vmatprep.subr.bf16.mxu0 0
        %964 = vmatpush1.bf16.msra.mxu0 %v942
        %965 = vmatprep.subr.bf16.mxu0 0
        %966 = vmatpush2.bf16.msra.mxu0 0
        %967 = vmatprep.subr.bf16.mxu0 0
        %968 = vmatpush2.bf16.msra.mxu0 0
        %969 = vmatprep.subr.bf16.mxu0 0
        %970 = vmatpush2.bf16.msra.mxu0 0
        %971 = vmatprep.subr.bf16.mxu0 0
        %972 = vmatpush2.bf16.msra.mxu0 0
        %973 = vmatprep.subr.bf16.mxu0 0
        %974 = vmatpush2.bf16.msra.mxu0 0
        %975 = vmatprep.subr.bf16.mxu0 0
        %976 = vmatpush2.bf16.msra.mxu0 0
        %977 = vmatprep.subr.bf16.mxu0 0
        %978 = vmatpush2.bf16.msra.mxu0 0
        %979 = vmatprep.subr.bf16.mxu0 0
        %980 = vmatpush2.bf16.msra.mxu0 0
        %981 = vmatprep.mubr.bf16.mxu0 0
        %982 = vmatmul.mubr.bf16.gmra.mxu0 %v947
        %v983 = vpop.f32.mrf.mxu0
        %v984 = vadd.f32 %v932, %v983
        %v985 = vpop.f32.mrf.mxu0
        %v986 = vpop.f32.mrf.mxu0
        %v987 = vpop.f32.mrf.mxu0
        %988 = vdwg.mxu0
        %v989 = vld [vmem:[%s13] sm:$0xf]
        %v990 = vld [vmem:[%s13 + $0x4] sm:$0xf]
        %v991 = vld [vmem:[%s13 + $0x8] sm:$0xf]
        %v992 = vld [vmem:[%s13 + $0xc] sm:$0xf]
        %v993 = vld [vmem:[%s14] sm:$0x1]
        %v995 = vlaneseq
        %v996 = vshrl.u32 %v995, 7
        %v997 = vsub.s32 0, %v996
        %v998 = vrot.slane %v993, %v997
        %v1004 = vunpack.c.l.b16 %v989
        %v1005 = vunpack.c.l.b16 %v990
        %v1006 = vunpack.c.l.b16 %v991
        %v1007 = vunpack.c.l.b16 %v992
        %v1008 = vpack.c.b16 %v1005, %v1004
        %v1009 = vpack.c.b16 %v1007, %v1006
        %1012 = vmatprep.subr.bf16.mxu0 0
        %1013 = vmatpush1.bf16.msra.mxu0 0
        %1014 = vmatprep.subr.bf16.mxu0 0
        %1015 = vmatpush1.bf16.msra.mxu0 0
        %1016 = vmatprep.subr.bf16.mxu0 0
        %1017 = vmatpush1.bf16.msra.mxu0 0
        %1018 = vmatprep.subr.bf16.mxu0 0
        %1019 = vmatpush1.bf16.msra.mxu0 0
        %1020 = vmatprep.subr.bf16.mxu0 0
        %1021 = vmatpush1.bf16.msra.mxu0 0
        %1022 = vmatprep.subr.bf16.mxu0 0
        %1023 = vmatpush1.bf16.msra.mxu0 0
        %1024 = vmatprep.subr.bf16.mxu0 0
        %1025 = vmatpush1.bf16.msra.mxu0 %v1009
        %1026 = vmatprep.subr.bf16.mxu0 0
        %1027 = vmatpush1.bf16.msra.mxu0 %v1008
        %1028 = vmatprep.subr.bf16.mxu0 0
        %1029 = vmatpush2.bf16.msra.mxu0 0
        %1030 = vmatprep.subr.bf16.mxu0 0
        %1031 = vmatpush2.bf16.msra.mxu0 0
        %1032 = vmatprep.subr.bf16.mxu0 0
        %1033 = vmatpush2.bf16.msra.mxu0 0
        %1034 = vmatprep.subr.bf16.mxu0 0
        %1035 = vmatpush2.bf16.msra.mxu0 0
        %1036 = vmatprep.subr.bf16.mxu0 0
        %1037 = vmatpush2.bf16.msra.mxu0 0
        %1038 = vmatprep.subr.bf16.mxu0 0
        %1039 = vmatpush2.bf16.msra.mxu0 0
        %1040 = vmatprep.subr.bf16.mxu0 0
        %1041 = vmatpush2.bf16.msra.mxu0 0
        %1042 = vmatprep.subr.bf16.mxu0 0
        %1043 = vmatpush2.bf16.msra.mxu0 0
        %1044 = vmatprep.mubr.bf16.mxu0 0
        %1045 = vmatmul.mubr.bf16.gmra.mxu0 %v947
        %v1046 = vpop.f32.mrf.mxu0
        %v1047 = vadd.f32 %v998, %v1046
        %v1048 = vpop.f32.mrf.mxu0
        %v1049 = vpop.f32.mrf.mxu0
        %v1050 = vpop.f32.mrf.mxu0
        %1051 = vdwg.mxu0
        %v1052 = vld [vmem:[%s15] sm:$0xf]
        %v1053 = vld [vmem:[%s15 + $0x4] sm:$0xf]
        %v1054 = vld [vmem:[%s15 + $0x8] sm:$0xf]
        %v1055 = vld [vmem:[%s15 + $0xc] sm:$0xf]
        %v1056 = vld [vmem:[%s16] sm:$0x1]
        %v1058 = vlaneseq
        %v1059 = vshrl.u32 %v1058, 7
        %v1060 = vsub.s32 0, %v1059
        %v1061 = vrot.slane %v1056, %v1060
        %v1067 = vunpack.c.l.b16 %v1052
        %v1068 = vunpack.c.l.b16 %v1053
        %v1069 = vunpack.c.l.b16 %v1054
        %v1070 = vunpack.c.l.b16 %v1055
        %v1071 = vpack.c.b16 %v1068, %v1067
        %v1072 = vpack.c.b16 %v1070, %v1069
        %1075 = vmatprep.subr.bf16.mxu0 0
        %1076 = vmatpush1.bf16.msra.mxu0 0
        %1077 = vmatprep.subr.bf16.mxu0 0
        %1078 = vmatpush1.bf16.msra.mxu0 0
        %1079 = vmatprep.subr.bf16.mxu0 0
        %1080 = vmatpush1.bf16.msra.mxu0 0
        %1081 = vmatprep.subr.bf16.mxu0 0
        %1082 = vmatpush1.bf16.msra.mxu0 0
        %1083 = vmatprep.subr.bf16.mxu0 0
        %1084 = vmatpush1.bf16.msra.mxu0 0
        %1085 = vmatprep.subr.bf16.mxu0 0
        %1086 = vmatpush1.bf16.msra.mxu0 0
        %1087 = vmatprep.subr.bf16.mxu0 0
        %1088 = vmatpush1.bf16.msra.mxu0 %v1072
        %1089 = vmatprep.subr.bf16.mxu0 0
        %1090 = vmatpush1.bf16.msra.mxu0 %v1071
        %1091 = vmatprep.subr.bf16.mxu0 0
        %1092 = vmatpush2.bf16.msra.mxu0 0
        %1093 = vmatprep.subr.bf16.mxu0 0
        %1094 = vmatpush2.bf16.msra.mxu0 0
        %1095 = vmatprep.subr.bf16.mxu0 0
        %1096 = vmatpush2.bf16.msra.mxu0 0
        %1097 = vmatprep.subr.bf16.mxu0 0
        %1098 = vmatpush2.bf16.msra.mxu0 0
        %1099 = vmatprep.subr.bf16.mxu0 0
        %1100 = vmatpush2.bf16.msra.mxu0 0
        %1101 = vmatprep.subr.bf16.mxu0 0
        %1102 = vmatpush2.bf16.msra.mxu0 0
        %1103 = vmatprep.subr.bf16.mxu0 0
        %1104 = vmatpush2.bf16.msra.mxu0 0
        %1105 = vmatprep.subr.bf16.mxu0 0
        %1106 = vmatpush2.bf16.msra.mxu0 0
        %1107 = vmatprep.mubr.bf16.mxu0 0
        %1108 = vmatmul.mubr.bf16.gmra.mxu0 %v947
        %v1109 = vpop.f32.mrf.mxu0
        %v1110 = vadd.f32 %v1061, %v1109
        %v1111 = vpop.f32.mrf.mxu0
        %v1112 = vpop.f32.mrf.mxu0
        %v1113 = vpop.f32.mrf.mxu0
        %1114 = vdwg.mxu0
        %v1115 = vld [vmem:[%s17] sm:$0xf]
        %v1116 = vld [vmem:[%s17 + $0x4] sm:$0xf]
        %v1117 = vld [vmem:[%s17 + $0x8] sm:$0xf]
        %v1118 = vld [vmem:[%s17 + $0xc] sm:$0xf]
        %v1119 = vld [vmem:[%s18] sm:$0x1]
        %v1121 = vlaneseq
        %v1122 = vshrl.u32 %v1121, 7
        %v1123 = vsub.s32 0, %v1122
        %v1124 = vrot.slane %v1119, %v1123
        %v1130 = vunpack.c.l.b16 %v1115
        %v1131 = vunpack.c.l.b16 %v1116
        %v1132 = vunpack.c.l.b16 %v1117
        %v1133 = vunpack.c.l.b16 %v1118
        %v1134 = vpack.c.b16 %v1131, %v1130
        %v1135 = vpack.c.b16 %v1133, %v1132
        %1138 = vmatprep.subr.bf16.mxu0 0
        %1139 = vmatpush1.bf16.msra.mxu0 0
        %1140 = vmatprep.subr.bf16.mxu0 0
        %1141 = vmatpush1.bf16.msra.mxu0 0
        %1142 = vmatprep.subr.bf16.mxu0 0
        %1143 = vmatpush1.bf16.msra.mxu0 0
        %1144 = vmatprep.subr.bf16.mxu0 0
        %1145 = vmatpush1.bf16.msra.mxu0 0
        %1146 = vmatprep.subr.bf16.mxu0 0
        %1147 = vmatpush1.bf16.msra.mxu0 0
        %1148 = vmatprep.subr.bf16.mxu0 0
        %1149 = vmatpush1.bf16.msra.mxu0 0
        %1150 = vmatprep.subr.bf16.mxu0 0
        %1151 = vmatpush1.bf16.msra.mxu0 %v1135
        %1152 = vmatprep.subr.bf16.mxu0 0
        %1153 = vmatpush1.bf16.msra.mxu0 %v1134
        %1154 = vmatprep.subr.bf16.mxu0 0
        %1155 = vmatpush2.bf16.msra.mxu0 0
        %1156 = vmatprep.subr.bf16.mxu0 0
        %1157 = vmatpush2.bf16.msra.mxu0 0
        %1158 = vmatprep.subr.bf16.mxu0 0
        %1159 = vmatpush2.bf16.msra.mxu0 0
        %1160 = vmatprep.subr.bf16.mxu0 0
        %1161 = vmatpush2.bf16.msra.mxu0 0
        %1162 = vmatprep.subr.bf16.mxu0 0
        %1163 = vmatpush2.bf16.msra.mxu0 0
        %1164 = vmatprep.subr.bf16.mxu0 0
        %1165 = vmatpush2.bf16.msra.mxu0 0
        %1166 = vmatprep.subr.bf16.mxu0 0
        %1167 = vmatpush2.bf16.msra.mxu0 0
        %1168 = vmatprep.subr.bf16.mxu0 0
        %1169 = vmatpush2.bf16.msra.mxu0 0
        %1170 = vmatprep.mubr.bf16.mxu0 0
        %1171 = vmatmul.mubr.bf16.gmra.mxu0 %v947
        %v1172 = vpop.f32.mrf.mxu0
        %v1173 = vadd.f32 %v1124, %v1172
        %v1174 = vpop.f32.mrf.mxu0
        %v1175 = vpop.f32.mrf.mxu0
        %v1176 = vpop.f32.mrf.mxu0
        %1177 = vdwg.mxu0
        %v1178 = vld [vmem:[%s2] sm:$0xff]
        %1180 = vset.pattern.permute.xlu0 0
        %1181 = vperm.xlu0 %1180, %v1178
        %v1182 = vpop.permute.xlu0 %1181
        %v1184 = vmul.f32 %v984, %v1182
        %v1185 = vpack.c.bf16 %v1184, %v1184
        %v1186 = vld [vmem:[%s3] sm:$0xff]
        %1188 = vset.pattern.permute.xlu0 0
        %1189 = vperm.xlu0 %1188, %v1186
        %v1190 = vpop.permute.xlu0 %1189
        %v1192 = vmul.f32 %v1047, %v1190
        %v1193 = vpack.c.bf16 %v1192, %v1192
        %v1194 = vld [vmem:[%s4] sm:$0xff]
        %1196 = vset.pattern.permute.xlu0 0
        %1197 = vperm.xlu0 %1196, %v1194
        %v1198 = vpop.permute.xlu0 %1197
        %v1200 = vmul.f32 %v1047, %v1198
        %v1201 = vpack.c.bf16 %v1200, %v1200
        %v1202 = vpack.c.bf16 %v1110, %v1110
        %v1203 = vxor.u32 %v1173, 2147483648
        %v1204 = vmul.f32 %v1203, 1.442695
        %v1205 = vpow.pop %v1204
        %v1206 = vadd.f32 %v1205, 1.0
        %v1207 = vrcp.pop %v1206
        %v1208 = vmul.f32 1.0, %v1207
        %v1209 = vmul.f32 %v1173, %v1208
        %v1210 = vpack.c.bf16 %v1209, %v1209
        %vm1211 = vcmask 64512
        %v1213 = vsel %vm1211, %v1185, 0
        %v1216 = vsel %vm1211, %v1193, 0
        %1218 = vmatprep.subr.bf16.mxu0 0
        %1219 = vmatpush1.bf16.xpose.msra.mxu0 0
        %1220 = vmatprep.subr.bf16.mxu0 0
        %1221 = vmatpush1.bf16.xpose.msra.mxu0 0
        %1222 = vmatprep.subr.bf16.mxu0 0
        %1223 = vmatpush1.bf16.xpose.msra.mxu0 0
        %1224 = vmatprep.subr.bf16.mxu0 0
        %1225 = vmatpush1.bf16.xpose.msra.mxu0 0
        %1226 = vmatprep.subr.bf16.mxu0 0
        %1227 = vmatpush1.bf16.xpose.msra.mxu0 0
        %1228 = vmatprep.subr.bf16.mxu0 0
        %1229 = vmatpush1.bf16.xpose.msra.mxu0 0
        %1230 = vmatprep.subr.bf16.mxu0 0
        %1231 = vmatpush1.bf16.xpose.msra.mxu0 0
        %1232 = vmatprep.subr.bf16.mxu0 0
        %1233 = vmatpush1.bf16.xpose.msra.mxu0 %v1216
        %1234 = vmatprep.subr.bf16.mxu0 0
        %1235 = vmatpush2.bf16.xpose.msra.mxu0 0
        %1236 = vmatprep.subr.bf16.mxu0 0
        %1237 = vmatpush2.bf16.xpose.msra.mxu0 0
        %1238 = vmatprep.subr.bf16.mxu0 0
        %1239 = vmatpush2.bf16.xpose.msra.mxu0 0
        %1240 = vmatprep.subr.bf16.mxu0 0
        %1241 = vmatpush2.bf16.xpose.msra.mxu0 0
        %1242 = vmatprep.subr.bf16.mxu0 0
        %1243 = vmatpush2.bf16.xpose.msra.mxu0 0
        %1244 = vmatprep.subr.bf16.mxu0 0
        %1245 = vmatpush2.bf16.xpose.msra.mxu0 0
        %1246 = vmatprep.subr.bf16.mxu0 0
        %1247 = vmatpush2.bf16.xpose.msra.mxu0 0
        %1248 = vmatprep.subr.bf16.mxu0 0
        %1249 = vmatpush2.bf16.xpose.msra.mxu0 0
        %1250 = vmatprep.mubr.bf16.mxu0 0
        %1251 = vmatmul.mubr.bf16.gmra.mxu0 %v1213
        %v1252 = vpop.f32.mrf.mxu0
        %v1253 = vadd.f32 0.0, %v1252
        %v1254 = vpop.f32.mrf.mxu0
        %v1255 = vpop.f32.mrf.mxu0
        %v1256 = vpop.f32.mrf.mxu0
        %1257 = vdwg.mxu0
        %v1258 = vsel %vm922, %v1253, 0.0
        %v1259 = vpack.c.bf16 %v1258, %v1258
        %v1260 = vld [vmem:[#allocation2] sm:$0xff]
        %v1261 = vpack.c.bf16 %v1260, %v1260
        %vm1262 = vcmask 1043456
        %v1264 = vsel %vm1262, %v1261, 0
        %1266 = vmatprep.subr.bf16.mxu0 0
        %1267 = vmatpush1.bf16.msra.mxu0 0
        %1268 = vmatprep.subr.bf16.mxu0 0
        %1269 = vmatpush1.bf16.msra.mxu0 0
        %1270 = vmatprep.subr.bf16.mxu0 0
        %1271 = vmatpush1.bf16.msra.mxu0 0
        %1272 = vmatprep.subr.bf16.mxu0 0
        %1273 = vmatpush1.bf16.msra.mxu0 0
        %1274 = vmatprep.subr.bf16.mxu0 0
        %1275 = vmatpush1.bf16.msra.mxu0 0
        %1276 = vmatprep.subr.bf16.mxu0 0
        %1277 = vmatpush1.bf16.msra.mxu0 0
        %1278 = vmatprep.subr.bf16.mxu0 0
        %1279 = vmatpush1.bf16.msra.mxu0 0
        %1280 = vmatprep.subr.bf16.mxu0 0
        %1281 = vmatpush1.bf16.msra.mxu0 %v1264
        %1282 = vmatprep.subr.bf16.mxu0 0
        %1283 = vmatpush2.bf16.msra.mxu0 0
        %1284 = vmatprep.subr.bf16.mxu0 0
        %1285 = vmatpush2.bf16.msra.mxu0 0
        %1286 = vmatprep.subr.bf16.mxu0 0
        %1287 = vmatpush2.bf16.msra.mxu0 0
        %1288 = vmatprep.subr.bf16.mxu0 0
        %1289 = vmatpush2.bf16.msra.mxu0 0
        %1290 = vmatprep.subr.bf16.mxu0 0
        %1291 = vmatpush2.bf16.msra.mxu0 0
        %1292 = vmatprep.subr.bf16.mxu0 0
        %1293 = vmatpush2.bf16.msra.mxu0 0
        %1294 = vmatprep.subr.bf16.mxu0 0
        %1295 = vmatpush2.bf16.msra.mxu0 0
        %1296 = vmatprep.subr.bf16.mxu0 0
        %1297 = vmatpush2.bf16.msra.mxu0 0
        %1298 = vmatprep.mubr.bf16.mxu0 0
        %1299 = vmatmul.mubr.bf16.gmra.mxu0 %v1213
        %v1300 = vpop.f32.mrf.mxu0
        %v1301 = vadd.f32 0.0, %v1300
        %v1302 = vpop.f32.mrf.mxu0
        %v1303 = vpop.f32.mrf.mxu0
        %v1304 = vpop.f32.mrf.mxu0
        %1305 = vdwg.mxu0
        %v1306 = vld [vmem:[%s5] sm:$0x1]
        %v1308 = vlaneseq
        %v1309 = vshrl.u32 %v1308, 7
        %v1310 = vsub.s32 0, %v1309
        %v1311 = vrot.slane %v1306, %v1310
        %1312 = vset.pattern.permute.xlu0 0
        %1313 = vperm.xlu0 %1312, %v1311
        %v1314 = vpop.permute.xlu0 %1313
        %v1316 = vmul.f32 %v1301, %v1314
        %v1318 = vsel %vm1211, %v1259, 0
        %v1321 = vsel %vm1262, %v1202, 0
        %1323 = vmatprep.subr.bf16.mxu0 0
        %1324 = vmatpush1.bf16.msra.mxu0 0
        %1325 = vmatprep.subr.bf16.mxu0 0
        %1326 = vmatpush1.bf16.msra.mxu0 0
        %1327 = vmatprep.subr.bf16.mxu0 0
        %1328 = vmatpush1.bf16.msra.mxu0 0
        %1329 = vmatprep.subr.bf16.mxu0 0
        %1330 = vmatpush1.bf16.msra.mxu0 0
        %1331 = vmatprep.subr.bf16.mxu0 0
        %1332 = vmatpush1.bf16.msra.mxu0 0
        %1333 = vmatprep.subr.bf16.mxu0 0
        %1334 = vmatpush1.bf16.msra.mxu0 0
        %1335 = vmatprep.subr.bf16.mxu0 0
        %1336 = vmatpush1.bf16.msra.mxu0 0
        %1337 = vmatprep.subr.bf16.mxu0 0
        %1338 = vmatpush1.bf16.msra.mxu0 %v1321
        %1339 = vmatprep.subr.bf16.mxu0 0
        %1340 = vmatpush2.bf16.msra.mxu0 0
        %1341 = vmatprep.subr.bf16.mxu0 0
        %1342 = vmatpush2.bf16.msra.mxu0 0
        %1343 = vmatprep.subr.bf16.mxu0 0
        %1344 = vmatpush2.bf16.msra.mxu0 0
        %1345 = vmatprep.subr.bf16.mxu0 0
        %1346 = vmatpush2.bf16.msra.mxu0 0
        %1347 = vmatprep.subr.bf16.mxu0 0
        %1348 = vmatpush2.bf16.msra.mxu0 0
        %1349 = vmatprep.subr.bf16.mxu0 0
        %1350 = vmatpush2.bf16.msra.mxu0 0
        %1351 = vmatprep.subr.bf16.mxu0 0
        %1352 = vmatpush2.bf16.msra.mxu0 0
        %1353 = vmatprep.subr.bf16.mxu0 0
        %1354 = vmatpush2.bf16.msra.mxu0 0
        %1355 = vmatprep.mubr.bf16.mxu0 0
        %1356 = vmatmul.mubr.bf16.gmra.mxu0 %v1318
        %v1357 = vpop.f32.mrf.mxu0
        %v1358 = vadd.f32 %v1316, %v1357
        %v1359 = vpop.f32.mrf.mxu0
        %v1360 = vpop.f32.mrf.mxu0
        %v1361 = vpop.f32.mrf.mxu0
        %1362 = vdwg.mxu0
        %v1363 = vld [vmem:[%s6] sm:$0x1]
        %v1365 = vlaneseq
        %v1366 = vshrl.u32 %v1365, 7
        %v1367 = vsub.s32 0, %v1366
        %v1368 = vrot.slane %v1363, %v1367
        %1369 = vset.pattern.permute.xlu0 0
        %1370 = vperm.xlu0 %1369, %v1368
        %v1371 = vpop.permute.xlu0 %1370
        %v1373 = vmul.f32 %v1260, %v1371
        %1374 = vxpose.xlu0.c.b16.start [1/8] %v1201, 128
        %1375 = vxpose.xlu0.c.b16.cont [2/8] 0, 128
        %1376 = vxpose.xlu0.c.b16.cont [3/8] 0, 128
        %1377 = vxpose.xlu0.c.b16.cont [4/8] 0, 128
        %1378 = vxpose.xlu0.c.b16.cont [5/8] 0, 128
        %1379 = vxpose.xlu0.c.b16.cont [6/8] 0, 128
        %1380 = vxpose.xlu0.c.b16.cont [7/8] 0, 128
        %1381 = vxpose.xlu0.c.b16.end [8/8] 0, 128
        %v1382 = vpop.trf.xlu0
        %v1383 = vpop.trf.xlu0
        %v1384 = vpop.trf.xlu0
        %v1385 = vpop.trf.xlu0
        %v1386 = vpop.trf.xlu0
        %v1387 = vpop.trf.xlu0
        %v1388 = vpop.trf.xlu0
        %v1389 = vpop.trf.xlu0
        %v1391 = vsel %vm1211, %v1382, 0
        %1393 = vmatprep.subr.bf16.mxu0 0
        %1394 = vmatpush1.bf16.msra.mxu0 0
        %1395 = vmatprep.subr.bf16.mxu0 0
        %1396 = vmatpush1.bf16.msra.mxu0 0
        %1397 = vmatprep.subr.bf16.mxu0 0
        %1398 = vmatpush1.bf16.msra.mxu0 0
        %1399 = vmatprep.subr.bf16.mxu0 0
        %1400 = vmatpush1.bf16.msra.mxu0 0
        %1401 = vmatprep.subr.bf16.mxu0 0
        %1402 = vmatpush1.bf16.msra.mxu0 0
        %1403 = vmatprep.subr.bf16.mxu0 0
        %1404 = vmatpush1.bf16.msra.mxu0 0
        %1405 = vmatprep.subr.bf16.mxu0 0
        %1406 = vmatpush1.bf16.msra.mxu0 0
        %1407 = vmatprep.subr.bf16.mxu0 0
        %1408 = vmatpush1.bf16.msra.mxu0 %v1321
        %1409 = vmatprep.subr.bf16.mxu0 0
        %1410 = vmatpush2.bf16.msra.mxu0 0
        %1411 = vmatprep.subr.bf16.mxu0 0
        %1412 = vmatpush2.bf16.msra.mxu0 0
        %1413 = vmatprep.subr.bf16.mxu0 0
        %1414 = vmatpush2.bf16.msra.mxu0 0
        %1415 = vmatprep.subr.bf16.mxu0 0
        %1416 = vmatpush2.bf16.msra.mxu0 0
        %1417 = vmatprep.subr.bf16.mxu0 0
        %1418 = vmatpush2.bf16.msra.mxu0 0
        %1419 = vmatprep.subr.bf16.mxu0 0
        %1420 = vmatpush2.bf16.msra.mxu0 0
        %1421 = vmatprep.subr.bf16.mxu0 0
        %1422 = vmatpush2.bf16.msra.mxu0 0
        %1423 = vmatprep.subr.bf16.mxu0 0
        %1424 = vmatpush2.bf16.msra.mxu0 0
        %1425 = vmatprep.mubr.bf16.mxu0 0
        %1426 = vmatmul.mubr.bf16.gmra.mxu0 %v1391
        %v1427 = vpop.f32.mrf.mxu0
        %v1428 = vadd.f32 %v1373, %v1427
        %v1429 = vpop.f32.mrf.mxu0
        %v1430 = vpop.f32.mrf.mxu0
        %v1431 = vpop.f32.mrf.mxu0
        %1432 = vdwg.mxu0
        %1433 = vst.msk [vmem:[#allocation2] sm:$0xff] %vm1211, %v1428
        %v1434 = vsel %vm1211, %v1358, 0.0
        %1435 = vadd.xlane.f32.xlu0 %v1434
        %v1436 = vpop.xlane.xlu0 %1435
        %v1437 = vrcp.pop 8.0
        %v1438 = vmul.f32 %v1436, %v1437
        %v1439 = vsub.f32 %v1358, %v1438
        %v1440 = vmul.f32 %v1439, %v1439
        %v1441 = vsel %vm1211, %v1440, 0.0
        %1442 = vadd.xlane.f32.xlu0 %v1441
        %v1443 = vpop.xlane.xlu0 %1442
        %v1444 = vmul.f32 %v1443, %v1437
        %v1445 = vadd.f32 %v1444, 1e-06
        %v1446 = vrsqrt.pop %v1445
        %v1447 = vmul.f32 %v1439, %v1446
        %v1448 = vunpack.c.l.bf16 %v1210
        %v1449 = vmul.f32 %v1447, %v1448
        %v1450 = vpack.c.bf16 %v1449, %v1449
        %v1451 = vld [vmem:[%s19] sm:$0xf]
        %s1452 = scalar_lea.vmem %s11, 16
        %v1453 = vld [vmem:[%s1452] sm:$0xf]
        %v1454 = vld [vmem:[%s1452 + $0x4] sm:$0xf]
        %v1455 = vld [vmem:[%s1452 + $0x8] sm:$0xf]
        %v1456 = vld [vmem:[%s1452 + $0xc] sm:$0xf]
        %s1457 = scalar_lea.vmem %s12, 1
        %v1458 = vld [vmem:[%s1457] sm:$0x1]
        %v1460 = vlaneseq
        %v1461 = vshrl.u32 %v1460, 7
        %v1462 = vsub.s32 0, %v1461
        %v1463 = vrot.slane %v1458, %v1462
        %v1469 = vunpack.c.l.b16 %v1453
        %v1470 = vunpack.c.l.b16 %v1454
        %v1471 = vunpack.c.l.b16 %v1455
        %v1472 = vunpack.c.l.b16 %v1456
        %v1473 = vpack.c.b16 %v1470, %v1469
        %v1474 = vpack.c.b16 %v1472, %v1471
        %1477 = vmatprep.subr.bf16.mxu0 0
        %1478 = vmatpush1.bf16.msra.mxu0 0
        %1479 = vmatprep.subr.bf16.mxu0 0
        %1480 = vmatpush1.bf16.msra.mxu0 0
        %1481 = vmatprep.subr.bf16.mxu0 0
        %1482 = vmatpush1.bf16.msra.mxu0 0
        %1483 = vmatprep.subr.bf16.mxu0 0
        %1484 = vmatpush1.bf16.msra.mxu0 0
        %1485 = vmatprep.subr.bf16.mxu0 0
        %1486 = vmatpush1.bf16.msra.mxu0 0
        %1487 = vmatprep.subr.bf16.mxu0 0
        %1488 = vmatpush1.bf16.msra.mxu0 0
        %1489 = vmatprep.subr.bf16.mxu0 0
        %1490 = vmatpush1.bf16.msra.mxu0 %v1474
        %1491 = vmatprep.subr.bf16.mxu0 0
        %1492 = vmatpush1.bf16.msra.mxu0 %v1473
        %1493 = vmatprep.subr.bf16.mxu0 0
        %1494 = vmatpush2.bf16.msra.mxu0 0
        %1495 = vmatprep.subr.bf16.mxu0 0
        %1496 = vmatpush2.bf16.msra.mxu0 0
        %1497 = vmatprep.subr.bf16.mxu0 0
        %1498 = vmatpush2.bf16.msra.mxu0 0
        %1499 = vmatprep.subr.bf16.mxu0 0
        %1500 = vmatpush2.bf16.msra.mxu0 0
        %1501 = vmatprep.subr.bf16.mxu0 0
        %1502 = vmatpush2.bf16.msra.mxu0 0
        %1503 = vmatprep.subr.bf16.mxu0 0
        %1504 = vmatpush2.bf16.msra.mxu0 0
        %1505 = vmatprep.subr.bf16.mxu0 0
        %1506 = vmatpush2.bf16.msra.mxu0 0
        %1507 = vmatprep.subr.bf16.mxu0 0
        %1508 = vmatpush2.bf16.msra.mxu0 0
        %1509 = vmatprep.mubr.bf16.mxu0 0
        %1510 = vmatmul.mubr.bf16.gmra.mxu0 %v947
        %v1511 = vpop.f32.mrf.mxu0
        %v1512 = vadd.f32 %v1463, %v1511
        %v1513 = vpop.f32.mrf.mxu0
        %v1514 = vpop.f32.mrf.mxu0
        %v1515 = vpop.f32.mrf.mxu0
        %1516 = vdwg.mxu0
        %s1517 = scalar_lea.vmem %s13, 16
        %v1518 = vld [vmem:[%s1517] sm:$0xf]
        %v1519 = vld [vmem:[%s1517 + $0x4] sm:$0xf]
        %v1520 = vld [vmem:[%s1517 + $0x8] sm:$0xf]
        %v1521 = vld [vmem:[%s1517 + $0xc] sm:$0xf]
        %s1522 = scalar_lea.vmem %s14, 1
        %v1523 = vld [vmem:[%s1522] sm:$0x1]
        %v1525 = vlaneseq
        %v1526 = vshrl.u32 %v1525, 7
        %v1527 = vsub.s32 0, %v1526
        %v1528 = vrot.slane %v1523, %v1527
        %v1534 = vunpack.c.l.b16 %v1518
        %v1535 = vunpack.c.l.b16 %v1519
        %v1536 = vunpack.c.l.b16 %v1520
        %v1537 = vunpack.c.l.b16 %v1521
        %v1538 = vpack.c.b16 %v1535, %v1534
        %v1539 = vpack.c.b16 %v1537, %v1536
        %1542 = vmatprep.subr.bf16.mxu0 0
        %1543 = vmatpush1.bf16.msra.mxu0 0
        %1544 = vmatprep.subr.bf16.mxu0 0
        %1545 = vmatpush1.bf16.msra.mxu0 0
        %1546 = vmatprep.subr.bf16.mxu0 0
        %1547 = vmatpush1.bf16.msra.mxu0 0
        %1548 = vmatprep.subr.bf16.mxu0 0
        %1549 = vmatpush1.bf16.msra.mxu0 0
        %1550 = vmatprep.subr.bf16.mxu0 0
        %1551 = vmatpush1.bf16.msra.mxu0 0
        %1552 = vmatprep.subr.bf16.mxu0 0
        %1553 = vmatpush1.bf16.msra.mxu0 0
        %1554 = vmatprep.subr.bf16.mxu0 0
        %1555 = vmatpush1.bf16.msra.mxu0 %v1539
        %1556 = vmatprep.subr.bf16.mxu0 0
        %1557 = vmatpush1.bf16.msra.mxu0 %v1538
        %1558 = vmatprep.subr.bf16.mxu0 0
        %1559 = vmatpush2.bf16.msra.mxu0 0
        %1560 = vmatprep.subr.bf16.mxu0 0
        %1561 = vmatpush2.bf16.msra.mxu0 0
        %1562 = vmatprep.subr.bf16.mxu0 0
        %1563 = vmatpush2.bf16.msra.mxu0 0
        %1564 = vmatprep.subr.bf16.mxu0 0
        %1565 = vmatpush2.bf16.msra.mxu0 0
        %1566 = vmatprep.subr.bf16.mxu0 0
        %1567 = vmatpush2.bf16.msra.mxu0 0
        %1568 = vmatprep.subr.bf16.mxu0 0
        %1569 = vmatpush2.bf16.msra.mxu0 0
        %1570 = vmatprep.subr.bf16.mxu0 0
        %1571 = vmatpush2.bf16.msra.mxu0 0
        %1572 = vmatprep.subr.bf16.mxu0 0
        %1573 = vmatpush2.bf16.msra.mxu0 0
        %1574 = vmatprep.mubr.bf16.mxu0 0
        %1575 = vmatmul.mubr.bf16.gmra.mxu0 %v947
        %v1576 = vpop.f32.mrf.mxu0
        %v1577 = vadd.f32 %v1528, %v1576
        %v1578 = vpop.f32.mrf.mxu0
        %v1579 = vpop.f32.mrf.mxu0
        %v1580 = vpop.f32.mrf.mxu0
        %1581 = vdwg.mxu0
        %s1582 = scalar_lea.vmem %s15, 16
        %v1583 = vld [vmem:[%s1582] sm:$0xf]
        %v1584 = vld [vmem:[%s1582 + $0x4] sm:$0xf]
        %v1585 = vld [vmem:[%s1582 + $0x8] sm:$0xf]
        %v1586 = vld [vmem:[%s1582 + $0xc] sm:$0xf]
        %s1587 = scalar_lea.vmem %s16, 1
        %v1588 = vld [vmem:[%s1587] sm:$0x1]
        %v1590 = vlaneseq
        %v1591 = vshrl.u32 %v1590, 7
        %v1592 = vsub.s32 0, %v1591
        %v1593 = vrot.slane %v1588, %v1592
        %v1599 = vunpack.c.l.b16 %v1583
        %v1600 = vunpack.c.l.b16 %v1584
        %v1601 = vunpack.c.l.b16 %v1585
        %v1602 = vunpack.c.l.b16 %v1586
        %v1603 = vpack.c.b16 %v1600, %v1599
        %v1604 = vpack.c.b16 %v1602, %v1601
        %1607 = vmatprep.subr.bf16.mxu0 0
        %1608 = vmatpush1.bf16.msra.mxu0 0
        %1609 = vmatprep.subr.bf16.mxu0 0
        %1610 = vmatpush1.bf16.msra.mxu0 0
        %1611 = vmatprep.subr.bf16.mxu0 0
        %1612 = vmatpush1.bf16.msra.mxu0 0
        %1613 = vmatprep.subr.bf16.mxu0 0
        %1614 = vmatpush1.bf16.msra.mxu0 0
        %1615 = vmatprep.subr.bf16.mxu0 0
        %1616 = vmatpush1.bf16.msra.mxu0 0
        %1617 = vmatprep.subr.bf16.mxu0 0
        %1618 = vmatpush1.bf16.msra.mxu0 0
        %1619 = vmatprep.subr.bf16.mxu0 0
        %1620 = vmatpush1.bf16.msra.mxu0 %v1604
        %1621 = vmatprep.subr.bf16.mxu0 0
        %1622 = vmatpush1.bf16.msra.mxu0 %v1603
        %1623 = vmatprep.subr.bf16.mxu0 0
        %1624 = vmatpush2.bf16.msra.mxu0 0
        %1625 = vmatprep.subr.bf16.mxu0 0
        %1626 = vmatpush2.bf16.msra.mxu0 0
        %1627 = vmatprep.subr.bf16.mxu0 0
        %1628 = vmatpush2.bf16.msra.mxu0 0
        %1629 = vmatprep.subr.bf16.mxu0 0
        %1630 = vmatpush2.bf16.msra.mxu0 0
        %1631 = vmatprep.subr.bf16.mxu0 0
        %1632 = vmatpush2.bf16.msra.mxu0 0
        %1633 = vmatprep.subr.bf16.mxu0 0
        %1634 = vmatpush2.bf16.msra.mxu0 0
        %1635 = vmatprep.subr.bf16.mxu0 0
        %1636 = vmatpush2.bf16.msra.mxu0 0
        %1637 = vmatprep.subr.bf16.mxu0 0
        %1638 = vmatpush2.bf16.msra.mxu0 0
        %1639 = vmatprep.mubr.bf16.mxu0 0
        %1640 = vmatmul.mubr.bf16.gmra.mxu0 %v947
        %v1641 = vpop.f32.mrf.mxu0
        %v1642 = vadd.f32 %v1593, %v1641
        %v1643 = vpop.f32.mrf.mxu0
        %v1644 = vpop.f32.mrf.mxu0
        %v1645 = vpop.f32.mrf.mxu0
        %1646 = vdwg.mxu0
        %s1647 = scalar_lea.vmem %s17, 16
        %v1648 = vld [vmem:[%s1647] sm:$0xf]
        %v1649 = vld [vmem:[%s1647 + $0x4] sm:$0xf]
        %v1650 = vld [vmem:[%s1647 + $0x8] sm:$0xf]
        %v1651 = vld [vmem:[%s1647 + $0xc] sm:$0xf]
        %s1652 = scalar_lea.vmem %s18, 1
        %v1653 = vld [vmem:[%s1652] sm:$0x1]
        %v1655 = vlaneseq
        %v1656 = vshrl.u32 %v1655, 7
        %v1657 = vsub.s32 0, %v1656
        %v1658 = vrot.slane %v1653, %v1657
        %v1664 = vunpack.c.l.b16 %v1648
        %v1665 = vunpack.c.l.b16 %v1649
        %v1666 = vunpack.c.l.b16 %v1650
        %v1667 = vunpack.c.l.b16 %v1651
        %v1668 = vpack.c.b16 %v1665, %v1664
        %v1669 = vpack.c.b16 %v1667, %v1666
        %1672 = vmatprep.subr.bf16.mxu0 0
        %1673 = vmatpush1.bf16.msra.mxu0 0
        %1674 = vmatprep.subr.bf16.mxu0 0
        %1675 = vmatpush1.bf16.msra.mxu0 0
        %1676 = vmatprep.subr.bf16.mxu0 0
        %1677 = vmatpush1.bf16.msra.mxu0 0
        %1678 = vmatprep.subr.bf16.mxu0 0
        %1679 = vmatpush1.bf16.msra.mxu0 0
        %1680 = vmatprep.subr.bf16.mxu0 0
        %1681 = vmatpush1.bf16.msra.mxu0 0
        %1682 = vmatprep.subr.bf16.mxu0 0
        %1683 = vmatpush1.bf16.msra.mxu0 0
        %1684 = vmatprep.subr.bf16.mxu0 0
        %1685 = vmatpush1.bf16.msra.mxu0 %v1669
        %1686 = vmatprep.subr.bf16.mxu0 0
        %1687 = vmatpush1.bf16.msra.mxu0 %v1668
        %1688 = vmatprep.subr.bf16.mxu0 0
        %1689 = vmatpush2.bf16.msra.mxu0 0
        %1690 = vmatprep.subr.bf16.mxu0 0
        %1691 = vmatpush2.bf16.msra.mxu0 0
        %1692 = vmatprep.subr.bf16.mxu0 0
        %1693 = vmatpush2.bf16.msra.mxu0 0
        %1694 = vmatprep.subr.bf16.mxu0 0
        %1695 = vmatpush2.bf16.msra.mxu0 0
        %1696 = vmatprep.subr.bf16.mxu0 0
        %1697 = vmatpush2.bf16.msra.mxu0 0
        %1698 = vmatprep.subr.bf16.mxu0 0
        %1699 = vmatpush2.bf16.msra.mxu0 0
        %1700 = vmatprep.subr.bf16.mxu0 0
        %1701 = vmatpush2.bf16.msra.mxu0 0
        %1702 = vmatprep.subr.bf16.mxu0 0
        %1703 = vmatpush2.bf16.msra.mxu0 0
        %1704 = vmatprep.mubr.bf16.mxu0 0
        %1705 = vmatmul.mubr.bf16.gmra.mxu0 %v947
        %v1706 = vpop.f32.mrf.mxu0
        %v1707 = vadd.f32 %v1658, %v1706
        %v1708 = vpop.f32.mrf.mxu0
        %v1709 = vpop.f32.mrf.mxu0
        %v1710 = vpop.f32.mrf.mxu0
        %1711 = vdwg.mxu0
        %s1712 = scalar_lea.vmem %s2, 8
        %v1713 = vld [vmem:[%s1712] sm:$0xff]
        %1715 = vset.pattern.permute.xlu0 0
        %1716 = vperm.xlu0 %1715, %v1713
        %v1717 = vpop.permute.xlu0 %1716
        %v1719 = vmul.f32 %v1512, %v1717
        %v1720 = vpack.c.bf16 %v1719, %v1719
        %s1721 = scalar_lea.vmem %s3, 8
        %v1722 = vld [vmem:[%s1721] sm:$0xff]
        %1724 = vset.pattern.permute.xlu0 0
        %1725 = vperm.xlu0 %1724, %v1722
        %v1726 = vpop.permute.xlu0 %1725
        %v1728 = vmul.f32 %v1577, %v1726
        %v1729 = vpack.c.bf16 %v1728, %v1728
        %s1730 = scalar_lea.vmem %s4, 8
        %v1731 = vld [vmem:[%s1730] sm:$0xff]
        %1733 = vset.pattern.permute.xlu0 0
        %1734 = vperm.xlu0 %1733, %v1731
        %v1735 = vpop.permute.xlu0 %1734
        %v1737 = vmul.f32 %v1577, %v1735
        %v1738 = vpack.c.bf16 %v1737, %v1737
        %v1739 = vpack.c.bf16 %v1642, %v1642
        %v1740 = vxor.u32 %v1707, 2147483648
        %v1741 = vmul.f32 %v1740, 1.442695
        %v1742 = vpow.pop %v1741
        %v1743 = vadd.f32 %v1742, 1.0
        %v1744 = vrcp.pop %v1743
        %v1745 = vmul.f32 1.0, %v1744
        %v1746 = vmul.f32 %v1707, %v1745
        %v1747 = vpack.c.bf16 %v1746, %v1746
        %v1749 = vsel %vm1211, %v1720, 0
        %v1752 = vsel %vm1211, %v1729, 0
        %1754 = vmatprep.subr.bf16.mxu0 0
        %1755 = vmatpush1.bf16.xpose.msra.mxu0 0
        %1756 = vmatprep.subr.bf16.mxu0 0
        %1757 = vmatpush1.bf16.xpose.msra.mxu0 0
        %1758 = vmatprep.subr.bf16.mxu0 0
        %1759 = vmatpush1.bf16.xpose.msra.mxu0 0
        %1760 = vmatprep.subr.bf16.mxu0 0
        %1761 = vmatpush1.bf16.xpose.msra.mxu0 0
        %1762 = vmatprep.subr.bf16.mxu0 0
        %1763 = vmatpush1.bf16.xpose.msra.mxu0 0
        %1764 = vmatprep.subr.bf16.mxu0 0
        %1765 = vmatpush1.bf16.xpose.msra.mxu0 0
        %1766 = vmatprep.subr.bf16.mxu0 0
        %1767 = vmatpush1.bf16.xpose.msra.mxu0 0
        %1768 = vmatprep.subr.bf16.mxu0 0
        %1769 = vmatpush1.bf16.xpose.msra.mxu0 %v1752
        %1770 = vmatprep.subr.bf16.mxu0 0
        %1771 = vmatpush2.bf16.xpose.msra.mxu0 0
        %1772 = vmatprep.subr.bf16.mxu0 0
        %1773 = vmatpush2.bf16.xpose.msra.mxu0 0
        %1774 = vmatprep.subr.bf16.mxu0 0
        %1775 = vmatpush2.bf16.xpose.msra.mxu0 0
        %1776 = vmatprep.subr.bf16.mxu0 0
        %1777 = vmatpush2.bf16.xpose.msra.mxu0 0
        %1778 = vmatprep.subr.bf16.mxu0 0
        %1779 = vmatpush2.bf16.xpose.msra.mxu0 0
        %1780 = vmatprep.subr.bf16.mxu0 0
        %1781 = vmatpush2.bf16.xpose.msra.mxu0 0
        %1782 = vmatprep.subr.bf16.mxu0 0
        %1783 = vmatpush2.bf16.xpose.msra.mxu0 0
        %1784 = vmatprep.subr.bf16.mxu0 0
        %1785 = vmatpush2.bf16.xpose.msra.mxu0 0
        %1786 = vmatprep.mubr.bf16.mxu0 0
        %1787 = vmatmul.mubr.bf16.gmra.mxu0 %v1749
        %v1788 = vpop.f32.mrf.mxu0
        %v1789 = vadd.f32 0.0, %v1788
        %v1790 = vpop.f32.mrf.mxu0
        %v1791 = vpop.f32.mrf.mxu0
        %v1792 = vpop.f32.mrf.mxu0
        %1793 = vdwg.mxu0
        %v1794 = vsel %vm922, %v1789, 0.0
        %v1795 = vpack.c.bf16 %v1794, %v1794
        %s1796 = scalar_lea.vmem [#allocation2], 8
        %v1797 = vld [vmem:[%s1796] sm:$0xff]
        %v1798 = vpack.c.bf16 %v1797, %v1797
        %v1800 = vsel %vm1262, %v1798, 0
        %1802 = vmatprep.subr.bf16.mxu0 0
        %1803 = vmatpush1.bf16.msra.mxu0 0
        %1804 = vmatprep.subr.bf16.mxu0 0
        %1805 = vmatpush1.bf16.msra.mxu0 0
        %1806 = vmatprep.subr.bf16.mxu0 0
        %1807 = vmatpush1.bf16.msra.mxu0 0
        %1808 = vmatprep.subr.bf16.mxu0 0
        %1809 = vmatpush1.bf16.msra.mxu0 0
        %1810 = vmatprep.subr.bf16.mxu0 0
        %1811 = vmatpush1.bf16.msra.mxu0 0
        %1812 = vmatprep.subr.bf16.mxu0 0
        %1813 = vmatpush1.bf16.msra.mxu0 0
        %1814 = vmatprep.subr.bf16.mxu0 0
        %1815 = vmatpush1.bf16.msra.mxu0 0
        %1816 = vmatprep.subr.bf16.mxu0 0
        %1817 = vmatpush1.bf16.msra.mxu0 %v1800
        %1818 = vmatprep.subr.bf16.mxu0 0
        %1819 = vmatpush2.bf16.msra.mxu0 0
        %1820 = vmatprep.subr.bf16.mxu0 0
        %1821 = vmatpush2.bf16.msra.mxu0 0
        %1822 = vmatprep.subr.bf16.mxu0 0
        %1823 = vmatpush2.bf16.msra.mxu0 0
        %1824 = vmatprep.subr.bf16.mxu0 0
        %1825 = vmatpush2.bf16.msra.mxu0 0
        %1826 = vmatprep.subr.bf16.mxu0 0
        %1827 = vmatpush2.bf16.msra.mxu0 0
        %1828 = vmatprep.subr.bf16.mxu0 0
        %1829 = vmatpush2.bf16.msra.mxu0 0
        %1830 = vmatprep.subr.bf16.mxu0 0
        %1831 = vmatpush2.bf16.msra.mxu0 0
        %1832 = vmatprep.subr.bf16.mxu0 0
        %1833 = vmatpush2.bf16.msra.mxu0 0
        %1834 = vmatprep.mubr.bf16.mxu0 0
        %1835 = vmatmul.mubr.bf16.gmra.mxu0 %v1749
        %v1836 = vpop.f32.mrf.mxu0
        %v1837 = vadd.f32 0.0, %v1836
        %v1838 = vpop.f32.mrf.mxu0
        %v1839 = vpop.f32.mrf.mxu0
        %v1840 = vpop.f32.mrf.mxu0
        %1841 = vdwg.mxu0
        %s1842 = scalar_lea.vmem %s5, 1
        %v1843 = vld [vmem:[%s1842] sm:$0x1]
        %v1845 = vlaneseq
        %v1846 = vshrl.u32 %v1845, 7
        %v1847 = vsub.s32 0, %v1846
        %v1848 = vrot.slane %v1843, %v1847
        %1849 = vset.pattern.permute.xlu0 0
        %1850 = vperm.xlu0 %1849, %v1848
        %v1851 = vpop.permute.xlu0 %1850
        %v1853 = vmul.f32 %v1837, %v1851
        %v1855 = vsel %vm1211, %v1795, 0
        %v1858 = vsel %vm1262, %v1739, 0
        %1860 = vmatprep.subr.bf16.mxu0 0
        %1861 = vmatpush1.bf16.msra.mxu0 0
        %1862 = vmatprep.subr.bf16.mxu0 0
        %1863 = vmatpush1.bf16.msra.mxu0 0
        %1864 = vmatprep.subr.bf16.mxu0 0
        %1865 = vmatpush1.bf16.msra.mxu0 0
        %1866 = vmatprep.subr.bf16.mxu0 0
        %1867 = vmatpush1.bf16.msra.mxu0 0
        %1868 = vmatprep.subr.bf16.mxu0 0
        %1869 = vmatpush1.bf16.msra.mxu0 0
        %1870 = vmatprep.subr.bf16.mxu0 0
        %1871 = vmatpush1.bf16.msra.mxu0 0
        %1872 = vmatprep.subr.bf16.mxu0 0
        %1873 = vmatpush1.bf16.msra.mxu0 0
        %1874 = vmatprep.subr.bf16.mxu0 0
        %1875 = vmatpush1.bf16.msra.mxu0 %v1858
        %1876 = vmatprep.subr.bf16.mxu0 0
        %1877 = vmatpush2.bf16.msra.mxu0 0
        %1878 = vmatprep.subr.bf16.mxu0 0
        %1879 = vmatpush2.bf16.msra.mxu0 0
        %1880 = vmatprep.subr.bf16.mxu0 0
        %1881 = vmatpush2.bf16.msra.mxu0 0
        %1882 = vmatprep.subr.bf16.mxu0 0
        %1883 = vmatpush2.bf16.msra.mxu0 0
        %1884 = vmatprep.subr.bf16.mxu0 0
        %1885 = vmatpush2.bf16.msra.mxu0 0
        %1886 = vmatprep.subr.bf16.mxu0 0
        %1887 = vmatpush2.bf16.msra.mxu0 0
        %1888 = vmatprep.subr.bf16.mxu0 0
        %1889 = vmatpush2.bf16.msra.mxu0 0
        %1890 = vmatprep.subr.bf16.mxu0 0
        %1891 = vmatpush2.bf16.msra.mxu0 0
        %1892 = vmatprep.mubr.bf16.mxu0 0
        %1893 = vmatmul.mubr.bf16.gmra.mxu0 %v1855
        %v1894 = vpop.f32.mrf.mxu0
        %v1895 = vadd.f32 %v1853, %v1894
        %v1896 = vpop.f32.mrf.mxu0
        %v1897 = vpop.f32.mrf.mxu0
        %v1898 = vpop.f32.mrf.mxu0
        %1899 = vdwg.mxu0
        %s1900 = scalar_lea.vmem %s6, 1
        %v1901 = vld [vmem:[%s1900] sm:$0x1]
        %v1903 = vlaneseq
        %v1904 = vshrl.u32 %v1903, 7
        %v1905 = vsub.s32 0, %v1904
        %v1906 = vrot.slane %v1901, %v1905
        %1907 = vset.pattern.permute.xlu0 0
        %1908 = vperm.xlu0 %1907, %v1906
        %v1909 = vpop.permute.xlu0 %1908
        %v1911 = vmul.f32 %v1797, %v1909
        %1912 = vxpose.xlu0.c.b16.start [1/8] %v1738, 128
        %1913 = vxpose.xlu0.c.b16.cont [2/8] 0, 128
        %1914 = vxpose.xlu0.c.b16.cont [3/8] 0, 128
        %1915 = vxpose.xlu0.c.b16.cont [4/8] 0, 128
        %1916 = vxpose.xlu0.c.b16.cont [5/8] 0, 128
        %1917 = vxpose.xlu0.c.b16.cont [6/8] 0, 128
        %1918 = vxpose.xlu0.c.b16.cont [7/8] 0, 128
        %1919 = vxpose.xlu0.c.b16.end [8/8] 0, 128
        %v1920 = vpop.trf.xlu0
        %v1921 = vpop.trf.xlu0
        %v1922 = vpop.trf.xlu0
        %v1923 = vpop.trf.xlu0
        %v1924 = vpop.trf.xlu0
        %v1925 = vpop.trf.xlu0
        %v1926 = vpop.trf.xlu0
        %v1927 = vpop.trf.xlu0
        %v1929 = vsel %vm1211, %v1920, 0
        %1931 = vmatprep.subr.bf16.mxu0 0
        %1932 = vmatpush1.bf16.msra.mxu0 0
        %1933 = vmatprep.subr.bf16.mxu0 0
        %1934 = vmatpush1.bf16.msra.mxu0 0
        %1935 = vmatprep.subr.bf16.mxu0 0
        %1936 = vmatpush1.bf16.msra.mxu0 0
        %1937 = vmatprep.subr.bf16.mxu0 0
        %1938 = vmatpush1.bf16.msra.mxu0 0
        %1939 = vmatprep.subr.bf16.mxu0 0
        %1940 = vmatpush1.bf16.msra.mxu0 0
        %1941 = vmatprep.subr.bf16.mxu0 0
        %1942 = vmatpush1.bf16.msra.mxu0 0
        %1943 = vmatprep.subr.bf16.mxu0 0
        %1944 = vmatpush1.bf16.msra.mxu0 0
        %1945 = vmatprep.subr.bf16.mxu0 0
        %1946 = vmatpush1.bf16.msra.mxu0 %v1858
        %1947 = vmatprep.subr.bf16.mxu0 0
        %1948 = vmatpush2.bf16.msra.mxu0 0
        %1949 = vmatprep.subr.bf16.mxu0 0
        %1950 = vmatpush2.bf16.msra.mxu0 0
        %1951 = vmatprep.subr.bf16.mxu0 0
        %1952 = vmatpush2.bf16.msra.mxu0 0
        %1953 = vmatprep.subr.bf16.mxu0 0
        %1954 = vmatpush2.bf16.msra.mxu0 0
        %1955 = vmatprep.subr.bf16.mxu0 0
        %1956 = vmatpush2.bf16.msra.mxu0 0
        %1957 = vmatprep.subr.bf16.mxu0 0
        %1958 = vmatpush2.bf16.msra.mxu0 0
        %1959 = vmatprep.subr.bf16.mxu0 0
        %1960 = vmatpush2.bf16.msra.mxu0 0
        %1961 = vmatprep.subr.bf16.mxu0 0
        %1962 = vmatpush2.bf16.msra.mxu0 0
        %1963 = vmatprep.mubr.bf16.mxu0 0
        %1964 = vmatmul.mubr.bf16.gmra.mxu0 %v1929
        %v1965 = vpop.f32.mrf.mxu0
        %v1966 = vadd.f32 %v1911, %v1965
        %v1967 = vpop.f32.mrf.mxu0
        %v1968 = vpop.f32.mrf.mxu0
        %v1969 = vpop.f32.mrf.mxu0
        %1970 = vdwg.mxu0
        %1971 = vst.msk [vmem:[%s1796] sm:$0xff] %vm1211, %v1966
        %v1972 = vsel %vm1211, %v1895, 0.0
        %1973 = vadd.xlane.f32.xlu0 %v1972
        %v1974 = vpop.xlane.xlu0 %1973
        %v1975 = vmul.f32 %v1974, %v1437
        %v1976 = vsub.f32 %v1895, %v1975
        %v1977 = vmul.f32 %v1976, %v1976
        %v1978 = vsel %vm1211, %v1977, 0.0
        %1979 = vadd.xlane.f32.xlu0 %v1978
        %v1980 = vpop.xlane.xlu0 %1979
        %v1981 = vmul.f32 %v1980, %v1437
        %v1982 = vadd.f32 %v1981, 1e-06
        %v1983 = vrsqrt.pop %v1982
        %v1984 = vmul.f32 %v1976, %v1983
        %v1985 = vunpack.c.l.bf16 %v1747
        %v1986 = vmul.f32 %v1984, %v1985
        %v1987 = vpack.c.bf16 %v1986, %v1986
        %s1988 = scalar_lea.vmem %s19, 4
        %v1989 = vld [vmem:[%s1988] sm:$0xf]
        %v1991 = vsel %vm1211, %v1987, 0
        %v1994 = vsel %vm1262, %v1989, 0
        %1996 = vmatprep.subr.bf16.mxu0 0
        %1997 = vmatpush1.bf16.msra.mxu0 0
        %1998 = vmatprep.subr.bf16.mxu0 0
        %1999 = vmatpush1.bf16.msra.mxu0 0
        %2000 = vmatprep.subr.bf16.mxu0 0
        %2001 = vmatpush1.bf16.msra.mxu0 0
        %2002 = vmatprep.subr.bf16.mxu0 0
        %2003 = vmatpush1.bf16.msra.mxu0 0
        %2004 = vmatprep.subr.bf16.mxu0 0
        %2005 = vmatpush1.bf16.msra.mxu0 0
        %2006 = vmatprep.subr.bf16.mxu0 0
        %2007 = vmatpush1.bf16.msra.mxu0 0
        %2008 = vmatprep.subr.bf16.mxu0 0
        %2009 = vmatpush1.bf16.msra.mxu0 0
        %2010 = vmatprep.subr.bf16.mxu0 0
        %2011 = vmatpush1.bf16.msra.mxu0 %v1994
        %2012 = vmatprep.subr.bf16.mxu0 0
        %2013 = vmatpush2.bf16.msra.mxu0 0
        %2014 = vmatprep.subr.bf16.mxu0 0
        %2015 = vmatpush2.bf16.msra.mxu0 0
        %2016 = vmatprep.subr.bf16.mxu0 0
        %2017 = vmatpush2.bf16.msra.mxu0 0
        %2018 = vmatprep.subr.bf16.mxu0 0
        %2019 = vmatpush2.bf16.msra.mxu0 0
        %2020 = vmatprep.subr.bf16.mxu0 0
        %2021 = vmatpush2.bf16.msra.mxu0 0
        %2022 = vmatprep.subr.bf16.mxu0 0
        %2023 = vmatpush2.bf16.msra.mxu0 0
        %2024 = vmatprep.subr.bf16.mxu0 0
        %2025 = vmatpush2.bf16.msra.mxu0 0
        %2026 = vmatprep.subr.bf16.mxu0 0
        %2027 = vmatpush2.bf16.msra.mxu0 0
        %2028 = vmatprep.mubr.bf16.mxu0 0
        %2029 = vmatmul.mubr.bf16.gmra.mxu0 %v1991
        %v2030 = vpop.f32.mrf.mxu0
        %v2031 = vadd.f32 0.0, %v2030
        %v2032 = vpop.f32.mrf.mxu0
        %v2033 = vpop.f32.mrf.mxu0
        %v2034 = vpop.f32.mrf.mxu0
        %2035 = vdwg.mxu0
        %v2037 = vsel %vm1211, %v1450, 0
        %v2040 = vsel %vm1262, %v1451, 0
        %2042 = vmatprep.subr.bf16.mxu0 0
        %2043 = vmatpush1.bf16.msra.mxu0 0
        %2044 = vmatprep.subr.bf16.mxu0 0
        %2045 = vmatpush1.bf16.msra.mxu0 0
        %2046 = vmatprep.subr.bf16.mxu0 0
        %2047 = vmatpush1.bf16.msra.mxu0 0
        %2048 = vmatprep.subr.bf16.mxu0 0
        %2049 = vmatpush1.bf16.msra.mxu0 0
        %2050 = vmatprep.subr.bf16.mxu0 0
        %2051 = vmatpush1.bf16.msra.mxu0 0
        %2052 = vmatprep.subr.bf16.mxu0 0
        %2053 = vmatpush1.bf16.msra.mxu0 0
        %2054 = vmatprep.subr.bf16.mxu0 0
        %2055 = vmatpush1.bf16.msra.mxu0 0
        %2056 = vmatprep.subr.bf16.mxu0 0
        %2057 = vmatpush1.bf16.msra.mxu0 %v2040
        %2058 = vmatprep.subr.bf16.mxu0 0
        %2059 = vmatpush2.bf16.msra.mxu0 0
        %2060 = vmatprep.subr.bf16.mxu0 0
        %2061 = vmatpush2.bf16.msra.mxu0 0
        %2062 = vmatprep.subr.bf16.mxu0 0
        %2063 = vmatpush2.bf16.msra.mxu0 0
        %2064 = vmatprep.subr.bf16.mxu0 0
        %2065 = vmatpush2.bf16.msra.mxu0 0
        %2066 = vmatprep.subr.bf16.mxu0 0
        %2067 = vmatpush2.bf16.msra.mxu0 0
        %2068 = vmatprep.subr.bf16.mxu0 0
        %2069 = vmatpush2.bf16.msra.mxu0 0
        %2070 = vmatprep.subr.bf16.mxu0 0
        %2071 = vmatpush2.bf16.msra.mxu0 0
        %2072 = vmatprep.subr.bf16.mxu0 0
        %2073 = vmatpush2.bf16.msra.mxu0 0
        %2074 = vmatprep.mubr.bf16.mxu0 0
        %2075 = vmatmul.mubr.bf16.gmra.mxu0 %v2037
        %v2076 = vpop.f32.mrf.mxu0
        %v2077 = vadd.f32 %v2031, %v2076
        %v2078 = vpop.f32.mrf.mxu0
        %v2079 = vpop.f32.mrf.mxu0
        %v2080 = vpop.f32.mrf.mxu0
        %2081 = vdwg.mxu0
        %s2082 = scalar_lea.vmem %s11, 32
        %v2083 = vld [vmem:[%s2082] sm:$0xf]
        %v2084 = vld [vmem:[%s2082 + $0x4] sm:$0xf]
        %v2085 = vld [vmem:[%s2082 + $0x8] sm:$0xf]
        %v2086 = vld [vmem:[%s2082 + $0xc] sm:$0xf]
        %s2087 = scalar_lea.vmem %s12, 2
        %v2088 = vld [vmem:[%s2087] sm:$0x1]
        %v2090 = vlaneseq
        %v2091 = vshrl.u32 %v2090, 7
        %v2092 = vsub.s32 0, %v2091
        %v2093 = vrot.slane %v2088, %v2092
        %v2099 = vunpack.c.l.b16 %v2083
        %v2100 = vunpack.c.l.b16 %v2084
        %v2101 = vunpack.c.l.b16 %v2085
        %v2102 = vunpack.c.l.b16 %v2086
        %v2103 = vpack.c.b16 %v2100, %v2099
        %v2104 = vpack.c.b16 %v2102, %v2101
        %2107 = vmatprep.subr.bf16.mxu0 0
        %2108 = vmatpush1.bf16.msra.mxu0 0
        %2109 = vmatprep.subr.bf16.mxu0 0
        %2110 = vmatpush1.bf16.msra.mxu0 0
        %2111 = vmatprep.subr.bf16.mxu0 0
        %2112 = vmatpush1.bf16.msra.mxu0 0
        %2113 = vmatprep.subr.bf16.mxu0 0
        %2114 = vmatpush1.bf16.msra.mxu0 0
        %2115 = vmatprep.subr.bf16.mxu0 0
        %2116 = vmatpush1.bf16.msra.mxu0 0
        %2117 = vmatprep.subr.bf16.mxu0 0
        %2118 = vmatpush1.bf16.msra.mxu0 0
        %2119 = vmatprep.subr.bf16.mxu0 0
        %2120 = vmatpush1.bf16.msra.mxu0 %v2104
        %2121 = vmatprep.subr.bf16.mxu0 0
        %2122 = vmatpush1.bf16.msra.mxu0 %v2103
        %2123 = vmatprep.subr.bf16.mxu0 0
        %2124 = vmatpush2.bf16.msra.mxu0 0
        %2125 = vmatprep.subr.bf16.mxu0 0
        %2126 = vmatpush2.bf16.msra.mxu0 0
        %2127 = vmatprep.subr.bf16.mxu0 0
        %2128 = vmatpush2.bf16.msra.mxu0 0
        %2129 = vmatprep.subr.bf16.mxu0 0
        %2130 = vmatpush2.bf16.msra.mxu0 0
        %2131 = vmatprep.subr.bf16.mxu0 0
        %2132 = vmatpush2.bf16.msra.mxu0 0
        %2133 = vmatprep.subr.bf16.mxu0 0
        %2134 = vmatpush2.bf16.msra.mxu0 0
        %2135 = vmatprep.subr.bf16.mxu0 0
        %2136 = vmatpush2.bf16.msra.mxu0 0
        %2137 = vmatprep.subr.bf16.mxu0 0
        %2138 = vmatpush2.bf16.msra.mxu0 0
        %2139 = vmatprep.mubr.bf16.mxu0 0
        %2140 = vmatmul.mubr.bf16.gmra.mxu0 %v947
        %v2141 = vpop.f32.mrf.mxu0
        %v2142 = vadd.f32 %v2093, %v2141
        %v2143 = vpop.f32.mrf.mxu0
        %v2144 = vpop.f32.mrf.mxu0
        %v2145 = vpop.f32.mrf.mxu0
        %2146 = vdwg.mxu0
        %s2147 = scalar_lea.vmem %s13, 32
        %v2148 = vld [vmem:[%s2147] sm:$0xf]
        %v2149 = vld [vmem:[%s2147 + $0x4] sm:$0xf]
        %v2150 = vld [vmem:[%s2147 + $0x8] sm:$0xf]
        %v2151 = vld [vmem:[%s2147 + $0xc] sm:$0xf]
        %s2152 = scalar_lea.vmem %s14, 2
        %v2153 = vld [vmem:[%s2152] sm:$0x1]
        %v2155 = vlaneseq
        %v2156 = vshrl.u32 %v2155, 7
        %v2157 = vsub.s32 0, %v2156
        %v2158 = vrot.slane %v2153, %v2157
        %v2164 = vunpack.c.l.b16 %v2148
        %v2165 = vunpack.c.l.b16 %v2149
        %v2166 = vunpack.c.l.b16 %v2150
        %v2167 = vunpack.c.l.b16 %v2151
        %v2168 = vpack.c.b16 %v2165, %v2164
        %v2169 = vpack.c.b16 %v2167, %v2166
        %2172 = vmatprep.subr.bf16.mxu0 0
        %2173 = vmatpush1.bf16.msra.mxu0 0
        %2174 = vmatprep.subr.bf16.mxu0 0
        %2175 = vmatpush1.bf16.msra.mxu0 0
        %2176 = vmatprep.subr.bf16.mxu0 0
        %2177 = vmatpush1.bf16.msra.mxu0 0
        %2178 = vmatprep.subr.bf16.mxu0 0
        %2179 = vmatpush1.bf16.msra.mxu0 0
        %2180 = vmatprep.subr.bf16.mxu0 0
        %2181 = vmatpush1.bf16.msra.mxu0 0
        %2182 = vmatprep.subr.bf16.mxu0 0
        %2183 = vmatpush1.bf16.msra.mxu0 0
        %2184 = vmatprep.subr.bf16.mxu0 0
        %2185 = vmatpush1.bf16.msra.mxu0 %v2169
        %2186 = vmatprep.subr.bf16.mxu0 0
        %2187 = vmatpush1.bf16.msra.mxu0 %v2168
        %2188 = vmatprep.subr.bf16.mxu0 0
        %2189 = vmatpush2.bf16.msra.mxu0 0
        %2190 = vmatprep.subr.bf16.mxu0 0
        %2191 = vmatpush2.bf16.msra.mxu0 0
        %2192 = vmatprep.subr.bf16.mxu0 0
        %2193 = vmatpush2.bf16.msra.mxu0 0
        %2194 = vmatprep.subr.bf16.mxu0 0
        %2195 = vmatpush2.bf16.msra.mxu0 0
        %2196 = vmatprep.subr.bf16.mxu0 0
        %2197 = vmatpush2.bf16.msra.mxu0 0
        %2198 = vmatprep.subr.bf16.mxu0 0
        %2199 = vmatpush2.bf16.msra.mxu0 0
        %2200 = vmatprep.subr.bf16.mxu0 0
        %2201 = vmatpush2.bf16.msra.mxu0 0
        %2202 = vmatprep.subr.bf16.mxu0 0
        %2203 = vmatpush2.bf16.msra.mxu0 0
        %2204 = vmatprep.mubr.bf16.mxu0 0
        %2205 = vmatmul.mubr.bf16.gmra.mxu0 %v947
        %v2206 = vpop.f32.mrf.mxu0
        %v2207 = vadd.f32 %v2158, %v2206
        %v2208 = vpop.f32.mrf.mxu0
        %v2209 = vpop.f32.mrf.mxu0
        %v2210 = vpop.f32.mrf.mxu0
        %2211 = vdwg.mxu0
        %s2212 = scalar_lea.vmem %s15, 32
        %v2213 = vld [vmem:[%s2212] sm:$0xf]
        %v2214 = vld [vmem:[%s2212 + $0x4] sm:$0xf]
        %v2215 = vld [vmem:[%s2212 + $0x8] sm:$0xf]
        %v2216 = vld [vmem:[%s2212 + $0xc] sm:$0xf]
        %s2217 = scalar_lea.vmem %s16, 2
        %v2218 = vld [vmem:[%s2217] sm:$0x1]
        %v2220 = vlaneseq
        %v2221 = vshrl.u32 %v2220, 7
        %v2222 = vsub.s32 0, %v2221
        %v2223 = vrot.slane %v2218, %v2222
        %v2229 = vunpack.c.l.b16 %v2213
        %v2230 = vunpack.c.l.b16 %v2214
        %v2231 = vunpack.c.l.b16 %v2215
        %v2232 = vunpack.c.l.b16 %v2216
        %v2233 = vpack.c.b16 %v2230, %v2229
        %v2234 = vpack.c.b16 %v2232, %v2231
        %2237 = vmatprep.subr.bf16.mxu0 0
        %2238 = vmatpush1.bf16.msra.mxu0 0
        %2239 = vmatprep.subr.bf16.mxu0 0
        %2240 = vmatpush1.bf16.msra.mxu0 0
        %2241 = vmatprep.subr.bf16.mxu0 0
        %2242 = vmatpush1.bf16.msra.mxu0 0
        %2243 = vmatprep.subr.bf16.mxu0 0
        %2244 = vmatpush1.bf16.msra.mxu0 0
        %2245 = vmatprep.subr.bf16.mxu0 0
        %2246 = vmatpush1.bf16.msra.mxu0 0
        %2247 = vmatprep.subr.bf16.mxu0 0
        %2248 = vmatpush1.bf16.msra.mxu0 0
        %2249 = vmatprep.subr.bf16.mxu0 0
        %2250 = vmatpush1.bf16.msra.mxu0 %v2234
        %2251 = vmatprep.subr.bf16.mxu0 0
        %2252 = vmatpush1.bf16.msra.mxu0 %v2233
        %2253 = vmatprep.subr.bf16.mxu0 0
        %2254 = vmatpush2.bf16.msra.mxu0 0
        %2255 = vmatprep.subr.bf16.mxu0 0
        %2256 = vmatpush2.bf16.msra.mxu0 0
        %2257 = vmatprep.subr.bf16.mxu0 0
        %2258 = vmatpush2.bf16.msra.mxu0 0
        %2259 = vmatprep.subr.bf16.mxu0 0
        %2260 = vmatpush2.bf16.msra.mxu0 0
        %2261 = vmatprep.subr.bf16.mxu0 0
        %2262 = vmatpush2.bf16.msra.mxu0 0
        %2263 = vmatprep.subr.bf16.mxu0 0
        %2264 = vmatpush2.bf16.msra.mxu0 0
        %2265 = vmatprep.subr.bf16.mxu0 0
        %2266 = vmatpush2.bf16.msra.mxu0 0
        %2267 = vmatprep.subr.bf16.mxu0 0
        %2268 = vmatpush2.bf16.msra.mxu0 0
        %2269 = vmatprep.mubr.bf16.mxu0 0
        %2270 = vmatmul.mubr.bf16.gmra.mxu0 %v947
        %v2271 = vpop.f32.mrf.mxu0
        %v2272 = vadd.f32 %v2223, %v2271
        %v2273 = vpop.f32.mrf.mxu0
        %v2274 = vpop.f32.mrf.mxu0
        %v2275 = vpop.f32.mrf.mxu0
        %2276 = vdwg.mxu0
        %s2277 = scalar_lea.vmem %s17, 32
        %v2278 = vld [vmem:[%s2277] sm:$0xf]
        %v2279 = vld [vmem:[%s2277 + $0x4] sm:$0xf]
        %v2280 = vld [vmem:[%s2277 + $0x8] sm:$0xf]
        %v2281 = vld [vmem:[%s2277 + $0xc] sm:$0xf]
        %s2282 = scalar_lea.vmem %s18, 2
        %v2283 = vld [vmem:[%s2282] sm:$0x1]
        %v2285 = vlaneseq
        %v2286 = vshrl.u32 %v2285, 7
        %v2287 = vsub.s32 0, %v2286
        %v2288 = vrot.slane %v2283, %v2287
        %v2294 = vunpack.c.l.b16 %v2278
        %v2295 = vunpack.c.l.b16 %v2279
        %v2296 = vunpack.c.l.b16 %v2280
        %v2297 = vunpack.c.l.b16 %v2281
        %v2298 = vpack.c.b16 %v2295, %v2294
        %v2299 = vpack.c.b16 %v2297, %v2296
        %2302 = vmatprep.subr.bf16.mxu0 0
        %2303 = vmatpush1.bf16.msra.mxu0 0
        %2304 = vmatprep.subr.bf16.mxu0 0
        %2305 = vmatpush1.bf16.msra.mxu0 0
        %2306 = vmatprep.subr.bf16.mxu0 0
        %2307 = vmatpush1.bf16.msra.mxu0 0
        %2308 = vmatprep.subr.bf16.mxu0 0
        %2309 = vmatpush1.bf16.msra.mxu0 0
        %2310 = vmatprep.subr.bf16.mxu0 0
        %2311 = vmatpush1.bf16.msra.mxu0 0
        %2312 = vmatprep.subr.bf16.mxu0 0
        %2313 = vmatpush1.bf16.msra.mxu0 0
        %2314 = vmatprep.subr.bf16.mxu0 0
        %2315 = vmatpush1.bf16.msra.mxu0 %v2299
        %2316 = vmatprep.subr.bf16.mxu0 0
        %2317 = vmatpush1.bf16.msra.mxu0 %v2298
        %2318 = vmatprep.subr.bf16.mxu0 0
        %2319 = vmatpush2.bf16.msra.mxu0 0
        %2320 = vmatprep.subr.bf16.mxu0 0
        %2321 = vmatpush2.bf16.msra.mxu0 0
        %2322 = vmatprep.subr.bf16.mxu0 0
        %2323 = vmatpush2.bf16.msra.mxu0 0
        %2324 = vmatprep.subr.bf16.mxu0 0
        %2325 = vmatpush2.bf16.msra.mxu0 0
        %2326 = vmatprep.subr.bf16.mxu0 0
        %2327 = vmatpush2.bf16.msra.mxu0 0
        %2328 = vmatprep.subr.bf16.mxu0 0
        %2329 = vmatpush2.bf16.msra.mxu0 0
        %2330 = vmatprep.subr.bf16.mxu0 0
        %2331 = vmatpush2.bf16.msra.mxu0 0
        %2332 = vmatprep.subr.bf16.mxu0 0
        %2333 = vmatpush2.bf16.msra.mxu0 0
        %2334 = vmatprep.mubr.bf16.mxu0 0
        %2335 = vmatmul.mubr.bf16.gmra.mxu0 %v947
        %v2336 = vpop.f32.mrf.mxu0
        %v2337 = vadd.f32 %v2288, %v2336
        %v2338 = vpop.f32.mrf.mxu0
        %v2339 = vpop.f32.mrf.mxu0
        %v2340 = vpop.f32.mrf.mxu0
        %2341 = vdwg.mxu0
        %s2342 = scalar_lea.vmem %s2, 16
        %v2343 = vld [vmem:[%s2342] sm:$0xff]
        %2345 = vset.pattern.permute.xlu0 0
        %2346 = vperm.xlu0 %2345, %v2343
        %v2347 = vpop.permute.xlu0 %2346
        %v2349 = vmul.f32 %v2142, %v2347
        %v2350 = vpack.c.bf16 %v2349, %v2349
        %s2351 = scalar_lea.vmem %s3, 16
        %v2352 = vld [vmem:[%s2351] sm:$0xff]
        %2354 = vset.pattern.permute.xlu0 0
        %2355 = vperm.xlu0 %2354, %v2352
        %v2356 = vpop.permute.xlu0 %2355
        %v2358 = vmul.f32 %v2207, %v2356
        %v2359 = vpack.c.bf16 %v2358, %v2358
        %s2360 = scalar_lea.vmem %s4, 16
        %v2361 = vld [vmem:[%s2360] sm:$0xff]
        %2363 = vset.pattern.permute.xlu0 0
        %2364 = vperm.xlu0 %2363, %v2361
        %v2365 = vpop.permute.xlu0 %2364
        %v2367 = vmul.f32 %v2207, %v2365
        %v2368 = vpack.c.bf16 %v2367, %v2367
        %v2369 = vpack.c.bf16 %v2272, %v2272
        %v2370 = vxor.u32 %v2337, 2147483648
        %v2371 = vmul.f32 %v2370, 1.442695
        %v2372 = vpow.pop %v2371
        %v2373 = vadd.f32 %v2372, 1.0
        %v2374 = vrcp.pop %v2373
        %v2375 = vmul.f32 1.0, %v2374
        %v2376 = vmul.f32 %v2337, %v2375
        %v2377 = vpack.c.bf16 %v2376, %v2376
        %v2379 = vsel %vm1211, %v2350, 0
        %v2382 = vsel %vm1211, %v2359, 0
        %2384 = vmatprep.subr.bf16.mxu0 0
        %2385 = vmatpush1.bf16.xpose.msra.mxu0 0
        %2386 = vmatprep.subr.bf16.mxu0 0
        %2387 = vmatpush1.bf16.xpose.msra.mxu0 0
        %2388 = vmatprep.subr.bf16.mxu0 0
        %2389 = vmatpush1.bf16.xpose.msra.mxu0 0
        %2390 = vmatprep.subr.bf16.mxu0 0
        %2391 = vmatpush1.bf16.xpose.msra.mxu0 0
        %2392 = vmatprep.subr.bf16.mxu0 0
        %2393 = vmatpush1.bf16.xpose.msra.mxu0 0
        %2394 = vmatprep.subr.bf16.mxu0 0
        %2395 = vmatpush1.bf16.xpose.msra.mxu0 0
        %2396 = vmatprep.subr.bf16.mxu0 0
        %2397 = vmatpush1.bf16.xpose.msra.mxu0 0
        %2398 = vmatprep.subr.bf16.mxu0 0
        %2399 = vmatpush1.bf16.xpose.msra.mxu0 %v2382
        %2400 = vmatprep.subr.bf16.mxu0 0
        %2401 = vmatpush2.bf16.xpose.msra.mxu0 0
        %2402 = vmatprep.subr.bf16.mxu0 0
        %2403 = vmatpush2.bf16.xpose.msra.mxu0 0
        %2404 = vmatprep.subr.bf16.mxu0 0
        %2405 = vmatpush2.bf16.xpose.msra.mxu0 0
        %2406 = vmatprep.subr.bf16.mxu0 0
        %2407 = vmatpush2.bf16.xpose.msra.mxu0 0
        %2408 = vmatprep.subr.bf16.mxu0 0
        %2409 = vmatpush2.bf16.xpose.msra.mxu0 0
        %2410 = vmatprep.subr.bf16.mxu0 0
        %2411 = vmatpush2.bf16.xpose.msra.mxu0 0
        %2412 = vmatprep.subr.bf16.mxu0 0
        %2413 = vmatpush2.bf16.xpose.msra.mxu0 0
        %2414 = vmatprep.subr.bf16.mxu0 0
        %2415 = vmatpush2.bf16.xpose.msra.mxu0 0
        %2416 = vmatprep.mubr.bf16.mxu0 0
        %2417 = vmatmul.mubr.bf16.gmra.mxu0 %v2379
        %v2418 = vpop.f32.mrf.mxu0
        %v2419 = vadd.f32 0.0, %v2418
        %v2420 = vpop.f32.mrf.mxu0
        %v2421 = vpop.f32.mrf.mxu0
        %v2422 = vpop.f32.mrf.mxu0
        %2423 = vdwg.mxu0
        %v2424 = vsel %vm922, %v2419, 0.0
        %v2425 = vpack.c.bf16 %v2424, %v2424
        %s2426 = scalar_lea.vmem [#allocation2], 16
        %v2427 = vld [vmem:[%s2426] sm:$0xff]
        %v2428 = vpack.c.bf16 %v2427, %v2427
        %v2430 = vsel %vm1262, %v2428, 0
        %2432 = vmatprep.subr.bf16.mxu0 0
        %2433 = vmatpush1.bf16.msra.mxu0 0
        %2434 = vmatprep.subr.bf16.mxu0 0
        %2435 = vmatpush1.bf16.msra.mxu0 0
        %2436 = vmatprep.subr.bf16.mxu0 0
        %2437 = vmatpush1.bf16.msra.mxu0 0
        %2438 = vmatprep.subr.bf16.mxu0 0
        %2439 = vmatpush1.bf16.msra.mxu0 0
        %2440 = vmatprep.subr.bf16.mxu0 0
        %2441 = vmatpush1.bf16.msra.mxu0 0
        %2442 = vmatprep.subr.bf16.mxu0 0
        %2443 = vmatpush1.bf16.msra.mxu0 0
        %2444 = vmatprep.subr.bf16.mxu0 0
        %2445 = vmatpush1.bf16.msra.mxu0 0
        %2446 = vmatprep.subr.bf16.mxu0 0
        %2447 = vmatpush1.bf16.msra.mxu0 %v2430
        %2448 = vmatprep.subr.bf16.mxu0 0
        %2449 = vmatpush2.bf16.msra.mxu0 0
        %2450 = vmatprep.subr.bf16.mxu0 0
        %2451 = vmatpush2.bf16.msra.mxu0 0
        %2452 = vmatprep.subr.bf16.mxu0 0
        %2453 = vmatpush2.bf16.msra.mxu0 0
        %2454 = vmatprep.subr.bf16.mxu0 0
        %2455 = vmatpush2.bf16.msra.mxu0 0
        %2456 = vmatprep.subr.bf16.mxu0 0
        %2457 = vmatpush2.bf16.msra.mxu0 0
        %2458 = vmatprep.subr.bf16.mxu0 0
        %2459 = vmatpush2.bf16.msra.mxu0 0
        %2460 = vmatprep.subr.bf16.mxu0 0
        %2461 = vmatpush2.bf16.msra.mxu0 0
        %2462 = vmatprep.subr.bf16.mxu0 0
        %2463 = vmatpush2.bf16.msra.mxu0 0
        %2464 = vmatprep.mubr.bf16.mxu0 0
        %2465 = vmatmul.mubr.bf16.gmra.mxu0 %v2379
        %v2466 = vpop.f32.mrf.mxu0
        %v2467 = vadd.f32 0.0, %v2466
        %v2468 = vpop.f32.mrf.mxu0
        %v2469 = vpop.f32.mrf.mxu0
        %v2470 = vpop.f32.mrf.mxu0
        %2471 = vdwg.mxu0
        %s2472 = scalar_lea.vmem %s5, 2
        %v2473 = vld [vmem:[%s2472] sm:$0x1]
        %v2475 = vlaneseq
        %v2476 = vshrl.u32 %v2475, 7
        %v2477 = vsub.s32 0, %v2476
        %v2478 = vrot.slane %v2473, %v2477
        %2479 = vset.pattern.permute.xlu0 0
        %2480 = vperm.xlu0 %2479, %v2478
        %v2481 = vpop.permute.xlu0 %2480
        %v2483 = vmul.f32 %v2467, %v2481
        %v2485 = vsel %vm1211, %v2425, 0
        %v2488 = vsel %vm1262, %v2369, 0
        %2490 = vmatprep.subr.bf16.mxu0 0
        %2491 = vmatpush1.bf16.msra.mxu0 0
        %2492 = vmatprep.subr.bf16.mxu0 0
        %2493 = vmatpush1.bf16.msra.mxu0 0
        %2494 = vmatprep.subr.bf16.mxu0 0
        %2495 = vmatpush1.bf16.msra.mxu0 0
        %2496 = vmatprep.subr.bf16.mxu0 0
        %2497 = vmatpush1.bf16.msra.mxu0 0
        %2498 = vmatprep.subr.bf16.mxu0 0
        %2499 = vmatpush1.bf16.msra.mxu0 0
        %2500 = vmatprep.subr.bf16.mxu0 0
        %2501 = vmatpush1.bf16.msra.mxu0 0
        %2502 = vmatprep.subr.bf16.mxu0 0
        %2503 = vmatpush1.bf16.msra.mxu0 0
        %2504 = vmatprep.subr.bf16.mxu0 0
        %2505 = vmatpush1.bf16.msra.mxu0 %v2488
        %2506 = vmatprep.subr.bf16.mxu0 0
        %2507 = vmatpush2.bf16.msra.mxu0 0
        %2508 = vmatprep.subr.bf16.mxu0 0
        %2509 = vmatpush2.bf16.msra.mxu0 0
        %2510 = vmatprep.subr.bf16.mxu0 0
        %2511 = vmatpush2.bf16.msra.mxu0 0
        %2512 = vmatprep.subr.bf16.mxu0 0
        %2513 = vmatpush2.bf16.msra.mxu0 0
        %2514 = vmatprep.subr.bf16.mxu0 0
        %2515 = vmatpush2.bf16.msra.mxu0 0
        %2516 = vmatprep.subr.bf16.mxu0 0
        %2517 = vmatpush2.bf16.msra.mxu0 0
        %2518 = vmatprep.subr.bf16.mxu0 0
        %2519 = vmatpush2.bf16.msra.mxu0 0
        %2520 = vmatprep.subr.bf16.mxu0 0
        %2521 = vmatpush2.bf16.msra.mxu0 0
        %2522 = vmatprep.mubr.bf16.mxu0 0
        %2523 = vmatmul.mubr.bf16.gmra.mxu0 %v2485
        %v2524 = vpop.f32.mrf.mxu0
        %v2525 = vadd.f32 %v2483, %v2524
        %v2526 = vpop.f32.mrf.mxu0
        %v2527 = vpop.f32.mrf.mxu0
        %v2528 = vpop.f32.mrf.mxu0
        %2529 = vdwg.mxu0
        %s2530 = scalar_lea.vmem %s6, 2
        %v2531 = vld [vmem:[%s2530] sm:$0x1]
        %v2533 = vlaneseq
        %v2534 = vshrl.u32 %v2533, 7
        %v2535 = vsub.s32 0, %v2534
        %v2536 = vrot.slane %v2531, %v2535
        %2537 = vset.pattern.permute.xlu0 0
        %2538 = vperm.xlu0 %2537, %v2536
        %v2539 = vpop.permute.xlu0 %2538
        %v2541 = vmul.f32 %v2427, %v2539
        %2542 = vxpose.xlu0.c.b16.start [1/8] %v2368, 128
        %2543 = vxpose.xlu0.c.b16.cont [2/8] 0, 128
        %2544 = vxpose.xlu0.c.b16.cont [3/8] 0, 128
        %2545 = vxpose.xlu0.c.b16.cont [4/8] 0, 128
        %2546 = vxpose.xlu0.c.b16.cont [5/8] 0, 128
        %2547 = vxpose.xlu0.c.b16.cont [6/8] 0, 128
        %2548 = vxpose.xlu0.c.b16.cont [7/8] 0, 128
        %2549 = vxpose.xlu0.c.b16.end [8/8] 0, 128
        %v2550 = vpop.trf.xlu0
        %v2551 = vpop.trf.xlu0
        %v2552 = vpop.trf.xlu0
        %v2553 = vpop.trf.xlu0
        %v2554 = vpop.trf.xlu0
        %v2555 = vpop.trf.xlu0
        %v2556 = vpop.trf.xlu0
        %v2557 = vpop.trf.xlu0
        %v2559 = vsel %vm1211, %v2550, 0
        %2561 = vmatprep.subr.bf16.mxu0 0
        %2562 = vmatpush1.bf16.msra.mxu0 0
        %2563 = vmatprep.subr.bf16.mxu0 0
        %2564 = vmatpush1.bf16.msra.mxu0 0
        %2565 = vmatprep.subr.bf16.mxu0 0
        %2566 = vmatpush1.bf16.msra.mxu0 0
        %2567 = vmatprep.subr.bf16.mxu0 0
        %2568 = vmatpush1.bf16.msra.mxu0 0
        %2569 = vmatprep.subr.bf16.mxu0 0
        %2570 = vmatpush1.bf16.msra.mxu0 0
        %2571 = vmatprep.subr.bf16.mxu0 0
        %2572 = vmatpush1.bf16.msra.mxu0 0
        %2573 = vmatprep.subr.bf16.mxu0 0
        %2574 = vmatpush1.bf16.msra.mxu0 0
        %2575 = vmatprep.subr.bf16.mxu0 0
        %2576 = vmatpush1.bf16.msra.mxu0 %v2488
        %2577 = vmatprep.subr.bf16.mxu0 0
        %2578 = vmatpush2.bf16.msra.mxu0 0
        %2579 = vmatprep.subr.bf16.mxu0 0
        %2580 = vmatpush2.bf16.msra.mxu0 0
        %2581 = vmatprep.subr.bf16.mxu0 0
        %2582 = vmatpush2.bf16.msra.mxu0 0
        %2583 = vmatprep.subr.bf16.mxu0 0
        %2584 = vmatpush2.bf16.msra.mxu0 0
        %2585 = vmatprep.subr.bf16.mxu0 0
        %2586 = vmatpush2.bf16.msra.mxu0 0
        %2587 = vmatprep.subr.bf16.mxu0 0
        %2588 = vmatpush2.bf16.msra.mxu0 0
        %2589 = vmatprep.subr.bf16.mxu0 0
        %2590 = vmatpush2.bf16.msra.mxu0 0
        %2591 = vmatprep.subr.bf16.mxu0 0
        %2592 = vmatpush2.bf16.msra.mxu0 0
        %2593 = vmatprep.mubr.bf16.mxu0 0
        %2594 = vmatmul.mubr.bf16.gmra.mxu0 %v2559
        %v2595 = vpop.f32.mrf.mxu0
        %v2596 = vadd.f32 %v2541, %v2595
        %v2597 = vpop.f32.mrf.mxu0
        %v2598 = vpop.f32.mrf.mxu0
        %v2599 = vpop.f32.mrf.mxu0
        %2600 = vdwg.mxu0
        %2601 = vst.msk [vmem:[%s2426] sm:$0xff] %vm1211, %v2596
        %v2602 = vsel %vm1211, %v2525, 0.0
        %2603 = vadd.xlane.f32.xlu0 %v2602
        %v2604 = vpop.xlane.xlu0 %2603
        %v2605 = vmul.f32 %v2604, %v1437
        %v2606 = vsub.f32 %v2525, %v2605
        %v2607 = vmul.f32 %v2606, %v2606
        %v2608 = vsel %vm1211, %v2607, 0.0
        %2609 = vadd.xlane.f32.xlu0 %v2608
        %v2610 = vpop.xlane.xlu0 %2609
        %v2611 = vmul.f32 %v2610, %v1437
        %v2612 = vadd.f32 %v2611, 1e-06
        %v2613 = vrsqrt.pop %v2612
        %v2614 = vmul.f32 %v2606, %v2613
        %v2615 = vunpack.c.l.bf16 %v2377
        %v2616 = vmul.f32 %v2614, %v2615
        %v2617 = vpack.c.bf16 %v2616, %v2616
        %s2618 = scalar_lea.vmem %s19, 8
        %v2619 = vld [vmem:[%s2618] sm:$0xf]
        %v2621 = vsel %vm1211, %v2617, 0
        %v2624 = vsel %vm1262, %v2619, 0
        %2626 = vmatprep.subr.bf16.mxu0 0
        %2627 = vmatpush1.bf16.msra.mxu0 0
        %2628 = vmatprep.subr.bf16.mxu0 0
        %2629 = vmatpush1.bf16.msra.mxu0 0
        %2630 = vmatprep.subr.bf16.mxu0 0
        %2631 = vmatpush1.bf16.msra.mxu0 0
        %2632 = vmatprep.subr.bf16.mxu0 0
        %2633 = vmatpush1.bf16.msra.mxu0 0
        %2634 = vmatprep.subr.bf16.mxu0 0
        %2635 = vmatpush1.bf16.msra.mxu0 0
        %2636 = vmatprep.subr.bf16.mxu0 0
        %2637 = vmatpush1.bf16.msra.mxu0 0
        %2638 = vmatprep.subr.bf16.mxu0 0
        %2639 = vmatpush1.bf16.msra.mxu0 0
        %2640 = vmatprep.subr.bf16.mxu0 0
        %2641 = vmatpush1.bf16.msra.mxu0 %v2624
        %2642 = vmatprep.subr.bf16.mxu0 0
        %2643 = vmatpush2.bf16.msra.mxu0 0
        %2644 = vmatprep.subr.bf16.mxu0 0
        %2645 = vmatpush2.bf16.msra.mxu0 0
        %2646 = vmatprep.subr.bf16.mxu0 0
        %2647 = vmatpush2.bf16.msra.mxu0 0
        %2648 = vmatprep.subr.bf16.mxu0 0
        %2649 = vmatpush2.bf16.msra.mxu0 0
        %2650 = vmatprep.subr.bf16.mxu0 0
        %2651 = vmatpush2.bf16.msra.mxu0 0
        %2652 = vmatprep.subr.bf16.mxu0 0
        %2653 = vmatpush2.bf16.msra.mxu0 0
        %2654 = vmatprep.subr.bf16.mxu0 0
        %2655 = vmatpush2.bf16.msra.mxu0 0
        %2656 = vmatprep.subr.bf16.mxu0 0
        %2657 = vmatpush2.bf16.msra.mxu0 0
        %2658 = vmatprep.mubr.bf16.mxu0 0
        %2659 = vmatmul.mubr.bf16.gmra.mxu0 %v2621
        %v2660 = vpop.f32.mrf.mxu0
        %v2661 = vadd.f32 0.0, %v2660
        %v2662 = vpop.f32.mrf.mxu0
        %v2663 = vpop.f32.mrf.mxu0
        %v2664 = vpop.f32.mrf.mxu0
        %2665 = vdwg.mxu0
        %v2666 = vadd.f32 %v2077, %v2661
        %s2667 = scalar_lea.vmem %s11, 48
        %v2668 = vld [vmem:[%s2667] sm:$0xf]
        %v2669 = vld [vmem:[%s2667 + $0x4] sm:$0xf]
        %v2670 = vld [vmem:[%s2667 + $0x8] sm:$0xf]
        %v2671 = vld [vmem:[%s2667 + $0xc] sm:$0xf]
        %s2672 = scalar_lea.vmem %s12, 3
        %v2673 = vld [vmem:[%s2672] sm:$0x1]
        %v2675 = vlaneseq
        %v2676 = vshrl.u32 %v2675, 7
        %v2677 = vsub.s32 0, %v2676
        %v2678 = vrot.slane %v2673, %v2677
        %v2684 = vunpack.c.l.b16 %v2668
        %v2685 = vunpack.c.l.b16 %v2669
        %v2686 = vunpack.c.l.b16 %v2670
        %v2687 = vunpack.c.l.b16 %v2671
        %v2688 = vpack.c.b16 %v2685, %v2684
        %v2689 = vpack.c.b16 %v2687, %v2686
        %2692 = vmatprep.subr.bf16.mxu0 0
        %2693 = vmatpush1.bf16.msra.mxu0 0
        %2694 = vmatprep.subr.bf16.mxu0 0
        %2695 = vmatpush1.bf16.msra.mxu0 0
        %2696 = vmatprep.subr.bf16.mxu0 0
        %2697 = vmatpush1.bf16.msra.mxu0 0
        %2698 = vmatprep.subr.bf16.mxu0 0
        %2699 = vmatpush1.bf16.msra.mxu0 0
        %2700 = vmatprep.subr.bf16.mxu0 0
        %2701 = vmatpush1.bf16.msra.mxu0 0
        %2702 = vmatprep.subr.bf16.mxu0 0
        %2703 = vmatpush1.bf16.msra.mxu0 0
        %2704 = vmatprep.subr.bf16.mxu0 0
        %2705 = vmatpush1.bf16.msra.mxu0 %v2689
        %2706 = vmatprep.subr.bf16.mxu0 0
        %2707 = vmatpush1.bf16.msra.mxu0 %v2688
        %2708 = vmatprep.subr.bf16.mxu0 0
        %2709 = vmatpush2.bf16.msra.mxu0 0
        %2710 = vmatprep.subr.bf16.mxu0 0
        %2711 = vmatpush2.bf16.msra.mxu0 0
        %2712 = vmatprep.subr.bf16.mxu0 0
        %2713 = vmatpush2.bf16.msra.mxu0 0
        %2714 = vmatprep.subr.bf16.mxu0 0
        %2715 = vmatpush2.bf16.msra.mxu0 0
        %2716 = vmatprep.subr.bf16.mxu0 0
        %2717 = vmatpush2.bf16.msra.mxu0 0
        %2718 = vmatprep.subr.bf16.mxu0 0
        %2719 = vmatpush2.bf16.msra.mxu0 0
        %2720 = vmatprep.subr.bf16.mxu0 0
        %2721 = vmatpush2.bf16.msra.mxu0 0
        %2722 = vmatprep.subr.bf16.mxu0 0
        %2723 = vmatpush2.bf16.msra.mxu0 0
        %2724 = vmatprep.mubr.bf16.mxu0 0
        %2725 = vmatmul.mubr.bf16.gmra.mxu0 %v947
        %v2726 = vpop.f32.mrf.mxu0
        %v2727 = vadd.f32 %v2678, %v2726
        %v2728 = vpop.f32.mrf.mxu0
        %v2729 = vpop.f32.mrf.mxu0
        %v2730 = vpop.f32.mrf.mxu0
        %2731 = vdwg.mxu0
        %s2732 = scalar_lea.vmem %s13, 48
        %v2733 = vld [vmem:[%s2732] sm:$0xf]
        %v2734 = vld [vmem:[%s2732 + $0x4] sm:$0xf]
        %v2735 = vld [vmem:[%s2732 + $0x8] sm:$0xf]
        %v2736 = vld [vmem:[%s2732 + $0xc] sm:$0xf]
        %s2737 = scalar_lea.vmem %s14, 3
        %v2738 = vld [vmem:[%s2737] sm:$0x1]
        %v2740 = vlaneseq
        %v2741 = vshrl.u32 %v2740, 7
        %v2742 = vsub.s32 0, %v2741
        %v2743 = vrot.slane %v2738, %v2742
        %v2749 = vunpack.c.l.b16 %v2733
        %v2750 = vunpack.c.l.b16 %v2734
        %v2751 = vunpack.c.l.b16 %v2735
        %v2752 = vunpack.c.l.b16 %v2736
        %v2753 = vpack.c.b16 %v2750, %v2749
        %v2754 = vpack.c.b16 %v2752, %v2751
        %2757 = vmatprep.subr.bf16.mxu0 0
        %2758 = vmatpush1.bf16.msra.mxu0 0
        %2759 = vmatprep.subr.bf16.mxu0 0
        %2760 = vmatpush1.bf16.msra.mxu0 0
        %2761 = vmatprep.subr.bf16.mxu0 0
        %2762 = vmatpush1.bf16.msra.mxu0 0
        %2763 = vmatprep.subr.bf16.mxu0 0
        %2764 = vmatpush1.bf16.msra.mxu0 0
        %2765 = vmatprep.subr.bf16.mxu0 0
        %2766 = vmatpush1.bf16.msra.mxu0 0
        %2767 = vmatprep.subr.bf16.mxu0 0
        %2768 = vmatpush1.bf16.msra.mxu0 0
        %2769 = vmatprep.subr.bf16.mxu0 0
        %2770 = vmatpush1.bf16.msra.mxu0 %v2754
        %2771 = vmatprep.subr.bf16.mxu0 0
        %2772 = vmatpush1.bf16.msra.mxu0 %v2753
        %2773 = vmatprep.subr.bf16.mxu0 0
        %2774 = vmatpush2.bf16.msra.mxu0 0
        %2775 = vmatprep.subr.bf16.mxu0 0
        %2776 = vmatpush2.bf16.msra.mxu0 0
        %2777 = vmatprep.subr.bf16.mxu0 0
        %2778 = vmatpush2.bf16.msra.mxu0 0
        %2779 = vmatprep.subr.bf16.mxu0 0
        %2780 = vmatpush2.bf16.msra.mxu0 0
        %2781 = vmatprep.subr.bf16.mxu0 0
        %2782 = vmatpush2.bf16.msra.mxu0 0
        %2783 = vmatprep.subr.bf16.mxu0 0
        %2784 = vmatpush2.bf16.msra.mxu0 0
        %2785 = vmatprep.subr.bf16.mxu0 0
        %2786 = vmatpush2.bf16.msra.mxu0 0
        %2787 = vmatprep.subr.bf16.mxu0 0
        %2788 = vmatpush2.bf16.msra.mxu0 0
        %2789 = vmatprep.mubr.bf16.mxu0 0
        %2790 = vmatmul.mubr.bf16.gmra.mxu0 %v947
        %v2791 = vpop.f32.mrf.mxu0
        %v2792 = vadd.f32 %v2743, %v2791
        %v2793 = vpop.f32.mrf.mxu0
        %v2794 = vpop.f32.mrf.mxu0
        %v2795 = vpop.f32.mrf.mxu0
        %2796 = vdwg.mxu0
        %s2797 = scalar_lea.vmem %s15, 48
        %v2798 = vld [vmem:[%s2797] sm:$0xf]
        %v2799 = vld [vmem:[%s2797 + $0x4] sm:$0xf]
        %v2800 = vld [vmem:[%s2797 + $0x8] sm:$0xf]
        %v2801 = vld [vmem:[%s2797 + $0xc] sm:$0xf]
        %s2802 = scalar_lea.vmem %s16, 3
        %v2803 = vld [vmem:[%s2802] sm:$0x1]
        %v2805 = vlaneseq
        %v2806 = vshrl.u32 %v2805, 7
        %v2807 = vsub.s32 0, %v2806
        %v2808 = vrot.slane %v2803, %v2807
        %v2814 = vunpack.c.l.b16 %v2798
        %v2815 = vunpack.c.l.b16 %v2799
        %v2816 = vunpack.c.l.b16 %v2800
        %v2817 = vunpack.c.l.b16 %v2801
        %v2818 = vpack.c.b16 %v2815, %v2814
        %v2819 = vpack.c.b16 %v2817, %v2816
        %2822 = vmatprep.subr.bf16.mxu0 0
        %2823 = vmatpush1.bf16.msra.mxu0 0
        %2824 = vmatprep.subr.bf16.mxu0 0
        %2825 = vmatpush1.bf16.msra.mxu0 0
        %2826 = vmatprep.subr.bf16.mxu0 0
        %2827 = vmatpush1.bf16.msra.mxu0 0
        %2828 = vmatprep.subr.bf16.mxu0 0
        %2829 = vmatpush1.bf16.msra.mxu0 0
        %2830 = vmatprep.subr.bf16.mxu0 0
        %2831 = vmatpush1.bf16.msra.mxu0 0
        %2832 = vmatprep.subr.bf16.mxu0 0
        %2833 = vmatpush1.bf16.msra.mxu0 0
        %2834 = vmatprep.subr.bf16.mxu0 0
        %2835 = vmatpush1.bf16.msra.mxu0 %v2819
        %2836 = vmatprep.subr.bf16.mxu0 0
        %2837 = vmatpush1.bf16.msra.mxu0 %v2818
        %2838 = vmatprep.subr.bf16.mxu0 0
        %2839 = vmatpush2.bf16.msra.mxu0 0
        %2840 = vmatprep.subr.bf16.mxu0 0
        %2841 = vmatpush2.bf16.msra.mxu0 0
        %2842 = vmatprep.subr.bf16.mxu0 0
        %2843 = vmatpush2.bf16.msra.mxu0 0
        %2844 = vmatprep.subr.bf16.mxu0 0
        %2845 = vmatpush2.bf16.msra.mxu0 0
        %2846 = vmatprep.subr.bf16.mxu0 0
        %2847 = vmatpush2.bf16.msra.mxu0 0
        %2848 = vmatprep.subr.bf16.mxu0 0
        %2849 = vmatpush2.bf16.msra.mxu0 0
        %2850 = vmatprep.subr.bf16.mxu0 0
        %2851 = vmatpush2.bf16.msra.mxu0 0
        %2852 = vmatprep.subr.bf16.mxu0 0
        %2853 = vmatpush2.bf16.msra.mxu0 0
        %2854 = vmatprep.mubr.bf16.mxu0 0
        %2855 = vmatmul.mubr.bf16.gmra.mxu0 %v947
        %v2856 = vpop.f32.mrf.mxu0
        %v2857 = vadd.f32 %v2808, %v2856
        %v2858 = vpop.f32.mrf.mxu0
        %v2859 = vpop.f32.mrf.mxu0
        %v2860 = vpop.f32.mrf.mxu0
        %2861 = vdwg.mxu0
        %s2862 = scalar_lea.vmem %s17, 48
        %v2863 = vld [vmem:[%s2862] sm:$0xf]
        %v2864 = vld [vmem:[%s2862 + $0x4] sm:$0xf]
        %v2865 = vld [vmem:[%s2862 + $0x8] sm:$0xf]
        %v2866 = vld [vmem:[%s2862 + $0xc] sm:$0xf]
        %s2867 = scalar_lea.vmem %s18, 3
        %v2868 = vld [vmem:[%s2867] sm:$0x1]
        %v2870 = vlaneseq
        %v2871 = vshrl.u32 %v2870, 7
        %v2872 = vsub.s32 0, %v2871
        %v2873 = vrot.slane %v2868, %v2872
        %v2879 = vunpack.c.l.b16 %v2863
        %v2880 = vunpack.c.l.b16 %v2864
        %v2881 = vunpack.c.l.b16 %v2865
        %v2882 = vunpack.c.l.b16 %v2866
        %v2883 = vpack.c.b16 %v2880, %v2879
        %v2884 = vpack.c.b16 %v2882, %v2881
        %2887 = vmatprep.subr.bf16.mxu0 0
        %2888 = vmatpush1.bf16.msra.mxu0 0
        %2889 = vmatprep.subr.bf16.mxu0 0
        %2890 = vmatpush1.bf16.msra.mxu0 0
        %2891 = vmatprep.subr.bf16.mxu0 0
        %2892 = vmatpush1.bf16.msra.mxu0 0
        %2893 = vmatprep.subr.bf16.mxu0 0
        %2894 = vmatpush1.bf16.msra.mxu0 0
        %2895 = vmatprep.subr.bf16.mxu0 0
        %2896 = vmatpush1.bf16.msra.mxu0 0
        %2897 = vmatprep.subr.bf16.mxu0 0
        %2898 = vmatpush1.bf16.msra.mxu0 0
        %2899 = vmatprep.subr.bf16.mxu0 0
        %2900 = vmatpush1.bf16.msra.mxu0 %v2884
        %2901 = vmatprep.subr.bf16.mxu0 0
        %2902 = vmatpush1.bf16.msra.mxu0 %v2883
        %2903 = vmatprep.subr.bf16.mxu0 0
        %2904 = vmatpush2.bf16.msra.mxu0 0
        %2905 = vmatprep.subr.bf16.mxu0 0
        %2906 = vmatpush2.bf16.msra.mxu0 0
        %2907 = vmatprep.subr.bf16.mxu0 0
        %2908 = vmatpush2.bf16.msra.mxu0 0
        %2909 = vmatprep.subr.bf16.mxu0 0
        %2910 = vmatpush2.bf16.msra.mxu0 0
        %2911 = vmatprep.subr.bf16.mxu0 0
        %2912 = vmatpush2.bf16.msra.mxu0 0
        %2913 = vmatprep.subr.bf16.mxu0 0
        %2914 = vmatpush2.bf16.msra.mxu0 0
        %2915 = vmatprep.subr.bf16.mxu0 0
        %2916 = vmatpush2.bf16.msra.mxu0 0
        %2917 = vmatprep.subr.bf16.mxu0 0
        %2918 = vmatpush2.bf16.msra.mxu0 0
        %2919 = vmatprep.mubr.bf16.mxu0 0
        %2920 = vmatmul.mubr.bf16.gmra.mxu0 %v947
        %v2921 = vpop.f32.mrf.mxu0
        %v2922 = vadd.f32 %v2873, %v2921
        %v2923 = vpop.f32.mrf.mxu0
        %v2924 = vpop.f32.mrf.mxu0
        %v2925 = vpop.f32.mrf.mxu0
        %2926 = vdwg.mxu0
        %s2927 = scalar_lea.vmem %s2, 24
        %v2928 = vld [vmem:[%s2927] sm:$0xff]
        %2930 = vset.pattern.permute.xlu0 0
        %2931 = vperm.xlu0 %2930, %v2928
        %v2932 = vpop.permute.xlu0 %2931
        %v2934 = vmul.f32 %v2727, %v2932
        %v2935 = vpack.c.bf16 %v2934, %v2934
        %s2936 = scalar_lea.vmem %s3, 24
        %v2937 = vld [vmem:[%s2936] sm:$0xff]
        %2939 = vset.pattern.permute.xlu0 0
        %2940 = vperm.xlu0 %2939, %v2937
        %v2941 = vpop.permute.xlu0 %2940
        %v2943 = vmul.f32 %v2792, %v2941
        %v2944 = vpack.c.bf16 %v2943, %v2943
        %s2945 = scalar_lea.vmem %s4, 24
        %v2946 = vld [vmem:[%s2945] sm:$0xff]
        %2948 = vset.pattern.permute.xlu0 0
        %2949 = vperm.xlu0 %2948, %v2946
        %v2950 = vpop.permute.xlu0 %2949
        %v2952 = vmul.f32 %v2792, %v2950
        %v2953 = vpack.c.bf16 %v2952, %v2952
        %v2954 = vpack.c.bf16 %v2857, %v2857
        %v2955 = vxor.u32 %v2922, 2147483648
        %v2956 = vmul.f32 %v2955, 1.442695
        %v2957 = vpow.pop %v2956
        %v2958 = vadd.f32 %v2957, 1.0
        %v2959 = vrcp.pop %v2958
        %v2960 = vmul.f32 1.0, %v2959
        %v2961 = vmul.f32 %v2922, %v2960
        %v2962 = vpack.c.bf16 %v2961, %v2961
        %v2964 = vsel %vm1211, %v2935, 0
        %v2967 = vsel %vm1211, %v2944, 0
        %2969 = vmatprep.subr.bf16.mxu0 0
        %2970 = vmatpush1.bf16.xpose.msra.mxu0 0
        %2971 = vmatprep.subr.bf16.mxu0 0
        %2972 = vmatpush1.bf16.xpose.msra.mxu0 0
        %2973 = vmatprep.subr.bf16.mxu0 0
        %2974 = vmatpush1.bf16.xpose.msra.mxu0 0
        %2975 = vmatprep.subr.bf16.mxu0 0
        %2976 = vmatpush1.bf16.xpose.msra.mxu0 0
        %2977 = vmatprep.subr.bf16.mxu0 0
        %2978 = vmatpush1.bf16.xpose.msra.mxu0 0
        %2979 = vmatprep.subr.bf16.mxu0 0
        %2980 = vmatpush1.bf16.xpose.msra.mxu0 0
        %2981 = vmatprep.subr.bf16.mxu0 0
        %2982 = vmatpush1.bf16.xpose.msra.mxu0 0
        %2983 = vmatprep.subr.bf16.mxu0 0
        %2984 = vmatpush1.bf16.xpose.msra.mxu0 %v2967
        %2985 = vmatprep.subr.bf16.mxu0 0
        %2986 = vmatpush2.bf16.xpose.msra.mxu0 0
        %2987 = vmatprep.subr.bf16.mxu0 0
        %2988 = vmatpush2.bf16.xpose.msra.mxu0 0
        %2989 = vmatprep.subr.bf16.mxu0 0
        %2990 = vmatpush2.bf16.xpose.msra.mxu0 0
        %2991 = vmatprep.subr.bf16.mxu0 0
        %2992 = vmatpush2.bf16.xpose.msra.mxu0 0
        %2993 = vmatprep.subr.bf16.mxu0 0
        %2994 = vmatpush2.bf16.xpose.msra.mxu0 0
        %2995 = vmatprep.subr.bf16.mxu0 0
        %2996 = vmatpush2.bf16.xpose.msra.mxu0 0
        %2997 = vmatprep.subr.bf16.mxu0 0
        %2998 = vmatpush2.bf16.xpose.msra.mxu0 0
        %2999 = vmatprep.subr.bf16.mxu0 0
        %3000 = vmatpush2.bf16.xpose.msra.mxu0 0
        %3001 = vmatprep.mubr.bf16.mxu0 0
        %3002 = vmatmul.mubr.bf16.gmra.mxu0 %v2964
        %v3003 = vpop.f32.mrf.mxu0
        %v3004 = vadd.f32 0.0, %v3003
        %v3005 = vpop.f32.mrf.mxu0
        %v3006 = vpop.f32.mrf.mxu0
        %v3007 = vpop.f32.mrf.mxu0
        %3008 = vdwg.mxu0
        %v3009 = vsel %vm922, %v3004, 0.0
        %v3010 = vpack.c.bf16 %v3009, %v3009
        %s3011 = scalar_lea.vmem [#allocation2], 24
        %v3012 = vld [vmem:[%s3011] sm:$0xff]
        %v3013 = vpack.c.bf16 %v3012, %v3012
        %v3015 = vsel %vm1262, %v3013, 0
        %3017 = vmatprep.subr.bf16.mxu0 0
        %3018 = vmatpush1.bf16.msra.mxu0 0
        %3019 = vmatprep.subr.bf16.mxu0 0
        %3020 = vmatpush1.bf16.msra.mxu0 0
        %3021 = vmatprep.subr.bf16.mxu0 0
        %3022 = vmatpush1.bf16.msra.mxu0 0
        %3023 = vmatprep.subr.bf16.mxu0 0
        %3024 = vmatpush1.bf16.msra.mxu0 0
        %3025 = vmatprep.subr.bf16.mxu0 0
        %3026 = vmatpush1.bf16.msra.mxu0 0
        %3027 = vmatprep.subr.bf16.mxu0 0
        %3028 = vmatpush1.bf16.msra.mxu0 0
        %3029 = vmatprep.subr.bf16.mxu0 0
        %3030 = vmatpush1.bf16.msra.mxu0 0
        %3031 = vmatprep.subr.bf16.mxu0 0
        %3032 = vmatpush1.bf16.msra.mxu0 %v3015
        %3033 = vmatprep.subr.bf16.mxu0 0
        %3034 = vmatpush2.bf16.msra.mxu0 0
        %3035 = vmatprep.subr.bf16.mxu0 0
        %3036 = vmatpush2.bf16.msra.mxu0 0
        %3037 = vmatprep.subr.bf16.mxu0 0
        %3038 = vmatpush2.bf16.msra.mxu0 0
        %3039 = vmatprep.subr.bf16.mxu0 0
        %3040 = vmatpush2.bf16.msra.mxu0 0
        %3041 = vmatprep.subr.bf16.mxu0 0
        %3042 = vmatpush2.bf16.msra.mxu0 0
        %3043 = vmatprep.subr.bf16.mxu0 0
        %3044 = vmatpush2.bf16.msra.mxu0 0
        %3045 = vmatprep.subr.bf16.mxu0 0
        %3046 = vmatpush2.bf16.msra.mxu0 0
        %3047 = vmatprep.subr.bf16.mxu0 0
        %3048 = vmatpush2.bf16.msra.mxu0 0
        %3049 = vmatprep.mubr.bf16.mxu0 0
        %3050 = vmatmul.mubr.bf16.gmra.mxu0 %v2964
        %v3051 = vpop.f32.mrf.mxu0
        %v3052 = vadd.f32 0.0, %v3051
        %v3053 = vpop.f32.mrf.mxu0
        %v3054 = vpop.f32.mrf.mxu0
        %v3055 = vpop.f32.mrf.mxu0
        %3056 = vdwg.mxu0
        %s3057 = scalar_lea.vmem %s5, 3
        %v3058 = vld [vmem:[%s3057] sm:$0x1]
        %v3060 = vlaneseq
        %v3061 = vshrl.u32 %v3060, 7
        %v3062 = vsub.s32 0, %v3061
        %v3063 = vrot.slane %v3058, %v3062
        %3064 = vset.pattern.permute.xlu0 0
        %3065 = vperm.xlu0 %3064, %v3063
        %v3066 = vpop.permute.xlu0 %3065
        %v3068 = vmul.f32 %v3052, %v3066
        %v3070 = vsel %vm1211, %v3010, 0
        %v3073 = vsel %vm1262, %v2954, 0
        %3075 = vmatprep.subr.bf16.mxu0 0
        %3076 = vmatpush1.bf16.msra.mxu0 0
        %3077 = vmatprep.subr.bf16.mxu0 0
        %3078 = vmatpush1.bf16.msra.mxu0 0
        %3079 = vmatprep.subr.bf16.mxu0 0
        %3080 = vmatpush1.bf16.msra.mxu0 0
        %3081 = vmatprep.subr.bf16.mxu0 0
        %3082 = vmatpush1.bf16.msra.mxu0 0
        %3083 = vmatprep.subr.bf16.mxu0 0
        %3084 = vmatpush1.bf16.msra.mxu0 0
        %3085 = vmatprep.subr.bf16.mxu0 0
        %3086 = vmatpush1.bf16.msra.mxu0 0
        %3087 = vmatprep.subr.bf16.mxu0 0
        %3088 = vmatpush1.bf16.msra.mxu0 0
        %3089 = vmatprep.subr.bf16.mxu0 0
        %3090 = vmatpush1.bf16.msra.mxu0 %v3073
        %3091 = vmatprep.subr.bf16.mxu0 0
        %3092 = vmatpush2.bf16.msra.mxu0 0
        %3093 = vmatprep.subr.bf16.mxu0 0
        %3094 = vmatpush2.bf16.msra.mxu0 0
        %3095 = vmatprep.subr.bf16.mxu0 0
        %3096 = vmatpush2.bf16.msra.mxu0 0
        %3097 = vmatprep.subr.bf16.mxu0 0
        %3098 = vmatpush2.bf16.msra.mxu0 0
        %3099 = vmatprep.subr.bf16.mxu0 0
        %3100 = vmatpush2.bf16.msra.mxu0 0
        %3101 = vmatprep.subr.bf16.mxu0 0
        %3102 = vmatpush2.bf16.msra.mxu0 0
        %3103 = vmatprep.subr.bf16.mxu0 0
        %3104 = vmatpush2.bf16.msra.mxu0 0
        %3105 = vmatprep.subr.bf16.mxu0 0
        %3106 = vmatpush2.bf16.msra.mxu0 0
        %3107 = vmatprep.mubr.bf16.mxu0 0
        %3108 = vmatmul.mubr.bf16.gmra.mxu0 %v3070
        %v3109 = vpop.f32.mrf.mxu0
        %v3110 = vadd.f32 %v3068, %v3109
        %v3111 = vpop.f32.mrf.mxu0
        %v3112 = vpop.f32.mrf.mxu0
        %v3113 = vpop.f32.mrf.mxu0
        %3114 = vdwg.mxu0
        %s3115 = scalar_lea.vmem %s6, 3
        %v3116 = vld [vmem:[%s3115] sm:$0x1]
        %v3118 = vlaneseq
        %v3119 = vshrl.u32 %v3118, 7
        %v3120 = vsub.s32 0, %v3119
        %v3121 = vrot.slane %v3116, %v3120
        %3122 = vset.pattern.permute.xlu0 0
        %3123 = vperm.xlu0 %3122, %v3121
        %v3124 = vpop.permute.xlu0 %3123
        %v3126 = vmul.f32 %v3012, %v3124
        %3127 = vxpose.xlu0.c.b16.start [1/8] %v2953, 128
        %3128 = vxpose.xlu0.c.b16.cont [2/8] 0, 128
        %3129 = vxpose.xlu0.c.b16.cont [3/8] 0, 128
        %3130 = vxpose.xlu0.c.b16.cont [4/8] 0, 128
        %3131 = vxpose.xlu0.c.b16.cont [5/8] 0, 128
        %3132 = vxpose.xlu0.c.b16.cont [6/8] 0, 128
        %3133 = vxpose.xlu0.c.b16.cont [7/8] 0, 128
        %3134 = vxpose.xlu0.c.b16.end [8/8] 0, 128
        %v3135 = vpop.trf.xlu0
        %v3136 = vpop.trf.xlu0
        %v3137 = vpop.trf.xlu0
        %v3138 = vpop.trf.xlu0
        %v3139 = vpop.trf.xlu0
        %v3140 = vpop.trf.xlu0
        %v3141 = vpop.trf.xlu0
        %v3142 = vpop.trf.xlu0
        %v3144 = vsel %vm1211, %v3135, 0
        %3146 = vmatprep.subr.bf16.mxu0 0
        %3147 = vmatpush1.bf16.msra.mxu0 0
        %3148 = vmatprep.subr.bf16.mxu0 0
        %3149 = vmatpush1.bf16.msra.mxu0 0
        %3150 = vmatprep.subr.bf16.mxu0 0
        %3151 = vmatpush1.bf16.msra.mxu0 0
        %3152 = vmatprep.subr.bf16.mxu0 0
        %3153 = vmatpush1.bf16.msra.mxu0 0
        %3154 = vmatprep.subr.bf16.mxu0 0
        %3155 = vmatpush1.bf16.msra.mxu0 0
        %3156 = vmatprep.subr.bf16.mxu0 0
        %3157 = vmatpush1.bf16.msra.mxu0 0
        %3158 = vmatprep.subr.bf16.mxu0 0
        %3159 = vmatpush1.bf16.msra.mxu0 0
        %3160 = vmatprep.subr.bf16.mxu0 0
        %3161 = vmatpush1.bf16.msra.mxu0 %v3073
        %3162 = vmatprep.subr.bf16.mxu0 0
        %3163 = vmatpush2.bf16.msra.mxu0 0
        %3164 = vmatprep.subr.bf16.mxu0 0
        %3165 = vmatpush2.bf16.msra.mxu0 0
        %3166 = vmatprep.subr.bf16.mxu0 0
        %3167 = vmatpush2.bf16.msra.mxu0 0
        %3168 = vmatprep.subr.bf16.mxu0 0
        %3169 = vmatpush2.bf16.msra.mxu0 0
        %3170 = vmatprep.subr.bf16.mxu0 0
        %3171 = vmatpush2.bf16.msra.mxu0 0
        %3172 = vmatprep.subr.bf16.mxu0 0
        %3173 = vmatpush2.bf16.msra.mxu0 0
        %3174 = vmatprep.subr.bf16.mxu0 0
        %3175 = vmatpush2.bf16.msra.mxu0 0
        %3176 = vmatprep.subr.bf16.mxu0 0
        %3177 = vmatpush2.bf16.msra.mxu0 0
        %3178 = vmatprep.mubr.bf16.mxu0 0
        %3179 = vmatmul.mubr.bf16.gmra.mxu0 %v3144
        %v3180 = vpop.f32.mrf.mxu0
        %v3181 = vadd.f32 %v3126, %v3180
        %v3182 = vpop.f32.mrf.mxu0
        %v3183 = vpop.f32.mrf.mxu0
        %v3184 = vpop.f32.mrf.mxu0
        %3185 = vdwg.mxu0
        %3186 = vst.msk [vmem:[%s3011] sm:$0xff] %vm1211, %v3181
        %v3187 = vsel %vm1211, %v3110, 0.0
        %3188 = vadd.xlane.f32.xlu0 %v3187
        %v3189 = vpop.xlane.xlu0 %3188
        %v3190 = vmul.f32 %v3189, %v1437
        %v3191 = vsub.f32 %v3110, %v3190
        %v3192 = vmul.f32 %v3191, %v3191
        %v3193 = vsel %vm1211, %v3192, 0.0
        %3194 = vadd.xlane.f32.xlu0 %v3193
        %v3195 = vpop.xlane.xlu0 %3194
        %v3196 = vmul.f32 %v3195, %v1437
        %v3197 = vadd.f32 %v3196, 1e-06
        %v3198 = vrsqrt.pop %v3197
        %v3199 = vmul.f32 %v3191, %v3198
        %v3200 = vunpack.c.l.bf16 %v2962
        %v3201 = vmul.f32 %v3199, %v3200
        %v3202 = vpack.c.bf16 %v3201, %v3201
        %s3203 = scalar_lea.vmem %s19, 12
        %v3204 = vld [vmem:[%s3203] sm:$0xf]
        %v3206 = vsel %vm1211, %v3202, 0
        %v3209 = vsel %vm1262, %v3204, 0
        %3211 = vmatprep.subr.bf16.mxu0 0
        %3212 = vmatpush1.bf16.msra.mxu0 0
        %3213 = vmatprep.subr.bf16.mxu0 0
        %3214 = vmatpush1.bf16.msra.mxu0 0
        %3215 = vmatprep.subr.bf16.mxu0 0
        %3216 = vmatpush1.bf16.msra.mxu0 0
        %3217 = vmatprep.subr.bf16.mxu0 0
        %3218 = vmatpush1.bf16.msra.mxu0 0
        %3219 = vmatprep.subr.bf16.mxu0 0
        %3220 = vmatpush1.bf16.msra.mxu0 0
        %3221 = vmatprep.subr.bf16.mxu0 0
        %3222 = vmatpush1.bf16.msra.mxu0 0
        %3223 = vmatprep.subr.bf16.mxu0 0
        %3224 = vmatpush1.bf16.msra.mxu0 0
        %3225 = vmatprep.subr.bf16.mxu0 0
        %3226 = vmatpush1.bf16.msra.mxu0 %v3209
        %3227 = vmatprep.subr.bf16.mxu0 0
        %3228 = vmatpush2.bf16.msra.mxu0 0
        %3229 = vmatprep.subr.bf16.mxu0 0
        %3230 = vmatpush2.bf16.msra.mxu0 0
        %3231 = vmatprep.subr.bf16.mxu0 0
        %3232 = vmatpush2.bf16.msra.mxu0 0
        %3233 = vmatprep.subr.bf16.mxu0 0
        %3234 = vmatpush2.bf16.msra.mxu0 0
        %3235 = vmatprep.subr.bf16.mxu0 0
        %3236 = vmatpush2.bf16.msra.mxu0 0
        %3237 = vmatprep.subr.bf16.mxu0 0
        %3238 = vmatpush2.bf16.msra.mxu0 0
        %3239 = vmatprep.subr.bf16.mxu0 0
        %3240 = vmatpush2.bf16.msra.mxu0 0
        %3241 = vmatprep.subr.bf16.mxu0 0
        %3242 = vmatpush2.bf16.msra.mxu0 0
        %3243 = vmatprep.mubr.bf16.mxu0 0
        %3244 = vmatmul.mubr.bf16.gmra.mxu0 %v3206
        %v3245 = vpop.f32.mrf.mxu0
        %v3246 = vadd.f32 0.0, %v3245
        %v3247 = vpop.f32.mrf.mxu0
        %v3248 = vpop.f32.mrf.mxu0
        %v3249 = vpop.f32.mrf.mxu0
        %3250 = vdwg.mxu0
        %v3251 = vadd.f32 %v2666, %v3246
        %p3252 = scmp.eq.s32.totalorder %s52, 1
        // Predicated region
        $region129: #{tpu_custom_call.1} parent=119 // pred_check
          %p3253 = pneg %p3252
        $region130: #{tpu_custom_call.1} parent=119 // pred_check_branch
          %3255 = sbr.rel (%p3253) target = $region132
        $region131: #{tpu_custom_call.1} parent=119 // pred_region
          %v3256 = vld [vmem:[#allocation2] sm:$0xff]
          %v3257 = vld [vmem:[#allocation2 + $0x8] sm:$0xff]
          %v3258 = vld [vmem:[#allocation2 + $0x10] sm:$0xff]
          %v3259 = vld [vmem:[#allocation2 + $0x18] sm:$0xff]
          %v3260 = vpack.c.bf16 %v3256, %v3256
          %v3261 = vpack.c.bf16 %v3257, %v3257
          %v3262 = vpack.c.bf16 %v3258, %v3258
          %v3263 = vpack.c.bf16 %v3259, %v3259
          %vm3264 = vcmask 60416
          %3265 = vst.msk [vmem:[%s857] sm:$0xf] %vm3264, %v3260
          %3266 = vst.msk [vmem:[%s857 + $0x4] sm:$0xf] %vm3264, %v3261
          %3267 = vst.msk [vmem:[%s857 + $0x8] sm:$0xf] %vm3264, %v3262
          %3268 = vst.msk [vmem:[%s857 + $0xc] sm:$0xf] %vm3264, %v3263
        $region132: #{tpu_custom_call.1} parent=119 // pred_fallthru
          _
        %v3269 = vld [vmem:[%s20] sm:$0x1]
        %v3271 = vlaneseq
        %v3272 = vshrl.u32 %v3271, 7
        %v3273 = vsub.s32 0, %v3272
        %v3274 = vrot.slane %v3269, %v3273
        %v3276 = vadd.f32 %v3251, %v3274
        %v3277 = vpack.c.bf16 %v3276, %v3276
        %v3278 = vadd.bf16 %v867, %v3277
        %v3279 = vunpack.c.l.bf16 %v3278
        %v3280 = vld [vmem:[%s9] sm:$0x1]
        %v3281 = vld [vmem:[%s10] sm:$0x1]
        %v3282 = vsel %vm888, %v3279, 0.0
        %3283 = vadd.xlane.f32.xlu0 %v3282
        %v3284 = vpop.xlane.xlu0 %3283
        %v3285 = vmul.f32 %v3284, %v892
        %v3286 = vsub.f32 %v3279, %v3285
        %v3287 = vmul.f32 %v3286, %v3286
        %v3288 = vsel %vm888, %v3287, 0.0
        %3289 = vadd.xlane.f32.xlu0 %v3288
        %v3290 = vpop.xlane.xlu0 %3289
        %v3291 = vmul.f32 %v3290, %v892
        %v3292 = vadd.f32 %v3291, 1e-06
        %v3293 = vrsqrt.pop %v3292
        %v3294 = vmul.f32 %v3286, %v3293
        %v3296 = vlaneseq
        %v3297 = vshrl.u32 %v3296, 7
        %v3298 = vsub.s32 0, %v3297
        %v3299 = vrot.slane %v3280, %v3298
        %v3301 = vmul.f32 %v3294, %v3299
        %v3303 = vlaneseq
        %v3304 = vshrl.u32 %v3303, 7
        %v3305 = vsub.s32 0, %v3304
        %v3306 = vrot.slane %v3281, %v3305
        %v3308 = vadd.f32 %v3301, %v3306
        %v3309 = vpack.c.bf16 %v3308, %v3308
        %v3310 = vld [vmem:[%s21] sm:$0xf]
        %v3311 = vld [vmem:[%s21 + $0x4] sm:$0xf]
        %v3312 = vld [vmem:[%s21 + $0x8] sm:$0xf]
        %v3313 = vld [vmem:[%s21 + $0xc] sm:$0xf]
        %v3314 = vld [vmem:[%s22] sm:$0x1]
        %v3316 = vlaneseq
        %v3317 = vshrl.u32 %v3316, 7
        %v3318 = vsub.s32 0, %v3317
        %v3319 = vrot.slane %v3314, %v3318
        %v3325 = vunpack.c.l.b16 %v3310
        %v3326 = vunpack.c.l.b16 %v3311
        %v3327 = vunpack.c.l.b16 %v3312
        %v3328 = vunpack.c.l.b16 %v3313
        %v3329 = vpack.c.b16 %v3326, %v3325
        %v3330 = vpack.c.b16 %v3328, %v3327
        %v3334 = vsel %vm888, %v3309, 0
        %3336 = vmatprep.subr.bf16.mxu0 0
        %3337 = vmatpush1.bf16.msra.mxu0 0
        %3338 = vmatprep.subr.bf16.mxu0 0
        %3339 = vmatpush1.bf16.msra.mxu0 0
        %3340 = vmatprep.subr.bf16.mxu0 0
        %3341 = vmatpush1.bf16.msra.mxu0 0
        %3342 = vmatprep.subr.bf16.mxu0 0
        %3343 = vmatpush1.bf16.msra.mxu0 0
        %3344 = vmatprep.subr.bf16.mxu0 0
        %3345 = vmatpush1.bf16.msra.mxu0 0
        %3346 = vmatprep.subr.bf16.mxu0 0
        %3347 = vmatpush1.bf16.msra.mxu0 0
        %3348 = vmatprep.subr.bf16.mxu0 0
        %3349 = vmatpush1.bf16.msra.mxu0 %v3330
        %3350 = vmatprep.subr.bf16.mxu0 0
        %3351 = vmatpush1.bf16.msra.mxu0 %v3329
        %3352 = vmatprep.subr.bf16.mxu0 0
        %3353 = vmatpush2.bf16.msra.mxu0 0
        %3354 = vmatprep.subr.bf16.mxu0 0
        %3355 = vmatpush2.bf16.msra.mxu0 0
        %3356 = vmatprep.subr.bf16.mxu0 0
        %3357 = vmatpush2.bf16.msra.mxu0 0
        %3358 = vmatprep.subr.bf16.mxu0 0
        %3359 = vmatpush2.bf16.msra.mxu0 0
        %3360 = vmatprep.subr.bf16.mxu0 0
        %3361 = vmatpush2.bf16.msra.mxu0 0
        %3362 = vmatprep.subr.bf16.mxu0 0
        %3363 = vmatpush2.bf16.msra.mxu0 0
        %3364 = vmatprep.subr.bf16.mxu0 0
        %3365 = vmatpush2.bf16.msra.mxu0 0
        %3366 = vmatprep.subr.bf16.mxu0 0
        %3367 = vmatpush2.bf16.msra.mxu0 0
        %3368 = vmatprep.mubr.bf16.mxu0 0
        %3369 = vmatmul.mubr.bf16.gmra.mxu0 %v3334
        %v3370 = vpop.f32.mrf.mxu0
        %v3371 = vadd.f32 %v3319, %v3370
        %v3372 = vpop.f32.mrf.mxu0
        %v3373 = vpop.f32.mrf.mxu0
        %v3374 = vpop.f32.mrf.mxu0
        %3375 = vdwg.mxu0
        %v3376 = vxor.u32 %v3371, 2147483648
        %v3377 = vmul.f32 %v3376, 1.442695
        %v3378 = vpow.pop %v3377
        %v3379 = vadd.f32 %v3378, 1.0
        %v3380 = vrcp.pop %v3379
        %v3381 = vmul.f32 1.0, %v3380
        %v3382 = vmul.f32 %v3371, %v3381
        %v3383 = vpack.c.bf16 %v3382, %v3382
        %v3384 = vld [vmem:[%s23] sm:$0xf]
        %v3385 = vld [vmem:[%s23 + $0x4] sm:$0xf]
        %v3386 = vld [vmem:[%s23 + $0x8] sm:$0xf]
        %v3387 = vld [vmem:[%s23 + $0xc] sm:$0xf]
        %v3388 = vld [vmem:[%s23 + $0x10] sm:$0xf]
        %v3389 = vld [vmem:[%s23 + $0x14] sm:$0xf]
        %v3390 = vld [vmem:[%s23 + $0x18] sm:$0xf]
        %v3391 = vld [vmem:[%s23 + $0x1c] sm:$0xf]
        %v3392 = vld [vmem:[%s24] sm:$0x1]
        %v3394 = vlaneseq
        %v3395 = vshrl.u32 %v3394, 7
        %v3396 = vsub.s32 0, %v3395
        %v3397 = vrot.slane %v3392, %v3396
        %v3407 = vunpack.c.l.b16 %v3384
        %v3408 = vunpack.c.l.b16 %v3385
        %v3409 = vunpack.c.l.b16 %v3386
        %v3410 = vunpack.c.l.b16 %v3387
        %v3411 = vunpack.c.l.b16 %v3388
        %v3412 = vunpack.c.l.b16 %v3389
        %v3413 = vunpack.c.l.b16 %v3390
        %v3414 = vunpack.c.l.b16 %v3391
        %v3415 = vpack.c.b16 %v3408, %v3407
        %v3416 = vpack.c.b16 %v3410, %v3409
        %v3417 = vpack.c.b16 %v3412, %v3411
        %v3418 = vpack.c.b16 %v3414, %v3413
        %vm3423 = vcmask 523264
        %v3425 = vsel %vm3423, %v3383, 0
        %3427 = vmatprep.subr.bf16.mxu0 0
        %3428 = vmatpush1.bf16.msra.mxu0 0
        %3429 = vmatprep.subr.bf16.mxu0 0
        %3430 = vmatpush1.bf16.msra.mxu0 0
        %3431 = vmatprep.subr.bf16.mxu0 0
        %3432 = vmatpush1.bf16.msra.mxu0 0
        %3433 = vmatprep.subr.bf16.mxu0 0
        %3434 = vmatpush1.bf16.msra.mxu0 0
        %3435 = vmatprep.subr.bf16.mxu0 0
        %3436 = vmatpush1.bf16.msra.mxu0 %v3418
        %3437 = vmatprep.subr.bf16.mxu0 0
        %3438 = vmatpush1.bf16.msra.mxu0 %v3417
        %3439 = vmatprep.subr.bf16.mxu0 0
        %3440 = vmatpush1.bf16.msra.mxu0 %v3416
        %3441 = vmatprep.subr.bf16.mxu0 0
        %3442 = vmatpush1.bf16.msra.mxu0 %v3415
        %3443 = vmatprep.subr.bf16.mxu0 0
        %3444 = vmatpush2.bf16.msra.mxu0 0
        %3445 = vmatprep.subr.bf16.mxu0 0
        %3446 = vmatpush2.bf16.msra.mxu0 0
        %3447 = vmatprep.subr.bf16.mxu0 0
        %3448 = vmatpush2.bf16.msra.mxu0 0
        %3449 = vmatprep.subr.bf16.mxu0 0
        %3450 = vmatpush2.bf16.msra.mxu0 0
        %3451 = vmatprep.subr.bf16.mxu0 0
        %3452 = vmatpush2.bf16.msra.mxu0 0
        %3453 = vmatprep.subr.bf16.mxu0 0
        %3454 = vmatpush2.bf16.msra.mxu0 0
        %3455 = vmatprep.subr.bf16.mxu0 0
        %3456 = vmatpush2.bf16.msra.mxu0 0
        %3457 = vmatprep.subr.bf16.mxu0 0
        %3458 = vmatpush2.bf16.msra.mxu0 0
        %3459 = vmatprep.mubr.bf16.mxu0 0
        %3460 = vmatmul.mubr.bf16.gmra.mxu0 %v3425
        %v3461 = vpop.f32.mrf.mxu0
        %v3462 = vadd.f32 %v3397, %v3461
        %v3463 = vpop.f32.mrf.mxu0
        %v3464 = vpop.f32.mrf.mxu0
        %v3465 = vpop.f32.mrf.mxu0
        %3466 = vdwg.mxu0
        %v3467 = vpack.c.bf16 %v3462, %v3462
        %v3468 = vadd.bf16 %v3278, %v3467
        %vm3469 = vcmask 257024
        %3470 = vst.msk [vmem:[%s850] sm:$0xf] %vm3469, %v3468
        %s3471 = sand.u32 %s606, 1
        %s3472 = scalar_lea.sflag [#allocation5], %s3471
        %s3473 = sand.u32 %s606, 1
        %s3474 = smul.addr %s3473, 4
        %s3475 = scalar_lea.vmem [#allocation6], %s3474
        %s3476 = sand.u32 %s632, 1
        %s3477 = scalar_lea.sflag [#allocation8], %s3476
        %s3478 = sand.u32 %s632, 1
        %s3479 = smul.addr %s3478, 16
        %s3480 = scalar_lea.vmem [#allocation7], %s3479
        // Predicated region
        $region133: #{tpu_custom_call.1} parent=119 // pred_check
          %p3481 = pneg %p616
        $region134: #{tpu_custom_call.1} parent=119 // pred_check_branch
          %3483 = sbr.rel (%p3481) target = $region136
        $region135: #{tpu_custom_call.1} parent=119 // pred_region
          %s3485 = ssub.s32 64, 64
          %3486 = vsyncadd %s3472, %s3485
          %s3487 = smul.addr %s51, 2
          %s3488 = sadd.s32 %s52, %s3487
          %s3489 = smul.addr %s3488, 64
          %s3490 = scalar_lea.hbm %s25, %s3489
          %s3492 = sshll.u32 %s3475, 4
          %s3493 = int_to_ptr.vmem [resolvable:$true] %s3492
          %3495 = dma.vmem_to_hbm [thread:$0]  %s3493, 64, %s3490, %s3472
        $region136: #{tpu_custom_call.1} parent=119 // pred_fallthru
          _
        // Predicated region
        $region137: #{tpu_custom_call.1} parent=119 // pred_check
          %p3496 = pneg %p642
        $region138: #{tpu_custom_call.1} parent=119 // pred_check_branch
          %3498 = sbr.rel (%p3496) target = $region140
        $region139: #{tpu_custom_call.1} parent=119 // pred_region
          %s3500 = ssub.s32 256, 256
          %3501 = vsyncadd %s3477, %s3500
          %s3502 = smul.addr %s51, 4
          %s3503 = smul.addr %s3502, 64
          %s3504 = scalar_lea.hbm %s26, %s3503
          %s3505 = sshll.u32 %s3480, 4
          %s3506 = int_to_ptr.vmem [resolvable:$true] %s3505
          %3511 = dma.vmem_to_hbm [thread:$0]  %s3506, 256, %s3504, %s3477, 64, 64, 4
        $region140: #{tpu_custom_call.1} parent=119 // pred_fallthru
          _
      $region120: #{tpu_custom_call.1} parent=5 // pred_fallthru
        _
      %p3512 = scmp.le.s32.totalorder 2, %s42
      // Predicated region
      $region141: #{tpu_custom_call.1} parent=5 // pred_check
        %p3513 = pneg %p3512
      $region142: #{tpu_custom_call.1} parent=5 // pred_check_branch
        %3515 = sbr.rel (%p3513) target = $region144
      $region143: #{tpu_custom_call.1} parent=5 // pred_region
        %s3516 = ssub.s32 %s42, 2
        // Predicated region
        $region145: #{tpu_custom_call.1} parent=143 // pred_check
          %p3517 = pneg %p622
        $region146: #{tpu_custom_call.1} parent=143 // pred_check_branch
          %3519 = sbr.rel (%p3517) target = $region148
        $region147: #{tpu_custom_call.1} parent=143 // pred_region
          %s3520 = sand.u32 %s607, 1
          %s3521 = scalar_lea.sflag [#allocation5], %s3520
          %s3522 = sand.u32 %s607, 1
          %s3523 = smul.addr %s3522, 4
          %s3524 = scalar_lea.vmem [#allocation6], %s3523
          %3525 = dma.done %s3521, 64
        $region148: #{tpu_custom_call.1} parent=143 // pred_fallthru
          _
        // Predicated region
        $region149: #{tpu_custom_call.1} parent=143 // pred_check
          %p3526 = pneg %p648
        $region150: #{tpu_custom_call.1} parent=143 // pred_check_branch
          %3528 = sbr.rel (%p3526) target = $region152
        $region151: #{tpu_custom_call.1} parent=143 // pred_region
          %s3529 = sand.u32 %s633, 1
          %s3530 = scalar_lea.sflag [#allocation8], %s3529
          %s3531 = sand.u32 %s633, 1
          %s3532 = smul.addr %s3531, 16
          %s3533 = scalar_lea.vmem [#allocation7], %s3532
          %3534 = dma.done %s3530, 256
        $region152: #{tpu_custom_call.1} parent=143 // pred_fallthru
          _
      $region144: #{tpu_custom_call.1} parent=5 // pred_fallthru
        _
    $region6: #{tpu_custom_call.1} parent=1 // loop_footer
      %s46 = sadd.s32 1, %s42
    $region7: #{tpu_custom_call.1} parent=1 // loop_footer_branch
      %41 = sbr.rel target = $region3
    $region8: #{tpu_custom_call.1} parent=1 // loop_exit
      _
    %3535 = vsyncpa [#allocation4], 1
    %s3536 = scalar_lea.sflag [#allocation4], 1
    %3537 = vsyncpa %s3536, 1
    %3538 = vsyncpa [#allocation5], 1
    %s3539 = scalar_lea.sflag [#allocation5], 1
    %3540 = vsyncpa %s3539, 1
    %3541 = vsyncpa [#allocation8], 1
    %s3542 = scalar_lea.sflag [#allocation8], 1
    %3543 = vsyncpa %s3542, 1

</llo_original>
